<compile_context>
chip_gen: v6e
topology: v6e:2x2x1
jax: 0.10.0
libtpu: 0.0.40
codegen_flags: <defaults>
</compile_context>

<pallas_src>
import jax
import jax.numpy as jnp
from jax import lax
from jax.experimental import pallas as pl
from jax.experimental.pallas import tpu as pltpu

F32 = jnp.float32
BF16 = jnp.bfloat16

# ---- small synthetic ECAPA-TDNN config (structure mirrors speechbrain defaults) ----
INPUT_FEAT = 24                    # (speechbrain: 80 fbank features)
CHANNELS = [32, 32, 32, 32, 96]    # (speechbrain: [1024]*4 + [3072])
KERNELS = [5, 3, 3, 3, 1]
DILATIONS = [1, 2, 3, 4, 1]
RES2NET_SCALE = 4                  # (speechbrain: 8)
SE_CHANNELS = 16                   # (speechbrain: 128)
ATT_CHANNELS = 16                  # (speechbrain: 128)
LIN_NEURONS = 32                   # (speechbrain: 192) -> embedding dim

BN_EPS = 1e-5
STAT_EPS = 1e-12


# -------------------------------------------------------------------------------
# Host-built constants: reflect-pad gather matrices + per-sequence sum/broadcast
# selectors.  Column layout everywhere: j = b*T + t  (lane-dense, batch folded in).
# -------------------------------------------------------------------------------
def _reflect_src(delta, t):
    tt = jnp.arange(t)
    r = tt + delta
    r = jnp.abs(r)                               # reflect at the left edge
    r = jnp.minimum(r, 2 * (t - 1) - r)          # reflect at the right edge
    return r                                     # (t,) source time per output time


def _gather_matrix(delta, nb, t):
    """(BT, BT) 0/1 matrix G:  (x @ G)[:, b*T+t] == x[:, b*T + reflect(t+delta)]."""
    bt = nb * t
    dst = jnp.arange(bt)
    src = (dst // t) * t + _reflect_src(delta, t)[dst % t]
    return (jnp.arange(bt)[:, None] == src[None, :]).astype(F32)


def _selectors(nb, t):
    bt = nb * t
    j = jnp.arange(bt)
    sel_sum = (j[:, None] // t == jnp.arange(nb)[None, :]).astype(F32)   # (BT, B)
    return sel_sum, sel_sum.T                                            # + (B, BT)


def build_constants(nb, t):
    pad0 = DILATIONS[0] * (KERNELS[0] - 1) // 2
    d0 = [k * DILATIONS[0] - pad0 for k in range(KERNELS[0]) if k * DILATIONS[0] != pad0]
    # block 0: all non-center taps fused into one wide gather operand (BT, 4*BT)
    mask0 = jnp.concatenate([_gather_matrix(d, nb, t) for d in d0], axis=1)
    # blocks 1..3 (dilations 2,3,4): [left | right] taps, (3, BT, 2*BT)
    maskd = jnp.stack(
        [jnp.concatenate([_gather_matrix(-d, nb, t), _gather_matrix(d, nb, t)], axis=1)
         for d in DILATIONS[1:4]])
    sel_sum, sel_bcast = _selectors(nb, t)
    return {"mask0": mask0, "maskd": maskd, "sel_sum": sel_sum, "sel_bcast": sel_bcast}


# -------------------------------------------------------------------------------
# Fused whole-forward kernel
# -------------------------------------------------------------------------------
def _make_kernel(nb, t):
    bt = nb * t
    hid = CHANNELS[1] // RES2NET_SCALE
    inv_t = 1.0 / t
    pad0 = DILATIONS[0] * (KERNELS[0] - 1) // 2      # center tap index of block 0

    def kernel(x_ref, mask0_ref, maskd_ref, ssum_ref, sbc_ref,
               b0w_ref, b0p_ref, tw_ref, tp_ref, r2w_ref, r2p_ref,
               se1w_ref, se1b_ref, se2w_ref, se2b_ref,
               mfaw_ref, mfap_ref, asptw_ref, asptp_ref,
               aspcw_ref, aspcb_ref, aspbn_ref, fcw_ref, fcb_ref, o_ref):

        ssum = ssum_ref[...]                         # (BT, B)  per-sequence sum
        sbc = sbc_ref[...]                           # (B, BT)  per-sequence broadcast

        def mm(w, v):                                # bf16 MXU matmul, f32 accumulation
            return jnp.dot(w.astype(BF16), v.astype(BF16), preferred_element_type=F32)

        def seg_sum(v):                              # (C, BT) -> (C, B)
            return jnp.dot(v, ssum, preferred_element_type=F32)

        def seg_bcast(v):                            # (C, B) -> (C, BT)
            return jnp.dot(v, sbc, preferred_element_type=F32)

        def bn_rows(y, g, b):                        # training BN, stats over all lanes
            mu = jnp.mean(y, axis=1, keepdims=True)
            var = jnp.mean((y - mu) ** 2, axis=1, keepdims=True)
            return (y - mu) * lax.rsqrt(var + BN_EPS) * g + b

        def act_bn(y, p):                            # TDNNBlock tail: +bias -> ReLU -> BN
            y = jnp.maximum(y + p[:, 0:1], 0.0)
            return bn_rows(y, p[:, 1:2], p[:, 2:3])

        # ----- block 0: TDNNBlock(F -> C0, k=5, d=1); one wide gather matmul -----
        x = x_ref[...]                                                   # (F, BT) f32
        taps0 = jnp.dot(x, mask0_ref[...], preferred_element_type=F32)   # (F, 4*BT)
        y = mm(b0w_ref[pad0], x)
        off = 0
        for k in range(KERNELS[0]):
            if k == pad0:
                continue
            y = y + mm(b0w_ref[k], taps0[:, off * bt:(off + 1) * bt])
            off += 1
        x = act_bn(y, b0p_ref[...])                                      # (C0, BT)

        # ----- 3 x SE-Res2Net blocks (dilations 2, 3, 4) -----
        xl = []
        for i in (1, 2, 3):
            residual = x                              # Cin == Cout -> identity shortcut
            h = act_bn(mm(tw_ref[2 * (i - 1)], x), tp_ref[2 * (i - 1)])
            gmat = maskd_ref[i - 1]                                       # (BT, 2*BT)
            chunks = [h[s * hid:(s + 1) * hid, :] for s in range(RES2NET_SCALE)]
            ys = [chunks[0]]
            yp = None
            for s in range(1, RES2NET_SCALE):
                inp = chunks[s] if s == 1 else chunks[s] + yp
                taps = jnp.dot(inp, gmat, preferred_element_type=F32)     # (hid, 2*BT)
                base = (i - 1) * 9 + (s - 1) * 3
                yk = (mm(r2w_ref[base + 1], inp)            # center tap
                      + mm(r2w_ref[base + 0], taps[:, :bt]) # left tap (reflect-padded)
                      + mm(r2w_ref[base + 2], taps[:, bt:]))# right tap
                yp = act_bn(yk, r2p_ref[(i - 1) * 3 + (s - 1)])
                ys.append(yp)
            h = jnp.concatenate(ys, axis=0)           # sublane-aligned 4x(hid,BT) concat
            h = act_bn(mm(tw_ref[2 * (i - 1) + 1], h), tp_ref[2 * (i - 1) + 1])
            # SE: mean over time -> bottleneck -> sigmoid gate broadcast over time
            s_pool = seg_sum(h) * inv_t                                   # (C, B)
            z = jnp.maximum(mm(se1w_ref[i - 1], s_pool) + se1b_ref[i - 1], 0.0)
            gate = jax.nn.sigmoid(mm(se2w_ref[i - 1], z) + se2b_ref[i - 1])
            x = h * seg_bcast(gate) + residual
            xl.append(x)

        # ----- MFA: concat-free 1x1 conv over the 3 block outputs -----
        y = mm(mfaw_ref[0], xl[0]) + mm(mfaw_ref[1], xl[1]) + mm(mfaw_ref[2], xl[2])
        x = act_bn(y, mfap_ref[...])                                      # (Clast, BT)

        # ----- ASP: global-context stats (uniform weights -> plain mean/std) -----
        gmean = seg_sum(x) * inv_t                                        # (C, B)
        dx = x - seg_bcast(gmean)
        gstd = jnp.sqrt(jnp.maximum(seg_sum(dx * dx) * inv_t, STAT_EPS))  # (C, B)
        # attention logits without materializing the (3C, BT) concat
        ab = mm(asptw_ref[1], gmean) + mm(asptw_ref[2], gstd)             # (att, B)
        a = mm(asptw_ref[0], x) + seg_bcast(ab)
        a = jnp.tanh(act_bn(a, asptp_ref[...]))
        e = mm(aspcw_ref[...], a) + aspcb_ref[...]                        # (C, BT)

        # per-(channel, sequence) softmax over time.  The row-global max is only a
        # constant shift per row, so the per-sequence softmax is unchanged.
        ex = jnp.exp(e - jnp.max(e, axis=1, keepdims=True))
        p = ex * seg_bcast(pl.reciprocal(seg_sum(ex), approx=True))       # (C, BT)
        mean = seg_sum(p * x)                                             # (C, B)
        dm = x - seg_bcast(mean)
        std = jnp.sqrt(jnp.maximum(seg_sum(p * dm * dm), STAT_EPS))       # (C, B)

        # ----- asp_bn (training-mode batch stats, per half) + fc for all columns -----
        def bn_batch(v, gb):                          # stats over the batch columns
            mu = jnp.mean(v, axis=1, keepdims=True)
            var = jnp.mean((v - mu) ** 2, axis=1, keepdims=True)
            return (v - mu) * lax.rsqrt(var + BN_EPS) * gb[:, 0:1] + gb[:, 1:2]

        emb = (mm(fcw_ref[0], bn_batch(mean, aspbn_ref[0]))
               + mm(fcw_ref[1], bn_batch(std, aspbn_ref[1]))
               + fcb_ref[...])                                            # (E, B)
        o_ref[...] = emb                              # one full-block store

    return kernel


# -------------------------------------------------------------------------------
# Parameter init (deterministic, synthetic; raw shapes mirror the ECAPA modules)
# -------------------------------------------------------------------------------
def _init_conv(key, c_out, c_in, k):
    kw, kb = jax.random.split(key)
    scale = 1.0 / jnp.sqrt(jnp.asarray(c_in * k, F32))
    w = jax.random.normal(kw, (c_out, c_in, k), F32) * scale
    b = jax.random.normal(kb, (c_out,), F32) * 0.01
    return w, b


def _init_bn(c):
    return jnp.ones((c,), F32), jnp.zeros((c,), F32)


def init_params(key):
    keys = iter(jax.random.split(key, 64))
    p = {}
    p["b0_w"], p["b0_b"] = _init_conv(next(keys), CHANNELS[0], INPUT_FEAT, KERNELS[0])
    p["b0_g"], p["b0_be"] = _init_bn(CHANNELS[0])
    for i in (1, 2, 3):
        blk = {}
        cin, cout = CHANNELS[i - 1], CHANNELS[i]
        blk["t1_w"], blk["t1_b"] = _init_conv(next(keys), cout, cin, 1)
        blk["t1_g"], blk["t1_be"] = _init_bn(cout)
        hid = cout // RES2NET_SCALE
        blk["r2"] = []
        for _ in range(RES2NET_SCALE - 1):
            w, b = _init_conv(next(keys), hid, hid, KERNELS[i])
            g, be = _init_bn(hid)
            blk["r2"].append((w, b, g, be))
        blk["t2_w"], blk["t2_b"] = _init_conv(next(keys), cout, cout, 1)
        blk["t2_g"], blk["t2_be"] = _init_bn(cout)
        blk["se1_w"], blk["se1_b"] = _init_conv(next(keys), SE_CHANNELS, cout, 1)
        blk["se2_w"], blk["se2_b"] = _init_conv(next(keys), cout, SE_CHANNELS, 1)
        p[f"se{i}"] = blk
    p["mfa_w"], p["mfa_b"] = _init_conv(next(keys), CHANNELS[-1], 3 * CHANNELS[1], 1)
    p["mfa_g"], p["mfa_be"] = _init_bn(CHANNELS[-1])
    p["asp_t_w"], p["asp_t_b"] = _init_conv(next(keys), ATT_CHANNELS, 3 * CHANNELS[-1], 1)
    p["asp_t_g"], p["asp_t_be"] = _init_bn(ATT_CHANNELS)
    p["asp_c_w"], p["asp_c_b"] = _init_conv(next(keys), CHANNELS[-1], ATT_CHANNELS, 1)
    p["asp_bn_g"], p["asp_bn_be"] = _init_bn(2 * CHANNELS[-1])
    p["fc_w"], p["fc_b"] = _init_conv(next(keys), LIN_NEURONS, 2 * CHANNELS[-1], 1)
    return p


# -------------------------------------------------------------------------------
# Host-side packing into a small number of grouped, kernel-friendly slabs
# -------------------------------------------------------------------------------
def _bgb(b, g, be):
    return jnp.stack([b, g, be], axis=1)            # (C, 3): bias | gamma | beta


def pack_params(p):
    def taps_first(w):                              # (Cout, Cin, K) -> (K, Cout, Cin)
        return jnp.transpose(w, (2, 0, 1))

    C = CHANNELS[-1]
    q = {"b0_w": taps_first(p["b0_w"]).astype(BF16),              # (5, 32, 24)
         "b0_p": _bgb(p["b0_b"], p["b0_g"], p["b0_be"])}
    t_w, t_p, r2_w, r2_p = [], [], [], []
    se1_w, se1_b, se2_w, se2_b = [], [], [], []
    for i in (1, 2, 3):
        blk = p[f"se{i}"]
        t_w += [blk["t1_w"][:, :, 0], blk["t2_w"][:, :, 0]]
        t_p += [_bgb(blk["t1_b"], blk["t1_g"], blk["t1_be"]),
                _bgb(blk["t2_b"], blk["t2_g"], blk["t2_be"])]
        for (w, b, g, be) in blk["r2"]:
            r2_w.append(taps_first(w))                            # (3, hid, hid)
            r2_p.append(_bgb(b, g, be))
        se1_w.append(blk["se1_w"][:, :, 0]); se1_b.append(blk["se1_b"][:, None])
        se2_w.append(blk["se2_w"][:, :, 0]); se2_b.append(blk["se2_b"][:, None])
    q["t_w"] = jnp.stack(t_w).astype(BF16)                        # (6, 32, 32)
    q["t_p"] = jnp.stack(t_p)                                     # (6, 32, 3)
    q["r2_w"] = jnp.concatenate(r2_w, axis=0).astype(BF16)        # (27, 8, 8)
    q["r2_p"] = jnp.stack(r2_p)                                   # (9, 8, 3)
    q["se1_w"] = jnp.stack(se1_w).astype(BF16)                    # (3, 16, 32)
    q["se1_b"] = jnp.stack(se1_b)                                 # (3, 16, 1)
    q["se2_w"] = jnp.stack(se2_w).astype(BF16)                    # (3, 32, 16)
    q["se2_b"] = jnp.stack(se2_b)                                 # (3, 32, 1)
    mfa = p["mfa_w"][:, :, 0]
    q["mfa_w"] = jnp.stack(jnp.split(mfa, 3, axis=1)).astype(BF16)    # (3, 96, 32)
    q["mfa_p"] = _bgb(p["mfa_b"], p["mfa_g"], p["mfa_be"])
    aspt = p["asp_t_w"][:, :, 0]
    q["aspt_w"] = jnp.stack(jnp.split(aspt, 3, axis=1)).astype(BF16)  # (3, 16, 96)
    q["aspt_p"] = _bgb(p["asp_t_b"], p["asp_t_g"], p["asp_t_be"])
    q["aspc_w"] = p["asp_c_w"][:, :, 0].astype(BF16)              # (96, 16)
    q["aspc_b"] = p["asp_c_b"][:, None]                           # (96, 1)
    bn = jnp.stack([p["asp_bn_g"], p["asp_bn_be"]], axis=1)       # (2C, 2)
    q["aspbn_p"] = jnp.stack([bn[:C], bn[C:]])                    # (2, 96, 2)
    fcw = p["fc_w"][:, :, 0]
    q["fc_w"] = jnp.stack([fcw[:, :C], fcw[:, C:]]).astype(BF16)  # (2, 32, 96)
    q["fc_b"] = p["fc_b"][:, None]                                # (32, 1)
    return q


# -------------------------------------------------------------------------------
# Full forward: one fused pallas_call.  feats (B, T, F) -> embeddings (B, LIN_NEURONS)
# -------------------------------------------------------------------------------
def _full_spec(shape):
    nd = len(shape)
    return pl.BlockSpec(shape, lambda i, nd=nd: (0,) * nd)


_ARG_ORDER = ["mask0", "maskd", "sel_sum", "sel_bcast",
              "b0_w", "b0_p", "t_w", "t_p", "r2_w", "r2_p",
              "se1_w", "se1_b", "se2_w", "se2_b",
              "mfa_w", "mfa_p", "aspt_w", "aspt_p",
              "aspc_w", "aspc_b", "aspbn_p", "fc_w", "fc_b"]


@jax.jit
def ecapa_tdnn_forward(packed, consts, feats):
    """feats (B, T, F) -> embeddings (B, LIN_NEURONS).  Pick B*T as a multiple of 128
    so the lane-dense (C, B*T) slabs fill whole vregs / MXU columns."""
    B, T, F = feats.shape
    # lane-dense input slab (F, B*T); column b*T + t holds frame (b, t)
    # TODO(synk): at production feature sizes fold this transpose into the feature
    # frontend (or an in-kernel transpose) instead of a separate XLA op.
    x2d = jnp.transpose(feats, (2, 0, 1)).reshape(F, B * T).astype(F32)
    merged = {**consts, **packed}
    args = [x2d] + [merged[n] for n in _ARG_ORDER]
    emb = pl.pallas_call(
        _make_kernel(B, T),
        out_shape=jax.ShapeDtypeStruct((LIN_NEURONS, B), F32),
        grid=(1,),
        in_specs=[_full_spec(a.shape) for a in args],
        out_specs=_full_spec((LIN_NEURONS, B)),
        compiler_params=pltpu.CompilerParams(dimension_semantics=("arbitrary",)),
    )(*args)
    return emb.T                                      # (B, LIN_NEURONS) == .squeeze(1)


if __name__ == "__main__":
    key = jax.random.PRNGKey(0)
    kp, kx = jax.random.split(key)
    params = init_params(kp)
    packed = pack_params(params)

    B, T = 2, 64                      # B*T = 128 lanes -> one full vreg / MXU width
    consts = build_constants(B, T)
    feats = jax.random.normal(kx, (B, T, INPUT_FEAT), F32)   # (batch, time, feat)

    emb = ecapa_tdnn_forward(packed, consts, feats)
    emb = jax.block_until_ready(emb)

    assert emb.shape == (B, LIN_NEURONS), emb.shape
    assert bool(jnp.all(jnp.isfinite(emb)))
    print("KERNEL_OK")
</pallas_src>

<mosaic_0001>
module attributes {stable_mosaic.version = 11 : i64} {
  func.func @kernel(%arg0: i32, %arg1: memref<24x128xf32, #tpu.memory_space<vmem>>, %arg2: memref<128x512xf32, #tpu.memory_space<vmem>>, %arg3: memref<3x128x256xf32, #tpu.memory_space<vmem>>, %arg4: memref<128x2xf32, #tpu.memory_space<vmem>>, %arg5: memref<2x128xf32, #tpu.memory_space<vmem>>, %arg6: memref<5x32x24xbf16, #tpu.memory_space<vmem>>, %arg7: memref<32x3xf32, #tpu.memory_space<vmem>>, %arg8: memref<6x32x32xbf16, #tpu.memory_space<vmem>>, %arg9: memref<6x32x3xf32, #tpu.memory_space<vmem>>, %arg10: memref<27x8x8xbf16, #tpu.memory_space<vmem>>, %arg11: memref<9x8x3xf32, #tpu.memory_space<vmem>>, %arg12: memref<3x16x32xbf16, #tpu.memory_space<vmem>>, %arg13: memref<3x16x1xf32, #tpu.memory_space<vmem>>, %arg14: memref<3x32x16xbf16, #tpu.memory_space<vmem>>, %arg15: memref<3x32x1xf32, #tpu.memory_space<vmem>>, %arg16: memref<3x96x32xbf16, #tpu.memory_space<vmem>>, %arg17: memref<96x3xf32, #tpu.memory_space<vmem>>, %arg18: memref<3x16x96xbf16, #tpu.memory_space<vmem>>, %arg19: memref<16x3xf32, #tpu.memory_space<vmem>>, %arg20: memref<96x16xbf16, #tpu.memory_space<vmem>>, %arg21: memref<96x1xf32, #tpu.memory_space<vmem>>, %arg22: memref<2x96x2xf32, #tpu.memory_space<vmem>>, %arg23: memref<2x32x96xbf16, #tpu.memory_space<vmem>>, %arg24: memref<32x1xf32, #tpu.memory_space<vmem>>, %arg25: memref<32x2xf32, #tpu.memory_space<vmem>>) attributes {dimension_semantics = [#tpu.dimension_semantics<arbitrary>], iteration_bounds = array<i64: 1>, scalar_prefetch = 0 : i64, scratch_operands = 0 : i64, tpu.core_type = #tpu.core_type<tc>, window_params = [{pipeline_mode = #tpu.pipeline_mode<synchronous>, transform_indices = @transform_0, window_bounds = array<i64: 24, 128>}, {pipeline_mode = #tpu.pipeline_mode<synchronous>, transform_indices = @transform_1, window_bounds = array<i64: 128, 512>}, {pipeline_mode = #tpu.pipeline_mode<synchronous>, transform_indices = @transform_2, window_bounds = array<i64: 3, 128, 256>}, {pipeline_mode = #tpu.pipeline_mode<synchronous>, transform_indices = @transform_3, window_bounds = array<i64: 128, 2>}, {pipeline_mode = #tpu.pipeline_mode<synchronous>, transform_indices = @transform_4, window_bounds = array<i64: 2, 128>}, {pipeline_mode = #tpu.pipeline_mode<synchronous>, transform_indices = @transform_5, window_bounds = array<i64: 5, 32, 24>}, {pipeline_mode = #tpu.pipeline_mode<synchronous>, transform_indices = @transform_6, window_bounds = array<i64: 32, 3>}, {pipeline_mode = #tpu.pipeline_mode<synchronous>, transform_indices = @transform_7, window_bounds = array<i64: 6, 32, 32>}, {pipeline_mode = #tpu.pipeline_mode<synchronous>, transform_indices = @transform_8, window_bounds = array<i64: 6, 32, 3>}, {pipeline_mode = #tpu.pipeline_mode<synchronous>, transform_indices = @transform_9, window_bounds = array<i64: 27, 8, 8>}, {pipeline_mode = #tpu.pipeline_mode<synchronous>, transform_indices = @transform_10, window_bounds = array<i64: 9, 8, 3>}, {pipeline_mode = #tpu.pipeline_mode<synchronous>, transform_indices = @transform_11, window_bounds = array<i64: 3, 16, 32>}, {pipeline_mode = #tpu.pipeline_mode<synchronous>, transform_indices = @transform_12, window_bounds = array<i64: 3, 16, 1>}, {pipeline_mode = #tpu.pipeline_mode<synchronous>, transform_indices = @transform_13, window_bounds = array<i64: 3, 32, 16>}, {pipeline_mode = #tpu.pipeline_mode<synchronous>, transform_indices = @transform_14, window_bounds = array<i64: 3, 32, 1>}, {pipeline_mode = #tpu.pipeline_mode<synchronous>, transform_indices = @transform_15, window_bounds = array<i64: 3, 96, 32>}, {pipeline_mode = #tpu.pipeline_mode<synchronous>, transform_indices = @transform_16, window_bounds = array<i64: 96, 3>}, {pipeline_mode = #tpu.pipeline_mode<synchronous>, transform_indices = @transform_17, window_bounds = array<i64: 3, 16, 96>}, {pipeline_mode = #tpu.pipeline_mode<synchronous>, transform_indices = @transform_18, window_bounds = array<i64: 16, 3>}, {pipeline_mode = #tpu.pipeline_mode<synchronous>, transform_indices = @transform_19, window_bounds = array<i64: 96, 16>}, {pipeline_mode = #tpu.pipeline_mode<synchronous>, transform_indices = @transform_20, window_bounds = array<i64: 96, 1>}, {pipeline_mode = #tpu.pipeline_mode<synchronous>, transform_indices = @transform_21, window_bounds = array<i64: 2, 96, 2>}, {pipeline_mode = #tpu.pipeline_mode<synchronous>, transform_indices = @transform_22, window_bounds = array<i64: 2, 32, 96>}, {pipeline_mode = #tpu.pipeline_mode<synchronous>, transform_indices = @transform_23, window_bounds = array<i64: 32, 1>}, {pipeline_mode = #tpu.pipeline_mode<synchronous>, transform_indices = @transform_24, window_bounds = array<i64: 32, 2>}]} {
    %c0 = arith.constant 0 : index
    %c0_0 = arith.constant 0 : index
    %0 = vector.load %arg4[%c0, %c0_0] : memref<128x2xf32, #tpu.memory_space<vmem>>, vector<128x2xf32>
    %c0_1 = arith.constant 0 : index
    %c0_2 = arith.constant 0 : index
    %1 = vector.load %arg5[%c0_1, %c0_2] : memref<2x128xf32, #tpu.memory_space<vmem>>, vector<2x128xf32>
    %c0_3 = arith.constant 0 : index
    %c0_4 = arith.constant 0 : index
    %2 = vector.load %arg1[%c0_3, %c0_4] : memref<24x128xf32, #tpu.memory_space<vmem>>, vector<24x128xf32>
    %c0_5 = arith.constant 0 : index
    %c0_6 = arith.constant 0 : index
    %3 = vector.load %arg2[%c0_5, %c0_6] : memref<128x512xf32, #tpu.memory_space<vmem>>, vector<128x512xf32>
    %cst = arith.constant dense<0.000000e+00> : vector<24x512xf32>
    %4 = tpu.matmul %2, %3, %cst {dimension_numbers = #tpu.dot_dimension_numbers<[1], [0], [0], [1], [0, 0, 1, 1], [], []>} : vector<24x128xf32>, vector<128x512xf32>, vector<24x512xf32> -> vector<24x512xf32>
    %c2 = arith.constant 2 : index
    %c0_7 = arith.constant 0 : index
    %c0_8 = arith.constant 0 : index
    %5 = vector.load %arg6[%c2, %c0_7, %c0_8] : memref<5x32x24xbf16, #tpu.memory_space<vmem>>, vector<1x32x24xbf16>
    %6 = vector.shape_cast %5 : vector<1x32x24xbf16> to vector<32x24xbf16>
    %7 = arith.truncf %2 : vector<24x128xf32> to vector<24x128xbf16>
    %cst_9 = arith.constant dense<0.000000e+00> : vector<32x128xf32>
    %8 = tpu.matmul %6, %7, %cst_9 {dimension_numbers = #tpu.dot_dimension_numbers<[1], [0], [0], [1], [0, 0, 1, 1], [], []>} : vector<32x24xbf16>, vector<24x128xbf16>, vector<32x128xf32> -> vector<32x128xf32>
    %c0_10 = arith.constant 0 : index
    %c0_11 = arith.constant 0 : index
    %c0_12 = arith.constant 0 : index
    %9 = vector.load %arg6[%c0_10, %c0_11, %c0_12] : memref<5x32x24xbf16, #tpu.memory_space<vmem>>, vector<1x32x24xbf16>
    %10 = vector.shape_cast %9 : vector<1x32x24xbf16> to vector<32x24xbf16>
    %11 = vector.extract_strided_slice %4 {offsets = [0, 0], sizes = [24, 128], strides = [1, 1]} : vector<24x512xf32> to vector<24x128xf32>
    %12 = arith.truncf %11 : vector<24x128xf32> to vector<24x128xbf16>
    %cst_13 = arith.constant dense<0.000000e+00> : vector<32x128xf32>
    %13 = tpu.matmul %10, %12, %cst_13 {dimension_numbers = #tpu.dot_dimension_numbers<[1], [0], [0], [1], [0, 0, 1, 1], [], []>} : vector<32x24xbf16>, vector<24x128xbf16>, vector<32x128xf32> -> vector<32x128xf32>
    %14 = arith.addf %8, %13 : vector<32x128xf32>
    %c1 = arith.constant 1 : index
    %c0_14 = arith.constant 0 : index
    %c0_15 = arith.constant 0 : index
    %15 = vector.load %arg6[%c1, %c0_14, %c0_15] : memref<5x32x24xbf16, #tpu.memory_space<vmem>>, vector<1x32x24xbf16>
    %16 = vector.shape_cast %15 : vector<1x32x24xbf16> to vector<32x24xbf16>
    %17 = vector.extract_strided_slice %4 {offsets = [0, 128], sizes = [24, 128], strides = [1, 1]} : vector<24x512xf32> to vector<24x128xf32>
    %18 = arith.truncf %17 : vector<24x128xf32> to vector<24x128xbf16>
    %cst_16 = arith.constant dense<0.000000e+00> : vector<32x128xf32>
    %19 = tpu.matmul %16, %18, %cst_16 {dimension_numbers = #tpu.dot_dimension_numbers<[1], [0], [0], [1], [0, 0, 1, 1], [], []>} : vector<32x24xbf16>, vector<24x128xbf16>, vector<32x128xf32> -> vector<32x128xf32>
    %20 = arith.addf %14, %19 : vector<32x128xf32>
    %c3 = arith.constant 3 : index
    %c0_17 = arith.constant 0 : index
    %c0_18 = arith.constant 0 : index
    %21 = vector.load %arg6[%c3, %c0_17, %c0_18] : memref<5x32x24xbf16, #tpu.memory_space<vmem>>, vector<1x32x24xbf16>
    %22 = vector.shape_cast %21 : vector<1x32x24xbf16> to vector<32x24xbf16>
    %23 = vector.extract_strided_slice %4 {offsets = [0, 256], sizes = [24, 128], strides = [1, 1]} : vector<24x512xf32> to vector<24x128xf32>
    %24 = arith.truncf %23 : vector<24x128xf32> to vector<24x128xbf16>
    %cst_19 = arith.constant dense<0.000000e+00> : vector<32x128xf32>
    %25 = tpu.matmul %22, %24, %cst_19 {dimension_numbers = #tpu.dot_dimension_numbers<[1], [0], [0], [1], [0, 0, 1, 1], [], []>} : vector<32x24xbf16>, vector<24x128xbf16>, vector<32x128xf32> -> vector<32x128xf32>
    %26 = arith.addf %20, %25 : vector<32x128xf32>
    %c4 = arith.constant 4 : index
    %c0_20 = arith.constant 0 : index
    %c0_21 = arith.constant 0 : index
    %27 = vector.load %arg6[%c4, %c0_20, %c0_21] : memref<5x32x24xbf16, #tpu.memory_space<vmem>>, vector<1x32x24xbf16>
    %28 = vector.shape_cast %27 : vector<1x32x24xbf16> to vector<32x24xbf16>
    %29 = vector.extract_strided_slice %4 {offsets = [0, 384], sizes = [24, 128], strides = [1, 1]} : vector<24x512xf32> to vector<24x128xf32>
    %30 = arith.truncf %29 : vector<24x128xf32> to vector<24x128xbf16>
    %cst_22 = arith.constant dense<0.000000e+00> : vector<32x128xf32>
    %31 = tpu.matmul %28, %30, %cst_22 {dimension_numbers = #tpu.dot_dimension_numbers<[1], [0], [0], [1], [0, 0, 1, 1], [], []>} : vector<32x24xbf16>, vector<24x128xbf16>, vector<32x128xf32> -> vector<32x128xf32>
    %32 = arith.addf %26, %31 : vector<32x128xf32>
    %c0_23 = arith.constant 0 : index
    %c0_24 = arith.constant 0 : index
    %33 = vector.load %arg7[%c0_23, %c0_24] : memref<32x3xf32, #tpu.memory_space<vmem>>, vector<32x3xf32>
    %34 = vector.extract_strided_slice %33 {offsets = [0, 0], sizes = [32, 1], strides = [1, 1]} : vector<32x3xf32> to vector<32x1xf32>
    %35 = vector.broadcast %34 : vector<32x1xf32> to vector<32x128xf32>
    %36 = arith.addf %32, %35 : vector<32x128xf32>
    %cst_25 = arith.constant 0.000000e+00 : f32
    %37 = vector.broadcast %cst_25 : f32 to vector<32x128xf32>
    %38 = arith.maximumf %36, %37 : vector<32x128xf32>
    %39 = vector.extract_strided_slice %33 {offsets = [0, 1], sizes = [32, 1], strides = [1, 1]} : vector<32x3xf32> to vector<32x1xf32>
    %40 = vector.extract_strided_slice %33 {offsets = [0, 2], sizes = [32, 1], strides = [1, 1]} : vector<32x3xf32> to vector<32x1xf32>
    %cst_26 = arith.constant dense<0.000000e+00> : vector<32xf32>
    %41 = vector.multi_reduction <add>, %38, %cst_26 [1] : vector<32x128xf32> to vector<32xf32>
    %42 = vector.shape_cast %41 : vector<32xf32> to vector<32x1xf32>
    %cst_27 = arith.constant 1.280000e+02 : f32
    %43 = vector.broadcast %cst_27 : f32 to vector<32x1xf32>
    %44 = arith.divf %42, %43 : vector<32x1xf32>
    %45 = vector.broadcast %44 : vector<32x1xf32> to vector<32x128xf32>
    %46 = arith.subf %38, %45 : vector<32x128xf32>
    %47 = arith.mulf %46, %46 : vector<32x128xf32>
    %cst_28 = arith.constant dense<0.000000e+00> : vector<32xf32>
    %48 = vector.multi_reduction <add>, %47, %cst_28 [1] : vector<32x128xf32> to vector<32xf32>
    %49 = vector.shape_cast %48 : vector<32xf32> to vector<32x1xf32>
    %cst_29 = arith.constant 1.280000e+02 : f32
    %50 = vector.broadcast %cst_29 : f32 to vector<32x1xf32>
    %51 = arith.divf %49, %50 : vector<32x1xf32>
    %52 = vector.broadcast %44 : vector<32x1xf32> to vector<32x128xf32>
    %53 = arith.subf %38, %52 : vector<32x128xf32>
    %cst_30 = arith.constant 9.99999974E-6 : f32
    %54 = vector.broadcast %cst_30 : f32 to vector<32x1xf32>
    %55 = arith.addf %51, %54 : vector<32x1xf32>
    %56 = math.rsqrt %55 : vector<32x1xf32>
    %57 = vector.broadcast %56 : vector<32x1xf32> to vector<32x128xf32>
    %58 = arith.mulf %53, %57 : vector<32x128xf32>
    %59 = vector.broadcast %39 : vector<32x1xf32> to vector<32x128xf32>
    %60 = arith.mulf %58, %59 : vector<32x128xf32>
    %61 = vector.broadcast %40 : vector<32x1xf32> to vector<32x128xf32>
    %62 = arith.addf %60, %61 : vector<32x128xf32>
    %c0_31 = arith.constant 0 : index
    %c0_32 = arith.constant 0 : index
    %c0_33 = arith.constant 0 : index
    %63 = vector.load %arg8[%c0_31, %c0_32, %c0_33] : memref<6x32x32xbf16, #tpu.memory_space<vmem>>, vector<1x32x32xbf16>
    %64 = vector.shape_cast %63 : vector<1x32x32xbf16> to vector<32x32xbf16>
    %65 = arith.truncf %62 : vector<32x128xf32> to vector<32x128xbf16>
    %cst_34 = arith.constant dense<0.000000e+00> : vector<32x128xf32>
    %66 = tpu.matmul %64, %65, %cst_34 {dimension_numbers = #tpu.dot_dimension_numbers<[1], [0], [0], [1], [0, 0, 1, 1], [], []>} : vector<32x32xbf16>, vector<32x128xbf16>, vector<32x128xf32> -> vector<32x128xf32>
    %c0_35 = arith.constant 0 : index
    %c0_36 = arith.constant 0 : index
    %c0_37 = arith.constant 0 : index
    %67 = vector.load %arg9[%c0_35, %c0_36, %c0_37] : memref<6x32x3xf32, #tpu.memory_space<vmem>>, vector<1x32x3xf32>
    %68 = vector.shape_cast %67 : vector<1x32x3xf32> to vector<32x3xf32>
    %69 = vector.extract_strided_slice %68 {offsets = [0, 0], sizes = [32, 1], strides = [1, 1]} : vector<32x3xf32> to vector<32x1xf32>
    %70 = vector.broadcast %69 : vector<32x1xf32> to vector<32x128xf32>
    %71 = arith.addf %66, %70 : vector<32x128xf32>
    %cst_38 = arith.constant 0.000000e+00 : f32
    %72 = vector.broadcast %cst_38 : f32 to vector<32x128xf32>
    %73 = arith.maximumf %71, %72 : vector<32x128xf32>
    %74 = vector.extract_strided_slice %68 {offsets = [0, 1], sizes = [32, 1], strides = [1, 1]} : vector<32x3xf32> to vector<32x1xf32>
    %75 = vector.extract_strided_slice %68 {offsets = [0, 2], sizes = [32, 1], strides = [1, 1]} : vector<32x3xf32> to vector<32x1xf32>
    %cst_39 = arith.constant dense<0.000000e+00> : vector<32xf32>
    %76 = vector.multi_reduction <add>, %73, %cst_39 [1] : vector<32x128xf32> to vector<32xf32>
    %77 = vector.shape_cast %76 : vector<32xf32> to vector<32x1xf32>
    %cst_40 = arith.constant 1.280000e+02 : f32
    %78 = vector.broadcast %cst_40 : f32 to vector<32x1xf32>
    %79 = arith.divf %77, %78 : vector<32x1xf32>
    %80 = vector.broadcast %79 : vector<32x1xf32> to vector<32x128xf32>
    %81 = arith.subf %73, %80 : vector<32x128xf32>
    %82 = arith.mulf %81, %81 : vector<32x128xf32>
    %cst_41 = arith.constant dense<0.000000e+00> : vector<32xf32>
    %83 = vector.multi_reduction <add>, %82, %cst_41 [1] : vector<32x128xf32> to vector<32xf32>
    %84 = vector.shape_cast %83 : vector<32xf32> to vector<32x1xf32>
    %cst_42 = arith.constant 1.280000e+02 : f32
    %85 = vector.broadcast %cst_42 : f32 to vector<32x1xf32>
    %86 = arith.divf %84, %85 : vector<32x1xf32>
    %87 = vector.broadcast %79 : vector<32x1xf32> to vector<32x128xf32>
    %88 = arith.subf %73, %87 : vector<32x128xf32>
    %cst_43 = arith.constant 9.99999974E-6 : f32
    %89 = vector.broadcast %cst_43 : f32 to vector<32x1xf32>
    %90 = arith.addf %86, %89 : vector<32x1xf32>
    %91 = math.rsqrt %90 : vector<32x1xf32>
    %92 = vector.broadcast %91 : vector<32x1xf32> to vector<32x128xf32>
    %93 = arith.mulf %88, %92 : vector<32x128xf32>
    %94 = vector.broadcast %74 : vector<32x1xf32> to vector<32x128xf32>
    %95 = arith.mulf %93, %94 : vector<32x128xf32>
    %96 = vector.broadcast %75 : vector<32x1xf32> to vector<32x128xf32>
    %97 = arith.addf %95, %96 : vector<32x128xf32>
    %c0_44 = arith.constant 0 : index
    %c0_45 = arith.constant 0 : index
    %c0_46 = arith.constant 0 : index
    %98 = vector.load %arg3[%c0_44, %c0_45, %c0_46] : memref<3x128x256xf32, #tpu.memory_space<vmem>>, vector<1x128x256xf32>
    %99 = vector.shape_cast %98 : vector<1x128x256xf32> to vector<128x256xf32>
    %100 = vector.extract_strided_slice %97 {offsets = [0, 0], sizes = [8, 128], strides = [1, 1]} : vector<32x128xf32> to vector<8x128xf32>
    %101 = vector.extract_strided_slice %97 {offsets = [8, 0], sizes = [8, 128], strides = [1, 1]} : vector<32x128xf32> to vector<8x128xf32>
    %102 = vector.extract_strided_slice %97 {offsets = [16, 0], sizes = [8, 128], strides = [1, 1]} : vector<32x128xf32> to vector<8x128xf32>
    %103 = vector.extract_strided_slice %97 {offsets = [24, 0], sizes = [8, 128], strides = [1, 1]} : vector<32x128xf32> to vector<8x128xf32>
    %cst_47 = arith.constant dense<0.000000e+00> : vector<8x256xf32>
    %104 = tpu.matmul %101, %99, %cst_47 {dimension_numbers = #tpu.dot_dimension_numbers<[1], [0], [0], [1], [0, 0, 1, 1], [], []>} : vector<8x128xf32>, vector<128x256xf32>, vector<8x256xf32> -> vector<8x256xf32>
    %c1_48 = arith.constant 1 : index
    %c0_49 = arith.constant 0 : index
    %c0_50 = arith.constant 0 : index
    %105 = vector.load %arg10[%c1_48, %c0_49, %c0_50] : memref<27x8x8xbf16, #tpu.memory_space<vmem>>, vector<1x8x8xbf16>
    %106 = vector.shape_cast %105 : vector<1x8x8xbf16> to vector<8x8xbf16>
    %107 = arith.truncf %101 : vector<8x128xf32> to vector<8x128xbf16>
    %cst_51 = arith.constant dense<0.000000e+00> : vector<8x128xf32>
    %108 = tpu.matmul %106, %107, %cst_51 {dimension_numbers = #tpu.dot_dimension_numbers<[1], [0], [0], [1], [0, 0, 1, 1], [], []>} : vector<8x8xbf16>, vector<8x128xbf16>, vector<8x128xf32> -> vector<8x128xf32>
    %c0_52 = arith.constant 0 : index
    %c0_53 = arith.constant 0 : index
    %c0_54 = arith.constant 0 : index
    %109 = vector.load %arg10[%c0_52, %c0_53, %c0_54] : memref<27x8x8xbf16, #tpu.memory_space<vmem>>, vector<1x8x8xbf16>
    %110 = vector.shape_cast %109 : vector<1x8x8xbf16> to vector<8x8xbf16>
    %111 = vector.extract_strided_slice %104 {offsets = [0, 0], sizes = [8, 128], strides = [1, 1]} : vector<8x256xf32> to vector<8x128xf32>
    %112 = arith.truncf %111 : vector<8x128xf32> to vector<8x128xbf16>
    %cst_55 = arith.constant dense<0.000000e+00> : vector<8x128xf32>
    %113 = tpu.matmul %110, %112, %cst_55 {dimension_numbers = #tpu.dot_dimension_numbers<[1], [0], [0], [1], [0, 0, 1, 1], [], []>} : vector<8x8xbf16>, vector<8x128xbf16>, vector<8x128xf32> -> vector<8x128xf32>
    %114 = arith.addf %108, %113 : vector<8x128xf32>
    %c2_56 = arith.constant 2 : index
    %c0_57 = arith.constant 0 : index
    %c0_58 = arith.constant 0 : index
    %115 = vector.load %arg10[%c2_56, %c0_57, %c0_58] : memref<27x8x8xbf16, #tpu.memory_space<vmem>>, vector<1x8x8xbf16>
    %116 = vector.shape_cast %115 : vector<1x8x8xbf16> to vector<8x8xbf16>
    %117 = vector.extract_strided_slice %104 {offsets = [0, 128], sizes = [8, 128], strides = [1, 1]} : vector<8x256xf32> to vector<8x128xf32>
    %118 = arith.truncf %117 : vector<8x128xf32> to vector<8x128xbf16>
    %cst_59 = arith.constant dense<0.000000e+00> : vector<8x128xf32>
    %119 = tpu.matmul %116, %118, %cst_59 {dimension_numbers = #tpu.dot_dimension_numbers<[1], [0], [0], [1], [0, 0, 1, 1], [], []>} : vector<8x8xbf16>, vector<8x128xbf16>, vector<8x128xf32> -> vector<8x128xf32>
    %120 = arith.addf %114, %119 : vector<8x128xf32>
    %c0_60 = arith.constant 0 : index
    %c0_61 = arith.constant 0 : index
    %c0_62 = arith.constant 0 : index
    %121 = vector.load %arg11[%c0_60, %c0_61, %c0_62] : memref<9x8x3xf32, #tpu.memory_space<vmem>>, vector<1x8x3xf32>
    %122 = vector.shape_cast %121 : vector<1x8x3xf32> to vector<8x3xf32>
    %123 = vector.extract_strided_slice %122 {offsets = [0, 0], sizes = [8, 1], strides = [1, 1]} : vector<8x3xf32> to vector<8x1xf32>
    %124 = vector.broadcast %123 : vector<8x1xf32> to vector<8x128xf32>
    %125 = arith.addf %120, %124 : vector<8x128xf32>
    %cst_63 = arith.constant 0.000000e+00 : f32
    %126 = vector.broadcast %cst_63 : f32 to vector<8x128xf32>
    %127 = arith.maximumf %125, %126 : vector<8x128xf32>
    %128 = vector.extract_strided_slice %122 {offsets = [0, 1], sizes = [8, 1], strides = [1, 1]} : vector<8x3xf32> to vector<8x1xf32>
    %129 = vector.extract_strided_slice %122 {offsets = [0, 2], sizes = [8, 1], strides = [1, 1]} : vector<8x3xf32> to vector<8x1xf32>
    %cst_64 = arith.constant dense<0.000000e+00> : vector<8xf32>
    %130 = vector.multi_reduction <add>, %127, %cst_64 [1] : vector<8x128xf32> to vector<8xf32>
    %131 = vector.shape_cast %130 : vector<8xf32> to vector<8x1xf32>
    %cst_65 = arith.constant 1.280000e+02 : f32
    %132 = vector.broadcast %cst_65 : f32 to vector<8x1xf32>
    %133 = arith.divf %131, %132 : vector<8x1xf32>
    %134 = vector.broadcast %133 : vector<8x1xf32> to vector<8x128xf32>
    %135 = arith.subf %127, %134 : vector<8x128xf32>
    %136 = arith.mulf %135, %135 : vector<8x128xf32>
    %cst_66 = arith.constant dense<0.000000e+00> : vector<8xf32>
    %137 = vector.multi_reduction <add>, %136, %cst_66 [1] : vector<8x128xf32> to vector<8xf32>
    %138 = vector.shape_cast %137 : vector<8xf32> to vector<8x1xf32>
    %cst_67 = arith.constant 1.280000e+02 : f32
    %139 = vector.broadcast %cst_67 : f32 to vector<8x1xf32>
    %140 = arith.divf %138, %139 : vector<8x1xf32>
    %141 = vector.broadcast %133 : vector<8x1xf32> to vector<8x128xf32>
    %142 = arith.subf %127, %141 : vector<8x128xf32>
    %cst_68 = arith.constant 9.99999974E-6 : f32
    %143 = vector.broadcast %cst_68 : f32 to vector<8x1xf32>
    %144 = arith.addf %140, %143 : vector<8x1xf32>
    %145 = math.rsqrt %144 : vector<8x1xf32>
    %146 = vector.broadcast %145 : vector<8x1xf32> to vector<8x128xf32>
    %147 = arith.mulf %142, %146 : vector<8x128xf32>
    %148 = vector.broadcast %128 : vector<8x1xf32> to vector<8x128xf32>
    %149 = arith.mulf %147, %148 : vector<8x128xf32>
    %150 = vector.broadcast %129 : vector<8x1xf32> to vector<8x128xf32>
    %151 = arith.addf %149, %150 : vector<8x128xf32>
    %152 = arith.addf %102, %151 : vector<8x128xf32>
    %cst_69 = arith.constant dense<0.000000e+00> : vector<8x256xf32>
    %153 = tpu.matmul %152, %99, %cst_69 {dimension_numbers = #tpu.dot_dimension_numbers<[1], [0], [0], [1], [0, 0, 1, 1], [], []>} : vector<8x128xf32>, vector<128x256xf32>, vector<8x256xf32> -> vector<8x256xf32>
    %c4_70 = arith.constant 4 : index
    %c0_71 = arith.constant 0 : index
    %c0_72 = arith.constant 0 : index
    %154 = vector.load %arg10[%c4_70, %c0_71, %c0_72] : memref<27x8x8xbf16, #tpu.memory_space<vmem>>, vector<1x8x8xbf16>
    %155 = vector.shape_cast %154 : vector<1x8x8xbf16> to vector<8x8xbf16>
    %156 = arith.truncf %152 : vector<8x128xf32> to vector<8x128xbf16>
    %cst_73 = arith.constant dense<0.000000e+00> : vector<8x128xf32>
    %157 = tpu.matmul %155, %156, %cst_73 {dimension_numbers = #tpu.dot_dimension_numbers<[1], [0], [0], [1], [0, 0, 1, 1], [], []>} : vector<8x8xbf16>, vector<8x128xbf16>, vector<8x128xf32> -> vector<8x128xf32>
    %c3_74 = arith.constant 3 : index
    %c0_75 = arith.constant 0 : index
    %c0_76 = arith.constant 0 : index
    %158 = vector.load %arg10[%c3_74, %c0_75, %c0_76] : memref<27x8x8xbf16, #tpu.memory_space<vmem>>, vector<1x8x8xbf16>
    %159 = vector.shape_cast %158 : vector<1x8x8xbf16> to vector<8x8xbf16>
    %160 = vector.extract_strided_slice %153 {offsets = [0, 0], sizes = [8, 128], strides = [1, 1]} : vector<8x256xf32> to vector<8x128xf32>
    %161 = arith.truncf %160 : vector<8x128xf32> to vector<8x128xbf16>
    %cst_77 = arith.constant dense<0.000000e+00> : vector<8x128xf32>
    %162 = tpu.matmul %159, %161, %cst_77 {dimension_numbers = #tpu.dot_dimension_numbers<[1], [0], [0], [1], [0, 0, 1, 1], [], []>} : vector<8x8xbf16>, vector<8x128xbf16>, vector<8x128xf32> -> vector<8x128xf32>
    %163 = arith.addf %157, %162 : vector<8x128xf32>
    %c5 = arith.constant 5 : index
    %c0_78 = arith.constant 0 : index
    %c0_79 = arith.constant 0 : index
    %164 = vector.load %arg10[%c5, %c0_78, %c0_79] : memref<27x8x8xbf16, #tpu.memory_space<vmem>>, vector<1x8x8xbf16>
    %165 = vector.shape_cast %164 : vector<1x8x8xbf16> to vector<8x8xbf16>
    %166 = vector.extract_strided_slice %153 {offsets = [0, 128], sizes = [8, 128], strides = [1, 1]} : vector<8x256xf32> to vector<8x128xf32>
    %167 = arith.truncf %166 : vector<8x128xf32> to vector<8x128xbf16>
    %cst_80 = arith.constant dense<0.000000e+00> : vector<8x128xf32>
    %168 = tpu.matmul %165, %167, %cst_80 {dimension_numbers = #tpu.dot_dimension_numbers<[1], [0], [0], [1], [0, 0, 1, 1], [], []>} : vector<8x8xbf16>, vector<8x128xbf16>, vector<8x128xf32> -> vector<8x128xf32>
    %169 = arith.addf %163, %168 : vector<8x128xf32>
    %c1_81 = arith.constant 1 : index
    %c0_82 = arith.constant 0 : index
    %c0_83 = arith.constant 0 : index
    %170 = vector.load %arg11[%c1_81, %c0_82, %c0_83] : memref<9x8x3xf32, #tpu.memory_space<vmem>>, vector<1x8x3xf32>
    %171 = vector.shape_cast %170 : vector<1x8x3xf32> to vector<8x3xf32>
    %172 = vector.extract_strided_slice %171 {offsets = [0, 0], sizes = [8, 1], strides = [1, 1]} : vector<8x3xf32> to vector<8x1xf32>
    %173 = vector.broadcast %172 : vector<8x1xf32> to vector<8x128xf32>
    %174 = arith.addf %169, %173 : vector<8x128xf32>
    %cst_84 = arith.constant 0.000000e+00 : f32
    %175 = vector.broadcast %cst_84 : f32 to vector<8x128xf32>
    %176 = arith.maximumf %174, %175 : vector<8x128xf32>
    %177 = vector.extract_strided_slice %171 {offsets = [0, 1], sizes = [8, 1], strides = [1, 1]} : vector<8x3xf32> to vector<8x1xf32>
    %178 = vector.extract_strided_slice %171 {offsets = [0, 2], sizes = [8, 1], strides = [1, 1]} : vector<8x3xf32> to vector<8x1xf32>
    %cst_85 = arith.constant dense<0.000000e+00> : vector<8xf32>
    %179 = vector.multi_reduction <add>, %176, %cst_85 [1] : vector<8x128xf32> to vector<8xf32>
    %180 = vector.shape_cast %179 : vector<8xf32> to vector<8x1xf32>
    %cst_86 = arith.constant 1.280000e+02 : f32
    %181 = vector.broadcast %cst_86 : f32 to vector<8x1xf32>
    %182 = arith.divf %180, %181 : vector<8x1xf32>
    %183 = vector.broadcast %182 : vector<8x1xf32> to vector<8x128xf32>
    %184 = arith.subf %176, %183 : vector<8x128xf32>
    %185 = arith.mulf %184, %184 : vector<8x128xf32>
    %cst_87 = arith.constant dense<0.000000e+00> : vector<8xf32>
    %186 = vector.multi_reduction <add>, %185, %cst_87 [1] : vector<8x128xf32> to vector<8xf32>
    %187 = vector.shape_cast %186 : vector<8xf32> to vector<8x1xf32>
    %cst_88 = arith.constant 1.280000e+02 : f32
    %188 = vector.broadcast %cst_88 : f32 to vector<8x1xf32>
    %189 = arith.divf %187, %188 : vector<8x1xf32>
    %190 = vector.broadcast %182 : vector<8x1xf32> to vector<8x128xf32>
    %191 = arith.subf %176, %190 : vector<8x128xf32>
    %cst_89 = arith.constant 9.99999974E-6 : f32
    %192 = vector.broadcast %cst_89 : f32 to vector<8x1xf32>
    %193 = arith.addf %189, %192 : vector<8x1xf32>
    %194 = math.rsqrt %193 : vector<8x1xf32>
    %195 = vector.broadcast %194 : vector<8x1xf32> to vector<8x128xf32>
    %196 = arith.mulf %191, %195 : vector<8x128xf32>
    %197 = vector.broadcast %177 : vector<8x1xf32> to vector<8x128xf32>
    %198 = arith.mulf %196, %197 : vector<8x128xf32>
    %199 = vector.broadcast %178 : vector<8x1xf32> to vector<8x128xf32>
    %200 = arith.addf %198, %199 : vector<8x128xf32>
    %201 = arith.addf %103, %200 : vector<8x128xf32>
    %cst_90 = arith.constant dense<0.000000e+00> : vector<8x256xf32>
    %202 = tpu.matmul %201, %99, %cst_90 {dimension_numbers = #tpu.dot_dimension_numbers<[1], [0], [0], [1], [0, 0, 1, 1], [], []>} : vector<8x128xf32>, vector<128x256xf32>, vector<8x256xf32> -> vector<8x256xf32>
    %c7 = arith.constant 7 : index
    %c0_91 = arith.constant 0 : index
    %c0_92 = arith.constant 0 : index
    %203 = vector.load %arg10[%c7, %c0_91, %c0_92] : memref<27x8x8xbf16, #tpu.memory_space<vmem>>, vector<1x8x8xbf16>
    %204 = vector.shape_cast %203 : vector<1x8x8xbf16> to vector<8x8xbf16>
    %205 = arith.truncf %201 : vector<8x128xf32> to vector<8x128xbf16>
    %cst_93 = arith.constant dense<0.000000e+00> : vector<8x128xf32>
    %206 = tpu.matmul %204, %205, %cst_93 {dimension_numbers = #tpu.dot_dimension_numbers<[1], [0], [0], [1], [0, 0, 1, 1], [], []>} : vector<8x8xbf16>, vector<8x128xbf16>, vector<8x128xf32> -> vector<8x128xf32>
    %c6 = arith.constant 6 : index
    %c0_94 = arith.constant 0 : index
    %c0_95 = arith.constant 0 : index
    %207 = vector.load %arg10[%c6, %c0_94, %c0_95] : memref<27x8x8xbf16, #tpu.memory_space<vmem>>, vector<1x8x8xbf16>
    %208 = vector.shape_cast %207 : vector<1x8x8xbf16> to vector<8x8xbf16>
    %209 = vector.extract_strided_slice %202 {offsets = [0, 0], sizes = [8, 128], strides = [1, 1]} : vector<8x256xf32> to vector<8x128xf32>
    %210 = arith.truncf %209 : vector<8x128xf32> to vector<8x128xbf16>
    %cst_96 = arith.constant dense<0.000000e+00> : vector<8x128xf32>
    %211 = tpu.matmul %208, %210, %cst_96 {dimension_numbers = #tpu.dot_dimension_numbers<[1], [0], [0], [1], [0, 0, 1, 1], [], []>} : vector<8x8xbf16>, vector<8x128xbf16>, vector<8x128xf32> -> vector<8x128xf32>
    %212 = arith.addf %206, %211 : vector<8x128xf32>
    %c8 = arith.constant 8 : index
    %c0_97 = arith.constant 0 : index
    %c0_98 = arith.constant 0 : index
    %213 = vector.load %arg10[%c8, %c0_97, %c0_98] : memref<27x8x8xbf16, #tpu.memory_space<vmem>>, vector<1x8x8xbf16>
    %214 = vector.shape_cast %213 : vector<1x8x8xbf16> to vector<8x8xbf16>
    %215 = vector.extract_strided_slice %202 {offsets = [0, 128], sizes = [8, 128], strides = [1, 1]} : vector<8x256xf32> to vector<8x128xf32>
    %216 = arith.truncf %215 : vector<8x128xf32> to vector<8x128xbf16>
    %cst_99 = arith.constant dense<0.000000e+00> : vector<8x128xf32>
    %217 = tpu.matmul %214, %216, %cst_99 {dimension_numbers = #tpu.dot_dimension_numbers<[1], [0], [0], [1], [0, 0, 1, 1], [], []>} : vector<8x8xbf16>, vector<8x128xbf16>, vector<8x128xf32> -> vector<8x128xf32>
    %218 = arith.addf %212, %217 : vector<8x128xf32>
    %c2_100 = arith.constant 2 : index
    %c0_101 = arith.constant 0 : index
    %c0_102 = arith.constant 0 : index
    %219 = vector.load %arg11[%c2_100, %c0_101, %c0_102] : memref<9x8x3xf32, #tpu.memory_space<vmem>>, vector<1x8x3xf32>
    %220 = vector.shape_cast %219 : vector<1x8x3xf32> to vector<8x3xf32>
    %221 = vector.extract_strided_slice %220 {offsets = [0, 0], sizes = [8, 1], strides = [1, 1]} : vector<8x3xf32> to vector<8x1xf32>
    %222 = vector.broadcast %221 : vector<8x1xf32> to vector<8x128xf32>
    %223 = arith.addf %218, %222 : vector<8x128xf32>
    %cst_103 = arith.constant 0.000000e+00 : f32
    %224 = vector.broadcast %cst_103 : f32 to vector<8x128xf32>
    %225 = arith.maximumf %223, %224 : vector<8x128xf32>
    %226 = vector.extract_strided_slice %220 {offsets = [0, 1], sizes = [8, 1], strides = [1, 1]} : vector<8x3xf32> to vector<8x1xf32>
    %227 = vector.extract_strided_slice %220 {offsets = [0, 2], sizes = [8, 1], strides = [1, 1]} : vector<8x3xf32> to vector<8x1xf32>
    %cst_104 = arith.constant dense<0.000000e+00> : vector<8xf32>
    %228 = vector.multi_reduction <add>, %225, %cst_104 [1] : vector<8x128xf32> to vector<8xf32>
    %229 = vector.shape_cast %228 : vector<8xf32> to vector<8x1xf32>
    %cst_105 = arith.constant 1.280000e+02 : f32
    %230 = vector.broadcast %cst_105 : f32 to vector<8x1xf32>
    %231 = arith.divf %229, %230 : vector<8x1xf32>
    %232 = vector.broadcast %231 : vector<8x1xf32> to vector<8x128xf32>
    %233 = arith.subf %225, %232 : vector<8x128xf32>
    %234 = arith.mulf %233, %233 : vector<8x128xf32>
    %cst_106 = arith.constant dense<0.000000e+00> : vector<8xf32>
    %235 = vector.multi_reduction <add>, %234, %cst_106 [1] : vector<8x128xf32> to vector<8xf32>
    %236 = vector.shape_cast %235 : vector<8xf32> to vector<8x1xf32>
    %cst_107 = arith.constant 1.280000e+02 : f32
    %237 = vector.broadcast %cst_107 : f32 to vector<8x1xf32>
    %238 = arith.divf %236, %237 : vector<8x1xf32>
    %239 = vector.broadcast %231 : vector<8x1xf32> to vector<8x128xf32>
    %240 = arith.subf %225, %239 : vector<8x128xf32>
    %cst_108 = arith.constant 9.99999974E-6 : f32
    %241 = vector.broadcast %cst_108 : f32 to vector<8x1xf32>
    %242 = arith.addf %238, %241 : vector<8x1xf32>
    %243 = math.rsqrt %242 : vector<8x1xf32>
    %244 = vector.broadcast %243 : vector<8x1xf32> to vector<8x128xf32>
    %245 = arith.mulf %240, %244 : vector<8x128xf32>
    %246 = vector.broadcast %226 : vector<8x1xf32> to vector<8x128xf32>
    %247 = arith.mulf %245, %246 : vector<8x128xf32>
    %248 = vector.broadcast %227 : vector<8x1xf32> to vector<8x128xf32>
    %249 = arith.addf %247, %248 : vector<8x128xf32>
    %250 = tpu.concatenate %100, %151, %200, %249 in 0 : vector<8x128xf32>, vector<8x128xf32>, vector<8x128xf32>, vector<8x128xf32> -> vector<32x128xf32>
    %c1_109 = arith.constant 1 : index
    %c0_110 = arith.constant 0 : index
    %c0_111 = arith.constant 0 : index
    %251 = vector.load %arg8[%c1_109, %c0_110, %c0_111] : memref<6x32x32xbf16, #tpu.memory_space<vmem>>, vector<1x32x32xbf16>
    %252 = vector.shape_cast %251 : vector<1x32x32xbf16> to vector<32x32xbf16>
    %253 = arith.truncf %250 : vector<32x128xf32> to vector<32x128xbf16>
    %cst_112 = arith.constant dense<0.000000e+00> : vector<32x128xf32>
    %254 = tpu.matmul %252, %253, %cst_112 {dimension_numbers = #tpu.dot_dimension_numbers<[1], [0], [0], [1], [0, 0, 1, 1], [], []>} : vector<32x32xbf16>, vector<32x128xbf16>, vector<32x128xf32> -> vector<32x128xf32>
    %c1_113 = arith.constant 1 : index
    %c0_114 = arith.constant 0 : index
    %c0_115 = arith.constant 0 : index
    %255 = vector.load %arg9[%c1_113, %c0_114, %c0_115] : memref<6x32x3xf32, #tpu.memory_space<vmem>>, vector<1x32x3xf32>
    %256 = vector.shape_cast %255 : vector<1x32x3xf32> to vector<32x3xf32>
    %257 = vector.extract_strided_slice %256 {offsets = [0, 0], sizes = [32, 1], strides = [1, 1]} : vector<32x3xf32> to vector<32x1xf32>
    %258 = vector.broadcast %257 : vector<32x1xf32> to vector<32x128xf32>
    %259 = arith.addf %254, %258 : vector<32x128xf32>
    %cst_116 = arith.constant 0.000000e+00 : f32
    %260 = vector.broadcast %cst_116 : f32 to vector<32x128xf32>
    %261 = arith.maximumf %259, %260 : vector<32x128xf32>
    %262 = vector.extract_strided_slice %256 {offsets = [0, 1], sizes = [32, 1], strides = [1, 1]} : vector<32x3xf32> to vector<32x1xf32>
    %263 = vector.extract_strided_slice %256 {offsets = [0, 2], sizes = [32, 1], strides = [1, 1]} : vector<32x3xf32> to vector<32x1xf32>
    %cst_117 = arith.constant dense<0.000000e+00> : vector<32xf32>
    %264 = vector.multi_reduction <add>, %261, %cst_117 [1] : vector<32x128xf32> to vector<32xf32>
    %265 = vector.shape_cast %264 : vector<32xf32> to vector<32x1xf32>
    %cst_118 = arith.constant 1.280000e+02 : f32
    %266 = vector.broadcast %cst_118 : f32 to vector<32x1xf32>
    %267 = arith.divf %265, %266 : vector<32x1xf32>
    %268 = vector.broadcast %267 : vector<32x1xf32> to vector<32x128xf32>
    %269 = arith.subf %261, %268 : vector<32x128xf32>
    %270 = arith.mulf %269, %269 : vector<32x128xf32>
    %cst_119 = arith.constant dense<0.000000e+00> : vector<32xf32>
    %271 = vector.multi_reduction <add>, %270, %cst_119 [1] : vector<32x128xf32> to vector<32xf32>
    %272 = vector.shape_cast %271 : vector<32xf32> to vector<32x1xf32>
    %cst_120 = arith.constant 1.280000e+02 : f32
    %273 = vector.broadcast %cst_120 : f32 to vector<32x1xf32>
    %274 = arith.divf %272, %273 : vector<32x1xf32>
    %275 = vector.broadcast %267 : vector<32x1xf32> to vector<32x128xf32>
    %276 = arith.subf %261, %275 : vector<32x128xf32>
    %cst_121 = arith.constant 9.99999974E-6 : f32
    %277 = vector.broadcast %cst_121 : f32 to vector<32x1xf32>
    %278 = arith.addf %274, %277 : vector<32x1xf32>
    %279 = math.rsqrt %278 : vector<32x1xf32>
    %280 = vector.broadcast %279 : vector<32x1xf32> to vector<32x128xf32>
    %281 = arith.mulf %276, %280 : vector<32x128xf32>
    %282 = vector.broadcast %262 : vector<32x1xf32> to vector<32x128xf32>
    %283 = arith.mulf %281, %282 : vector<32x128xf32>
    %284 = vector.broadcast %263 : vector<32x1xf32> to vector<32x128xf32>
    %285 = arith.addf %283, %284 : vector<32x128xf32>
    %cst_122 = arith.constant dense<0.000000e+00> : vector<32x2xf32>
    %286 = tpu.matmul %285, %0, %cst_122 {dimension_numbers = #tpu.dot_dimension_numbers<[1], [0], [0], [1], [0, 0, 1, 1], [], []>} : vector<32x128xf32>, vector<128x2xf32>, vector<32x2xf32> -> vector<32x2xf32>
    %cst_123 = arith.constant 1.562500e-02 : f32
    %287 = vector.broadcast %cst_123 : f32 to vector<32x2xf32>
    %288 = arith.mulf %286, %287 : vector<32x2xf32>
    %c0_124 = arith.constant 0 : index
    %c0_125 = arith.constant 0 : index
    %c0_126 = arith.constant 0 : index
    %289 = vector.load %arg12[%c0_124, %c0_125, %c0_126] : memref<3x16x32xbf16, #tpu.memory_space<vmem>>, vector<1x16x32xbf16>
    %290 = vector.shape_cast %289 : vector<1x16x32xbf16> to vector<16x32xbf16>
    %291 = arith.truncf %288 : vector<32x2xf32> to vector<32x2xbf16>
    %cst_127 = arith.constant dense<0.000000e+00> : vector<16x2xf32>
    %292 = tpu.matmul %290, %291, %cst_127 {dimension_numbers = #tpu.dot_dimension_numbers<[1], [0], [0], [1], [0, 0, 1, 1], [], []>} : vector<16x32xbf16>, vector<32x2xbf16>, vector<16x2xf32> -> vector<16x2xf32>
    %c0_128 = arith.constant 0 : index
    %c0_129 = arith.constant 0 : index
    %c0_130 = arith.constant 0 : index
    %293 = vector.load %arg13[%c0_128, %c0_129, %c0_130] : memref<3x16x1xf32, #tpu.memory_space<vmem>>, vector<1x16x1xf32>
    %294 = vector.shape_cast %293 : vector<1x16x1xf32> to vector<16x1xf32>
    %295 = vector.broadcast %294 : vector<16x1xf32> to vector<16x2xf32>
    %296 = arith.addf %292, %295 : vector<16x2xf32>
    %cst_131 = arith.constant 0.000000e+00 : f32
    %297 = vector.broadcast %cst_131 : f32 to vector<16x2xf32>
    %298 = arith.maximumf %296, %297 : vector<16x2xf32>
    %c0_132 = arith.constant 0 : index
    %c0_133 = arith.constant 0 : index
    %c0_134 = arith.constant 0 : index
    %299 = vector.load %arg14[%c0_132, %c0_133, %c0_134] : memref<3x32x16xbf16, #tpu.memory_space<vmem>>, vector<1x32x16xbf16>
    %300 = vector.shape_cast %299 : vector<1x32x16xbf16> to vector<32x16xbf16>
    %301 = arith.truncf %298 : vector<16x2xf32> to vector<16x2xbf16>
    %cst_135 = arith.constant dense<0.000000e+00> : vector<32x2xf32>
    %302 = tpu.matmul %300, %301, %cst_135 {dimension_numbers = #tpu.dot_dimension_numbers<[1], [0], [0], [1], [0, 0, 1, 1], [], []>} : vector<32x16xbf16>, vector<16x2xbf16>, vector<32x2xf32> -> vector<32x2xf32>
    %c0_136 = arith.constant 0 : index
    %c0_137 = arith.constant 0 : index
    %c0_138 = arith.constant 0 : index
    %303 = vector.load %arg15[%c0_136, %c0_137, %c0_138] : memref<3x32x1xf32, #tpu.memory_space<vmem>>, vector<1x32x1xf32>
    %304 = vector.shape_cast %303 : vector<1x32x1xf32> to vector<32x1xf32>
    %305 = vector.broadcast %304 : vector<32x1xf32> to vector<32x2xf32>
    %306 = arith.addf %302, %305 : vector<32x2xf32>
    %307 = arith.negf %306 : vector<32x2xf32>
    %308 = math.exp %307 : vector<32x2xf32>
    %cst_139 = arith.constant 1.000000e+00 : f32
    %309 = vector.broadcast %cst_139 : f32 to vector<32x2xf32>
    %310 = arith.addf %309, %308 : vector<32x2xf32>
    %311 = arith.divf %309, %310 : vector<32x2xf32>
    %cst_140 = arith.constant dense<0.000000e+00> : vector<32x128xf32>
    %312 = tpu.matmul %311, %1, %cst_140 {dimension_numbers = #tpu.dot_dimension_numbers<[1], [0], [0], [1], [0, 0, 1, 1], [], []>} : vector<32x2xf32>, vector<2x128xf32>, vector<32x128xf32> -> vector<32x128xf32>
    %313 = arith.mulf %285, %312 : vector<32x128xf32>
    %314 = arith.addf %313, %62 : vector<32x128xf32>
    %c2_141 = arith.constant 2 : index
    %c0_142 = arith.constant 0 : index
    %c0_143 = arith.constant 0 : index
    %315 = vector.load %arg8[%c2_141, %c0_142, %c0_143] : memref<6x32x32xbf16, #tpu.memory_space<vmem>>, vector<1x32x32xbf16>
    %316 = vector.shape_cast %315 : vector<1x32x32xbf16> to vector<32x32xbf16>
    %317 = arith.truncf %314 : vector<32x128xf32> to vector<32x128xbf16>
    %cst_144 = arith.constant dense<0.000000e+00> : vector<32x128xf32>
    %318 = tpu.matmul %316, %317, %cst_144 {dimension_numbers = #tpu.dot_dimension_numbers<[1], [0], [0], [1], [0, 0, 1, 1], [], []>} : vector<32x32xbf16>, vector<32x128xbf16>, vector<32x128xf32> -> vector<32x128xf32>
    %c2_145 = arith.constant 2 : index
    %c0_146 = arith.constant 0 : index
    %c0_147 = arith.constant 0 : index
    %319 = vector.load %arg9[%c2_145, %c0_146, %c0_147] : memref<6x32x3xf32, #tpu.memory_space<vmem>>, vector<1x32x3xf32>
    %320 = vector.shape_cast %319 : vector<1x32x3xf32> to vector<32x3xf32>
    %321 = vector.extract_strided_slice %320 {offsets = [0, 0], sizes = [32, 1], strides = [1, 1]} : vector<32x3xf32> to vector<32x1xf32>
    %322 = vector.broadcast %321 : vector<32x1xf32> to vector<32x128xf32>
    %323 = arith.addf %318, %322 : vector<32x128xf32>
    %cst_148 = arith.constant 0.000000e+00 : f32
    %324 = vector.broadcast %cst_148 : f32 to vector<32x128xf32>
    %325 = arith.maximumf %323, %324 : vector<32x128xf32>
    %326 = vector.extract_strided_slice %320 {offsets = [0, 1], sizes = [32, 1], strides = [1, 1]} : vector<32x3xf32> to vector<32x1xf32>
    %327 = vector.extract_strided_slice %320 {offsets = [0, 2], sizes = [32, 1], strides = [1, 1]} : vector<32x3xf32> to vector<32x1xf32>
    %cst_149 = arith.constant dense<0.000000e+00> : vector<32xf32>
    %328 = vector.multi_reduction <add>, %325, %cst_149 [1] : vector<32x128xf32> to vector<32xf32>
    %329 = vector.shape_cast %328 : vector<32xf32> to vector<32x1xf32>
    %cst_150 = arith.constant 1.280000e+02 : f32
    %330 = vector.broadcast %cst_150 : f32 to vector<32x1xf32>
    %331 = arith.divf %329, %330 : vector<32x1xf32>
    %332 = vector.broadcast %331 : vector<32x1xf32> to vector<32x128xf32>
    %333 = arith.subf %325, %332 : vector<32x128xf32>
    %334 = arith.mulf %333, %333 : vector<32x128xf32>
    %cst_151 = arith.constant dense<0.000000e+00> : vector<32xf32>
    %335 = vector.multi_reduction <add>, %334, %cst_151 [1] : vector<32x128xf32> to vector<32xf32>
    %336 = vector.shape_cast %335 : vector<32xf32> to vector<32x1xf32>
    %cst_152 = arith.constant 1.280000e+02 : f32
    %337 = vector.broadcast %cst_152 : f32 to vector<32x1xf32>
    %338 = arith.divf %336, %337 : vector<32x1xf32>
    %339 = vector.broadcast %331 : vector<32x1xf32> to vector<32x128xf32>
    %340 = arith.subf %325, %339 : vector<32x128xf32>
    %cst_153 = arith.constant 9.99999974E-6 : f32
    %341 = vector.broadcast %cst_153 : f32 to vector<32x1xf32>
    %342 = arith.addf %338, %341 : vector<32x1xf32>
    %343 = math.rsqrt %342 : vector<32x1xf32>
    %344 = vector.broadcast %343 : vector<32x1xf32> to vector<32x128xf32>
    %345 = arith.mulf %340, %344 : vector<32x128xf32>
    %346 = vector.broadcast %326 : vector<32x1xf32> to vector<32x128xf32>
    %347 = arith.mulf %345, %346 : vector<32x128xf32>
    %348 = vector.broadcast %327 : vector<32x1xf32> to vector<32x128xf32>
    %349 = arith.addf %347, %348 : vector<32x128xf32>
    %c1_154 = arith.constant 1 : index
    %c0_155 = arith.constant 0 : index
    %c0_156 = arith.constant 0 : index
    %350 = vector.load %arg3[%c1_154, %c0_155, %c0_156] : memref<3x128x256xf32, #tpu.memory_space<vmem>>, vector<1x128x256xf32>
    %351 = vector.shape_cast %350 : vector<1x128x256xf32> to vector<128x256xf32>
    %352 = vector.extract_strided_slice %349 {offsets = [0, 0], sizes = [8, 128], strides = [1, 1]} : vector<32x128xf32> to vector<8x128xf32>
    %353 = vector.extract_strided_slice %349 {offsets = [8, 0], sizes = [8, 128], strides = [1, 1]} : vector<32x128xf32> to vector<8x128xf32>
    %354 = vector.extract_strided_slice %349 {offsets = [16, 0], sizes = [8, 128], strides = [1, 1]} : vector<32x128xf32> to vector<8x128xf32>
    %355 = vector.extract_strided_slice %349 {offsets = [24, 0], sizes = [8, 128], strides = [1, 1]} : vector<32x128xf32> to vector<8x128xf32>
    %cst_157 = arith.constant dense<0.000000e+00> : vector<8x256xf32>
    %356 = tpu.matmul %353, %351, %cst_157 {dimension_numbers = #tpu.dot_dimension_numbers<[1], [0], [0], [1], [0, 0, 1, 1], [], []>} : vector<8x128xf32>, vector<128x256xf32>, vector<8x256xf32> -> vector<8x256xf32>
    %c10 = arith.constant 10 : index
    %c0_158 = arith.constant 0 : index
    %c0_159 = arith.constant 0 : index
    %357 = vector.load %arg10[%c10, %c0_158, %c0_159] : memref<27x8x8xbf16, #tpu.memory_space<vmem>>, vector<1x8x8xbf16>
    %358 = vector.shape_cast %357 : vector<1x8x8xbf16> to vector<8x8xbf16>
    %359 = arith.truncf %353 : vector<8x128xf32> to vector<8x128xbf16>
    %cst_160 = arith.constant dense<0.000000e+00> : vector<8x128xf32>
    %360 = tpu.matmul %358, %359, %cst_160 {dimension_numbers = #tpu.dot_dimension_numbers<[1], [0], [0], [1], [0, 0, 1, 1], [], []>} : vector<8x8xbf16>, vector<8x128xbf16>, vector<8x128xf32> -> vector<8x128xf32>
    %c9 = arith.constant 9 : index
    %c0_161 = arith.constant 0 : index
    %c0_162 = arith.constant 0 : index
    %361 = vector.load %arg10[%c9, %c0_161, %c0_162] : memref<27x8x8xbf16, #tpu.memory_space<vmem>>, vector<1x8x8xbf16>
    %362 = vector.shape_cast %361 : vector<1x8x8xbf16> to vector<8x8xbf16>
    %363 = vector.extract_strided_slice %356 {offsets = [0, 0], sizes = [8, 128], strides = [1, 1]} : vector<8x256xf32> to vector<8x128xf32>
    %364 = arith.truncf %363 : vector<8x128xf32> to vector<8x128xbf16>
    %cst_163 = arith.constant dense<0.000000e+00> : vector<8x128xf32>
    %365 = tpu.matmul %362, %364, %cst_163 {dimension_numbers = #tpu.dot_dimension_numbers<[1], [0], [0], [1], [0, 0, 1, 1], [], []>} : vector<8x8xbf16>, vector<8x128xbf16>, vector<8x128xf32> -> vector<8x128xf32>
    %366 = arith.addf %360, %365 : vector<8x128xf32>
    %c11 = arith.constant 11 : index
    %c0_164 = arith.constant 0 : index
    %c0_165 = arith.constant 0 : index
    %367 = vector.load %arg10[%c11, %c0_164, %c0_165] : memref<27x8x8xbf16, #tpu.memory_space<vmem>>, vector<1x8x8xbf16>
    %368 = vector.shape_cast %367 : vector<1x8x8xbf16> to vector<8x8xbf16>
    %369 = vector.extract_strided_slice %356 {offsets = [0, 128], sizes = [8, 128], strides = [1, 1]} : vector<8x256xf32> to vector<8x128xf32>
    %370 = arith.truncf %369 : vector<8x128xf32> to vector<8x128xbf16>
    %cst_166 = arith.constant dense<0.000000e+00> : vector<8x128xf32>
    %371 = tpu.matmul %368, %370, %cst_166 {dimension_numbers = #tpu.dot_dimension_numbers<[1], [0], [0], [1], [0, 0, 1, 1], [], []>} : vector<8x8xbf16>, vector<8x128xbf16>, vector<8x128xf32> -> vector<8x128xf32>
    %372 = arith.addf %366, %371 : vector<8x128xf32>
    %c3_167 = arith.constant 3 : index
    %c0_168 = arith.constant 0 : index
    %c0_169 = arith.constant 0 : index
    %373 = vector.load %arg11[%c3_167, %c0_168, %c0_169] : memref<9x8x3xf32, #tpu.memory_space<vmem>>, vector<1x8x3xf32>
    %374 = vector.shape_cast %373 : vector<1x8x3xf32> to vector<8x3xf32>
    %375 = vector.extract_strided_slice %374 {offsets = [0, 0], sizes = [8, 1], strides = [1, 1]} : vector<8x3xf32> to vector<8x1xf32>
    %376 = vector.broadcast %375 : vector<8x1xf32> to vector<8x128xf32>
    %377 = arith.addf %372, %376 : vector<8x128xf32>
    %cst_170 = arith.constant 0.000000e+00 : f32
    %378 = vector.broadcast %cst_170 : f32 to vector<8x128xf32>
    %379 = arith.maximumf %377, %378 : vector<8x128xf32>
    %380 = vector.extract_strided_slice %374 {offsets = [0, 1], sizes = [8, 1], strides = [1, 1]} : vector<8x3xf32> to vector<8x1xf32>
    %381 = vector.extract_strided_slice %374 {offsets = [0, 2], sizes = [8, 1], strides = [1, 1]} : vector<8x3xf32> to vector<8x1xf32>
    %cst_171 = arith.constant dense<0.000000e+00> : vector<8xf32>
    %382 = vector.multi_reduction <add>, %379, %cst_171 [1] : vector<8x128xf32> to vector<8xf32>
    %383 = vector.shape_cast %382 : vector<8xf32> to vector<8x1xf32>
    %cst_172 = arith.constant 1.280000e+02 : f32
    %384 = vector.broadcast %cst_172 : f32 to vector<8x1xf32>
    %385 = arith.divf %383, %384 : vector<8x1xf32>
    %386 = vector.broadcast %385 : vector<8x1xf32> to vector<8x128xf32>
    %387 = arith.subf %379, %386 : vector<8x128xf32>
    %388 = arith.mulf %387, %387 : vector<8x128xf32>
    %cst_173 = arith.constant dense<0.000000e+00> : vector<8xf32>
    %389 = vector.multi_reduction <add>, %388, %cst_173 [1] : vector<8x128xf32> to vector<8xf32>
    %390 = vector.shape_cast %389 : vector<8xf32> to vector<8x1xf32>
    %cst_174 = arith.constant 1.280000e+02 : f32
    %391 = vector.broadcast %cst_174 : f32 to vector<8x1xf32>
    %392 = arith.divf %390, %391 : vector<8x1xf32>
    %393 = vector.broadcast %385 : vector<8x1xf32> to vector<8x128xf32>
    %394 = arith.subf %379, %393 : vector<8x128xf32>
    %cst_175 = arith.constant 9.99999974E-6 : f32
    %395 = vector.broadcast %cst_175 : f32 to vector<8x1xf32>
    %396 = arith.addf %392, %395 : vector<8x1xf32>
    %397 = math.rsqrt %396 : vector<8x1xf32>
    %398 = vector.broadcast %397 : vector<8x1xf32> to vector<8x128xf32>
    %399 = arith.mulf %394, %398 : vector<8x128xf32>
    %400 = vector.broadcast %380 : vector<8x1xf32> to vector<8x128xf32>
    %401 = arith.mulf %399, %400 : vector<8x128xf32>
    %402 = vector.broadcast %381 : vector<8x1xf32> to vector<8x128xf32>
    %403 = arith.addf %401, %402 : vector<8x128xf32>
    %404 = arith.addf %354, %403 : vector<8x128xf32>
    %cst_176 = arith.constant dense<0.000000e+00> : vector<8x256xf32>
    %405 = tpu.matmul %404, %351, %cst_176 {dimension_numbers = #tpu.dot_dimension_numbers<[1], [0], [0], [1], [0, 0, 1, 1], [], []>} : vector<8x128xf32>, vector<128x256xf32>, vector<8x256xf32> -> vector<8x256xf32>
    %c13 = arith.constant 13 : index
    %c0_177 = arith.constant 0 : index
    %c0_178 = arith.constant 0 : index
    %406 = vector.load %arg10[%c13, %c0_177, %c0_178] : memref<27x8x8xbf16, #tpu.memory_space<vmem>>, vector<1x8x8xbf16>
    %407 = vector.shape_cast %406 : vector<1x8x8xbf16> to vector<8x8xbf16>
    %408 = arith.truncf %404 : vector<8x128xf32> to vector<8x128xbf16>
    %cst_179 = arith.constant dense<0.000000e+00> : vector<8x128xf32>
    %409 = tpu.matmul %407, %408, %cst_179 {dimension_numbers = #tpu.dot_dimension_numbers<[1], [0], [0], [1], [0, 0, 1, 1], [], []>} : vector<8x8xbf16>, vector<8x128xbf16>, vector<8x128xf32> -> vector<8x128xf32>
    %c12 = arith.constant 12 : index
    %c0_180 = arith.constant 0 : index
    %c0_181 = arith.constant 0 : index
    %410 = vector.load %arg10[%c12, %c0_180, %c0_181] : memref<27x8x8xbf16, #tpu.memory_space<vmem>>, vector<1x8x8xbf16>
    %411 = vector.shape_cast %410 : vector<1x8x8xbf16> to vector<8x8xbf16>
    %412 = vector.extract_strided_slice %405 {offsets = [0, 0], sizes = [8, 128], strides = [1, 1]} : vector<8x256xf32> to vector<8x128xf32>
    %413 = arith.truncf %412 : vector<8x128xf32> to vector<8x128xbf16>
    %cst_182 = arith.constant dense<0.000000e+00> : vector<8x128xf32>
    %414 = tpu.matmul %411, %413, %cst_182 {dimension_numbers = #tpu.dot_dimension_numbers<[1], [0], [0], [1], [0, 0, 1, 1], [], []>} : vector<8x8xbf16>, vector<8x128xbf16>, vector<8x128xf32> -> vector<8x128xf32>
    %415 = arith.addf %409, %414 : vector<8x128xf32>
    %c14 = arith.constant 14 : index
    %c0_183 = arith.constant 0 : index
    %c0_184 = arith.constant 0 : index
    %416 = vector.load %arg10[%c14, %c0_183, %c0_184] : memref<27x8x8xbf16, #tpu.memory_space<vmem>>, vector<1x8x8xbf16>
    %417 = vector.shape_cast %416 : vector<1x8x8xbf16> to vector<8x8xbf16>
    %418 = vector.extract_strided_slice %405 {offsets = [0, 128], sizes = [8, 128], strides = [1, 1]} : vector<8x256xf32> to vector<8x128xf32>
    %419 = arith.truncf %418 : vector<8x128xf32> to vector<8x128xbf16>
    %cst_185 = arith.constant dense<0.000000e+00> : vector<8x128xf32>
    %420 = tpu.matmul %417, %419, %cst_185 {dimension_numbers = #tpu.dot_dimension_numbers<[1], [0], [0], [1], [0, 0, 1, 1], [], []>} : vector<8x8xbf16>, vector<8x128xbf16>, vector<8x128xf32> -> vector<8x128xf32>
    %421 = arith.addf %415, %420 : vector<8x128xf32>
    %c4_186 = arith.constant 4 : index
    %c0_187 = arith.constant 0 : index
    %c0_188 = arith.constant 0 : index
    %422 = vector.load %arg11[%c4_186, %c0_187, %c0_188] : memref<9x8x3xf32, #tpu.memory_space<vmem>>, vector<1x8x3xf32>
    %423 = vector.shape_cast %422 : vector<1x8x3xf32> to vector<8x3xf32>
    %424 = vector.extract_strided_slice %423 {offsets = [0, 0], sizes = [8, 1], strides = [1, 1]} : vector<8x3xf32> to vector<8x1xf32>
    %425 = vector.broadcast %424 : vector<8x1xf32> to vector<8x128xf32>
    %426 = arith.addf %421, %425 : vector<8x128xf32>
    %cst_189 = arith.constant 0.000000e+00 : f32
    %427 = vector.broadcast %cst_189 : f32 to vector<8x128xf32>
    %428 = arith.maximumf %426, %427 : vector<8x128xf32>
    %429 = vector.extract_strided_slice %423 {offsets = [0, 1], sizes = [8, 1], strides = [1, 1]} : vector<8x3xf32> to vector<8x1xf32>
    %430 = vector.extract_strided_slice %423 {offsets = [0, 2], sizes = [8, 1], strides = [1, 1]} : vector<8x3xf32> to vector<8x1xf32>
    %cst_190 = arith.constant dense<0.000000e+00> : vector<8xf32>
    %431 = vector.multi_reduction <add>, %428, %cst_190 [1] : vector<8x128xf32> to vector<8xf32>
    %432 = vector.shape_cast %431 : vector<8xf32> to vector<8x1xf32>
    %cst_191 = arith.constant 1.280000e+02 : f32
    %433 = vector.broadcast %cst_191 : f32 to vector<8x1xf32>
    %434 = arith.divf %432, %433 : vector<8x1xf32>
    %435 = vector.broadcast %434 : vector<8x1xf32> to vector<8x128xf32>
    %436 = arith.subf %428, %435 : vector<8x128xf32>
    %437 = arith.mulf %436, %436 : vector<8x128xf32>
    %cst_192 = arith.constant dense<0.000000e+00> : vector<8xf32>
    %438 = vector.multi_reduction <add>, %437, %cst_192 [1] : vector<8x128xf32> to vector<8xf32>
    %439 = vector.shape_cast %438 : vector<8xf32> to vector<8x1xf32>
    %cst_193 = arith.constant 1.280000e+02 : f32
    %440 = vector.broadcast %cst_193 : f32 to vector<8x1xf32>
    %441 = arith.divf %439, %440 : vector<8x1xf32>
    %442 = vector.broadcast %434 : vector<8x1xf32> to vector<8x128xf32>
    %443 = arith.subf %428, %442 : vector<8x128xf32>
    %cst_194 = arith.constant 9.99999974E-6 : f32
    %444 = vector.broadcast %cst_194 : f32 to vector<8x1xf32>
    %445 = arith.addf %441, %444 : vector<8x1xf32>
    %446 = math.rsqrt %445 : vector<8x1xf32>
    %447 = vector.broadcast %446 : vector<8x1xf32> to vector<8x128xf32>
    %448 = arith.mulf %443, %447 : vector<8x128xf32>
    %449 = vector.broadcast %429 : vector<8x1xf32> to vector<8x128xf32>
    %450 = arith.mulf %448, %449 : vector<8x128xf32>
    %451 = vector.broadcast %430 : vector<8x1xf32> to vector<8x128xf32>
    %452 = arith.addf %450, %451 : vector<8x128xf32>
    %453 = arith.addf %355, %452 : vector<8x128xf32>
    %cst_195 = arith.constant dense<0.000000e+00> : vector<8x256xf32>
    %454 = tpu.matmul %453, %351, %cst_195 {dimension_numbers = #tpu.dot_dimension_numbers<[1], [0], [0], [1], [0, 0, 1, 1], [], []>} : vector<8x128xf32>, vector<128x256xf32>, vector<8x256xf32> -> vector<8x256xf32>
    %c16 = arith.constant 16 : index
    %c0_196 = arith.constant 0 : index
    %c0_197 = arith.constant 0 : index
    %455 = vector.load %arg10[%c16, %c0_196, %c0_197] : memref<27x8x8xbf16, #tpu.memory_space<vmem>>, vector<1x8x8xbf16>
    %456 = vector.shape_cast %455 : vector<1x8x8xbf16> to vector<8x8xbf16>
    %457 = arith.truncf %453 : vector<8x128xf32> to vector<8x128xbf16>
    %cst_198 = arith.constant dense<0.000000e+00> : vector<8x128xf32>
    %458 = tpu.matmul %456, %457, %cst_198 {dimension_numbers = #tpu.dot_dimension_numbers<[1], [0], [0], [1], [0, 0, 1, 1], [], []>} : vector<8x8xbf16>, vector<8x128xbf16>, vector<8x128xf32> -> vector<8x128xf32>
    %c15 = arith.constant 15 : index
    %c0_199 = arith.constant 0 : index
    %c0_200 = arith.constant 0 : index
    %459 = vector.load %arg10[%c15, %c0_199, %c0_200] : memref<27x8x8xbf16, #tpu.memory_space<vmem>>, vector<1x8x8xbf16>
    %460 = vector.shape_cast %459 : vector<1x8x8xbf16> to vector<8x8xbf16>
    %461 = vector.extract_strided_slice %454 {offsets = [0, 0], sizes = [8, 128], strides = [1, 1]} : vector<8x256xf32> to vector<8x128xf32>
    %462 = arith.truncf %461 : vector<8x128xf32> to vector<8x128xbf16>
    %cst_201 = arith.constant dense<0.000000e+00> : vector<8x128xf32>
    %463 = tpu.matmul %460, %462, %cst_201 {dimension_numbers = #tpu.dot_dimension_numbers<[1], [0], [0], [1], [0, 0, 1, 1], [], []>} : vector<8x8xbf16>, vector<8x128xbf16>, vector<8x128xf32> -> vector<8x128xf32>
    %464 = arith.addf %458, %463 : vector<8x128xf32>
    %c17 = arith.constant 17 : index
    %c0_202 = arith.constant 0 : index
    %c0_203 = arith.constant 0 : index
    %465 = vector.load %arg10[%c17, %c0_202, %c0_203] : memref<27x8x8xbf16, #tpu.memory_space<vmem>>, vector<1x8x8xbf16>
    %466 = vector.shape_cast %465 : vector<1x8x8xbf16> to vector<8x8xbf16>
    %467 = vector.extract_strided_slice %454 {offsets = [0, 128], sizes = [8, 128], strides = [1, 1]} : vector<8x256xf32> to vector<8x128xf32>
    %468 = arith.truncf %467 : vector<8x128xf32> to vector<8x128xbf16>
    %cst_204 = arith.constant dense<0.000000e+00> : vector<8x128xf32>
    %469 = tpu.matmul %466, %468, %cst_204 {dimension_numbers = #tpu.dot_dimension_numbers<[1], [0], [0], [1], [0, 0, 1, 1], [], []>} : vector<8x8xbf16>, vector<8x128xbf16>, vector<8x128xf32> -> vector<8x128xf32>
    %470 = arith.addf %464, %469 : vector<8x128xf32>
    %c5_205 = arith.constant 5 : index
    %c0_206 = arith.constant 0 : index
    %c0_207 = arith.constant 0 : index
    %471 = vector.load %arg11[%c5_205, %c0_206, %c0_207] : memref<9x8x3xf32, #tpu.memory_space<vmem>>, vector<1x8x3xf32>
    %472 = vector.shape_cast %471 : vector<1x8x3xf32> to vector<8x3xf32>
    %473 = vector.extract_strided_slice %472 {offsets = [0, 0], sizes = [8, 1], strides = [1, 1]} : vector<8x3xf32> to vector<8x1xf32>
    %474 = vector.broadcast %473 : vector<8x1xf32> to vector<8x128xf32>
    %475 = arith.addf %470, %474 : vector<8x128xf32>
    %cst_208 = arith.constant 0.000000e+00 : f32
    %476 = vector.broadcast %cst_208 : f32 to vector<8x128xf32>
    %477 = arith.maximumf %475, %476 : vector<8x128xf32>
    %478 = vector.extract_strided_slice %472 {offsets = [0, 1], sizes = [8, 1], strides = [1, 1]} : vector<8x3xf32> to vector<8x1xf32>
    %479 = vector.extract_strided_slice %472 {offsets = [0, 2], sizes = [8, 1], strides = [1, 1]} : vector<8x3xf32> to vector<8x1xf32>
    %cst_209 = arith.constant dense<0.000000e+00> : vector<8xf32>
    %480 = vector.multi_reduction <add>, %477, %cst_209 [1] : vector<8x128xf32> to vector<8xf32>
    %481 = vector.shape_cast %480 : vector<8xf32> to vector<8x1xf32>
    %cst_210 = arith.constant 1.280000e+02 : f32
    %482 = vector.broadcast %cst_210 : f32 to vector<8x1xf32>
    %483 = arith.divf %481, %482 : vector<8x1xf32>
    %484 = vector.broadcast %483 : vector<8x1xf32> to vector<8x128xf32>
    %485 = arith.subf %477, %484 : vector<8x128xf32>
    %486 = arith.mulf %485, %485 : vector<8x128xf32>
    %cst_211 = arith.constant dense<0.000000e+00> : vector<8xf32>
    %487 = vector.multi_reduction <add>, %486, %cst_211 [1] : vector<8x128xf32> to vector<8xf32>
    %488 = vector.shape_cast %487 : vector<8xf32> to vector<8x1xf32>
    %cst_212 = arith.constant 1.280000e+02 : f32
    %489 = vector.broadcast %cst_212 : f32 to vector<8x1xf32>
    %490 = arith.divf %488, %489 : vector<8x1xf32>
    %491 = vector.broadcast %483 : vector<8x1xf32> to vector<8x128xf32>
    %492 = arith.subf %477, %491 : vector<8x128xf32>
    %cst_213 = arith.constant 9.99999974E-6 : f32
    %493 = vector.broadcast %cst_213 : f32 to vector<8x1xf32>
    %494 = arith.addf %490, %493 : vector<8x1xf32>
    %495 = math.rsqrt %494 : vector<8x1xf32>
    %496 = vector.broadcast %495 : vector<8x1xf32> to vector<8x128xf32>
    %497 = arith.mulf %492, %496 : vector<8x128xf32>
    %498 = vector.broadcast %478 : vector<8x1xf32> to vector<8x128xf32>
    %499 = arith.mulf %497, %498 : vector<8x128xf32>
    %500 = vector.broadcast %479 : vector<8x1xf32> to vector<8x128xf32>
    %501 = arith.addf %499, %500 : vector<8x128xf32>
    %502 = tpu.concatenate %352, %403, %452, %501 in 0 : vector<8x128xf32>, vector<8x128xf32>, vector<8x128xf32>, vector<8x128xf32> -> vector<32x128xf32>
    %c3_214 = arith.constant 3 : index
    %c0_215 = arith.constant 0 : index
    %c0_216 = arith.constant 0 : index
    %503 = vector.load %arg8[%c3_214, %c0_215, %c0_216] : memref<6x32x32xbf16, #tpu.memory_space<vmem>>, vector<1x32x32xbf16>
    %504 = vector.shape_cast %503 : vector<1x32x32xbf16> to vector<32x32xbf16>
    %505 = arith.truncf %502 : vector<32x128xf32> to vector<32x128xbf16>
    %cst_217 = arith.constant dense<0.000000e+00> : vector<32x128xf32>
    %506 = tpu.matmul %504, %505, %cst_217 {dimension_numbers = #tpu.dot_dimension_numbers<[1], [0], [0], [1], [0, 0, 1, 1], [], []>} : vector<32x32xbf16>, vector<32x128xbf16>, vector<32x128xf32> -> vector<32x128xf32>
    %c3_218 = arith.constant 3 : index
    %c0_219 = arith.constant 0 : index
    %c0_220 = arith.constant 0 : index
    %507 = vector.load %arg9[%c3_218, %c0_219, %c0_220] : memref<6x32x3xf32, #tpu.memory_space<vmem>>, vector<1x32x3xf32>
    %508 = vector.shape_cast %507 : vector<1x32x3xf32> to vector<32x3xf32>
    %509 = vector.extract_strided_slice %508 {offsets = [0, 0], sizes = [32, 1], strides = [1, 1]} : vector<32x3xf32> to vector<32x1xf32>
    %510 = vector.broadcast %509 : vector<32x1xf32> to vector<32x128xf32>
    %511 = arith.addf %506, %510 : vector<32x128xf32>
    %cst_221 = arith.constant 0.000000e+00 : f32
    %512 = vector.broadcast %cst_221 : f32 to vector<32x128xf32>
    %513 = arith.maximumf %511, %512 : vector<32x128xf32>
    %514 = vector.extract_strided_slice %508 {offsets = [0, 1], sizes = [32, 1], strides = [1, 1]} : vector<32x3xf32> to vector<32x1xf32>
    %515 = vector.extract_strided_slice %508 {offsets = [0, 2], sizes = [32, 1], strides = [1, 1]} : vector<32x3xf32> to vector<32x1xf32>
    %cst_222 = arith.constant dense<0.000000e+00> : vector<32xf32>
    %516 = vector.multi_reduction <add>, %513, %cst_222 [1] : vector<32x128xf32> to vector<32xf32>
    %517 = vector.shape_cast %516 : vector<32xf32> to vector<32x1xf32>
    %cst_223 = arith.constant 1.280000e+02 : f32
    %518 = vector.broadcast %cst_223 : f32 to vector<32x1xf32>
    %519 = arith.divf %517, %518 : vector<32x1xf32>
    %520 = vector.broadcast %519 : vector<32x1xf32> to vector<32x128xf32>
    %521 = arith.subf %513, %520 : vector<32x128xf32>
    %522 = arith.mulf %521, %521 : vector<32x128xf32>
    %cst_224 = arith.constant dense<0.000000e+00> : vector<32xf32>
    %523 = vector.multi_reduction <add>, %522, %cst_224 [1] : vector<32x128xf32> to vector<32xf32>
    %524 = vector.shape_cast %523 : vector<32xf32> to vector<32x1xf32>
    %cst_225 = arith.constant 1.280000e+02 : f32
    %525 = vector.broadcast %cst_225 : f32 to vector<32x1xf32>
    %526 = arith.divf %524, %525 : vector<32x1xf32>
    %527 = vector.broadcast %519 : vector<32x1xf32> to vector<32x128xf32>
    %528 = arith.subf %513, %527 : vector<32x128xf32>
    %cst_226 = arith.constant 9.99999974E-6 : f32
    %529 = vector.broadcast %cst_226 : f32 to vector<32x1xf32>
    %530 = arith.addf %526, %529 : vector<32x1xf32>
    %531 = math.rsqrt %530 : vector<32x1xf32>
    %532 = vector.broadcast %531 : vector<32x1xf32> to vector<32x128xf32>
    %533 = arith.mulf %528, %532 : vector<32x128xf32>
    %534 = vector.broadcast %514 : vector<32x1xf32> to vector<32x128xf32>
    %535 = arith.mulf %533, %534 : vector<32x128xf32>
    %536 = vector.broadcast %515 : vector<32x1xf32> to vector<32x128xf32>
    %537 = arith.addf %535, %536 : vector<32x128xf32>
    %cst_227 = arith.constant dense<0.000000e+00> : vector<32x2xf32>
    %538 = tpu.matmul %537, %0, %cst_227 {dimension_numbers = #tpu.dot_dimension_numbers<[1], [0], [0], [1], [0, 0, 1, 1], [], []>} : vector<32x128xf32>, vector<128x2xf32>, vector<32x2xf32> -> vector<32x2xf32>
    %cst_228 = arith.constant 1.562500e-02 : f32
    %539 = vector.broadcast %cst_228 : f32 to vector<32x2xf32>
    %540 = arith.mulf %538, %539 : vector<32x2xf32>
    %c1_229 = arith.constant 1 : index
    %c0_230 = arith.constant 0 : index
    %c0_231 = arith.constant 0 : index
    %541 = vector.load %arg12[%c1_229, %c0_230, %c0_231] : memref<3x16x32xbf16, #tpu.memory_space<vmem>>, vector<1x16x32xbf16>
    %542 = vector.shape_cast %541 : vector<1x16x32xbf16> to vector<16x32xbf16>
    %543 = arith.truncf %540 : vector<32x2xf32> to vector<32x2xbf16>
    %cst_232 = arith.constant dense<0.000000e+00> : vector<16x2xf32>
    %544 = tpu.matmul %542, %543, %cst_232 {dimension_numbers = #tpu.dot_dimension_numbers<[1], [0], [0], [1], [0, 0, 1, 1], [], []>} : vector<16x32xbf16>, vector<32x2xbf16>, vector<16x2xf32> -> vector<16x2xf32>
    %c1_233 = arith.constant 1 : index
    %c0_234 = arith.constant 0 : index
    %c0_235 = arith.constant 0 : index
    %545 = vector.load %arg13[%c1_233, %c0_234, %c0_235] : memref<3x16x1xf32, #tpu.memory_space<vmem>>, vector<1x16x1xf32>
    %546 = vector.shape_cast %545 : vector<1x16x1xf32> to vector<16x1xf32>
    %547 = vector.broadcast %546 : vector<16x1xf32> to vector<16x2xf32>
    %548 = arith.addf %544, %547 : vector<16x2xf32>
    %cst_236 = arith.constant 0.000000e+00 : f32
    %549 = vector.broadcast %cst_236 : f32 to vector<16x2xf32>
    %550 = arith.maximumf %548, %549 : vector<16x2xf32>
    %c1_237 = arith.constant 1 : index
    %c0_238 = arith.constant 0 : index
    %c0_239 = arith.constant 0 : index
    %551 = vector.load %arg14[%c1_237, %c0_238, %c0_239] : memref<3x32x16xbf16, #tpu.memory_space<vmem>>, vector<1x32x16xbf16>
    %552 = vector.shape_cast %551 : vector<1x32x16xbf16> to vector<32x16xbf16>
    %553 = arith.truncf %550 : vector<16x2xf32> to vector<16x2xbf16>
    %cst_240 = arith.constant dense<0.000000e+00> : vector<32x2xf32>
    %554 = tpu.matmul %552, %553, %cst_240 {dimension_numbers = #tpu.dot_dimension_numbers<[1], [0], [0], [1], [0, 0, 1, 1], [], []>} : vector<32x16xbf16>, vector<16x2xbf16>, vector<32x2xf32> -> vector<32x2xf32>
    %c1_241 = arith.constant 1 : index
    %c0_242 = arith.constant 0 : index
    %c0_243 = arith.constant 0 : index
    %555 = vector.load %arg15[%c1_241, %c0_242, %c0_243] : memref<3x32x1xf32, #tpu.memory_space<vmem>>, vector<1x32x1xf32>
    %556 = vector.shape_cast %555 : vector<1x32x1xf32> to vector<32x1xf32>
    %557 = vector.broadcast %556 : vector<32x1xf32> to vector<32x2xf32>
    %558 = arith.addf %554, %557 : vector<32x2xf32>
    %559 = arith.negf %558 : vector<32x2xf32>
    %560 = math.exp %559 : vector<32x2xf32>
    %cst_244 = arith.constant 1.000000e+00 : f32
    %561 = vector.broadcast %cst_244 : f32 to vector<32x2xf32>
    %562 = arith.addf %561, %560 : vector<32x2xf32>
    %563 = arith.divf %561, %562 : vector<32x2xf32>
    %cst_245 = arith.constant dense<0.000000e+00> : vector<32x128xf32>
    %564 = tpu.matmul %563, %1, %cst_245 {dimension_numbers = #tpu.dot_dimension_numbers<[1], [0], [0], [1], [0, 0, 1, 1], [], []>} : vector<32x2xf32>, vector<2x128xf32>, vector<32x128xf32> -> vector<32x128xf32>
    %565 = arith.mulf %537, %564 : vector<32x128xf32>
    %566 = arith.addf %565, %314 : vector<32x128xf32>
    %c4_246 = arith.constant 4 : index
    %c0_247 = arith.constant 0 : index
    %c0_248 = arith.constant 0 : index
    %567 = vector.load %arg8[%c4_246, %c0_247, %c0_248] : memref<6x32x32xbf16, #tpu.memory_space<vmem>>, vector<1x32x32xbf16>
    %568 = vector.shape_cast %567 : vector<1x32x32xbf16> to vector<32x32xbf16>
    %569 = arith.truncf %566 : vector<32x128xf32> to vector<32x128xbf16>
    %cst_249 = arith.constant dense<0.000000e+00> : vector<32x128xf32>
    %570 = tpu.matmul %568, %569, %cst_249 {dimension_numbers = #tpu.dot_dimension_numbers<[1], [0], [0], [1], [0, 0, 1, 1], [], []>} : vector<32x32xbf16>, vector<32x128xbf16>, vector<32x128xf32> -> vector<32x128xf32>
    %c4_250 = arith.constant 4 : index
    %c0_251 = arith.constant 0 : index
    %c0_252 = arith.constant 0 : index
    %571 = vector.load %arg9[%c4_250, %c0_251, %c0_252] : memref<6x32x3xf32, #tpu.memory_space<vmem>>, vector<1x32x3xf32>
    %572 = vector.shape_cast %571 : vector<1x32x3xf32> to vector<32x3xf32>
    %573 = vector.extract_strided_slice %572 {offsets = [0, 0], sizes = [32, 1], strides = [1, 1]} : vector<32x3xf32> to vector<32x1xf32>
    %574 = vector.broadcast %573 : vector<32x1xf32> to vector<32x128xf32>
    %575 = arith.addf %570, %574 : vector<32x128xf32>
    %cst_253 = arith.constant 0.000000e+00 : f32
    %576 = vector.broadcast %cst_253 : f32 to vector<32x128xf32>
    %577 = arith.maximumf %575, %576 : vector<32x128xf32>
    %578 = vector.extract_strided_slice %572 {offsets = [0, 1], sizes = [32, 1], strides = [1, 1]} : vector<32x3xf32> to vector<32x1xf32>
    %579 = vector.extract_strided_slice %572 {offsets = [0, 2], sizes = [32, 1], strides = [1, 1]} : vector<32x3xf32> to vector<32x1xf32>
    %cst_254 = arith.constant dense<0.000000e+00> : vector<32xf32>
    %580 = vector.multi_reduction <add>, %577, %cst_254 [1] : vector<32x128xf32> to vector<32xf32>
    %581 = vector.shape_cast %580 : vector<32xf32> to vector<32x1xf32>
    %cst_255 = arith.constant 1.280000e+02 : f32
    %582 = vector.broadcast %cst_255 : f32 to vector<32x1xf32>
    %583 = arith.divf %581, %582 : vector<32x1xf32>
    %584 = vector.broadcast %583 : vector<32x1xf32> to vector<32x128xf32>
    %585 = arith.subf %577, %584 : vector<32x128xf32>
    %586 = arith.mulf %585, %585 : vector<32x128xf32>
    %cst_256 = arith.constant dense<0.000000e+00> : vector<32xf32>
    %587 = vector.multi_reduction <add>, %586, %cst_256 [1] : vector<32x128xf32> to vector<32xf32>
    %588 = vector.shape_cast %587 : vector<32xf32> to vector<32x1xf32>
    %cst_257 = arith.constant 1.280000e+02 : f32
    %589 = vector.broadcast %cst_257 : f32 to vector<32x1xf32>
    %590 = arith.divf %588, %589 : vector<32x1xf32>
    %591 = vector.broadcast %583 : vector<32x1xf32> to vector<32x128xf32>
    %592 = arith.subf %577, %591 : vector<32x128xf32>
    %cst_258 = arith.constant 9.99999974E-6 : f32
    %593 = vector.broadcast %cst_258 : f32 to vector<32x1xf32>
    %594 = arith.addf %590, %593 : vector<32x1xf32>
    %595 = math.rsqrt %594 : vector<32x1xf32>
    %596 = vector.broadcast %595 : vector<32x1xf32> to vector<32x128xf32>
    %597 = arith.mulf %592, %596 : vector<32x128xf32>
    %598 = vector.broadcast %578 : vector<32x1xf32> to vector<32x128xf32>
    %599 = arith.mulf %597, %598 : vector<32x128xf32>
    %600 = vector.broadcast %579 : vector<32x1xf32> to vector<32x128xf32>
    %601 = arith.addf %599, %600 : vector<32x128xf32>
    %c2_259 = arith.constant 2 : index
    %c0_260 = arith.constant 0 : index
    %c0_261 = arith.constant 0 : index
    %602 = vector.load %arg3[%c2_259, %c0_260, %c0_261] : memref<3x128x256xf32, #tpu.memory_space<vmem>>, vector<1x128x256xf32>
    %603 = vector.shape_cast %602 : vector<1x128x256xf32> to vector<128x256xf32>
    %604 = vector.extract_strided_slice %601 {offsets = [0, 0], sizes = [8, 128], strides = [1, 1]} : vector<32x128xf32> to vector<8x128xf32>
    %605 = vector.extract_strided_slice %601 {offsets = [8, 0], sizes = [8, 128], strides = [1, 1]} : vector<32x128xf32> to vector<8x128xf32>
    %606 = vector.extract_strided_slice %601 {offsets = [16, 0], sizes = [8, 128], strides = [1, 1]} : vector<32x128xf32> to vector<8x128xf32>
    %607 = vector.extract_strided_slice %601 {offsets = [24, 0], sizes = [8, 128], strides = [1, 1]} : vector<32x128xf32> to vector<8x128xf32>
    %cst_262 = arith.constant dense<0.000000e+00> : vector<8x256xf32>
    %608 = tpu.matmul %605, %603, %cst_262 {dimension_numbers = #tpu.dot_dimension_numbers<[1], [0], [0], [1], [0, 0, 1, 1], [], []>} : vector<8x128xf32>, vector<128x256xf32>, vector<8x256xf32> -> vector<8x256xf32>
    %c19 = arith.constant 19 : index
    %c0_263 = arith.constant 0 : index
    %c0_264 = arith.constant 0 : index
    %609 = vector.load %arg10[%c19, %c0_263, %c0_264] : memref<27x8x8xbf16, #tpu.memory_space<vmem>>, vector<1x8x8xbf16>
    %610 = vector.shape_cast %609 : vector<1x8x8xbf16> to vector<8x8xbf16>
    %611 = arith.truncf %605 : vector<8x128xf32> to vector<8x128xbf16>
    %cst_265 = arith.constant dense<0.000000e+00> : vector<8x128xf32>
    %612 = tpu.matmul %610, %611, %cst_265 {dimension_numbers = #tpu.dot_dimension_numbers<[1], [0], [0], [1], [0, 0, 1, 1], [], []>} : vector<8x8xbf16>, vector<8x128xbf16>, vector<8x128xf32> -> vector<8x128xf32>
    %c18 = arith.constant 18 : index
    %c0_266 = arith.constant 0 : index
    %c0_267 = arith.constant 0 : index
    %613 = vector.load %arg10[%c18, %c0_266, %c0_267] : memref<27x8x8xbf16, #tpu.memory_space<vmem>>, vector<1x8x8xbf16>
    %614 = vector.shape_cast %613 : vector<1x8x8xbf16> to vector<8x8xbf16>
    %615 = vector.extract_strided_slice %608 {offsets = [0, 0], sizes = [8, 128], strides = [1, 1]} : vector<8x256xf32> to vector<8x128xf32>
    %616 = arith.truncf %615 : vector<8x128xf32> to vector<8x128xbf16>
    %cst_268 = arith.constant dense<0.000000e+00> : vector<8x128xf32>
    %617 = tpu.matmul %614, %616, %cst_268 {dimension_numbers = #tpu.dot_dimension_numbers<[1], [0], [0], [1], [0, 0, 1, 1], [], []>} : vector<8x8xbf16>, vector<8x128xbf16>, vector<8x128xf32> -> vector<8x128xf32>
    %618 = arith.addf %612, %617 : vector<8x128xf32>
    %c20 = arith.constant 20 : index
    %c0_269 = arith.constant 0 : index
    %c0_270 = arith.constant 0 : index
    %619 = vector.load %arg10[%c20, %c0_269, %c0_270] : memref<27x8x8xbf16, #tpu.memory_space<vmem>>, vector<1x8x8xbf16>
    %620 = vector.shape_cast %619 : vector<1x8x8xbf16> to vector<8x8xbf16>
    %621 = vector.extract_strided_slice %608 {offsets = [0, 128], sizes = [8, 128], strides = [1, 1]} : vector<8x256xf32> to vector<8x128xf32>
    %622 = arith.truncf %621 : vector<8x128xf32> to vector<8x128xbf16>
    %cst_271 = arith.constant dense<0.000000e+00> : vector<8x128xf32>
    %623 = tpu.matmul %620, %622, %cst_271 {dimension_numbers = #tpu.dot_dimension_numbers<[1], [0], [0], [1], [0, 0, 1, 1], [], []>} : vector<8x8xbf16>, vector<8x128xbf16>, vector<8x128xf32> -> vector<8x128xf32>
    %624 = arith.addf %618, %623 : vector<8x128xf32>
    %c6_272 = arith.constant 6 : index
    %c0_273 = arith.constant 0 : index
    %c0_274 = arith.constant 0 : index
    %625 = vector.load %arg11[%c6_272, %c0_273, %c0_274] : memref<9x8x3xf32, #tpu.memory_space<vmem>>, vector<1x8x3xf32>
    %626 = vector.shape_cast %625 : vector<1x8x3xf32> to vector<8x3xf32>
    %627 = vector.extract_strided_slice %626 {offsets = [0, 0], sizes = [8, 1], strides = [1, 1]} : vector<8x3xf32> to vector<8x1xf32>
    %628 = vector.broadcast %627 : vector<8x1xf32> to vector<8x128xf32>
    %629 = arith.addf %624, %628 : vector<8x128xf32>
    %cst_275 = arith.constant 0.000000e+00 : f32
    %630 = vector.broadcast %cst_275 : f32 to vector<8x128xf32>
    %631 = arith.maximumf %629, %630 : vector<8x128xf32>
    %632 = vector.extract_strided_slice %626 {offsets = [0, 1], sizes = [8, 1], strides = [1, 1]} : vector<8x3xf32> to vector<8x1xf32>
    %633 = vector.extract_strided_slice %626 {offsets = [0, 2], sizes = [8, 1], strides = [1, 1]} : vector<8x3xf32> to vector<8x1xf32>
    %cst_276 = arith.constant dense<0.000000e+00> : vector<8xf32>
    %634 = vector.multi_reduction <add>, %631, %cst_276 [1] : vector<8x128xf32> to vector<8xf32>
    %635 = vector.shape_cast %634 : vector<8xf32> to vector<8x1xf32>
    %cst_277 = arith.constant 1.280000e+02 : f32
    %636 = vector.broadcast %cst_277 : f32 to vector<8x1xf32>
    %637 = arith.divf %635, %636 : vector<8x1xf32>
    %638 = vector.broadcast %637 : vector<8x1xf32> to vector<8x128xf32>
    %639 = arith.subf %631, %638 : vector<8x128xf32>
    %640 = arith.mulf %639, %639 : vector<8x128xf32>
    %cst_278 = arith.constant dense<0.000000e+00> : vector<8xf32>
    %641 = vector.multi_reduction <add>, %640, %cst_278 [1] : vector<8x128xf32> to vector<8xf32>
    %642 = vector.shape_cast %641 : vector<8xf32> to vector<8x1xf32>
    %cst_279 = arith.constant 1.280000e+02 : f32
    %643 = vector.broadcast %cst_279 : f32 to vector<8x1xf32>
    %644 = arith.divf %642, %643 : vector<8x1xf32>
    %645 = vector.broadcast %637 : vector<8x1xf32> to vector<8x128xf32>
    %646 = arith.subf %631, %645 : vector<8x128xf32>
    %cst_280 = arith.constant 9.99999974E-6 : f32
    %647 = vector.broadcast %cst_280 : f32 to vector<8x1xf32>
    %648 = arith.addf %644, %647 : vector<8x1xf32>
    %649 = math.rsqrt %648 : vector<8x1xf32>
    %650 = vector.broadcast %649 : vector<8x1xf32> to vector<8x128xf32>
    %651 = arith.mulf %646, %650 : vector<8x128xf32>
    %652 = vector.broadcast %632 : vector<8x1xf32> to vector<8x128xf32>
    %653 = arith.mulf %651, %652 : vector<8x128xf32>
    %654 = vector.broadcast %633 : vector<8x1xf32> to vector<8x128xf32>
    %655 = arith.addf %653, %654 : vector<8x128xf32>
    %656 = arith.addf %606, %655 : vector<8x128xf32>
    %cst_281 = arith.constant dense<0.000000e+00> : vector<8x256xf32>
    %657 = tpu.matmul %656, %603, %cst_281 {dimension_numbers = #tpu.dot_dimension_numbers<[1], [0], [0], [1], [0, 0, 1, 1], [], []>} : vector<8x128xf32>, vector<128x256xf32>, vector<8x256xf32> -> vector<8x256xf32>
    %c22 = arith.constant 22 : index
    %c0_282 = arith.constant 0 : index
    %c0_283 = arith.constant 0 : index
    %658 = vector.load %arg10[%c22, %c0_282, %c0_283] : memref<27x8x8xbf16, #tpu.memory_space<vmem>>, vector<1x8x8xbf16>
    %659 = vector.shape_cast %658 : vector<1x8x8xbf16> to vector<8x8xbf16>
    %660 = arith.truncf %656 : vector<8x128xf32> to vector<8x128xbf16>
    %cst_284 = arith.constant dense<0.000000e+00> : vector<8x128xf32>
    %661 = tpu.matmul %659, %660, %cst_284 {dimension_numbers = #tpu.dot_dimension_numbers<[1], [0], [0], [1], [0, 0, 1, 1], [], []>} : vector<8x8xbf16>, vector<8x128xbf16>, vector<8x128xf32> -> vector<8x128xf32>
    %c21 = arith.constant 21 : index
    %c0_285 = arith.constant 0 : index
    %c0_286 = arith.constant 0 : index
    %662 = vector.load %arg10[%c21, %c0_285, %c0_286] : memref<27x8x8xbf16, #tpu.memory_space<vmem>>, vector<1x8x8xbf16>
    %663 = vector.shape_cast %662 : vector<1x8x8xbf16> to vector<8x8xbf16>
    %664 = vector.extract_strided_slice %657 {offsets = [0, 0], sizes = [8, 128], strides = [1, 1]} : vector<8x256xf32> to vector<8x128xf32>
    %665 = arith.truncf %664 : vector<8x128xf32> to vector<8x128xbf16>
    %cst_287 = arith.constant dense<0.000000e+00> : vector<8x128xf32>
    %666 = tpu.matmul %663, %665, %cst_287 {dimension_numbers = #tpu.dot_dimension_numbers<[1], [0], [0], [1], [0, 0, 1, 1], [], []>} : vector<8x8xbf16>, vector<8x128xbf16>, vector<8x128xf32> -> vector<8x128xf32>
    %667 = arith.addf %661, %666 : vector<8x128xf32>
    %c23 = arith.constant 23 : index
    %c0_288 = arith.constant 0 : index
    %c0_289 = arith.constant 0 : index
    %668 = vector.load %arg10[%c23, %c0_288, %c0_289] : memref<27x8x8xbf16, #tpu.memory_space<vmem>>, vector<1x8x8xbf16>
    %669 = vector.shape_cast %668 : vector<1x8x8xbf16> to vector<8x8xbf16>
    %670 = vector.extract_strided_slice %657 {offsets = [0, 128], sizes = [8, 128], strides = [1, 1]} : vector<8x256xf32> to vector<8x128xf32>
    %671 = arith.truncf %670 : vector<8x128xf32> to vector<8x128xbf16>
    %cst_290 = arith.constant dense<0.000000e+00> : vector<8x128xf32>
    %672 = tpu.matmul %669, %671, %cst_290 {dimension_numbers = #tpu.dot_dimension_numbers<[1], [0], [0], [1], [0, 0, 1, 1], [], []>} : vector<8x8xbf16>, vector<8x128xbf16>, vector<8x128xf32> -> vector<8x128xf32>
    %673 = arith.addf %667, %672 : vector<8x128xf32>
    %c7_291 = arith.constant 7 : index
    %c0_292 = arith.constant 0 : index
    %c0_293 = arith.constant 0 : index
    %674 = vector.load %arg11[%c7_291, %c0_292, %c0_293] : memref<9x8x3xf32, #tpu.memory_space<vmem>>, vector<1x8x3xf32>
    %675 = vector.shape_cast %674 : vector<1x8x3xf32> to vector<8x3xf32>
    %676 = vector.extract_strided_slice %675 {offsets = [0, 0], sizes = [8, 1], strides = [1, 1]} : vector<8x3xf32> to vector<8x1xf32>
    %677 = vector.broadcast %676 : vector<8x1xf32> to vector<8x128xf32>
    %678 = arith.addf %673, %677 : vector<8x128xf32>
    %cst_294 = arith.constant 0.000000e+00 : f32
    %679 = vector.broadcast %cst_294 : f32 to vector<8x128xf32>
    %680 = arith.maximumf %678, %679 : vector<8x128xf32>
    %681 = vector.extract_strided_slice %675 {offsets = [0, 1], sizes = [8, 1], strides = [1, 1]} : vector<8x3xf32> to vector<8x1xf32>
    %682 = vector.extract_strided_slice %675 {offsets = [0, 2], sizes = [8, 1], strides = [1, 1]} : vector<8x3xf32> to vector<8x1xf32>
    %cst_295 = arith.constant dense<0.000000e+00> : vector<8xf32>
    %683 = vector.multi_reduction <add>, %680, %cst_295 [1] : vector<8x128xf32> to vector<8xf32>
    %684 = vector.shape_cast %683 : vector<8xf32> to vector<8x1xf32>
    %cst_296 = arith.constant 1.280000e+02 : f32
    %685 = vector.broadcast %cst_296 : f32 to vector<8x1xf32>
    %686 = arith.divf %684, %685 : vector<8x1xf32>
    %687 = vector.broadcast %686 : vector<8x1xf32> to vector<8x128xf32>
    %688 = arith.subf %680, %687 : vector<8x128xf32>
    %689 = arith.mulf %688, %688 : vector<8x128xf32>
    %cst_297 = arith.constant dense<0.000000e+00> : vector<8xf32>
    %690 = vector.multi_reduction <add>, %689, %cst_297 [1] : vector<8x128xf32> to vector<8xf32>
    %691 = vector.shape_cast %690 : vector<8xf32> to vector<8x1xf32>
    %cst_298 = arith.constant 1.280000e+02 : f32
    %692 = vector.broadcast %cst_298 : f32 to vector<8x1xf32>
    %693 = arith.divf %691, %692 : vector<8x1xf32>
    %694 = vector.broadcast %686 : vector<8x1xf32> to vector<8x128xf32>
    %695 = arith.subf %680, %694 : vector<8x128xf32>
    %cst_299 = arith.constant 9.99999974E-6 : f32
    %696 = vector.broadcast %cst_299 : f32 to vector<8x1xf32>
    %697 = arith.addf %693, %696 : vector<8x1xf32>
    %698 = math.rsqrt %697 : vector<8x1xf32>
    %699 = vector.broadcast %698 : vector<8x1xf32> to vector<8x128xf32>
    %700 = arith.mulf %695, %699 : vector<8x128xf32>
    %701 = vector.broadcast %681 : vector<8x1xf32> to vector<8x128xf32>
    %702 = arith.mulf %700, %701 : vector<8x128xf32>
    %703 = vector.broadcast %682 : vector<8x1xf32> to vector<8x128xf32>
    %704 = arith.addf %702, %703 : vector<8x128xf32>
    %705 = arith.addf %607, %704 : vector<8x128xf32>
    %cst_300 = arith.constant dense<0.000000e+00> : vector<8x256xf32>
    %706 = tpu.matmul %705, %603, %cst_300 {dimension_numbers = #tpu.dot_dimension_numbers<[1], [0], [0], [1], [0, 0, 1, 1], [], []>} : vector<8x128xf32>, vector<128x256xf32>, vector<8x256xf32> -> vector<8x256xf32>
    %c25 = arith.constant 25 : index
    %c0_301 = arith.constant 0 : index
    %c0_302 = arith.constant 0 : index
    %707 = vector.load %arg10[%c25, %c0_301, %c0_302] : memref<27x8x8xbf16, #tpu.memory_space<vmem>>, vector<1x8x8xbf16>
    %708 = vector.shape_cast %707 : vector<1x8x8xbf16> to vector<8x8xbf16>
    %709 = arith.truncf %705 : vector<8x128xf32> to vector<8x128xbf16>
    %cst_303 = arith.constant dense<0.000000e+00> : vector<8x128xf32>
    %710 = tpu.matmul %708, %709, %cst_303 {dimension_numbers = #tpu.dot_dimension_numbers<[1], [0], [0], [1], [0, 0, 1, 1], [], []>} : vector<8x8xbf16>, vector<8x128xbf16>, vector<8x128xf32> -> vector<8x128xf32>
    %c24 = arith.constant 24 : index
    %c0_304 = arith.constant 0 : index
    %c0_305 = arith.constant 0 : index
    %711 = vector.load %arg10[%c24, %c0_304, %c0_305] : memref<27x8x8xbf16, #tpu.memory_space<vmem>>, vector<1x8x8xbf16>
    %712 = vector.shape_cast %711 : vector<1x8x8xbf16> to vector<8x8xbf16>
    %713 = vector.extract_strided_slice %706 {offsets = [0, 0], sizes = [8, 128], strides = [1, 1]} : vector<8x256xf32> to vector<8x128xf32>
    %714 = arith.truncf %713 : vector<8x128xf32> to vector<8x128xbf16>
    %cst_306 = arith.constant dense<0.000000e+00> : vector<8x128xf32>
    %715 = tpu.matmul %712, %714, %cst_306 {dimension_numbers = #tpu.dot_dimension_numbers<[1], [0], [0], [1], [0, 0, 1, 1], [], []>} : vector<8x8xbf16>, vector<8x128xbf16>, vector<8x128xf32> -> vector<8x128xf32>
    %716 = arith.addf %710, %715 : vector<8x128xf32>
    %c26 = arith.constant 26 : index
    %c0_307 = arith.constant 0 : index
    %c0_308 = arith.constant 0 : index
    %717 = vector.load %arg10[%c26, %c0_307, %c0_308] : memref<27x8x8xbf16, #tpu.memory_space<vmem>>, vector<1x8x8xbf16>
    %718 = vector.shape_cast %717 : vector<1x8x8xbf16> to vector<8x8xbf16>
    %719 = vector.extract_strided_slice %706 {offsets = [0, 128], sizes = [8, 128], strides = [1, 1]} : vector<8x256xf32> to vector<8x128xf32>
    %720 = arith.truncf %719 : vector<8x128xf32> to vector<8x128xbf16>
    %cst_309 = arith.constant dense<0.000000e+00> : vector<8x128xf32>
    %721 = tpu.matmul %718, %720, %cst_309 {dimension_numbers = #tpu.dot_dimension_numbers<[1], [0], [0], [1], [0, 0, 1, 1], [], []>} : vector<8x8xbf16>, vector<8x128xbf16>, vector<8x128xf32> -> vector<8x128xf32>
    %722 = arith.addf %716, %721 : vector<8x128xf32>
    %c8_310 = arith.constant 8 : index
    %c0_311 = arith.constant 0 : index
    %c0_312 = arith.constant 0 : index
    %723 = vector.load %arg11[%c8_310, %c0_311, %c0_312] : memref<9x8x3xf32, #tpu.memory_space<vmem>>, vector<1x8x3xf32>
    %724 = vector.shape_cast %723 : vector<1x8x3xf32> to vector<8x3xf32>
    %725 = vector.extract_strided_slice %724 {offsets = [0, 0], sizes = [8, 1], strides = [1, 1]} : vector<8x3xf32> to vector<8x1xf32>
    %726 = vector.broadcast %725 : vector<8x1xf32> to vector<8x128xf32>
    %727 = arith.addf %722, %726 : vector<8x128xf32>
    %cst_313 = arith.constant 0.000000e+00 : f32
    %728 = vector.broadcast %cst_313 : f32 to vector<8x128xf32>
    %729 = arith.maximumf %727, %728 : vector<8x128xf32>
    %730 = vector.extract_strided_slice %724 {offsets = [0, 1], sizes = [8, 1], strides = [1, 1]} : vector<8x3xf32> to vector<8x1xf32>
    %731 = vector.extract_strided_slice %724 {offsets = [0, 2], sizes = [8, 1], strides = [1, 1]} : vector<8x3xf32> to vector<8x1xf32>
    %cst_314 = arith.constant dense<0.000000e+00> : vector<8xf32>
    %732 = vector.multi_reduction <add>, %729, %cst_314 [1] : vector<8x128xf32> to vector<8xf32>
    %733 = vector.shape_cast %732 : vector<8xf32> to vector<8x1xf32>
    %cst_315 = arith.constant 1.280000e+02 : f32
    %734 = vector.broadcast %cst_315 : f32 to vector<8x1xf32>
    %735 = arith.divf %733, %734 : vector<8x1xf32>
    %736 = vector.broadcast %735 : vector<8x1xf32> to vector<8x128xf32>
    %737 = arith.subf %729, %736 : vector<8x128xf32>
    %738 = arith.mulf %737, %737 : vector<8x128xf32>
    %cst_316 = arith.constant dense<0.000000e+00> : vector<8xf32>
    %739 = vector.multi_reduction <add>, %738, %cst_316 [1] : vector<8x128xf32> to vector<8xf32>
    %740 = vector.shape_cast %739 : vector<8xf32> to vector<8x1xf32>
    %cst_317 = arith.constant 1.280000e+02 : f32
    %741 = vector.broadcast %cst_317 : f32 to vector<8x1xf32>
    %742 = arith.divf %740, %741 : vector<8x1xf32>
    %743 = vector.broadcast %735 : vector<8x1xf32> to vector<8x128xf32>
    %744 = arith.subf %729, %743 : vector<8x128xf32>
    %cst_318 = arith.constant 9.99999974E-6 : f32
    %745 = vector.broadcast %cst_318 : f32 to vector<8x1xf32>
    %746 = arith.addf %742, %745 : vector<8x1xf32>
    %747 = math.rsqrt %746 : vector<8x1xf32>
    %748 = vector.broadcast %747 : vector<8x1xf32> to vector<8x128xf32>
    %749 = arith.mulf %744, %748 : vector<8x128xf32>
    %750 = vector.broadcast %730 : vector<8x1xf32> to vector<8x128xf32>
    %751 = arith.mulf %749, %750 : vector<8x128xf32>
    %752 = vector.broadcast %731 : vector<8x1xf32> to vector<8x128xf32>
    %753 = arith.addf %751, %752 : vector<8x128xf32>
    %754 = tpu.concatenate %604, %655, %704, %753 in 0 : vector<8x128xf32>, vector<8x128xf32>, vector<8x128xf32>, vector<8x128xf32> -> vector<32x128xf32>
    %c5_319 = arith.constant 5 : index
    %c0_320 = arith.constant 0 : index
    %c0_321 = arith.constant 0 : index
    %755 = vector.load %arg8[%c5_319, %c0_320, %c0_321] : memref<6x32x32xbf16, #tpu.memory_space<vmem>>, vector<1x32x32xbf16>
    %756 = vector.shape_cast %755 : vector<1x32x32xbf16> to vector<32x32xbf16>
    %757 = arith.truncf %754 : vector<32x128xf32> to vector<32x128xbf16>
    %cst_322 = arith.constant dense<0.000000e+00> : vector<32x128xf32>
    %758 = tpu.matmul %756, %757, %cst_322 {dimension_numbers = #tpu.dot_dimension_numbers<[1], [0], [0], [1], [0, 0, 1, 1], [], []>} : vector<32x32xbf16>, vector<32x128xbf16>, vector<32x128xf32> -> vector<32x128xf32>
    %c5_323 = arith.constant 5 : index
    %c0_324 = arith.constant 0 : index
    %c0_325 = arith.constant 0 : index
    %759 = vector.load %arg9[%c5_323, %c0_324, %c0_325] : memref<6x32x3xf32, #tpu.memory_space<vmem>>, vector<1x32x3xf32>
    %760 = vector.shape_cast %759 : vector<1x32x3xf32> to vector<32x3xf32>
    %761 = vector.extract_strided_slice %760 {offsets = [0, 0], sizes = [32, 1], strides = [1, 1]} : vector<32x3xf32> to vector<32x1xf32>
    %762 = vector.broadcast %761 : vector<32x1xf32> to vector<32x128xf32>
    %763 = arith.addf %758, %762 : vector<32x128xf32>
    %cst_326 = arith.constant 0.000000e+00 : f32
    %764 = vector.broadcast %cst_326 : f32 to vector<32x128xf32>
    %765 = arith.maximumf %763, %764 : vector<32x128xf32>
    %766 = vector.extract_strided_slice %760 {offsets = [0, 1], sizes = [32, 1], strides = [1, 1]} : vector<32x3xf32> to vector<32x1xf32>
    %767 = vector.extract_strided_slice %760 {offsets = [0, 2], sizes = [32, 1], strides = [1, 1]} : vector<32x3xf32> to vector<32x1xf32>
    %cst_327 = arith.constant dense<0.000000e+00> : vector<32xf32>
    %768 = vector.multi_reduction <add>, %765, %cst_327 [1] : vector<32x128xf32> to vector<32xf32>
    %769 = vector.shape_cast %768 : vector<32xf32> to vector<32x1xf32>
    %cst_328 = arith.constant 1.280000e+02 : f32
    %770 = vector.broadcast %cst_328 : f32 to vector<32x1xf32>
    %771 = arith.divf %769, %770 : vector<32x1xf32>
    %772 = vector.broadcast %771 : vector<32x1xf32> to vector<32x128xf32>
    %773 = arith.subf %765, %772 : vector<32x128xf32>
    %774 = arith.mulf %773, %773 : vector<32x128xf32>
    %cst_329 = arith.constant dense<0.000000e+00> : vector<32xf32>
    %775 = vector.multi_reduction <add>, %774, %cst_329 [1] : vector<32x128xf32> to vector<32xf32>
    %776 = vector.shape_cast %775 : vector<32xf32> to vector<32x1xf32>
    %cst_330 = arith.constant 1.280000e+02 : f32
    %777 = vector.broadcast %cst_330 : f32 to vector<32x1xf32>
    %778 = arith.divf %776, %777 : vector<32x1xf32>
    %779 = vector.broadcast %771 : vector<32x1xf32> to vector<32x128xf32>
    %780 = arith.subf %765, %779 : vector<32x128xf32>
    %cst_331 = arith.constant 9.99999974E-6 : f32
    %781 = vector.broadcast %cst_331 : f32 to vector<32x1xf32>
    %782 = arith.addf %778, %781 : vector<32x1xf32>
    %783 = math.rsqrt %782 : vector<32x1xf32>
    %784 = vector.broadcast %783 : vector<32x1xf32> to vector<32x128xf32>
    %785 = arith.mulf %780, %784 : vector<32x128xf32>
    %786 = vector.broadcast %766 : vector<32x1xf32> to vector<32x128xf32>
    %787 = arith.mulf %785, %786 : vector<32x128xf32>
    %788 = vector.broadcast %767 : vector<32x1xf32> to vector<32x128xf32>
    %789 = arith.addf %787, %788 : vector<32x128xf32>
    %cst_332 = arith.constant dense<0.000000e+00> : vector<32x2xf32>
    %790 = tpu.matmul %789, %0, %cst_332 {dimension_numbers = #tpu.dot_dimension_numbers<[1], [0], [0], [1], [0, 0, 1, 1], [], []>} : vector<32x128xf32>, vector<128x2xf32>, vector<32x2xf32> -> vector<32x2xf32>
    %cst_333 = arith.constant 1.562500e-02 : f32
    %791 = vector.broadcast %cst_333 : f32 to vector<32x2xf32>
    %792 = arith.mulf %790, %791 : vector<32x2xf32>
    %c2_334 = arith.constant 2 : index
    %c0_335 = arith.constant 0 : index
    %c0_336 = arith.constant 0 : index
    %793 = vector.load %arg12[%c2_334, %c0_335, %c0_336] : memref<3x16x32xbf16, #tpu.memory_space<vmem>>, vector<1x16x32xbf16>
    %794 = vector.shape_cast %793 : vector<1x16x32xbf16> to vector<16x32xbf16>
    %795 = arith.truncf %792 : vector<32x2xf32> to vector<32x2xbf16>
    %cst_337 = arith.constant dense<0.000000e+00> : vector<16x2xf32>
    %796 = tpu.matmul %794, %795, %cst_337 {dimension_numbers = #tpu.dot_dimension_numbers<[1], [0], [0], [1], [0, 0, 1, 1], [], []>} : vector<16x32xbf16>, vector<32x2xbf16>, vector<16x2xf32> -> vector<16x2xf32>
    %c2_338 = arith.constant 2 : index
    %c0_339 = arith.constant 0 : index
    %c0_340 = arith.constant 0 : index
    %797 = vector.load %arg13[%c2_338, %c0_339, %c0_340] : memref<3x16x1xf32, #tpu.memory_space<vmem>>, vector<1x16x1xf32>
    %798 = vector.shape_cast %797 : vector<1x16x1xf32> to vector<16x1xf32>
    %799 = vector.broadcast %798 : vector<16x1xf32> to vector<16x2xf32>
    %800 = arith.addf %796, %799 : vector<16x2xf32>
    %cst_341 = arith.constant 0.000000e+00 : f32
    %801 = vector.broadcast %cst_341 : f32 to vector<16x2xf32>
    %802 = arith.maximumf %800, %801 : vector<16x2xf32>
    %c2_342 = arith.constant 2 : index
    %c0_343 = arith.constant 0 : index
    %c0_344 = arith.constant 0 : index
    %803 = vector.load %arg14[%c2_342, %c0_343, %c0_344] : memref<3x32x16xbf16, #tpu.memory_space<vmem>>, vector<1x32x16xbf16>
    %804 = vector.shape_cast %803 : vector<1x32x16xbf16> to vector<32x16xbf16>
    %805 = arith.truncf %802 : vector<16x2xf32> to vector<16x2xbf16>
    %cst_345 = arith.constant dense<0.000000e+00> : vector<32x2xf32>
    %806 = tpu.matmul %804, %805, %cst_345 {dimension_numbers = #tpu.dot_dimension_numbers<[1], [0], [0], [1], [0, 0, 1, 1], [], []>} : vector<32x16xbf16>, vector<16x2xbf16>, vector<32x2xf32> -> vector<32x2xf32>
    %c2_346 = arith.constant 2 : index
    %c0_347 = arith.constant 0 : index
    %c0_348 = arith.constant 0 : index
    %807 = vector.load %arg15[%c2_346, %c0_347, %c0_348] : memref<3x32x1xf32, #tpu.memory_space<vmem>>, vector<1x32x1xf32>
    %808 = vector.shape_cast %807 : vector<1x32x1xf32> to vector<32x1xf32>
    %809 = vector.broadcast %808 : vector<32x1xf32> to vector<32x2xf32>
    %810 = arith.addf %806, %809 : vector<32x2xf32>
    %811 = arith.negf %810 : vector<32x2xf32>
    %812 = math.exp %811 : vector<32x2xf32>
    %cst_349 = arith.constant 1.000000e+00 : f32
    %813 = vector.broadcast %cst_349 : f32 to vector<32x2xf32>
    %814 = arith.addf %813, %812 : vector<32x2xf32>
    %815 = arith.divf %813, %814 : vector<32x2xf32>
    %cst_350 = arith.constant dense<0.000000e+00> : vector<32x128xf32>
    %816 = tpu.matmul %815, %1, %cst_350 {dimension_numbers = #tpu.dot_dimension_numbers<[1], [0], [0], [1], [0, 0, 1, 1], [], []>} : vector<32x2xf32>, vector<2x128xf32>, vector<32x128xf32> -> vector<32x128xf32>
    %817 = arith.mulf %789, %816 : vector<32x128xf32>
    %818 = arith.addf %817, %566 : vector<32x128xf32>
    %c0_351 = arith.constant 0 : index
    %c0_352 = arith.constant 0 : index
    %c0_353 = arith.constant 0 : index
    %819 = vector.load %arg16[%c0_351, %c0_352, %c0_353] : memref<3x96x32xbf16, #tpu.memory_space<vmem>>, vector<1x96x32xbf16>
    %820 = vector.shape_cast %819 : vector<1x96x32xbf16> to vector<96x32xbf16>
    %821 = arith.truncf %314 : vector<32x128xf32> to vector<32x128xbf16>
    %cst_354 = arith.constant dense<0.000000e+00> : vector<96x128xf32>
    %822 = tpu.matmul %820, %821, %cst_354 {dimension_numbers = #tpu.dot_dimension_numbers<[1], [0], [0], [1], [0, 0, 1, 1], [], []>} : vector<96x32xbf16>, vector<32x128xbf16>, vector<96x128xf32> -> vector<96x128xf32>
    %c1_355 = arith.constant 1 : index
    %c0_356 = arith.constant 0 : index
    %c0_357 = arith.constant 0 : index
    %823 = vector.load %arg16[%c1_355, %c0_356, %c0_357] : memref<3x96x32xbf16, #tpu.memory_space<vmem>>, vector<1x96x32xbf16>
    %824 = vector.shape_cast %823 : vector<1x96x32xbf16> to vector<96x32xbf16>
    %825 = arith.truncf %566 : vector<32x128xf32> to vector<32x128xbf16>
    %cst_358 = arith.constant dense<0.000000e+00> : vector<96x128xf32>
    %826 = tpu.matmul %824, %825, %cst_358 {dimension_numbers = #tpu.dot_dimension_numbers<[1], [0], [0], [1], [0, 0, 1, 1], [], []>} : vector<96x32xbf16>, vector<32x128xbf16>, vector<96x128xf32> -> vector<96x128xf32>
    %827 = arith.addf %822, %826 : vector<96x128xf32>
    %c2_359 = arith.constant 2 : index
    %c0_360 = arith.constant 0 : index
    %c0_361 = arith.constant 0 : index
    %828 = vector.load %arg16[%c2_359, %c0_360, %c0_361] : memref<3x96x32xbf16, #tpu.memory_space<vmem>>, vector<1x96x32xbf16>
    %829 = vector.shape_cast %828 : vector<1x96x32xbf16> to vector<96x32xbf16>
    %830 = arith.truncf %818 : vector<32x128xf32> to vector<32x128xbf16>
    %cst_362 = arith.constant dense<0.000000e+00> : vector<96x128xf32>
    %831 = tpu.matmul %829, %830, %cst_362 {dimension_numbers = #tpu.dot_dimension_numbers<[1], [0], [0], [1], [0, 0, 1, 1], [], []>} : vector<96x32xbf16>, vector<32x128xbf16>, vector<96x128xf32> -> vector<96x128xf32>
    %832 = arith.addf %827, %831 : vector<96x128xf32>
    %c0_363 = arith.constant 0 : index
    %c0_364 = arith.constant 0 : index
    %833 = vector.load %arg17[%c0_363, %c0_364] : memref<96x3xf32, #tpu.memory_space<vmem>>, vector<96x3xf32>
    %834 = vector.extract_strided_slice %833 {offsets = [0, 0], sizes = [96, 1], strides = [1, 1]} : vector<96x3xf32> to vector<96x1xf32>
    %835 = vector.broadcast %834 : vector<96x1xf32> to vector<96x128xf32>
    %836 = arith.addf %832, %835 : vector<96x128xf32>
    %cst_365 = arith.constant 0.000000e+00 : f32
    %837 = vector.broadcast %cst_365 : f32 to vector<96x128xf32>
    %838 = arith.maximumf %836, %837 : vector<96x128xf32>
    %839 = vector.extract_strided_slice %833 {offsets = [0, 1], sizes = [96, 1], strides = [1, 1]} : vector<96x3xf32> to vector<96x1xf32>
    %840 = vector.extract_strided_slice %833 {offsets = [0, 2], sizes = [96, 1], strides = [1, 1]} : vector<96x3xf32> to vector<96x1xf32>
    %cst_366 = arith.constant dense<0.000000e+00> : vector<96xf32>
    %841 = vector.multi_reduction <add>, %838, %cst_366 [1] : vector<96x128xf32> to vector<96xf32>
    %842 = vector.shape_cast %841 : vector<96xf32> to vector<96x1xf32>
    %cst_367 = arith.constant 1.280000e+02 : f32
    %843 = vector.broadcast %cst_367 : f32 to vector<96x1xf32>
    %844 = arith.divf %842, %843 : vector<96x1xf32>
    %845 = vector.broadcast %844 : vector<96x1xf32> to vector<96x128xf32>
    %846 = arith.subf %838, %845 : vector<96x128xf32>
    %847 = arith.mulf %846, %846 : vector<96x128xf32>
    %cst_368 = arith.constant dense<0.000000e+00> : vector<96xf32>
    %848 = vector.multi_reduction <add>, %847, %cst_368 [1] : vector<96x128xf32> to vector<96xf32>
    %849 = vector.shape_cast %848 : vector<96xf32> to vector<96x1xf32>
    %cst_369 = arith.constant 1.280000e+02 : f32
    %850 = vector.broadcast %cst_369 : f32 to vector<96x1xf32>
    %851 = arith.divf %849, %850 : vector<96x1xf32>
    %852 = vector.broadcast %844 : vector<96x1xf32> to vector<96x128xf32>
    %853 = arith.subf %838, %852 : vector<96x128xf32>
    %cst_370 = arith.constant 9.99999974E-6 : f32
    %854 = vector.broadcast %cst_370 : f32 to vector<96x1xf32>
    %855 = arith.addf %851, %854 : vector<96x1xf32>
    %856 = math.rsqrt %855 : vector<96x1xf32>
    %857 = vector.broadcast %856 : vector<96x1xf32> to vector<96x128xf32>
    %858 = arith.mulf %853, %857 : vector<96x128xf32>
    %859 = vector.broadcast %839 : vector<96x1xf32> to vector<96x128xf32>
    %860 = arith.mulf %858, %859 : vector<96x128xf32>
    %861 = vector.broadcast %840 : vector<96x1xf32> to vector<96x128xf32>
    %862 = arith.addf %860, %861 : vector<96x128xf32>
    %cst_371 = arith.constant dense<0.000000e+00> : vector<96x2xf32>
    %863 = tpu.matmul %862, %0, %cst_371 {dimension_numbers = #tpu.dot_dimension_numbers<[1], [0], [0], [1], [0, 0, 1, 1], [], []>} : vector<96x128xf32>, vector<128x2xf32>, vector<96x2xf32> -> vector<96x2xf32>
    %cst_372 = arith.constant 1.562500e-02 : f32
    %864 = vector.broadcast %cst_372 : f32 to vector<96x2xf32>
    %865 = arith.mulf %863, %864 : vector<96x2xf32>
    %cst_373 = arith.constant dense<0.000000e+00> : vector<96x128xf32>
    %866 = tpu.matmul %865, %1, %cst_373 {dimension_numbers = #tpu.dot_dimension_numbers<[1], [0], [0], [1], [0, 0, 1, 1], [], []>} : vector<96x2xf32>, vector<2x128xf32>, vector<96x128xf32> -> vector<96x128xf32>
    %867 = arith.subf %862, %866 : vector<96x128xf32>
    %868 = arith.mulf %867, %867 : vector<96x128xf32>
    %cst_374 = arith.constant dense<0.000000e+00> : vector<96x2xf32>
    %869 = tpu.matmul %868, %0, %cst_374 {dimension_numbers = #tpu.dot_dimension_numbers<[1], [0], [0], [1], [0, 0, 1, 1], [], []>} : vector<96x128xf32>, vector<128x2xf32>, vector<96x2xf32> -> vector<96x2xf32>
    %cst_375 = arith.constant 1.562500e-02 : f32
    %870 = vector.broadcast %cst_375 : f32 to vector<96x2xf32>
    %871 = arith.mulf %869, %870 : vector<96x2xf32>
    %cst_376 = arith.constant 9.99999996E-13 : f32
    %872 = vector.broadcast %cst_376 : f32 to vector<96x2xf32>
    %873 = arith.maximumf %871, %872 : vector<96x2xf32>
    %874 = math.sqrt %873 : vector<96x2xf32>
    %c1_377 = arith.constant 1 : index
    %c0_378 = arith.constant 0 : index
    %c0_379 = arith.constant 0 : index
    %875 = vector.load %arg18[%c1_377, %c0_378, %c0_379] : memref<3x16x96xbf16, #tpu.memory_space<vmem>>, vector<1x16x96xbf16>
    %876 = vector.shape_cast %875 : vector<1x16x96xbf16> to vector<16x96xbf16>
    %877 = arith.truncf %865 : vector<96x2xf32> to vector<96x2xbf16>
    %cst_380 = arith.constant dense<0.000000e+00> : vector<16x2xf32>
    %878 = tpu.matmul %876, %877, %cst_380 {dimension_numbers = #tpu.dot_dimension_numbers<[1], [0], [0], [1], [0, 0, 1, 1], [], []>} : vector<16x96xbf16>, vector<96x2xbf16>, vector<16x2xf32> -> vector<16x2xf32>
    %c2_381 = arith.constant 2 : index
    %c0_382 = arith.constant 0 : index
    %c0_383 = arith.constant 0 : index
    %879 = vector.load %arg18[%c2_381, %c0_382, %c0_383] : memref<3x16x96xbf16, #tpu.memory_space<vmem>>, vector<1x16x96xbf16>
    %880 = vector.shape_cast %879 : vector<1x16x96xbf16> to vector<16x96xbf16>
    %881 = arith.truncf %874 : vector<96x2xf32> to vector<96x2xbf16>
    %cst_384 = arith.constant dense<0.000000e+00> : vector<16x2xf32>
    %882 = tpu.matmul %880, %881, %cst_384 {dimension_numbers = #tpu.dot_dimension_numbers<[1], [0], [0], [1], [0, 0, 1, 1], [], []>} : vector<16x96xbf16>, vector<96x2xbf16>, vector<16x2xf32> -> vector<16x2xf32>
    %883 = arith.addf %878, %882 : vector<16x2xf32>
    %c0_385 = arith.constant 0 : index
    %c0_386 = arith.constant 0 : index
    %c0_387 = arith.constant 0 : index
    %884 = vector.load %arg18[%c0_385, %c0_386, %c0_387] : memref<3x16x96xbf16, #tpu.memory_space<vmem>>, vector<1x16x96xbf16>
    %885 = vector.shape_cast %884 : vector<1x16x96xbf16> to vector<16x96xbf16>
    %886 = arith.truncf %862 : vector<96x128xf32> to vector<96x128xbf16>
    %cst_388 = arith.constant dense<0.000000e+00> : vector<16x128xf32>
    %887 = tpu.matmul %885, %886, %cst_388 {dimension_numbers = #tpu.dot_dimension_numbers<[1], [0], [0], [1], [0, 0, 1, 1], [], []>} : vector<16x96xbf16>, vector<96x128xbf16>, vector<16x128xf32> -> vector<16x128xf32>
    %cst_389 = arith.constant dense<0.000000e+00> : vector<16x128xf32>
    %888 = tpu.matmul %883, %1, %cst_389 {dimension_numbers = #tpu.dot_dimension_numbers<[1], [0], [0], [1], [0, 0, 1, 1], [], []>} : vector<16x2xf32>, vector<2x128xf32>, vector<16x128xf32> -> vector<16x128xf32>
    %889 = arith.addf %887, %888 : vector<16x128xf32>
    %c0_390 = arith.constant 0 : index
    %c0_391 = arith.constant 0 : index
    %890 = vector.load %arg19[%c0_390, %c0_391] : memref<16x3xf32, #tpu.memory_space<vmem>>, vector<16x3xf32>
    %891 = vector.extract_strided_slice %890 {offsets = [0, 0], sizes = [16, 1], strides = [1, 1]} : vector<16x3xf32> to vector<16x1xf32>
    %892 = vector.broadcast %891 : vector<16x1xf32> to vector<16x128xf32>
    %893 = arith.addf %889, %892 : vector<16x128xf32>
    %cst_392 = arith.constant 0.000000e+00 : f32
    %894 = vector.broadcast %cst_392 : f32 to vector<16x128xf32>
    %895 = arith.maximumf %893, %894 : vector<16x128xf32>
    %896 = vector.extract_strided_slice %890 {offsets = [0, 1], sizes = [16, 1], strides = [1, 1]} : vector<16x3xf32> to vector<16x1xf32>
    %897 = vector.extract_strided_slice %890 {offsets = [0, 2], sizes = [16, 1], strides = [1, 1]} : vector<16x3xf32> to vector<16x1xf32>
    %cst_393 = arith.constant dense<0.000000e+00> : vector<16xf32>
    %898 = vector.multi_reduction <add>, %895, %cst_393 [1] : vector<16x128xf32> to vector<16xf32>
    %899 = vector.shape_cast %898 : vector<16xf32> to vector<16x1xf32>
    %cst_394 = arith.constant 1.280000e+02 : f32
    %900 = vector.broadcast %cst_394 : f32 to vector<16x1xf32>
    %901 = arith.divf %899, %900 : vector<16x1xf32>
    %902 = vector.broadcast %901 : vector<16x1xf32> to vector<16x128xf32>
    %903 = arith.subf %895, %902 : vector<16x128xf32>
    %904 = arith.mulf %903, %903 : vector<16x128xf32>
    %cst_395 = arith.constant dense<0.000000e+00> : vector<16xf32>
    %905 = vector.multi_reduction <add>, %904, %cst_395 [1] : vector<16x128xf32> to vector<16xf32>
    %906 = vector.shape_cast %905 : vector<16xf32> to vector<16x1xf32>
    %cst_396 = arith.constant 1.280000e+02 : f32
    %907 = vector.broadcast %cst_396 : f32 to vector<16x1xf32>
    %908 = arith.divf %906, %907 : vector<16x1xf32>
    %909 = vector.broadcast %901 : vector<16x1xf32> to vector<16x128xf32>
    %910 = arith.subf %895, %909 : vector<16x128xf32>
    %cst_397 = arith.constant 9.99999974E-6 : f32
    %911 = vector.broadcast %cst_397 : f32 to vector<16x1xf32>
    %912 = arith.addf %908, %911 : vector<16x1xf32>
    %913 = math.rsqrt %912 : vector<16x1xf32>
    %914 = vector.broadcast %913 : vector<16x1xf32> to vector<16x128xf32>
    %915 = arith.mulf %910, %914 : vector<16x128xf32>
    %916 = vector.broadcast %896 : vector<16x1xf32> to vector<16x128xf32>
    %917 = arith.mulf %915, %916 : vector<16x128xf32>
    %918 = vector.broadcast %897 : vector<16x1xf32> to vector<16x128xf32>
    %919 = arith.addf %917, %918 : vector<16x128xf32>
    %920 = math.tanh %919 : vector<16x128xf32>
    %c0_398 = arith.constant 0 : index
    %c0_399 = arith.constant 0 : index
    %921 = vector.load %arg20[%c0_398, %c0_399] : memref<96x16xbf16, #tpu.memory_space<vmem>>, vector<96x16xbf16>
    %922 = arith.truncf %920 : vector<16x128xf32> to vector<16x128xbf16>
    %cst_400 = arith.constant dense<0.000000e+00> : vector<96x128xf32>
    %923 = tpu.matmul %921, %922, %cst_400 {dimension_numbers = #tpu.dot_dimension_numbers<[1], [0], [0], [1], [0, 0, 1, 1], [], []>} : vector<96x16xbf16>, vector<16x128xbf16>, vector<96x128xf32> -> vector<96x128xf32>
    %c0_401 = arith.constant 0 : index
    %c0_402 = arith.constant 0 : index
    %924 = vector.load %arg21[%c0_401, %c0_402] : memref<96x1xf32, #tpu.memory_space<vmem>>, vector<96x1xf32>
    %925 = vector.broadcast %924 : vector<96x1xf32> to vector<96x128xf32>
    %926 = arith.addf %923, %925 : vector<96x128xf32>
    %cst_403 = arith.constant dense<0xFF800000> : vector<96xf32>
    %927 = vector.multi_reduction <maximumf>, %926, %cst_403 [1] : vector<96x128xf32> to vector<96xf32>
    %928 = vector.shape_cast %927 : vector<96xf32> to vector<96x1xf32>
    %929 = vector.broadcast %928 : vector<96x1xf32> to vector<96x128xf32>
    %930 = arith.subf %926, %929 : vector<96x128xf32>
    %931 = math.exp %930 : vector<96x128xf32>
    %cst_404 = arith.constant dense<0.000000e+00> : vector<96x2xf32>
    %932 = tpu.matmul %931, %0, %cst_404 {dimension_numbers = #tpu.dot_dimension_numbers<[1], [0], [0], [1], [0, 0, 1, 1], [], []>} : vector<96x128xf32>, vector<128x2xf32>, vector<96x2xf32> -> vector<96x2xf32>
    %933 = tpu.reciprocal %932 {approx = true} : vector<96x2xf32> -> vector<96x2xf32>
    %cst_405 = arith.constant dense<0.000000e+00> : vector<96x128xf32>
    %934 = tpu.matmul %933, %1, %cst_405 {dimension_numbers = #tpu.dot_dimension_numbers<[1], [0], [0], [1], [0, 0, 1, 1], [], []>} : vector<96x2xf32>, vector<2x128xf32>, vector<96x128xf32> -> vector<96x128xf32>
    %935 = arith.mulf %931, %934 : vector<96x128xf32>
    %936 = arith.mulf %935, %862 : vector<96x128xf32>
    %cst_406 = arith.constant dense<0.000000e+00> : vector<96x2xf32>
    %937 = tpu.matmul %936, %0, %cst_406 {dimension_numbers = #tpu.dot_dimension_numbers<[1], [0], [0], [1], [0, 0, 1, 1], [], []>} : vector<96x128xf32>, vector<128x2xf32>, vector<96x2xf32> -> vector<96x2xf32>
    %cst_407 = arith.constant dense<0.000000e+00> : vector<96x128xf32>
    %938 = tpu.matmul %937, %1, %cst_407 {dimension_numbers = #tpu.dot_dimension_numbers<[1], [0], [0], [1], [0, 0, 1, 1], [], []>} : vector<96x2xf32>, vector<2x128xf32>, vector<96x128xf32> -> vector<96x128xf32>
    %939 = arith.subf %862, %938 : vector<96x128xf32>
    %940 = arith.mulf %935, %939 : vector<96x128xf32>
    %941 = arith.mulf %940, %939 : vector<96x128xf32>
    %cst_408 = arith.constant dense<0.000000e+00> : vector<96x2xf32>
    %942 = tpu.matmul %941, %0, %cst_408 {dimension_numbers = #tpu.dot_dimension_numbers<[1], [0], [0], [1], [0, 0, 1, 1], [], []>} : vector<96x128xf32>, vector<128x2xf32>, vector<96x2xf32> -> vector<96x2xf32>
    %cst_409 = arith.constant 9.99999996E-13 : f32
    %943 = vector.broadcast %cst_409 : f32 to vector<96x2xf32>
    %944 = arith.maximumf %942, %943 : vector<96x2xf32>
    %945 = math.sqrt %944 : vector<96x2xf32>
    %c0_410 = arith.constant 0 : index
    %c0_411 = arith.constant 0 : index
    %c0_412 = arith.constant 0 : index
    %946 = vector.load %arg23[%c0_410, %c0_411, %c0_412] : memref<2x32x96xbf16, #tpu.memory_space<vmem>>, vector<1x32x96xbf16>
    %947 = vector.shape_cast %946 : vector<1x32x96xbf16> to vector<32x96xbf16>
    %c0_413 = arith.constant 0 : index
    %c0_414 = arith.constant 0 : index
    %c0_415 = arith.constant 0 : index
    %948 = vector.load %arg22[%c0_413, %c0_414, %c0_415] : memref<2x96x2xf32, #tpu.memory_space<vmem>>, vector<1x96x2xf32>
    %949 = vector.shape_cast %948 : vector<1x96x2xf32> to vector<96x2xf32>
    %cst_416 = arith.constant dense<0.000000e+00> : vector<96xf32>
    %950 = vector.multi_reduction <add>, %937, %cst_416 [1] : vector<96x2xf32> to vector<96xf32>
    %951 = vector.shape_cast %950 : vector<96xf32> to vector<96x1xf32>
    %cst_417 = arith.constant 2.000000e+00 : f32
    %952 = vector.broadcast %cst_417 : f32 to vector<96x1xf32>
    %953 = arith.divf %951, %952 : vector<96x1xf32>
    %954 = vector.broadcast %953 : vector<96x1xf32> to vector<96x2xf32>
    %955 = arith.subf %937, %954 : vector<96x2xf32>
    %956 = arith.mulf %955, %955 : vector<96x2xf32>
    %cst_418 = arith.constant dense<0.000000e+00> : vector<96xf32>
    %957 = vector.multi_reduction <add>, %956, %cst_418 [1] : vector<96x2xf32> to vector<96xf32>
    %958 = vector.shape_cast %957 : vector<96xf32> to vector<96x1xf32>
    %cst_419 = arith.constant 2.000000e+00 : f32
    %959 = vector.broadcast %cst_419 : f32 to vector<96x1xf32>
    %960 = arith.divf %958, %959 : vector<96x1xf32>
    %961 = vector.broadcast %953 : vector<96x1xf32> to vector<96x2xf32>
    %962 = arith.subf %937, %961 : vector<96x2xf32>
    %cst_420 = arith.constant 9.99999974E-6 : f32
    %963 = vector.broadcast %cst_420 : f32 to vector<96x1xf32>
    %964 = arith.addf %960, %963 : vector<96x1xf32>
    %965 = math.rsqrt %964 : vector<96x1xf32>
    %966 = vector.broadcast %965 : vector<96x1xf32> to vector<96x2xf32>
    %967 = arith.mulf %962, %966 : vector<96x2xf32>
    %968 = vector.extract_strided_slice %949 {offsets = [0, 0], sizes = [96, 1], strides = [1, 1]} : vector<96x2xf32> to vector<96x1xf32>
    %969 = vector.broadcast %968 : vector<96x1xf32> to vector<96x2xf32>
    %970 = arith.mulf %967, %969 : vector<96x2xf32>
    %971 = vector.extract_strided_slice %949 {offsets = [0, 1], sizes = [96, 1], strides = [1, 1]} : vector<96x2xf32> to vector<96x1xf32>
    %972 = vector.broadcast %971 : vector<96x1xf32> to vector<96x2xf32>
    %973 = arith.addf %970, %972 : vector<96x2xf32>
    %974 = arith.truncf %973 : vector<96x2xf32> to vector<96x2xbf16>
    %cst_421 = arith.constant dense<0.000000e+00> : vector<32x2xf32>
    %975 = tpu.matmul %947, %974, %cst_421 {dimension_numbers = #tpu.dot_dimension_numbers<[1], [0], [0], [1], [0, 0, 1, 1], [], []>} : vector<32x96xbf16>, vector<96x2xbf16>, vector<32x2xf32> -> vector<32x2xf32>
    %c1_422 = arith.constant 1 : index
    %c0_423 = arith.constant 0 : index
    %c0_424 = arith.constant 0 : index
    %976 = vector.load %arg23[%c1_422, %c0_423, %c0_424] : memref<2x32x96xbf16, #tpu.memory_space<vmem>>, vector<1x32x96xbf16>
    %977 = vector.shape_cast %976 : vector<1x32x96xbf16> to vector<32x96xbf16>
    %c1_425 = arith.constant 1 : index
    %c0_426 = arith.constant 0 : index
    %c0_427 = arith.constant 0 : index
    %978 = vector.load %arg22[%c1_425, %c0_426, %c0_427] : memref<2x96x2xf32, #tpu.memory_space<vmem>>, vector<1x96x2xf32>
    %979 = vector.shape_cast %978 : vector<1x96x2xf32> to vector<96x2xf32>
    %cst_428 = arith.constant dense<0.000000e+00> : vector<96xf32>
    %980 = vector.multi_reduction <add>, %945, %cst_428 [1] : vector<96x2xf32> to vector<96xf32>
    %981 = vector.shape_cast %980 : vector<96xf32> to vector<96x1xf32>
    %cst_429 = arith.constant 2.000000e+00 : f32
    %982 = vector.broadcast %cst_429 : f32 to vector<96x1xf32>
    %983 = arith.divf %981, %982 : vector<96x1xf32>
    %984 = vector.broadcast %983 : vector<96x1xf32> to vector<96x2xf32>
    %985 = arith.subf %945, %984 : vector<96x2xf32>
    %986 = arith.mulf %985, %985 : vector<96x2xf32>
    %cst_430 = arith.constant dense<0.000000e+00> : vector<96xf32>
    %987 = vector.multi_reduction <add>, %986, %cst_430 [1] : vector<96x2xf32> to vector<96xf32>
    %988 = vector.shape_cast %987 : vector<96xf32> to vector<96x1xf32>
    %cst_431 = arith.constant 2.000000e+00 : f32
    %989 = vector.broadcast %cst_431 : f32 to vector<96x1xf32>
    %990 = arith.divf %988, %989 : vector<96x1xf32>
    %991 = vector.broadcast %983 : vector<96x1xf32> to vector<96x2xf32>
    %992 = arith.subf %945, %991 : vector<96x2xf32>
    %cst_432 = arith.constant 9.99999974E-6 : f32
    %993 = vector.broadcast %cst_432 : f32 to vector<96x1xf32>
    %994 = arith.addf %990, %993 : vector<96x1xf32>
    %995 = math.rsqrt %994 : vector<96x1xf32>
    %996 = vector.broadcast %995 : vector<96x1xf32> to vector<96x2xf32>
    %997 = arith.mulf %992, %996 : vector<96x2xf32>
    %998 = vector.extract_strided_slice %979 {offsets = [0, 0], sizes = [96, 1], strides = [1, 1]} : vector<96x2xf32> to vector<96x1xf32>
    %999 = vector.broadcast %998 : vector<96x1xf32> to vector<96x2xf32>
    %1000 = arith.mulf %997, %999 : vector<96x2xf32>
    %1001 = vector.extract_strided_slice %979 {offsets = [0, 1], sizes = [96, 1], strides = [1, 1]} : vector<96x2xf32> to vector<96x1xf32>
    %1002 = vector.broadcast %1001 : vector<96x1xf32> to vector<96x2xf32>
    %1003 = arith.addf %1000, %1002 : vector<96x2xf32>
    %1004 = arith.truncf %1003 : vector<96x2xf32> to vector<96x2xbf16>
    %cst_433 = arith.constant dense<0.000000e+00> : vector<32x2xf32>
    %1005 = tpu.matmul %977, %1004, %cst_433 {dimension_numbers = #tpu.dot_dimension_numbers<[1], [0], [0], [1], [0, 0, 1, 1], [], []>} : vector<32x96xbf16>, vector<96x2xbf16>, vector<32x2xf32> -> vector<32x2xf32>
    %1006 = arith.addf %975, %1005 : vector<32x2xf32>
    %c0_434 = arith.constant 0 : index
    %c0_435 = arith.constant 0 : index
    %1007 = vector.load %arg24[%c0_434, %c0_435] : memref<32x1xf32, #tpu.memory_space<vmem>>, vector<32x1xf32>
    %1008 = vector.broadcast %1007 : vector<32x1xf32> to vector<32x2xf32>
    %1009 = arith.addf %1006, %1008 : vector<32x2xf32>
    %c0_436 = arith.constant 0 : index
    %c0_437 = arith.constant 0 : index
    %1010 = vector.load %arg25[%c0_436, %c0_437] : memref<32x2xf32, #tpu.memory_space<vmem>>, vector<32x2xf32>
    tpu.vector_store %arg25[%c0_436, %c0_437], %1009 {strides = array<i32>} : memref<32x2xf32, #tpu.memory_space<vmem>>, vector<32x2xf32>,
    return
  }
  func.func @transform_0(%arg0: i32) -> (i32, i32) {
    %c0_i32 = arith.constant 0 : i32
    %c0_i32_0 = arith.constant 0 : i32
    %c0_i32_1 = arith.constant 0 : i32
    return %c0_i32, %c0_i32_0 : i32, i32
  }
  func.func @transform_1(%arg0: i32) -> (i32, i32) {
    %c0_i32 = arith.constant 0 : i32
    %c0_i32_0 = arith.constant 0 : i32
    %c0_i32_1 = arith.constant 0 : i32
    return %c0_i32, %c0_i32_0 : i32, i32
  }
  func.func @transform_2(%arg0: i32) -> (i32, i32, i32) {
    %c0_i32 = arith.constant 0 : i32
    %c0_i32_0 = arith.constant 0 : i32
    %c0_i32_1 = arith.constant 0 : i32
    %c0_i32_2 = arith.constant 0 : i32
    return %c0_i32, %c0_i32_0, %c0_i32_1 : i32, i32, i32
  }
  func.func @transform_3(%arg0: i32) -> (i32, i32) {
    %c0_i32 = arith.constant 0 : i32
    %c0_i32_0 = arith.constant 0 : i32
    %c0_i32_1 = arith.constant 0 : i32
    return %c0_i32, %c0_i32_0 : i32, i32
  }
  func.func @transform_4(%arg0: i32) -> (i32, i32) {
    %c0_i32 = arith.constant 0 : i32
    %c0_i32_0 = arith.constant 0 : i32
    %c0_i32_1 = arith.constant 0 : i32
    return %c0_i32, %c0_i32_0 : i32, i32
  }
  func.func @transform_5(%arg0: i32) -> (i32, i32, i32) {
    %c0_i32 = arith.constant 0 : i32
    %c0_i32_0 = arith.constant 0 : i32
    %c0_i32_1 = arith.constant 0 : i32
    %c0_i32_2 = arith.constant 0 : i32
    return %c0_i32, %c0_i32_0, %c0_i32_1 : i32, i32, i32
  }
  func.func @transform_6(%arg0: i32) -> (i32, i32) {
    %c0_i32 = arith.constant 0 : i32
    %c0_i32_0 = arith.constant 0 : i32
    %c0_i32_1 = arith.constant 0 : i32
    return %c0_i32, %c0_i32_0 : i32, i32
  }
  func.func @transform_7(%arg0: i32) -> (i32, i32, i32) {
    %c0_i32 = arith.constant 0 : i32
    %c0_i32_0 = arith.constant 0 : i32
    %c0_i32_1 = arith.constant 0 : i32
    %c0_i32_2 = arith.constant 0 : i32
    return %c0_i32, %c0_i32_0, %c0_i32_1 : i32, i32, i32
  }
  func.func @transform_8(%arg0: i32) -> (i32, i32, i32) {
    %c0_i32 = arith.constant 0 : i32
    %c0_i32_0 = arith.constant 0 : i32
    %c0_i32_1 = arith.constant 0 : i32
    %c0_i32_2 = arith.constant 0 : i32
    return %c0_i32, %c0_i32_0, %c0_i32_1 : i32, i32, i32
  }
  func.func @transform_9(%arg0: i32) -> (i32, i32, i32) {
    %c0_i32 = arith.constant 0 : i32
    %c0_i32_0 = arith.constant 0 : i32
    %c0_i32_1 = arith.constant 0 : i32
    %c0_i32_2 = arith.constant 0 : i32
    return %c0_i32, %c0_i32_0, %c0_i32_1 : i32, i32, i32
  }
  func.func @transform_10(%arg0: i32) -> (i32, i32, i32) {
    %c0_i32 = arith.constant 0 : i32
    %c0_i32_0 = arith.constant 0 : i32
    %c0_i32_1 = arith.constant 0 : i32
    %c0_i32_2 = arith.constant 0 : i32
    return %c0_i32, %c0_i32_0, %c0_i32_1 : i32, i32, i32
  }
  func.func @transform_11(%arg0: i32) -> (i32, i32, i32) {
    %c0_i32 = arith.constant 0 : i32
    %c0_i32_0 = arith.constant 0 : i32
    %c0_i32_1 = arith.constant 0 : i32
    %c0_i32_2 = arith.constant 0 : i32
    return %c0_i32, %c0_i32_0, %c0_i32_1 : i32, i32, i32
  }
  func.func @transform_12(%arg0: i32) -> (i32, i32, i32) {
    %c0_i32 = arith.constant 0 : i32
    %c0_i32_0 = arith.constant 0 : i32
    %c0_i32_1 = arith.constant 0 : i32
    %c0_i32_2 = arith.constant 0 : i32
    return %c0_i32, %c0_i32_0, %c0_i32_1 : i32, i32, i32
  }
  func.func @transform_13(%arg0: i32) -> (i32, i32, i32) {
    %c0_i32 = arith.constant 0 : i32
    %c0_i32_0 = arith.constant 0 : i32
    %c0_i32_1 = arith.constant 0 : i32
    %c0_i32_2 = arith.constant 0 : i32
    return %c0_i32, %c0_i32_0, %c0_i32_1 : i32, i32, i32
  }
  func.func @transform_14(%arg0: i32) -> (i32, i32, i32) {
    %c0_i32 = arith.constant 0 : i32
    %c0_i32_0 = arith.constant 0 : i32
    %c0_i32_1 = arith.constant 0 : i32
    %c0_i32_2 = arith.constant 0 : i32
    return %c0_i32, %c0_i32_0, %c0_i32_1 : i32, i32, i32
  }
  func.func @transform_15(%arg0: i32) -> (i32, i32, i32) {
    %c0_i32 = arith.constant 0 : i32
    %c0_i32_0 = arith.constant 0 : i32
    %c0_i32_1 = arith.constant 0 : i32
    %c0_i32_2 = arith.constant 0 : i32
    return %c0_i32, %c0_i32_0, %c0_i32_1 : i32, i32, i32
  }
  func.func @transform_16(%arg0: i32) -> (i32, i32) {
    %c0_i32 = arith.constant 0 : i32
    %c0_i32_0 = arith.constant 0 : i32
    %c0_i32_1 = arith.constant 0 : i32
    return %c0_i32, %c0_i32_0 : i32, i32
  }
  func.func @transform_17(%arg0: i32) -> (i32, i32, i32) {
    %c0_i32 = arith.constant 0 : i32
    %c0_i32_0 = arith.constant 0 : i32
    %c0_i32_1 = arith.constant 0 : i32
    %c0_i32_2 = arith.constant 0 : i32
    return %c0_i32, %c0_i32_0, %c0_i32_1 : i32, i32, i32
  }
  func.func @transform_18(%arg0: i32) -> (i32, i32) {
    %c0_i32 = arith.constant 0 : i32
    %c0_i32_0 = arith.constant 0 : i32
    %c0_i32_1 = arith.constant 0 : i32
    return %c0_i32, %c0_i32_0 : i32, i32
  }
  func.func @transform_19(%arg0: i32) -> (i32, i32) {
    %c0_i32 = arith.constant 0 : i32
    %c0_i32_0 = arith.constant 0 : i32
    %c0_i32_1 = arith.constant 0 : i32
    return %c0_i32, %c0_i32_0 : i32, i32
  }
  func.func @transform_20(%arg0: i32) -> (i32, i32) {
    %c0_i32 = arith.constant 0 : i32
    %c0_i32_0 = arith.constant 0 : i32
    %c0_i32_1 = arith.constant 0 : i32
    return %c0_i32, %c0_i32_0 : i32, i32
  }
  func.func @transform_21(%arg0: i32) -> (i32, i32, i32) {
    %c0_i32 = arith.constant 0 : i32
    %c0_i32_0 = arith.constant 0 : i32
    %c0_i32_1 = arith.constant 0 : i32
    %c0_i32_2 = arith.constant 0 : i32
    return %c0_i32, %c0_i32_0, %c0_i32_1 : i32, i32, i32
  }
  func.func @transform_22(%arg0: i32) -> (i32, i32, i32) {
    %c0_i32 = arith.constant 0 : i32
    %c0_i32_0 = arith.constant 0 : i32
    %c0_i32_1 = arith.constant 0 : i32
    %c0_i32_2 = arith.constant 0 : i32
    return %c0_i32, %c0_i32_0, %c0_i32_1 : i32, i32, i32
  }
  func.func @transform_23(%arg0: i32) -> (i32, i32) {
    %c0_i32 = arith.constant 0 : i32
    %c0_i32_0 = arith.constant 0 : i32
    %c0_i32_1 = arith.constant 0 : i32
    return %c0_i32, %c0_i32_0 : i32, i32
  }
  func.func @transform_24(%arg0: i32) -> (i32, i32) {
    %c0_i32 = arith.constant 0 : i32
    %c0_i32_0 = arith.constant 0 : i32
    %c0_i32_1 = arith.constant 0 : i32
    return %c0_i32, %c0_i32_0 : i32, i32
  }
}

</mosaic_0001>

<llo_original>
// kernel: ecapa_tdnn_forward.1
$region0: #{ecapa_tdnn_forward.1}
  #allocation0 [shape = 'u32[]', space=smem, size = 0x4, offset = 0x4, fixed_abs, tag = 'smem constant byte address 0x4 - core index']
  #allocation1 [shape = 'u32[144,128]{1,0:T(1,128)}', space=vmem, size = 0x12000, scoped, tag = 'internal scratch']
  %s0 = inlined_call_operand.vmem [shape: f32[24,128], index: 0, kind: input, shape index: {}]
  %s1 = inlined_call_operand.vmem [shape: f32[128,512], index: 1, kind: input, shape index: {}]
  %s2 = inlined_call_operand.vmem [shape: f32[3,128,256], index: 2, kind: input, shape index: {}]
  %s3 = inlined_call_operand.vmem [shape: f32[128,2], index: 3, kind: input, shape index: {}]
  %s4 = inlined_call_operand.vmem [shape: f32[2,128], index: 4, kind: input, shape index: {}]
  %s5 = inlined_call_operand.vmem [shape: bf16[5,32,24], index: 5, kind: input, shape index: {}]
  %s6 = inlined_call_operand.vmem [shape: f32[32,3], index: 6, kind: input, shape index: {}]
  %s7 = inlined_call_operand.vmem [shape: bf16[6,32,32], index: 7, kind: input, shape index: {}]
  %s8 = inlined_call_operand.vmem [shape: f32[6,32,3], index: 8, kind: input, shape index: {}]
  %s9 = inlined_call_operand.vmem [shape: bf16[27,8,8], index: 9, kind: input, shape index: {}]
  %s10 = inlined_call_operand.vmem [shape: f32[9,8,3], index: 10, kind: input, shape index: {}]
  %s11 = inlined_call_operand.vmem [shape: bf16[3,16,32], index: 11, kind: input, shape index: {}]
  %s12 = inlined_call_operand.vmem [shape: f32[3,16,1], index: 12, kind: input, shape index: {}]
  %s13 = inlined_call_operand.vmem [shape: bf16[3,32,16], index: 13, kind: input, shape index: {}]
  %s14 = inlined_call_operand.vmem [shape: f32[3,32,1], index: 14, kind: input, shape index: {}]
  %s15 = inlined_call_operand.vmem [shape: bf16[3,96,32], index: 15, kind: input, shape index: {}]
  %s16 = inlined_call_operand.vmem [shape: f32[96,3], index: 16, kind: input, shape index: {}]
  %s17 = inlined_call_operand.vmem [shape: bf16[3,16,96], index: 17, kind: input, shape index: {}]
  %s18 = inlined_call_operand.vmem [shape: f32[16,3], index: 18, kind: input, shape index: {}]
  %s19 = inlined_call_operand.vmem [shape: bf16[96,16], index: 19, kind: input, shape index: {}]
  %s20 = inlined_call_operand.vmem [shape: f32[96,1], index: 20, kind: input, shape index: {}]
  %s21 = inlined_call_operand.vmem [shape: f32[2,96,2], index: 21, kind: input, shape index: {}]
  %s22 = inlined_call_operand.vmem [shape: bf16[2,32,96], index: 22, kind: input, shape index: {}]
  %s23 = inlined_call_operand.vmem [shape: f32[32,1], index: 23, kind: input, shape index: {}]
  %s24 = inlined_call_operand.vmem [shape: f32[32,2], index: 24, kind: output, shape index: {}]
  %s25 = sld [smem:[#allocation0]]
  $region106: #{ecapa_tdnn_forward.1} parent=0
    _
  %s27 = ssub.s32 1, %s25
  %s28 = scalar_select 0, %s27, %s25
  // Predicated region
  $region2: #{ecapa_tdnn_forward.1} parent=0 // pred_check
    _
  $region3: #{ecapa_tdnn_forward.1} parent=0 // pred_check_branch
    %30 = sbr.rel (0) target = $region5
  $region4: #{ecapa_tdnn_forward.1} parent=0 // pred_region
    _
  $region5: #{ecapa_tdnn_forward.1} parent=0 // pred_fallthru
    _
  // Predicated region
  $region6: #{ecapa_tdnn_forward.1} parent=0 // pred_check
    _
  $region7: #{ecapa_tdnn_forward.1} parent=0 // pred_check_branch
    %32 = sbr.rel (0) target = $region9
  $region8: #{ecapa_tdnn_forward.1} parent=0 // pred_region
    _
  $region9: #{ecapa_tdnn_forward.1} parent=0 // pred_fallthru
    _
  // Predicated region
  $region10: #{ecapa_tdnn_forward.1} parent=0 // pred_check
    _
  $region11: #{ecapa_tdnn_forward.1} parent=0 // pred_check_branch
    %34 = sbr.rel (0) target = $region13
  $region12: #{ecapa_tdnn_forward.1} parent=0 // pred_region
    _
  $region13: #{ecapa_tdnn_forward.1} parent=0 // pred_fallthru
    _
  // Predicated region
  $region14: #{ecapa_tdnn_forward.1} parent=0 // pred_check
    _
  $region15: #{ecapa_tdnn_forward.1} parent=0 // pred_check_branch
    %36 = sbr.rel (0) target = $region17
  $region16: #{ecapa_tdnn_forward.1} parent=0 // pred_region
    _
  $region17: #{ecapa_tdnn_forward.1} parent=0 // pred_fallthru
    _
  // Predicated region
  $region18: #{ecapa_tdnn_forward.1} parent=0 // pred_check
    _
  $region19: #{ecapa_tdnn_forward.1} parent=0 // pred_check_branch
    %38 = sbr.rel (0) target = $region21
  $region20: #{ecapa_tdnn_forward.1} parent=0 // pred_region
    _
  $region21: #{ecapa_tdnn_forward.1} parent=0 // pred_fallthru
    _
  // Predicated region
  $region22: #{ecapa_tdnn_forward.1} parent=0 // pred_check
    _
  $region23: #{ecapa_tdnn_forward.1} parent=0 // pred_check_branch
    %40 = sbr.rel (0) target = $region25
  $region24: #{ecapa_tdnn_forward.1} parent=0 // pred_region
    _
  $region25: #{ecapa_tdnn_forward.1} parent=0 // pred_fallthru
    _
  // Predicated region
  $region26: #{ecapa_tdnn_forward.1} parent=0 // pred_check
    _
  $region27: #{ecapa_tdnn_forward.1} parent=0 // pred_check_branch
    %42 = sbr.rel (0) target = $region29
  $region28: #{ecapa_tdnn_forward.1} parent=0 // pred_region
    _
  $region29: #{ecapa_tdnn_forward.1} parent=0 // pred_fallthru
    _
  // Predicated region
  $region30: #{ecapa_tdnn_forward.1} parent=0 // pred_check
    _
  $region31: #{ecapa_tdnn_forward.1} parent=0 // pred_check_branch
    %44 = sbr.rel (0) target = $region33
  $region32: #{ecapa_tdnn_forward.1} parent=0 // pred_region
    _
  $region33: #{ecapa_tdnn_forward.1} parent=0 // pred_fallthru
    _
  // Predicated region
  $region34: #{ecapa_tdnn_forward.1} parent=0 // pred_check
    _
  $region35: #{ecapa_tdnn_forward.1} parent=0 // pred_check_branch
    %46 = sbr.rel (0) target = $region37
  $region36: #{ecapa_tdnn_forward.1} parent=0 // pred_region
    _
  $region37: #{ecapa_tdnn_forward.1} parent=0 // pred_fallthru
    _
  // Predicated region
  $region38: #{ecapa_tdnn_forward.1} parent=0 // pred_check
    _
  $region39: #{ecapa_tdnn_forward.1} parent=0 // pred_check_branch
    %48 = sbr.rel (0) target = $region41
  $region40: #{ecapa_tdnn_forward.1} parent=0 // pred_region
    _
  $region41: #{ecapa_tdnn_forward.1} parent=0 // pred_fallthru
    _
  // Predicated region
  $region42: #{ecapa_tdnn_forward.1} parent=0 // pred_check
    _
  $region43: #{ecapa_tdnn_forward.1} parent=0 // pred_check_branch
    %50 = sbr.rel (0) target = $region45
  $region44: #{ecapa_tdnn_forward.1} parent=0 // pred_region
    _
  $region45: #{ecapa_tdnn_forward.1} parent=0 // pred_fallthru
    _
  // Predicated region
  $region46: #{ecapa_tdnn_forward.1} parent=0 // pred_check
    _
  $region47: #{ecapa_tdnn_forward.1} parent=0 // pred_check_branch
    %52 = sbr.rel (0) target = $region49
  $region48: #{ecapa_tdnn_forward.1} parent=0 // pred_region
    _
  $region49: #{ecapa_tdnn_forward.1} parent=0 // pred_fallthru
    _
  // Predicated region
  $region50: #{ecapa_tdnn_forward.1} parent=0 // pred_check
    _
  $region51: #{ecapa_tdnn_forward.1} parent=0 // pred_check_branch
    %54 = sbr.rel (0) target = $region53
  $region52: #{ecapa_tdnn_forward.1} parent=0 // pred_region
    _
  $region53: #{ecapa_tdnn_forward.1} parent=0 // pred_fallthru
    _
  // Predicated region
  $region54: #{ecapa_tdnn_forward.1} parent=0 // pred_check
    _
  $region55: #{ecapa_tdnn_forward.1} parent=0 // pred_check_branch
    %56 = sbr.rel (0) target = $region57
  $region56: #{ecapa_tdnn_forward.1} parent=0 // pred_region
    _
  $region57: #{ecapa_tdnn_forward.1} parent=0 // pred_fallthru
    _
  // Predicated region
  $region58: #{ecapa_tdnn_forward.1} parent=0 // pred_check
    _
  $region59: #{ecapa_tdnn_forward.1} parent=0 // pred_check_branch
    %58 = sbr.rel (0) target = $region61
  $region60: #{ecapa_tdnn_forward.1} parent=0 // pred_region
    _
  $region61: #{ecapa_tdnn_forward.1} parent=0 // pred_fallthru
    _
  // Predicated region
  $region62: #{ecapa_tdnn_forward.1} parent=0 // pred_check
    _
  $region63: #{ecapa_tdnn_forward.1} parent=0 // pred_check_branch
    %60 = sbr.rel (0) target = $region65
  $region64: #{ecapa_tdnn_forward.1} parent=0 // pred_region
    _
  $region65: #{ecapa_tdnn_forward.1} parent=0 // pred_fallthru
    _
  // Predicated region
  $region66: #{ecapa_tdnn_forward.1} parent=0 // pred_check
    _
  $region67: #{ecapa_tdnn_forward.1} parent=0 // pred_check_branch
    %62 = sbr.rel (0) target = $region69
  $region68: #{ecapa_tdnn_forward.1} parent=0 // pred_region
    _
  $region69: #{ecapa_tdnn_forward.1} parent=0 // pred_fallthru
    _
  // Predicated region
  $region70: #{ecapa_tdnn_forward.1} parent=0 // pred_check
    _
  $region71: #{ecapa_tdnn_forward.1} parent=0 // pred_check_branch
    %64 = sbr.rel (0) target = $region73
  $region72: #{ecapa_tdnn_forward.1} parent=0 // pred_region
    _
  $region73: #{ecapa_tdnn_forward.1} parent=0 // pred_fallthru
    _
  // Predicated region
  $region74: #{ecapa_tdnn_forward.1} parent=0 // pred_check
    _
  $region75: #{ecapa_tdnn_forward.1} parent=0 // pred_check_branch
    %66 = sbr.rel (0) target = $region77
  $region76: #{ecapa_tdnn_forward.1} parent=0 // pred_region
    _
  $region77: #{ecapa_tdnn_forward.1} parent=0 // pred_fallthru
    _
  // Predicated region
  $region78: #{ecapa_tdnn_forward.1} parent=0 // pred_check
    _
  $region79: #{ecapa_tdnn_forward.1} parent=0 // pred_check_branch
    %68 = sbr.rel (0) target = $region81
  $region80: #{ecapa_tdnn_forward.1} parent=0 // pred_region
    _
  $region81: #{ecapa_tdnn_forward.1} parent=0 // pred_fallthru
    _
  // Predicated region
  $region82: #{ecapa_tdnn_forward.1} parent=0 // pred_check
    _
  $region83: #{ecapa_tdnn_forward.1} parent=0 // pred_check_branch
    %70 = sbr.rel (0) target = $region85
  $region84: #{ecapa_tdnn_forward.1} parent=0 // pred_region
    _
  $region85: #{ecapa_tdnn_forward.1} parent=0 // pred_fallthru
    _
  // Predicated region
  $region86: #{ecapa_tdnn_forward.1} parent=0 // pred_check
    _
  $region87: #{ecapa_tdnn_forward.1} parent=0 // pred_check_branch
    %72 = sbr.rel (0) target = $region89
  $region88: #{ecapa_tdnn_forward.1} parent=0 // pred_region
    _
  $region89: #{ecapa_tdnn_forward.1} parent=0 // pred_fallthru
    _
  // Predicated region
  $region90: #{ecapa_tdnn_forward.1} parent=0 // pred_check
    _
  $region91: #{ecapa_tdnn_forward.1} parent=0 // pred_check_branch
    %74 = sbr.rel (0) target = $region93
  $region92: #{ecapa_tdnn_forward.1} parent=0 // pred_region
    _
  $region93: #{ecapa_tdnn_forward.1} parent=0 // pred_fallthru
    _
  // Predicated region
  $region94: #{ecapa_tdnn_forward.1} parent=0 // pred_check
    _
  $region95: #{ecapa_tdnn_forward.1} parent=0 // pred_check_branch
    %76 = sbr.rel (0) target = $region97
  $region96: #{ecapa_tdnn_forward.1} parent=0 // pred_region
    _
  $region97: #{ecapa_tdnn_forward.1} parent=0 // pred_fallthru
    _
  %v78 = vld [vmem:[%s3] sm:$0xff]
  %v79 = vld [vmem:[%s3 + $0x8] sm:$0xff]
  %v80 = vld [vmem:[%s3 + $0x10] sm:$0xff]
  %v81 = vld [vmem:[%s3 + $0x18] sm:$0xff]
  %v82 = vld [vmem:[%s3 + $0x20] sm:$0xff]
  %v83 = vld [vmem:[%s3 + $0x28] sm:$0xff]
  %v84 = vld [vmem:[%s3 + $0x30] sm:$0xff]
  %v85 = vld [vmem:[%s3 + $0x38] sm:$0xff]
  %v86 = vld [vmem:[%s3 + $0x40] sm:$0xff]
  %v87 = vld [vmem:[%s3 + $0x48] sm:$0xff]
  %v88 = vld [vmem:[%s3 + $0x50] sm:$0xff]
  %v89 = vld [vmem:[%s3 + $0x58] sm:$0xff]
  %v90 = vld [vmem:[%s3 + $0x60] sm:$0xff]
  %v91 = vld [vmem:[%s3 + $0x68] sm:$0xff]
  %v92 = vld [vmem:[%s3 + $0x70] sm:$0xff]
  %v93 = vld [vmem:[%s3 + $0x78] sm:$0xff]
  %v94 = vld [vmem:[%s4] sm:$0x3]
  %v95 = vld [vmem:[%s0] sm:$0xff]
  %v96 = vld [vmem:[%s0 + $0x8] sm:$0xff]
  %v97 = vld [vmem:[%s0 + $0x10] sm:$0xff]
  %v98 = vld [vmem:[%s1] sm:$0xff]
  %v99 = vld [vmem:[%s1 + $0x8] sm:$0xff]
  %v100 = vld [vmem:[%s1 + $0x10] sm:$0xff]
  %v101 = vld [vmem:[%s1 + $0x18] sm:$0xff]
  %v102 = vld [vmem:[%s1 + $0x20] sm:$0xff]
  %v103 = vld [vmem:[%s1 + $0x28] sm:$0xff]
  %v104 = vld [vmem:[%s1 + $0x30] sm:$0xff]
  %v105 = vld [vmem:[%s1 + $0x38] sm:$0xff]
  %v106 = vld [vmem:[%s1 + $0x40] sm:$0xff]
  %v107 = vld [vmem:[%s1 + $0x48] sm:$0xff]
  %v108 = vld [vmem:[%s1 + $0x50] sm:$0xff]
  %v109 = vld [vmem:[%s1 + $0x58] sm:$0xff]
  %v110 = vld [vmem:[%s1 + $0x60] sm:$0xff]
  %v111 = vld [vmem:[%s1 + $0x68] sm:$0xff]
  %v112 = vld [vmem:[%s1 + $0x70] sm:$0xff]
  %v113 = vld [vmem:[%s1 + $0x78] sm:$0xff]
  %v114 = vld [vmem:[%s1 + $0x80] sm:$0xff]
  %v115 = vld [vmem:[%s1 + $0x88] sm:$0xff]
  %v116 = vld [vmem:[%s1 + $0x90] sm:$0xff]
  %v117 = vld [vmem:[%s1 + $0x98] sm:$0xff]
  %v118 = vld [vmem:[%s1 + $0xa0] sm:$0xff]
  %v119 = vld [vmem:[%s1 + $0xa8] sm:$0xff]
  %v120 = vld [vmem:[%s1 + $0xb0] sm:$0xff]
  %v121 = vld [vmem:[%s1 + $0xb8] sm:$0xff]
  %v122 = vld [vmem:[%s1 + $0xc0] sm:$0xff]
  %v123 = vld [vmem:[%s1 + $0xc8] sm:$0xff]
  %v124 = vld [vmem:[%s1 + $0xd0] sm:$0xff]
  %v125 = vld [vmem:[%s1 + $0xd8] sm:$0xff]
  %v126 = vld [vmem:[%s1 + $0xe0] sm:$0xff]
  %v127 = vld [vmem:[%s1 + $0xe8] sm:$0xff]
  %v128 = vld [vmem:[%s1 + $0xf0] sm:$0xff]
  %v129 = vld [vmem:[%s1 + $0xf8] sm:$0xff]
  %v130 = vld [vmem:[%s1 + $0x100] sm:$0xff]
  %v131 = vld [vmem:[%s1 + $0x108] sm:$0xff]
  %v132 = vld [vmem:[%s1 + $0x110] sm:$0xff]
  %v133 = vld [vmem:[%s1 + $0x118] sm:$0xff]
  %v134 = vld [vmem:[%s1 + $0x120] sm:$0xff]
  %v135 = vld [vmem:[%s1 + $0x128] sm:$0xff]
  %v136 = vld [vmem:[%s1 + $0x130] sm:$0xff]
  %v137 = vld [vmem:[%s1 + $0x138] sm:$0xff]
  %v138 = vld [vmem:[%s1 + $0x140] sm:$0xff]
  %v139 = vld [vmem:[%s1 + $0x148] sm:$0xff]
  %v140 = vld [vmem:[%s1 + $0x150] sm:$0xff]
  %v141 = vld [vmem:[%s1 + $0x158] sm:$0xff]
  %v142 = vld [vmem:[%s1 + $0x160] sm:$0xff]
  %v143 = vld [vmem:[%s1 + $0x168] sm:$0xff]
  %v144 = vld [vmem:[%s1 + $0x170] sm:$0xff]
  %v145 = vld [vmem:[%s1 + $0x178] sm:$0xff]
  %v146 = vld [vmem:[%s1 + $0x180] sm:$0xff]
  %v147 = vld [vmem:[%s1 + $0x188] sm:$0xff]
  %v148 = vld [vmem:[%s1 + $0x190] sm:$0xff]
  %v149 = vld [vmem:[%s1 + $0x198] sm:$0xff]
  %v150 = vld [vmem:[%s1 + $0x1a0] sm:$0xff]
  %v151 = vld [vmem:[%s1 + $0x1a8] sm:$0xff]
  %v152 = vld [vmem:[%s1 + $0x1b0] sm:$0xff]
  %v153 = vld [vmem:[%s1 + $0x1b8] sm:$0xff]
  %v154 = vld [vmem:[%s1 + $0x1c0] sm:$0xff]
  %v155 = vld [vmem:[%s1 + $0x1c8] sm:$0xff]
  %v156 = vld [vmem:[%s1 + $0x1d0] sm:$0xff]
  %v157 = vld [vmem:[%s1 + $0x1d8] sm:$0xff]
  %v158 = vld [vmem:[%s1 + $0x1e0] sm:$0xff]
  %v159 = vld [vmem:[%s1 + $0x1e8] sm:$0xff]
  %v160 = vld [vmem:[%s1 + $0x1f0] sm:$0xff]
  %v161 = vld [vmem:[%s1 + $0x1f8] sm:$0xff]
  %162 = vmatprep.subr.mxu0 %v159
  %163 = vmatpush1.msra.mxu0 %v158
  %164 = vmatprep.subr.mxu0 %v155
  %165 = vmatpush1.msra.mxu0 %v154
  %166 = vmatprep.subr.mxu0 %v151
  %167 = vmatpush1.msra.mxu0 %v150
  %168 = vmatprep.subr.mxu0 %v147
  %169 = vmatpush1.msra.mxu0 %v146
  %170 = vmatprep.subr.mxu0 %v143
  %171 = vmatpush1.msra.mxu0 %v142
  %172 = vmatprep.subr.mxu0 %v139
  %173 = vmatpush1.msra.mxu0 %v138
  %174 = vmatprep.subr.mxu0 %v135
  %175 = vmatpush1.msra.mxu0 %v134
  %176 = vmatprep.subr.mxu0 %v131
  %177 = vmatpush1.msra.mxu0 %v130
  %178 = vmatprep.subr.mxu0 %v127
  %179 = vmatpush1.msra.mxu0 %v126
  %180 = vmatprep.subr.mxu0 %v123
  %181 = vmatpush1.msra.mxu0 %v122
  %182 = vmatprep.subr.mxu0 %v119
  %183 = vmatpush1.msra.mxu0 %v118
  %184 = vmatprep.subr.mxu0 %v115
  %185 = vmatpush1.msra.mxu0 %v114
  %186 = vmatprep.subr.mxu0 %v111
  %187 = vmatpush1.msra.mxu0 %v110
  %188 = vmatprep.subr.mxu0 %v107
  %189 = vmatpush1.msra.mxu0 %v106
  %190 = vmatprep.subr.mxu0 %v103
  %191 = vmatpush1.msra.mxu0 %v102
  %192 = vmatprep.subr.mxu0 %v99
  %193 = vmatpush1.msra.mxu0 %v98
  %194 = vmatprep.subr.mxu0 0.0
  %195 = vmatpush2.msra.mxu0 0.0
  %196 = vmatprep.subr.mxu0 0.0
  %197 = vmatpush2.msra.mxu0 0.0
  %198 = vmatprep.subr.mxu0 0.0
  %199 = vmatpush2.msra.mxu0 0.0
  %200 = vmatprep.subr.mxu0 0.0
  %201 = vmatpush2.msra.mxu0 0.0
  %202 = vmatprep.subr.mxu0 0.0
  %203 = vmatpush2.msra.mxu0 0.0
  %204 = vmatprep.subr.mxu0 0.0
  %205 = vmatpush2.msra.mxu0 0.0
  %206 = vmatprep.subr.mxu0 0.0
  %207 = vmatpush2.msra.mxu0 0.0
  %208 = vmatprep.subr.mxu0 0.0
  %209 = vmatpush2.msra.mxu0 0.0
  %210 = vmatprep.subr.mxu0 0.0
  %211 = vmatpush2.msra.mxu0 0.0
  %212 = vmatprep.subr.mxu0 0.0
  %213 = vmatpush2.msra.mxu0 0.0
  %214 = vmatprep.subr.mxu0 0.0
  %215 = vmatpush2.msra.mxu0 0.0
  %216 = vmatprep.subr.mxu0 0.0
  %217 = vmatpush2.msra.mxu0 0.0
  %218 = vmatprep.subr.mxu0 0.0
  %219 = vmatpush2.msra.mxu0 0.0
  %220 = vmatprep.subr.mxu0 0.0
  %221 = vmatpush2.msra.mxu0 0.0
  %222 = vmatprep.subr.mxu0 0.0
  %223 = vmatpush2.msra.mxu0 0.0
  %224 = vmatprep.subr.mxu0 0.0
  %225 = vmatpush2.msra.mxu0 0.0
  %226 = vmatprep.mubr.f32.mxu0 0.0
  %227 = vmatmul.mubr.f32.gmra.mxu0 %v95
  %v228 = vpop.f32.mrf.mxu0
  %v229 = vadd.f32 0.0, %v228
  %v230 = vpop.f32.mrf.mxu0
  %v231 = vadd.f32 0.0, %v230
  %232 = vmatprep.mubr.f32.mxu0 0.0
  %233 = vmatmul.mubr.f32.gmra.mxu0 %v96
  %v234 = vpop.f32.mrf.mxu0
  %v235 = vadd.f32 0.0, %v234
  %v236 = vpop.f32.mrf.mxu0
  %v237 = vadd.f32 0.0, %v236
  %238 = vmatprep.mubr.f32.mxu0 0.0
  %239 = vmatmul.mubr.f32.gmra.mxu0 %v97
  %v240 = vpop.f32.mrf.mxu0
  %v241 = vadd.f32 0.0, %v240
  %v242 = vpop.f32.mrf.mxu0
  %v243 = vadd.f32 0.0, %v242
  %244 = vdwg.mxu0
  %245 = vmatprep.subr.mxu0 %v161
  %246 = vmatpush1.msra.mxu0 %v160
  %247 = vmatprep.subr.mxu0 %v157
  %248 = vmatpush1.msra.mxu0 %v156
  %249 = vmatprep.subr.mxu0 %v153
  %250 = vmatpush1.msra.mxu0 %v152
  %251 = vmatprep.subr.mxu0 %v149
  %252 = vmatpush1.msra.mxu0 %v148
  %253 = vmatprep.subr.mxu0 %v145
  %254 = vmatpush1.msra.mxu0 %v144
  %255 = vmatprep.subr.mxu0 %v141
  %256 = vmatpush1.msra.mxu0 %v140
  %257 = vmatprep.subr.mxu0 %v137
  %258 = vmatpush1.msra.mxu0 %v136
  %259 = vmatprep.subr.mxu0 %v133
  %260 = vmatpush1.msra.mxu0 %v132
  %261 = vmatprep.subr.mxu0 %v129
  %262 = vmatpush1.msra.mxu0 %v128
  %263 = vmatprep.subr.mxu0 %v125
  %264 = vmatpush1.msra.mxu0 %v124
  %265 = vmatprep.subr.mxu0 %v121
  %266 = vmatpush1.msra.mxu0 %v120
  %267 = vmatprep.subr.mxu0 %v117
  %268 = vmatpush1.msra.mxu0 %v116
  %269 = vmatprep.subr.mxu0 %v113
  %270 = vmatpush1.msra.mxu0 %v112
  %271 = vmatprep.subr.mxu0 %v109
  %272 = vmatpush1.msra.mxu0 %v108
  %273 = vmatprep.subr.mxu0 %v105
  %274 = vmatpush1.msra.mxu0 %v104
  %275 = vmatprep.subr.mxu0 %v101
  %276 = vmatpush1.msra.mxu0 %v100
  %277 = vmatprep.subr.mxu0 0.0
  %278 = vmatpush2.msra.mxu0 0.0
  %279 = vmatprep.subr.mxu0 0.0
  %280 = vmatpush2.msra.mxu0 0.0
  %281 = vmatprep.subr.mxu0 0.0
  %282 = vmatpush2.msra.mxu0 0.0
  %283 = vmatprep.subr.mxu0 0.0
  %284 = vmatpush2.msra.mxu0 0.0
  %285 = vmatprep.subr.mxu0 0.0
  %286 = vmatpush2.msra.mxu0 0.0
  %287 = vmatprep.subr.mxu0 0.0
  %288 = vmatpush2.msra.mxu0 0.0
  %289 = vmatprep.subr.mxu0 0.0
  %290 = vmatpush2.msra.mxu0 0.0
  %291 = vmatprep.subr.mxu0 0.0
  %292 = vmatpush2.msra.mxu0 0.0
  %293 = vmatprep.subr.mxu0 0.0
  %294 = vmatpush2.msra.mxu0 0.0
  %295 = vmatprep.subr.mxu0 0.0
  %296 = vmatpush2.msra.mxu0 0.0
  %297 = vmatprep.subr.mxu0 0.0
  %298 = vmatpush2.msra.mxu0 0.0
  %299 = vmatprep.subr.mxu0 0.0
  %300 = vmatpush2.msra.mxu0 0.0
  %301 = vmatprep.subr.mxu0 0.0
  %302 = vmatpush2.msra.mxu0 0.0
  %303 = vmatprep.subr.mxu0 0.0
  %304 = vmatpush2.msra.mxu0 0.0
  %305 = vmatprep.subr.mxu0 0.0
  %306 = vmatpush2.msra.mxu0 0.0
  %307 = vmatprep.subr.mxu0 0.0
  %308 = vmatpush2.msra.mxu0 0.0
  %309 = vmatprep.mubr.f32.mxu0 0.0
  %310 = vmatmul.mubr.f32.gmra.mxu0 %v95
  %v311 = vpop.f32.mrf.mxu0
  %v312 = vadd.f32 0.0, %v311
  %v313 = vpop.f32.mrf.mxu0
  %v314 = vadd.f32 0.0, %v313
  %315 = vmatprep.mubr.f32.mxu0 0.0
  %316 = vmatmul.mubr.f32.gmra.mxu0 %v96
  %v317 = vpop.f32.mrf.mxu0
  %v318 = vadd.f32 0.0, %v317
  %v319 = vpop.f32.mrf.mxu0
  %v320 = vadd.f32 0.0, %v319
  %321 = vmatprep.mubr.f32.mxu0 0.0
  %322 = vmatmul.mubr.f32.gmra.mxu0 %v97
  %v323 = vpop.f32.mrf.mxu0
  %v324 = vadd.f32 0.0, %v323
  %v325 = vpop.f32.mrf.mxu0
  %v326 = vadd.f32 0.0, %v325
  %327 = vdwg.mxu0
  %s328 = scalar_lea.vmem %s5, 32
  %v329 = vld [vmem:[%s328] sm:$0xf]
  %v330 = vld [vmem:[%s328 + $0x4] sm:$0xf]
  %v331 = vld [vmem:[%s328 + $0x8] sm:$0xf]
  %v332 = vld [vmem:[%s328 + $0xc] sm:$0xf]
  %v333 = vpack.c.bf16 %v96, %v95
  %v334 = vpack.c.bf16 %v97, %v97
  %v335 = vld [vmem:[%s5] sm:$0xf]
  %v336 = vld [vmem:[%s5 + $0x4] sm:$0xf]
  %v337 = vld [vmem:[%s5 + $0x8] sm:$0xf]
  %v338 = vld [vmem:[%s5 + $0xc] sm:$0xf]
  %v339 = vpack.c.bf16 %v235, %v229
  %v340 = vpack.c.bf16 %v241, %v241
  %v345 = vunpack.c.l.b16 %v335
  %v346 = vunpack.c.l.b16 %v336
  %v347 = vunpack.c.l.b16 %v337
  %v348 = vunpack.c.l.b16 %v338
  %v349 = vpack.c.b16 %v346, %v345
  %v350 = vpack.c.b16 %v348, %v347
  %vm351 = vcmask 195584
  %v353 = vsel %vm351, %v349, 0
  %v356 = vsel %vm351, %v350, 0
  %vm358 = vcmask 1043456
  %v360 = vsel %vm358, %v340, 0
  %362 = vmatprep.subr.bf16.mxu0 0
  %363 = vmatpush1.bf16.msra.mxu0 0
  %364 = vmatprep.subr.bf16.mxu0 0
  %365 = vmatpush1.bf16.msra.mxu0 0
  %366 = vmatprep.subr.bf16.mxu0 0
  %367 = vmatpush1.bf16.msra.mxu0 0
  %368 = vmatprep.subr.bf16.mxu0 0
  %369 = vmatpush1.bf16.msra.mxu0 0
  %370 = vmatprep.subr.bf16.mxu0 0
  %371 = vmatpush1.bf16.msra.mxu0 0
  %372 = vmatprep.subr.bf16.mxu0 0
  %373 = vmatpush1.bf16.msra.mxu0 0
  %374 = vmatprep.subr.bf16.mxu0 0
  %375 = vmatpush1.bf16.msra.mxu0 %v360
  %376 = vmatprep.subr.bf16.mxu0 0
  %377 = vmatpush1.bf16.msra.mxu0 %v339
  %378 = vmatprep.subr.bf16.mxu0 0
  %379 = vmatpush2.bf16.msra.mxu0 0
  %380 = vmatprep.subr.bf16.mxu0 0
  %381 = vmatpush2.bf16.msra.mxu0 0
  %382 = vmatprep.subr.bf16.mxu0 0
  %383 = vmatpush2.bf16.msra.mxu0 0
  %384 = vmatprep.subr.bf16.mxu0 0
  %385 = vmatpush2.bf16.msra.mxu0 0
  %386 = vmatprep.subr.bf16.mxu0 0
  %387 = vmatpush2.bf16.msra.mxu0 0
  %388 = vmatprep.subr.bf16.mxu0 0
  %389 = vmatpush2.bf16.msra.mxu0 0
  %390 = vmatprep.subr.bf16.mxu0 0
  %391 = vmatpush2.bf16.msra.mxu0 0
  %392 = vmatprep.subr.bf16.mxu0 0
  %393 = vmatpush2.bf16.msra.mxu0 0
  %394 = vmatprep.mubr.bf16.mxu0 0
  %395 = vmatmul.mubr.bf16.gmra.mxu0 %v353
  %v396 = vpop.f32.mrf.mxu0
  %v397 = vadd.f32 0.0, %v396
  %v398 = vpop.f32.mrf.mxu0
  %v399 = vpop.f32.mrf.mxu0
  %v400 = vadd.f32 0.0, %v399
  %v401 = vpop.f32.mrf.mxu0
  %402 = vmatprep.mubr.bf16.mxu0 0
  %403 = vmatmul.mubr.bf16.gmra.mxu0 %v356
  %v404 = vpop.f32.mrf.mxu0
  %v405 = vadd.f32 0.0, %v404
  %v406 = vpop.f32.mrf.mxu0
  %v407 = vpop.f32.mrf.mxu0
  %v408 = vadd.f32 0.0, %v407
  %v409 = vpop.f32.mrf.mxu0
  %410 = vdwg.mxu0
  %v415 = vunpack.c.l.b16 %v329
  %v416 = vunpack.c.l.b16 %v330
  %v417 = vunpack.c.l.b16 %v331
  %v418 = vunpack.c.l.b16 %v332
  %v419 = vpack.c.b16 %v416, %v415
  %v420 = vpack.c.b16 %v418, %v417
  %v422 = vsel %vm351, %v419, 0
  %v425 = vsel %vm351, %v420, 0
  %v428 = vsel %vm358, %v334, 0
  %430 = vmatprep.subr.bf16.mxu0 0
  %431 = vmatpush1.bf16.msra.mxu0 0
  %432 = vmatprep.subr.bf16.mxu0 0
  %433 = vmatpush1.bf16.msra.mxu0 0
  %434 = vmatprep.subr.bf16.mxu0 0
  %435 = vmatpush1.bf16.msra.mxu0 0
  %436 = vmatprep.subr.bf16.mxu0 0
  %437 = vmatpush1.bf16.msra.mxu0 0
  %438 = vmatprep.subr.bf16.mxu0 0
  %439 = vmatpush1.bf16.msra.mxu0 0
  %440 = vmatprep.subr.bf16.mxu0 0
  %441 = vmatpush1.bf16.msra.mxu0 0
  %442 = vmatprep.subr.bf16.mxu0 0
  %443 = vmatpush1.bf16.msra.mxu0 %v428
  %444 = vmatprep.subr.bf16.mxu0 0
  %445 = vmatpush1.bf16.msra.mxu0 %v333
  %446 = vmatprep.subr.bf16.mxu0 0
  %447 = vmatpush2.bf16.msra.mxu0 0
  %448 = vmatprep.subr.bf16.mxu0 0
  %449 = vmatpush2.bf16.msra.mxu0 0
  %450 = vmatprep.subr.bf16.mxu0 0
  %451 = vmatpush2.bf16.msra.mxu0 0
  %452 = vmatprep.subr.bf16.mxu0 0
  %453 = vmatpush2.bf16.msra.mxu0 0
  %454 = vmatprep.subr.bf16.mxu0 0
  %455 = vmatpush2.bf16.msra.mxu0 0
  %456 = vmatprep.subr.bf16.mxu0 0
  %457 = vmatpush2.bf16.msra.mxu0 0
  %458 = vmatprep.subr.bf16.mxu0 0
  %459 = vmatpush2.bf16.msra.mxu0 0
  %460 = vmatprep.subr.bf16.mxu0 0
  %461 = vmatpush2.bf16.msra.mxu0 0
  %462 = vmatprep.mubr.bf16.mxu0 0
  %463 = vmatmul.mubr.bf16.gmra.mxu0 %v422
  %v464 = vpop.f32.mrf.mxu0
  %v465 = vadd.f32 %v397, %v464
  %v466 = vpop.f32.mrf.mxu0
  %v467 = vpop.f32.mrf.mxu0
  %v468 = vadd.f32 %v400, %v467
  %v469 = vpop.f32.mrf.mxu0
  %470 = vmatprep.mubr.bf16.mxu0 0
  %471 = vmatmul.mubr.bf16.gmra.mxu0 %v425
  %v472 = vpop.f32.mrf.mxu0
  %v473 = vadd.f32 %v405, %v472
  %v474 = vpop.f32.mrf.mxu0
  %v475 = vpop.f32.mrf.mxu0
  %v476 = vadd.f32 %v408, %v475
  %v477 = vpop.f32.mrf.mxu0
  %478 = vdwg.mxu0
  %s479 = scalar_lea.vmem %s5, 16
  %v480 = vld [vmem:[%s479] sm:$0xf]
  %v481 = vld [vmem:[%s479 + $0x4] sm:$0xf]
  %v482 = vld [vmem:[%s479 + $0x8] sm:$0xf]
  %v483 = vld [vmem:[%s479 + $0xc] sm:$0xf]
  %v484 = vpack.c.bf16 %v237, %v231
  %v485 = vpack.c.bf16 %v243, %v243
  %v490 = vunpack.c.l.b16 %v480
  %v491 = vunpack.c.l.b16 %v481
  %v492 = vunpack.c.l.b16 %v482
  %v493 = vunpack.c.l.b16 %v483
  %v494 = vpack.c.b16 %v491, %v490
  %v495 = vpack.c.b16 %v493, %v492
  %v497 = vsel %vm351, %v494, 0
  %v500 = vsel %vm351, %v495, 0
  %v503 = vsel %vm358, %v485, 0
  %505 = vmatprep.subr.bf16.mxu0 0
  %506 = vmatpush1.bf16.msra.mxu0 0
  %507 = vmatprep.subr.bf16.mxu0 0
  %508 = vmatpush1.bf16.msra.mxu0 0
  %509 = vmatprep.subr.bf16.mxu0 0
  %510 = vmatpush1.bf16.msra.mxu0 0
  %511 = vmatprep.subr.bf16.mxu0 0
  %512 = vmatpush1.bf16.msra.mxu0 0
  %513 = vmatprep.subr.bf16.mxu0 0
  %514 = vmatpush1.bf16.msra.mxu0 0
  %515 = vmatprep.subr.bf16.mxu0 0
  %516 = vmatpush1.bf16.msra.mxu0 0
  %517 = vmatprep.subr.bf16.mxu0 0
  %518 = vmatpush1.bf16.msra.mxu0 %v503
  %519 = vmatprep.subr.bf16.mxu0 0
  %520 = vmatpush1.bf16.msra.mxu0 %v484
  %521 = vmatprep.subr.bf16.mxu0 0
  %522 = vmatpush2.bf16.msra.mxu0 0
  %523 = vmatprep.subr.bf16.mxu0 0
  %524 = vmatpush2.bf16.msra.mxu0 0
  %525 = vmatprep.subr.bf16.mxu0 0
  %526 = vmatpush2.bf16.msra.mxu0 0
  %527 = vmatprep.subr.bf16.mxu0 0
  %528 = vmatpush2.bf16.msra.mxu0 0
  %529 = vmatprep.subr.bf16.mxu0 0
  %530 = vmatpush2.bf16.msra.mxu0 0
  %531 = vmatprep.subr.bf16.mxu0 0
  %532 = vmatpush2.bf16.msra.mxu0 0
  %533 = vmatprep.subr.bf16.mxu0 0
  %534 = vmatpush2.bf16.msra.mxu0 0
  %535 = vmatprep.subr.bf16.mxu0 0
  %536 = vmatpush2.bf16.msra.mxu0 0
  %537 = vmatprep.mubr.bf16.mxu0 0
  %538 = vmatmul.mubr.bf16.gmra.mxu0 %v497
  %v539 = vpop.f32.mrf.mxu0
  %v540 = vadd.f32 0.0, %v539
  %v541 = vpop.f32.mrf.mxu0
  %v542 = vpop.f32.mrf.mxu0
  %v543 = vadd.f32 0.0, %v542
  %v544 = vpop.f32.mrf.mxu0
  %545 = vmatprep.mubr.bf16.mxu0 0
  %546 = vmatmul.mubr.bf16.gmra.mxu0 %v500
  %v547 = vpop.f32.mrf.mxu0
  %v548 = vadd.f32 0.0, %v547
  %v549 = vpop.f32.mrf.mxu0
  %v550 = vpop.f32.mrf.mxu0
  %v551 = vadd.f32 0.0, %v550
  %v552 = vpop.f32.mrf.mxu0
  %553 = vdwg.mxu0
  %v554 = vadd.f32 %v465, %v540
  %v555 = vadd.f32 %v468, %v543
  %v556 = vadd.f32 %v473, %v548
  %v557 = vadd.f32 %v476, %v551
  %s558 = scalar_lea.vmem %s5, 48
  %v559 = vld [vmem:[%s558] sm:$0xf]
  %v560 = vld [vmem:[%s558 + $0x4] sm:$0xf]
  %v561 = vld [vmem:[%s558 + $0x8] sm:$0xf]
  %v562 = vld [vmem:[%s558 + $0xc] sm:$0xf]
  %v563 = vpack.c.bf16 %v318, %v312
  %v564 = vpack.c.bf16 %v324, %v324
  %v569 = vunpack.c.l.b16 %v559
  %v570 = vunpack.c.l.b16 %v560
  %v571 = vunpack.c.l.b16 %v561
  %v572 = vunpack.c.l.b16 %v562
  %v573 = vpack.c.b16 %v570, %v569
  %v574 = vpack.c.b16 %v572, %v571
  %v576 = vsel %vm351, %v573, 0
  %v579 = vsel %vm351, %v574, 0
  %v582 = vsel %vm358, %v564, 0
  %584 = vmatprep.subr.bf16.mxu0 0
  %585 = vmatpush1.bf16.msra.mxu0 0
  %586 = vmatprep.subr.bf16.mxu0 0
  %587 = vmatpush1.bf16.msra.mxu0 0
  %588 = vmatprep.subr.bf16.mxu0 0
  %589 = vmatpush1.bf16.msra.mxu0 0
  %590 = vmatprep.subr.bf16.mxu0 0
  %591 = vmatpush1.bf16.msra.mxu0 0
  %592 = vmatprep.subr.bf16.mxu0 0
  %593 = vmatpush1.bf16.msra.mxu0 0
  %594 = vmatprep.subr.bf16.mxu0 0
  %595 = vmatpush1.bf16.msra.mxu0 0
  %596 = vmatprep.subr.bf16.mxu0 0
  %597 = vmatpush1.bf16.msra.mxu0 %v582
  %598 = vmatprep.subr.bf16.mxu0 0
  %599 = vmatpush1.bf16.msra.mxu0 %v563
  %600 = vmatprep.subr.bf16.mxu0 0
  %601 = vmatpush2.bf16.msra.mxu0 0
  %602 = vmatprep.subr.bf16.mxu0 0
  %603 = vmatpush2.bf16.msra.mxu0 0
  %604 = vmatprep.subr.bf16.mxu0 0
  %605 = vmatpush2.bf16.msra.mxu0 0
  %606 = vmatprep.subr.bf16.mxu0 0
  %607 = vmatpush2.bf16.msra.mxu0 0
  %608 = vmatprep.subr.bf16.mxu0 0
  %609 = vmatpush2.bf16.msra.mxu0 0
  %610 = vmatprep.subr.bf16.mxu0 0
  %611 = vmatpush2.bf16.msra.mxu0 0
  %612 = vmatprep.subr.bf16.mxu0 0
  %613 = vmatpush2.bf16.msra.mxu0 0
  %614 = vmatprep.subr.bf16.mxu0 0
  %615 = vmatpush2.bf16.msra.mxu0 0
  %616 = vmatprep.mubr.bf16.mxu0 0
  %617 = vmatmul.mubr.bf16.gmra.mxu0 %v576
  %v618 = vpop.f32.mrf.mxu0
  %v619 = vadd.f32 0.0, %v618
  %v620 = vpop.f32.mrf.mxu0
  %v621 = vpop.f32.mrf.mxu0
  %v622 = vadd.f32 0.0, %v621
  %v623 = vpop.f32.mrf.mxu0
  %624 = vmatprep.mubr.bf16.mxu0 0
  %625 = vmatmul.mubr.bf16.gmra.mxu0 %v579
  %v626 = vpop.f32.mrf.mxu0
  %v627 = vadd.f32 0.0, %v626
  %v628 = vpop.f32.mrf.mxu0
  %v629 = vpop.f32.mrf.mxu0
  %v630 = vadd.f32 0.0, %v629
  %v631 = vpop.f32.mrf.mxu0
  %632 = vdwg.mxu0
  %v633 = vadd.f32 %v554, %v619
  %v634 = vadd.f32 %v555, %v622
  %v635 = vadd.f32 %v556, %v627
  %v636 = vadd.f32 %v557, %v630
  %s637 = scalar_lea.vmem %s5, 64
  %v638 = vld [vmem:[%s637] sm:$0xf]
  %v639 = vld [vmem:[%s637 + $0x4] sm:$0xf]
  %v640 = vld [vmem:[%s637 + $0x8] sm:$0xf]
  %v641 = vld [vmem:[%s637 + $0xc] sm:$0xf]
  %v642 = vpack.c.bf16 %v320, %v314
  %v643 = vpack.c.bf16 %v326, %v326
  %v648 = vunpack.c.l.b16 %v638
  %v649 = vunpack.c.l.b16 %v639
  %v650 = vunpack.c.l.b16 %v640
  %v651 = vunpack.c.l.b16 %v641
  %v652 = vpack.c.b16 %v649, %v648
  %v653 = vpack.c.b16 %v651, %v650
  %v655 = vsel %vm351, %v652, 0
  %v658 = vsel %vm351, %v653, 0
  %v661 = vsel %vm358, %v643, 0
  %663 = vmatprep.subr.bf16.mxu0 0
  %664 = vmatpush1.bf16.msra.mxu0 0
  %665 = vmatprep.subr.bf16.mxu0 0
  %666 = vmatpush1.bf16.msra.mxu0 0
  %667 = vmatprep.subr.bf16.mxu0 0
  %668 = vmatpush1.bf16.msra.mxu0 0
  %669 = vmatprep.subr.bf16.mxu0 0
  %670 = vmatpush1.bf16.msra.mxu0 0
  %671 = vmatprep.subr.bf16.mxu0 0
  %672 = vmatpush1.bf16.msra.mxu0 0
  %673 = vmatprep.subr.bf16.mxu0 0
  %674 = vmatpush1.bf16.msra.mxu0 0
  %675 = vmatprep.subr.bf16.mxu0 0
  %676 = vmatpush1.bf16.msra.mxu0 %v661
  %677 = vmatprep.subr.bf16.mxu0 0
  %678 = vmatpush1.bf16.msra.mxu0 %v642
  %679 = vmatprep.subr.bf16.mxu0 0
  %680 = vmatpush2.bf16.msra.mxu0 0
  %681 = vmatprep.subr.bf16.mxu0 0
  %682 = vmatpush2.bf16.msra.mxu0 0
  %683 = vmatprep.subr.bf16.mxu0 0
  %684 = vmatpush2.bf16.msra.mxu0 0
  %685 = vmatprep.subr.bf16.mxu0 0
  %686 = vmatpush2.bf16.msra.mxu0 0
  %687 = vmatprep.subr.bf16.mxu0 0
  %688 = vmatpush2.bf16.msra.mxu0 0
  %689 = vmatprep.subr.bf16.mxu0 0
  %690 = vmatpush2.bf16.msra.mxu0 0
  %691 = vmatprep.subr.bf16.mxu0 0
  %692 = vmatpush2.bf16.msra.mxu0 0
  %693 = vmatprep.subr.bf16.mxu0 0
  %694 = vmatpush2.bf16.msra.mxu0 0
  %695 = vmatprep.mubr.bf16.mxu0 0
  %696 = vmatmul.mubr.bf16.gmra.mxu0 %v655
  %v697 = vpop.f32.mrf.mxu0
  %v698 = vadd.f32 0.0, %v697
  %v699 = vpop.f32.mrf.mxu0
  %v700 = vpop.f32.mrf.mxu0
  %v701 = vadd.f32 0.0, %v700
  %v702 = vpop.f32.mrf.mxu0
  %703 = vmatprep.mubr.bf16.mxu0 0
  %704 = vmatmul.mubr.bf16.gmra.mxu0 %v658
  %v705 = vpop.f32.mrf.mxu0
  %v706 = vadd.f32 0.0, %v705
  %v707 = vpop.f32.mrf.mxu0
  %v708 = vpop.f32.mrf.mxu0
  %v709 = vadd.f32 0.0, %v708
  %v710 = vpop.f32.mrf.mxu0
  %711 = vdwg.mxu0
  %v712 = vadd.f32 %v633, %v698
  %v713 = vadd.f32 %v634, %v701
  %v714 = vadd.f32 %v635, %v706
  %v715 = vadd.f32 %v636, %v709
  %v716 = vld [vmem:[%s6] sm:$0xff]
  %v717 = vld [vmem:[%s6 + $0x8] sm:$0xff]
  %v718 = vld [vmem:[%s6 + $0x10] sm:$0xff]
  %v719 = vld [vmem:[%s6 + $0x18] sm:$0xff]
  %721 = vset.pattern.permute.xlu0 0
  %722 = vperm.xlu0 %721, %v716
  %v723 = vpop.permute.xlu0 %722
  %726 = vset.pattern.permute.xlu0 0
  %727 = vperm.xlu0 %726, %v717
  %v728 = vpop.permute.xlu0 %727
  %731 = vset.pattern.permute.xlu0 0
  %732 = vperm.xlu0 %731, %v718
  %v733 = vpop.permute.xlu0 %732
  %736 = vset.pattern.permute.xlu0 0
  %737 = vperm.xlu0 %736, %v719
  %v738 = vpop.permute.xlu0 %737
  %v740 = vadd.f32 %v712, %v723
  %v741 = vadd.f32 %v713, %v728
  %v742 = vadd.f32 %v714, %v733
  %v743 = vadd.f32 %v715, %v738
  %v744 = vmax.f32 %v740, 0.0
  %v745 = vmax.f32 %v741, 0.0
  %v746 = vmax.f32 %v742, 0.0
  %v747 = vmax.f32 %v743, 0.0
  %748 = vadd.xlane.f32.xlu0 %v744
  %v749 = vpop.xlane.xlu0 %748
  %750 = vadd.xlane.f32.xlu0 %v745
  %v751 = vpop.xlane.xlu0 %750
  %752 = vadd.xlane.f32.xlu0 %v746
  %v753 = vpop.xlane.xlu0 %752
  %754 = vadd.xlane.f32.xlu0 %v747
  %v755 = vpop.xlane.xlu0 %754
  %v756 = vrcp.pop 128.0
  %v757 = vmul.f32 %v749, %v756
  %v758 = vmul.f32 %v751, %v756
  %v759 = vmul.f32 %v753, %v756
  %v760 = vmul.f32 %v755, %v756
  %v761 = vsub.f32 %v744, %v757
  %v762 = vsub.f32 %v745, %v758
  %v763 = vsub.f32 %v746, %v759
  %v764 = vsub.f32 %v747, %v760
  %v765 = vmul.f32 %v761, %v761
  %v766 = vmul.f32 %v762, %v762
  %v767 = vmul.f32 %v763, %v763
  %v768 = vmul.f32 %v764, %v764
  %769 = vadd.xlane.f32.xlu0 %v765
  %v770 = vpop.xlane.xlu0 %769
  %771 = vadd.xlane.f32.xlu0 %v766
  %v772 = vpop.xlane.xlu0 %771
  %773 = vadd.xlane.f32.xlu0 %v767
  %v774 = vpop.xlane.xlu0 %773
  %775 = vadd.xlane.f32.xlu0 %v768
  %v776 = vpop.xlane.xlu0 %775
  %v777 = vmul.f32 %v770, %v756
  %v778 = vmul.f32 %v772, %v756
  %v779 = vmul.f32 %v774, %v756
  %v780 = vmul.f32 %v776, %v756
  %v781 = vadd.f32 %v777, 1e-05
  %v782 = vadd.f32 %v778, 1e-05
  %v783 = vadd.f32 %v779, 1e-05
  %v784 = vadd.f32 %v780, 1e-05
  %v785 = vrsqrt.pop %v781
  %v786 = vrsqrt.pop %v782
  %v787 = vrsqrt.pop %v783
  %v788 = vrsqrt.pop %v784
  %v789 = vmul.f32 %v761, %v785
  %v790 = vmul.f32 %v762, %v786
  %v791 = vmul.f32 %v763, %v787
  %v792 = vmul.f32 %v764, %v788
  %793 = vset.pattern.permute.xlu0 1
  %794 = vperm.xlu0 %793, %v716
  %v795 = vpop.permute.xlu0 %794
  %797 = vset.pattern.permute.xlu0 1
  %798 = vperm.xlu0 %797, %v717
  %v799 = vpop.permute.xlu0 %798
  %801 = vset.pattern.permute.xlu0 1
  %802 = vperm.xlu0 %801, %v718
  %v803 = vpop.permute.xlu0 %802
  %805 = vset.pattern.permute.xlu0 1
  %806 = vperm.xlu0 %805, %v719
  %v807 = vpop.permute.xlu0 %806
  %v809 = vmul.f32 %v789, %v795
  %v810 = vmul.f32 %v790, %v799
  %v811 = vmul.f32 %v791, %v803
  %v812 = vmul.f32 %v792, %v807
  %813 = vset.pattern.permute.xlu0 2
  %814 = vperm.xlu0 %813, %v716
  %v815 = vpop.permute.xlu0 %814
  %817 = vset.pattern.permute.xlu0 2
  %818 = vperm.xlu0 %817, %v717
  %v819 = vpop.permute.xlu0 %818
  %821 = vset.pattern.permute.xlu0 2
  %822 = vperm.xlu0 %821, %v718
  %v823 = vpop.permute.xlu0 %822
  %825 = vset.pattern.permute.xlu0 2
  %826 = vperm.xlu0 %825, %v719
  %v827 = vpop.permute.xlu0 %826
  %v829 = vadd.f32 %v809, %v815
  %v830 = vadd.f32 %v810, %v819
  %v831 = vadd.f32 %v811, %v823
  %v832 = vadd.f32 %v812, %v827
  %v833 = vld [vmem:[%s7] sm:$0xf]
  %v834 = vld [vmem:[%s7 + $0x4] sm:$0xf]
  %v835 = vld [vmem:[%s7 + $0x8] sm:$0xf]
  %v836 = vld [vmem:[%s7 + $0xc] sm:$0xf]
  %v837 = vpack.c.bf16 %v830, %v829
  %v838 = vpack.c.bf16 %v832, %v831
  %v839 = vld [vmem:[%s8] sm:$0xff]
  %v840 = vld [vmem:[%s8 + $0x8] sm:$0xff]
  %v841 = vld [vmem:[%s8 + $0x10] sm:$0xff]
  %v842 = vld [vmem:[%s8 + $0x18] sm:$0xff]
  %844 = vset.pattern.permute.xlu0 0
  %845 = vperm.xlu0 %844, %v839
  %v846 = vpop.permute.xlu0 %845
  %849 = vset.pattern.permute.xlu0 0
  %850 = vperm.xlu0 %849, %v840
  %v851 = vpop.permute.xlu0 %850
  %854 = vset.pattern.permute.xlu0 0
  %855 = vperm.xlu0 %854, %v841
  %v856 = vpop.permute.xlu0 %855
  %859 = vset.pattern.permute.xlu0 0
  %860 = vperm.xlu0 %859, %v842
  %v861 = vpop.permute.xlu0 %860
  %v867 = vunpack.c.l.b16 %v833
  %v868 = vunpack.c.l.b16 %v834
  %v869 = vunpack.c.l.b16 %v835
  %v870 = vunpack.c.l.b16 %v836
  %v871 = vpack.c.b16 %v868, %v867
  %v872 = vpack.c.b16 %v870, %v869
  %vm873 = vcmask 261120
  %v875 = vsel %vm873, %v871, 0
  %v878 = vsel %vm873, %v872, 0
  %880 = vmatprep.subr.bf16.mxu0 0
  %881 = vmatpush1.bf16.msra.mxu0 0
  %882 = vmatprep.subr.bf16.mxu0 0
  %883 = vmatpush1.bf16.msra.mxu0 0
  %884 = vmatprep.subr.bf16.mxu0 0
  %885 = vmatpush1.bf16.msra.mxu0 0
  %886 = vmatprep.subr.bf16.mxu0 0
  %887 = vmatpush1.bf16.msra.mxu0 0
  %888 = vmatprep.subr.bf16.mxu0 0
  %889 = vmatpush1.bf16.msra.mxu0 0
  %890 = vmatprep.subr.bf16.mxu0 0
  %891 = vmatpush1.bf16.msra.mxu0 0
  %892 = vmatprep.subr.bf16.mxu0 0
  %893 = vmatpush1.bf16.msra.mxu0 %v838
  %894 = vmatprep.subr.bf16.mxu0 0
  %895 = vmatpush1.bf16.msra.mxu0 %v837
  %896 = vmatprep.subr.bf16.mxu0 0
  %897 = vmatpush2.bf16.msra.mxu0 0
  %898 = vmatprep.subr.bf16.mxu0 0
  %899 = vmatpush2.bf16.msra.mxu0 0
  %900 = vmatprep.subr.bf16.mxu0 0
  %901 = vmatpush2.bf16.msra.mxu0 0
  %902 = vmatprep.subr.bf16.mxu0 0
  %903 = vmatpush2.bf16.msra.mxu0 0
  %904 = vmatprep.subr.bf16.mxu0 0
  %905 = vmatpush2.bf16.msra.mxu0 0
  %906 = vmatprep.subr.bf16.mxu0 0
  %907 = vmatpush2.bf16.msra.mxu0 0
  %908 = vmatprep.subr.bf16.mxu0 0
  %909 = vmatpush2.bf16.msra.mxu0 0
  %910 = vmatprep.subr.bf16.mxu0 0
  %911 = vmatpush2.bf16.msra.mxu0 0
  %912 = vmatprep.mubr.bf16.mxu0 0
  %913 = vmatmul.mubr.bf16.gmra.mxu0 %v875
  %v914 = vpop.f32.mrf.mxu0
  %v915 = vadd.f32 %v846, %v914
  %v916 = vpop.f32.mrf.mxu0
  %v917 = vpop.f32.mrf.mxu0
  %v918 = vadd.f32 %v851, %v917
  %v919 = vpop.f32.mrf.mxu0
  %920 = vmatprep.mubr.bf16.mxu0 0
  %921 = vmatmul.mubr.bf16.gmra.mxu0 %v878
  %v922 = vpop.f32.mrf.mxu0
  %v923 = vadd.f32 %v856, %v922
  %v924 = vpop.f32.mrf.mxu0
  %v925 = vpop.f32.mrf.mxu0
  %v926 = vadd.f32 %v861, %v925
  %v927 = vpop.f32.mrf.mxu0
  %928 = vdwg.mxu0
  %v929 = vmax.f32 %v915, 0.0
  %v930 = vmax.f32 %v918, 0.0
  %v931 = vmax.f32 %v923, 0.0
  %v932 = vmax.f32 %v926, 0.0
  %933 = vadd.xlane.f32.xlu0 %v929
  %v934 = vpop.xlane.xlu0 %933
  %935 = vadd.xlane.f32.xlu0 %v930
  %v936 = vpop.xlane.xlu0 %935
  %937 = vadd.xlane.f32.xlu0 %v931
  %v938 = vpop.xlane.xlu0 %937
  %939 = vadd.xlane.f32.xlu0 %v932
  %v940 = vpop.xlane.xlu0 %939
  %v941 = vmul.f32 %v934, %v756
  %v942 = vmul.f32 %v936, %v756
  %v943 = vmul.f32 %v938, %v756
  %v944 = vmul.f32 %v940, %v756
  %v945 = vsub.f32 %v929, %v941
  %v946 = vsub.f32 %v930, %v942
  %v947 = vsub.f32 %v931, %v943
  %v948 = vsub.f32 %v932, %v944
  %v949 = vmul.f32 %v945, %v945
  %v950 = vmul.f32 %v946, %v946
  %v951 = vmul.f32 %v947, %v947
  %v952 = vmul.f32 %v948, %v948
  %953 = vadd.xlane.f32.xlu0 %v949
  %v954 = vpop.xlane.xlu0 %953
  %955 = vadd.xlane.f32.xlu0 %v950
  %v956 = vpop.xlane.xlu0 %955
  %957 = vadd.xlane.f32.xlu0 %v951
  %v958 = vpop.xlane.xlu0 %957
  %959 = vadd.xlane.f32.xlu0 %v952
  %v960 = vpop.xlane.xlu0 %959
  %v961 = vmul.f32 %v954, %v756
  %v962 = vmul.f32 %v956, %v756
  %v963 = vmul.f32 %v958, %v756
  %v964 = vmul.f32 %v960, %v756
  %v965 = vadd.f32 %v961, 1e-05
  %v966 = vadd.f32 %v962, 1e-05
  %v967 = vadd.f32 %v963, 1e-05
  %v968 = vadd.f32 %v964, 1e-05
  %v969 = vrsqrt.pop %v965
  %v970 = vrsqrt.pop %v966
  %v971 = vrsqrt.pop %v967
  %v972 = vrsqrt.pop %v968
  %v973 = vmul.f32 %v945, %v969
  %v974 = vmul.f32 %v946, %v970
  %v975 = vmul.f32 %v947, %v971
  %v976 = vmul.f32 %v948, %v972
  %977 = vset.pattern.permute.xlu0 1
  %978 = vperm.xlu0 %977, %v839
  %v979 = vpop.permute.xlu0 %978
  %981 = vset.pattern.permute.xlu0 1
  %982 = vperm.xlu0 %981, %v840
  %v983 = vpop.permute.xlu0 %982
  %985 = vset.pattern.permute.xlu0 1
  %986 = vperm.xlu0 %985, %v841
  %v987 = vpop.permute.xlu0 %986
  %989 = vset.pattern.permute.xlu0 1
  %990 = vperm.xlu0 %989, %v842
  %v991 = vpop.permute.xlu0 %990
  %v993 = vmul.f32 %v973, %v979
  %v994 = vmul.f32 %v974, %v983
  %v995 = vmul.f32 %v975, %v987
  %v996 = vmul.f32 %v976, %v991
  %997 = vset.pattern.permute.xlu0 2
  %998 = vperm.xlu0 %997, %v839
  %v999 = vpop.permute.xlu0 %998
  %1001 = vset.pattern.permute.xlu0 2
  %1002 = vperm.xlu0 %1001, %v840
  %v1003 = vpop.permute.xlu0 %1002
  %1005 = vset.pattern.permute.xlu0 2
  %1006 = vperm.xlu0 %1005, %v841
  %v1007 = vpop.permute.xlu0 %1006
  %1009 = vset.pattern.permute.xlu0 2
  %1010 = vperm.xlu0 %1009, %v842
  %v1011 = vpop.permute.xlu0 %1010
  %v1013 = vadd.f32 %v993, %v999
  %v1014 = vadd.f32 %v994, %v1003
  %v1015 = vadd.f32 %v995, %v1007
  %v1016 = vadd.f32 %v996, %v1011
  %v1017 = vld [vmem:[%s2] sm:$0xff]
  %v1018 = vld [vmem:[%s2 + $0x8] sm:$0xff]
  %v1019 = vld [vmem:[%s2 + $0x10] sm:$0xff]
  %v1020 = vld [vmem:[%s2 + $0x18] sm:$0xff]
  %v1021 = vld [vmem:[%s2 + $0x20] sm:$0xff]
  %v1022 = vld [vmem:[%s2 + $0x28] sm:$0xff]
  %v1023 = vld [vmem:[%s2 + $0x30] sm:$0xff]
  %v1024 = vld [vmem:[%s2 + $0x38] sm:$0xff]
  %v1025 = vld [vmem:[%s2 + $0x40] sm:$0xff]
  %v1026 = vld [vmem:[%s2 + $0x48] sm:$0xff]
  %v1027 = vld [vmem:[%s2 + $0x50] sm:$0xff]
  %v1028 = vld [vmem:[%s2 + $0x58] sm:$0xff]
  %v1029 = vld [vmem:[%s2 + $0x60] sm:$0xff]
  %v1030 = vld [vmem:[%s2 + $0x68] sm:$0xff]
  %v1031 = vld [vmem:[%s2 + $0x70] sm:$0xff]
  %v1032 = vld [vmem:[%s2 + $0x78] sm:$0xff]
  %v1033 = vld [vmem:[%s2 + $0x80] sm:$0xff]
  %v1034 = vld [vmem:[%s2 + $0x88] sm:$0xff]
  %v1035 = vld [vmem:[%s2 + $0x90] sm:$0xff]
  %v1036 = vld [vmem:[%s2 + $0x98] sm:$0xff]
  %v1037 = vld [vmem:[%s2 + $0xa0] sm:$0xff]
  %v1038 = vld [vmem:[%s2 + $0xa8] sm:$0xff]
  %v1039 = vld [vmem:[%s2 + $0xb0] sm:$0xff]
  %v1040 = vld [vmem:[%s2 + $0xb8] sm:$0xff]
  %v1041 = vld [vmem:[%s2 + $0xc0] sm:$0xff]
  %v1042 = vld [vmem:[%s2 + $0xc8] sm:$0xff]
  %v1043 = vld [vmem:[%s2 + $0xd0] sm:$0xff]
  %v1044 = vld [vmem:[%s2 + $0xd8] sm:$0xff]
  %v1045 = vld [vmem:[%s2 + $0xe0] sm:$0xff]
  %v1046 = vld [vmem:[%s2 + $0xe8] sm:$0xff]
  %v1047 = vld [vmem:[%s2 + $0xf0] sm:$0xff]
  %v1048 = vld [vmem:[%s2 + $0xf8] sm:$0xff]
  %1049 = vmatprep.subr.mxu0 %v1048
  %1050 = vmatpush1.msra.mxu0 %v1047
  %1051 = vmatprep.subr.mxu0 %v1046
  %1052 = vmatpush1.msra.mxu0 %v1045
  %1053 = vmatprep.subr.mxu0 %v1044
  %1054 = vmatpush1.msra.mxu0 %v1043
  %1055 = vmatprep.subr.mxu0 %v1042
  %1056 = vmatpush1.msra.mxu0 %v1041
  %1057 = vmatprep.subr.mxu0 %v1040
  %1058 = vmatpush1.msra.mxu0 %v1039
  %1059 = vmatprep.subr.mxu0 %v1038
  %1060 = vmatpush1.msra.mxu0 %v1037
  %1061 = vmatprep.subr.mxu0 %v1036
  %1062 = vmatpush1.msra.mxu0 %v1035
  %1063 = vmatprep.subr.mxu0 %v1034
  %1064 = vmatpush1.msra.mxu0 %v1033
  %1065 = vmatprep.subr.mxu0 %v1032
  %1066 = vmatpush1.msra.mxu0 %v1031
  %1067 = vmatprep.subr.mxu0 %v1030
  %1068 = vmatpush1.msra.mxu0 %v1029
  %1069 = vmatprep.subr.mxu0 %v1028
  %1070 = vmatpush1.msra.mxu0 %v1027
  %1071 = vmatprep.subr.mxu0 %v1026
  %1072 = vmatpush1.msra.mxu0 %v1025
  %1073 = vmatprep.subr.mxu0 %v1024
  %1074 = vmatpush1.msra.mxu0 %v1023
  %1075 = vmatprep.subr.mxu0 %v1022
  %1076 = vmatpush1.msra.mxu0 %v1021
  %1077 = vmatprep.subr.mxu0 %v1020
  %1078 = vmatpush1.msra.mxu0 %v1019
  %1079 = vmatprep.subr.mxu0 %v1018
  %1080 = vmatpush1.msra.mxu0 %v1017
  %1081 = vmatprep.subr.mxu0 0.0
  %1082 = vmatpush2.msra.mxu0 0.0
  %1083 = vmatprep.subr.mxu0 0.0
  %1084 = vmatpush2.msra.mxu0 0.0
  %1085 = vmatprep.subr.mxu0 0.0
  %1086 = vmatpush2.msra.mxu0 0.0
  %1087 = vmatprep.subr.mxu0 0.0
  %1088 = vmatpush2.msra.mxu0 0.0
  %1089 = vmatprep.subr.mxu0 0.0
  %1090 = vmatpush2.msra.mxu0 0.0
  %1091 = vmatprep.subr.mxu0 0.0
  %1092 = vmatpush2.msra.mxu0 0.0
  %1093 = vmatprep.subr.mxu0 0.0
  %1094 = vmatpush2.msra.mxu0 0.0
  %1095 = vmatprep.subr.mxu0 0.0
  %1096 = vmatpush2.msra.mxu0 0.0
  %1097 = vmatprep.subr.mxu0 0.0
  %1098 = vmatpush2.msra.mxu0 0.0
  %1099 = vmatprep.subr.mxu0 0.0
  %1100 = vmatpush2.msra.mxu0 0.0
  %1101 = vmatprep.subr.mxu0 0.0
  %1102 = vmatpush2.msra.mxu0 0.0
  %1103 = vmatprep.subr.mxu0 0.0
  %1104 = vmatpush2.msra.mxu0 0.0
  %1105 = vmatprep.subr.mxu0 0.0
  %1106 = vmatpush2.msra.mxu0 0.0
  %1107 = vmatprep.subr.mxu0 0.0
  %1108 = vmatpush2.msra.mxu0 0.0
  %1109 = vmatprep.subr.mxu0 0.0
  %1110 = vmatpush2.msra.mxu0 0.0
  %1111 = vmatprep.subr.mxu0 0.0
  %1112 = vmatpush2.msra.mxu0 0.0
  %1113 = vmatprep.mubr.f32.mxu0 0.0
  %1114 = vmatmul.mubr.f32.gmra.mxu0 %v1014
  %v1115 = vpop.f32.mrf.mxu0
  %v1116 = vadd.f32 0.0, %v1115
  %v1117 = vpop.f32.mrf.mxu0
  %v1118 = vadd.f32 0.0, %v1117
  %1119 = vdwg.mxu0
  %s1120 = scalar_lea.vmem %s9, 4
  %v1121 = vld [vmem:[%s1120] sm:$0xf]
  %v1122 = vpack.c.bf16 %v1014, %v1014
  %v1123 = vld [vmem:[%s9] sm:$0xf]
  %v1124 = vpack.c.bf16 %v1116, %v1116
  %vm1125 = vcmask 64512
  %v1127 = vsel %vm1125, %v1123, 0
  %v1130 = vsel %vm358, %v1124, 0
  %1132 = vmatprep.subr.bf16.mxu0 0
  %1133 = vmatpush1.bf16.msra.mxu0 0
  %1134 = vmatprep.subr.bf16.mxu0 0
  %1135 = vmatpush1.bf16.msra.mxu0 0
  %1136 = vmatprep.subr.bf16.mxu0 0
  %1137 = vmatpush1.bf16.msra.mxu0 0
  %1138 = vmatprep.subr.bf16.mxu0 0
  %1139 = vmatpush1.bf16.msra.mxu0 0
  %1140 = vmatprep.subr.bf16.mxu0 0
  %1141 = vmatpush1.bf16.msra.mxu0 0
  %1142 = vmatprep.subr.bf16.mxu0 0
  %1143 = vmatpush1.bf16.msra.mxu0 0
  %1144 = vmatprep.subr.bf16.mxu0 0
  %1145 = vmatpush1.bf16.msra.mxu0 0
  %1146 = vmatprep.subr.bf16.mxu0 0
  %1147 = vmatpush1.bf16.msra.mxu0 %v1130
  %1148 = vmatprep.subr.bf16.mxu0 0
  %1149 = vmatpush2.bf16.msra.mxu0 0
  %1150 = vmatprep.subr.bf16.mxu0 0
  %1151 = vmatpush2.bf16.msra.mxu0 0
  %1152 = vmatprep.subr.bf16.mxu0 0
  %1153 = vmatpush2.bf16.msra.mxu0 0
  %1154 = vmatprep.subr.bf16.mxu0 0
  %1155 = vmatpush2.bf16.msra.mxu0 0
  %1156 = vmatprep.subr.bf16.mxu0 0
  %1157 = vmatpush2.bf16.msra.mxu0 0
  %1158 = vmatprep.subr.bf16.mxu0 0
  %1159 = vmatpush2.bf16.msra.mxu0 0
  %1160 = vmatprep.subr.bf16.mxu0 0
  %1161 = vmatpush2.bf16.msra.mxu0 0
  %1162 = vmatprep.subr.bf16.mxu0 0
  %1163 = vmatpush2.bf16.msra.mxu0 0
  %1164 = vmatprep.mubr.bf16.mxu0 0
  %1165 = vmatmul.mubr.bf16.gmra.mxu0 %v1127
  %v1166 = vpop.f32.mrf.mxu0
  %v1167 = vadd.f32 0.0, %v1166
  %v1168 = vpop.f32.mrf.mxu0
  %v1169 = vpop.f32.mrf.mxu0
  %v1170 = vpop.f32.mrf.mxu0
  %1171 = vdwg.mxu0
  %v1173 = vsel %vm1125, %v1121, 0
  %v1176 = vsel %vm358, %v1122, 0
  %1178 = vmatprep.subr.bf16.mxu0 0
  %1179 = vmatpush1.bf16.msra.mxu0 0
  %1180 = vmatprep.subr.bf16.mxu0 0
  %1181 = vmatpush1.bf16.msra.mxu0 0
  %1182 = vmatprep.subr.bf16.mxu0 0
  %1183 = vmatpush1.bf16.msra.mxu0 0
  %1184 = vmatprep.subr.bf16.mxu0 0
  %1185 = vmatpush1.bf16.msra.mxu0 0
  %1186 = vmatprep.subr.bf16.mxu0 0
  %1187 = vmatpush1.bf16.msra.mxu0 0
  %1188 = vmatprep.subr.bf16.mxu0 0
  %1189 = vmatpush1.bf16.msra.mxu0 0
  %1190 = vmatprep.subr.bf16.mxu0 0
  %1191 = vmatpush1.bf16.msra.mxu0 0
  %1192 = vmatprep.subr.bf16.mxu0 0
  %1193 = vmatpush1.bf16.msra.mxu0 %v1176
  %1194 = vmatprep.subr.bf16.mxu0 0
  %1195 = vmatpush2.bf16.msra.mxu0 0
  %1196 = vmatprep.subr.bf16.mxu0 0
  %1197 = vmatpush2.bf16.msra.mxu0 0
  %1198 = vmatprep.subr.bf16.mxu0 0
  %1199 = vmatpush2.bf16.msra.mxu0 0
  %1200 = vmatprep.subr.bf16.mxu0 0
  %1201 = vmatpush2.bf16.msra.mxu0 0
  %1202 = vmatprep.subr.bf16.mxu0 0
  %1203 = vmatpush2.bf16.msra.mxu0 0
  %1204 = vmatprep.subr.bf16.mxu0 0
  %1205 = vmatpush2.bf16.msra.mxu0 0
  %1206 = vmatprep.subr.bf16.mxu0 0
  %1207 = vmatpush2.bf16.msra.mxu0 0
  %1208 = vmatprep.subr.bf16.mxu0 0
  %1209 = vmatpush2.bf16.msra.mxu0 0
  %1210 = vmatprep.mubr.bf16.mxu0 0
  %1211 = vmatmul.mubr.bf16.gmra.mxu0 %v1173
  %v1212 = vpop.f32.mrf.mxu0
  %v1213 = vadd.f32 %v1167, %v1212
  %v1214 = vpop.f32.mrf.mxu0
  %v1215 = vpop.f32.mrf.mxu0
  %v1216 = vpop.f32.mrf.mxu0
  %1217 = vdwg.mxu0
  %s1218 = scalar_lea.vmem %s9, 8
  %v1219 = vld [vmem:[%s1218] sm:$0xf]
  %v1220 = vpack.c.bf16 %v1118, %v1118
  %v1222 = vsel %vm1125, %v1219, 0
  %v1225 = vsel %vm358, %v1220, 0
  %1227 = vmatprep.subr.bf16.mxu0 0
  %1228 = vmatpush1.bf16.msra.mxu0 0
  %1229 = vmatprep.subr.bf16.mxu0 0
  %1230 = vmatpush1.bf16.msra.mxu0 0
  %1231 = vmatprep.subr.bf16.mxu0 0
  %1232 = vmatpush1.bf16.msra.mxu0 0
  %1233 = vmatprep.subr.bf16.mxu0 0
  %1234 = vmatpush1.bf16.msra.mxu0 0
  %1235 = vmatprep.subr.bf16.mxu0 0
  %1236 = vmatpush1.bf16.msra.mxu0 0
  %1237 = vmatprep.subr.bf16.mxu0 0
  %1238 = vmatpush1.bf16.msra.mxu0 0
  %1239 = vmatprep.subr.bf16.mxu0 0
  %1240 = vmatpush1.bf16.msra.mxu0 0
  %1241 = vmatprep.subr.bf16.mxu0 0
  %1242 = vmatpush1.bf16.msra.mxu0 %v1225
  %1243 = vmatprep.subr.bf16.mxu0 0
  %1244 = vmatpush2.bf16.msra.mxu0 0
  %1245 = vmatprep.subr.bf16.mxu0 0
  %1246 = vmatpush2.bf16.msra.mxu0 0
  %1247 = vmatprep.subr.bf16.mxu0 0
  %1248 = vmatpush2.bf16.msra.mxu0 0
  %1249 = vmatprep.subr.bf16.mxu0 0
  %1250 = vmatpush2.bf16.msra.mxu0 0
  %1251 = vmatprep.subr.bf16.mxu0 0
  %1252 = vmatpush2.bf16.msra.mxu0 0
  %1253 = vmatprep.subr.bf16.mxu0 0
  %1254 = vmatpush2.bf16.msra.mxu0 0
  %1255 = vmatprep.subr.bf16.mxu0 0
  %1256 = vmatpush2.bf16.msra.mxu0 0
  %1257 = vmatprep.subr.bf16.mxu0 0
  %1258 = vmatpush2.bf16.msra.mxu0 0
  %1259 = vmatprep.mubr.bf16.mxu0 0
  %1260 = vmatmul.mubr.bf16.gmra.mxu0 %v1222
  %v1261 = vpop.f32.mrf.mxu0
  %v1262 = vadd.f32 0.0, %v1261
  %v1263 = vpop.f32.mrf.mxu0
  %v1264 = vpop.f32.mrf.mxu0
  %v1265 = vpop.f32.mrf.mxu0
  %1266 = vdwg.mxu0
  %v1267 = vadd.f32 %v1213, %v1262
  %v1268 = vld [vmem:[%s10] sm:$0xff]
  %1270 = vset.pattern.permute.xlu0 0
  %1271 = vperm.xlu0 %1270, %v1268
  %v1272 = vpop.permute.xlu0 %1271
  %v1274 = vadd.f32 %v1267, %v1272
  %v1275 = vmax.f32 %v1274, 0.0
  %1276 = vadd.xlane.f32.xlu0 %v1275
  %v1277 = vpop.xlane.xlu0 %1276
  %v1278 = vmul.f32 %v1277, %v756
  %v1279 = vsub.f32 %v1275, %v1278
  %v1280 = vmul.f32 %v1279, %v1279
  %1281 = vadd.xlane.f32.xlu0 %v1280
  %v1282 = vpop.xlane.xlu0 %1281
  %v1283 = vmul.f32 %v1282, %v756
  %v1284 = vadd.f32 %v1283, 1e-05
  %v1285 = vrsqrt.pop %v1284
  %v1286 = vmul.f32 %v1279, %v1285
  %1287 = vset.pattern.permute.xlu0 1
  %1288 = vperm.xlu0 %1287, %v1268
  %v1289 = vpop.permute.xlu0 %1288
  %v1291 = vmul.f32 %v1286, %v1289
  %1292 = vset.pattern.permute.xlu0 2
  %1293 = vperm.xlu0 %1292, %v1268
  %v1294 = vpop.permute.xlu0 %1293
  %v1296 = vadd.f32 %v1291, %v1294
  %v1297 = vadd.f32 %v1015, %v1296
  %1298 = vmatprep.subr.mxu0 %v1048
  %1299 = vmatpush1.msra.mxu0 %v1047
  %1300 = vmatprep.subr.mxu0 %v1046
  %1301 = vmatpush1.msra.mxu0 %v1045
  %1302 = vmatprep.subr.mxu0 %v1044
  %1303 = vmatpush1.msra.mxu0 %v1043
  %1304 = vmatprep.subr.mxu0 %v1042
  %1305 = vmatpush1.msra.mxu0 %v1041
  %1306 = vmatprep.subr.mxu0 %v1040
  %1307 = vmatpush1.msra.mxu0 %v1039
  %1308 = vmatprep.subr.mxu0 %v1038
  %1309 = vmatpush1.msra.mxu0 %v1037
  %1310 = vmatprep.subr.mxu0 %v1036
  %1311 = vmatpush1.msra.mxu0 %v1035
  %1312 = vmatprep.subr.mxu0 %v1034
  %1313 = vmatpush1.msra.mxu0 %v1033
  %1314 = vmatprep.subr.mxu0 %v1032
  %1315 = vmatpush1.msra.mxu0 %v1031
  %1316 = vmatprep.subr.mxu0 %v1030
  %1317 = vmatpush1.msra.mxu0 %v1029
  %1318 = vmatprep.subr.mxu0 %v1028
  %1319 = vmatpush1.msra.mxu0 %v1027
  %1320 = vmatprep.subr.mxu0 %v1026
  %1321 = vmatpush1.msra.mxu0 %v1025
  %1322 = vmatprep.subr.mxu0 %v1024
  %1323 = vmatpush1.msra.mxu0 %v1023
  %1324 = vmatprep.subr.mxu0 %v1022
  %1325 = vmatpush1.msra.mxu0 %v1021
  %1326 = vmatprep.subr.mxu0 %v1020
  %1327 = vmatpush1.msra.mxu0 %v1019
  %1328 = vmatprep.subr.mxu0 %v1018
  %1329 = vmatpush1.msra.mxu0 %v1017
  %1330 = vmatprep.subr.mxu0 0.0
  %1331 = vmatpush2.msra.mxu0 0.0
  %1332 = vmatprep.subr.mxu0 0.0
  %1333 = vmatpush2.msra.mxu0 0.0
  %1334 = vmatprep.subr.mxu0 0.0
  %1335 = vmatpush2.msra.mxu0 0.0
  %1336 = vmatprep.subr.mxu0 0.0
  %1337 = vmatpush2.msra.mxu0 0.0
  %1338 = vmatprep.subr.mxu0 0.0
  %1339 = vmatpush2.msra.mxu0 0.0
  %1340 = vmatprep.subr.mxu0 0.0
  %1341 = vmatpush2.msra.mxu0 0.0
  %1342 = vmatprep.subr.mxu0 0.0
  %1343 = vmatpush2.msra.mxu0 0.0
  %1344 = vmatprep.subr.mxu0 0.0
  %1345 = vmatpush2.msra.mxu0 0.0
  %1346 = vmatprep.subr.mxu0 0.0
  %1347 = vmatpush2.msra.mxu0 0.0
  %1348 = vmatprep.subr.mxu0 0.0
  %1349 = vmatpush2.msra.mxu0 0.0
  %1350 = vmatprep.subr.mxu0 0.0
  %1351 = vmatpush2.msra.mxu0 0.0
  %1352 = vmatprep.subr.mxu0 0.0
  %1353 = vmatpush2.msra.mxu0 0.0
  %1354 = vmatprep.subr.mxu0 0.0
  %1355 = vmatpush2.msra.mxu0 0.0
  %1356 = vmatprep.subr.mxu0 0.0
  %1357 = vmatpush2.msra.mxu0 0.0
  %1358 = vmatprep.subr.mxu0 0.0
  %1359 = vmatpush2.msra.mxu0 0.0
  %1360 = vmatprep.subr.mxu0 0.0
  %1361 = vmatpush2.msra.mxu0 0.0
  %1362 = vmatprep.mubr.f32.mxu0 0.0
  %1363 = vmatmul.mubr.f32.gmra.mxu0 %v1297
  %v1364 = vpop.f32.mrf.mxu0
  %v1365 = vadd.f32 0.0, %v1364
  %v1366 = vpop.f32.mrf.mxu0
  %v1367 = vadd.f32 0.0, %v1366
  %1368 = vdwg.mxu0
  %s1369 = scalar_lea.vmem %s9, 16
  %v1370 = vld [vmem:[%s1369] sm:$0xf]
  %v1371 = vpack.c.bf16 %v1297, %v1297
  %s1372 = scalar_lea.vmem %s9, 12
  %v1373 = vld [vmem:[%s1372] sm:$0xf]
  %v1374 = vpack.c.bf16 %v1365, %v1365
  %v1376 = vsel %vm1125, %v1373, 0
  %v1379 = vsel %vm358, %v1374, 0
  %1381 = vmatprep.subr.bf16.mxu0 0
  %1382 = vmatpush1.bf16.msra.mxu0 0
  %1383 = vmatprep.subr.bf16.mxu0 0
  %1384 = vmatpush1.bf16.msra.mxu0 0
  %1385 = vmatprep.subr.bf16.mxu0 0
  %1386 = vmatpush1.bf16.msra.mxu0 0
  %1387 = vmatprep.subr.bf16.mxu0 0
  %1388 = vmatpush1.bf16.msra.mxu0 0
  %1389 = vmatprep.subr.bf16.mxu0 0
  %1390 = vmatpush1.bf16.msra.mxu0 0
  %1391 = vmatprep.subr.bf16.mxu0 0
  %1392 = vmatpush1.bf16.msra.mxu0 0
  %1393 = vmatprep.subr.bf16.mxu0 0
  %1394 = vmatpush1.bf16.msra.mxu0 0
  %1395 = vmatprep.subr.bf16.mxu0 0
  %1396 = vmatpush1.bf16.msra.mxu0 %v1379
  %1397 = vmatprep.subr.bf16.mxu0 0
  %1398 = vmatpush2.bf16.msra.mxu0 0
  %1399 = vmatprep.subr.bf16.mxu0 0
  %1400 = vmatpush2.bf16.msra.mxu0 0
  %1401 = vmatprep.subr.bf16.mxu0 0
  %1402 = vmatpush2.bf16.msra.mxu0 0
  %1403 = vmatprep.subr.bf16.mxu0 0
  %1404 = vmatpush2.bf16.msra.mxu0 0
  %1405 = vmatprep.subr.bf16.mxu0 0
  %1406 = vmatpush2.bf16.msra.mxu0 0
  %1407 = vmatprep.subr.bf16.mxu0 0
  %1408 = vmatpush2.bf16.msra.mxu0 0
  %1409 = vmatprep.subr.bf16.mxu0 0
  %1410 = vmatpush2.bf16.msra.mxu0 0
  %1411 = vmatprep.subr.bf16.mxu0 0
  %1412 = vmatpush2.bf16.msra.mxu0 0
  %1413 = vmatprep.mubr.bf16.mxu0 0
  %1414 = vmatmul.mubr.bf16.gmra.mxu0 %v1376
  %v1415 = vpop.f32.mrf.mxu0
  %v1416 = vadd.f32 0.0, %v1415
  %v1417 = vpop.f32.mrf.mxu0
  %v1418 = vpop.f32.mrf.mxu0
  %v1419 = vpop.f32.mrf.mxu0
  %1420 = vdwg.mxu0
  %v1422 = vsel %vm1125, %v1370, 0
  %v1425 = vsel %vm358, %v1371, 0
  %1427 = vmatprep.subr.bf16.mxu0 0
  %1428 = vmatpush1.bf16.msra.mxu0 0
  %1429 = vmatprep.subr.bf16.mxu0 0
  %1430 = vmatpush1.bf16.msra.mxu0 0
  %1431 = vmatprep.subr.bf16.mxu0 0
  %1432 = vmatpush1.bf16.msra.mxu0 0
  %1433 = vmatprep.subr.bf16.mxu0 0
  %1434 = vmatpush1.bf16.msra.mxu0 0
  %1435 = vmatprep.subr.bf16.mxu0 0
  %1436 = vmatpush1.bf16.msra.mxu0 0
  %1437 = vmatprep.subr.bf16.mxu0 0
  %1438 = vmatpush1.bf16.msra.mxu0 0
  %1439 = vmatprep.subr.bf16.mxu0 0
  %1440 = vmatpush1.bf16.msra.mxu0 0
  %1441 = vmatprep.subr.bf16.mxu0 0
  %1442 = vmatpush1.bf16.msra.mxu0 %v1425
  %1443 = vmatprep.subr.bf16.mxu0 0
  %1444 = vmatpush2.bf16.msra.mxu0 0
  %1445 = vmatprep.subr.bf16.mxu0 0
  %1446 = vmatpush2.bf16.msra.mxu0 0
  %1447 = vmatprep.subr.bf16.mxu0 0
  %1448 = vmatpush2.bf16.msra.mxu0 0
  %1449 = vmatprep.subr.bf16.mxu0 0
  %1450 = vmatpush2.bf16.msra.mxu0 0
  %1451 = vmatprep.subr.bf16.mxu0 0
  %1452 = vmatpush2.bf16.msra.mxu0 0
  %1453 = vmatprep.subr.bf16.mxu0 0
  %1454 = vmatpush2.bf16.msra.mxu0 0
  %1455 = vmatprep.subr.bf16.mxu0 0
  %1456 = vmatpush2.bf16.msra.mxu0 0
  %1457 = vmatprep.subr.bf16.mxu0 0
  %1458 = vmatpush2.bf16.msra.mxu0 0
  %1459 = vmatprep.mubr.bf16.mxu0 0
  %1460 = vmatmul.mubr.bf16.gmra.mxu0 %v1422
  %v1461 = vpop.f32.mrf.mxu0
  %v1462 = vadd.f32 %v1416, %v1461
  %v1463 = vpop.f32.mrf.mxu0
  %v1464 = vpop.f32.mrf.mxu0
  %v1465 = vpop.f32.mrf.mxu0
  %1466 = vdwg.mxu0
  %s1467 = scalar_lea.vmem %s9, 20
  %v1468 = vld [vmem:[%s1467] sm:$0xf]
  %v1469 = vpack.c.bf16 %v1367, %v1367
  %v1471 = vsel %vm1125, %v1468, 0
  %v1474 = vsel %vm358, %v1469, 0
  %1476 = vmatprep.subr.bf16.mxu0 0
  %1477 = vmatpush1.bf16.msra.mxu0 0
  %1478 = vmatprep.subr.bf16.mxu0 0
  %1479 = vmatpush1.bf16.msra.mxu0 0
  %1480 = vmatprep.subr.bf16.mxu0 0
  %1481 = vmatpush1.bf16.msra.mxu0 0
  %1482 = vmatprep.subr.bf16.mxu0 0
  %1483 = vmatpush1.bf16.msra.mxu0 0
  %1484 = vmatprep.subr.bf16.mxu0 0
  %1485 = vmatpush1.bf16.msra.mxu0 0
  %1486 = vmatprep.subr.bf16.mxu0 0
  %1487 = vmatpush1.bf16.msra.mxu0 0
  %1488 = vmatprep.subr.bf16.mxu0 0
  %1489 = vmatpush1.bf16.msra.mxu0 0
  %1490 = vmatprep.subr.bf16.mxu0 0
  %1491 = vmatpush1.bf16.msra.mxu0 %v1474
  %1492 = vmatprep.subr.bf16.mxu0 0
  %1493 = vmatpush2.bf16.msra.mxu0 0
  %1494 = vmatprep.subr.bf16.mxu0 0
  %1495 = vmatpush2.bf16.msra.mxu0 0
  %1496 = vmatprep.subr.bf16.mxu0 0
  %1497 = vmatpush2.bf16.msra.mxu0 0
  %1498 = vmatprep.subr.bf16.mxu0 0
  %1499 = vmatpush2.bf16.msra.mxu0 0
  %1500 = vmatprep.subr.bf16.mxu0 0
  %1501 = vmatpush2.bf16.msra.mxu0 0
  %1502 = vmatprep.subr.bf16.mxu0 0
  %1503 = vmatpush2.bf16.msra.mxu0 0
  %1504 = vmatprep.subr.bf16.mxu0 0
  %1505 = vmatpush2.bf16.msra.mxu0 0
  %1506 = vmatprep.subr.bf16.mxu0 0
  %1507 = vmatpush2.bf16.msra.mxu0 0
  %1508 = vmatprep.mubr.bf16.mxu0 0
  %1509 = vmatmul.mubr.bf16.gmra.mxu0 %v1471
  %v1510 = vpop.f32.mrf.mxu0
  %v1511 = vadd.f32 0.0, %v1510
  %v1512 = vpop.f32.mrf.mxu0
  %v1513 = vpop.f32.mrf.mxu0
  %v1514 = vpop.f32.mrf.mxu0
  %1515 = vdwg.mxu0
  %v1516 = vadd.f32 %v1462, %v1511
  %s1517 = scalar_lea.vmem %s10, 8
  %v1518 = vld [vmem:[%s1517] sm:$0xff]
  %1520 = vset.pattern.permute.xlu0 0
  %1521 = vperm.xlu0 %1520, %v1518
  %v1522 = vpop.permute.xlu0 %1521
  %v1524 = vadd.f32 %v1516, %v1522
  %v1525 = vmax.f32 %v1524, 0.0
  %1526 = vadd.xlane.f32.xlu0 %v1525
  %v1527 = vpop.xlane.xlu0 %1526
  %v1528 = vmul.f32 %v1527, %v756
  %v1529 = vsub.f32 %v1525, %v1528
  %v1530 = vmul.f32 %v1529, %v1529
  %1531 = vadd.xlane.f32.xlu0 %v1530
  %v1532 = vpop.xlane.xlu0 %1531
  %v1533 = vmul.f32 %v1532, %v756
  %v1534 = vadd.f32 %v1533, 1e-05
  %v1535 = vrsqrt.pop %v1534
  %v1536 = vmul.f32 %v1529, %v1535
  %1537 = vset.pattern.permute.xlu0 1
  %1538 = vperm.xlu0 %1537, %v1518
  %v1539 = vpop.permute.xlu0 %1538
  %v1541 = vmul.f32 %v1536, %v1539
  %1542 = vset.pattern.permute.xlu0 2
  %1543 = vperm.xlu0 %1542, %v1518
  %v1544 = vpop.permute.xlu0 %1543
  %v1546 = vadd.f32 %v1541, %v1544
  %v1547 = vadd.f32 %v1016, %v1546
  %1548 = vmatprep.subr.mxu0 %v1048
  %1549 = vmatpush1.msra.mxu0 %v1047
  %1550 = vmatprep.subr.mxu0 %v1046
  %1551 = vmatpush1.msra.mxu0 %v1045
  %1552 = vmatprep.subr.mxu0 %v1044
  %1553 = vmatpush1.msra.mxu0 %v1043
  %1554 = vmatprep.subr.mxu0 %v1042
  %1555 = vmatpush1.msra.mxu0 %v1041
  %1556 = vmatprep.subr.mxu0 %v1040
  %1557 = vmatpush1.msra.mxu0 %v1039
  %1558 = vmatprep.subr.mxu0 %v1038
  %1559 = vmatpush1.msra.mxu0 %v1037
  %1560 = vmatprep.subr.mxu0 %v1036
  %1561 = vmatpush1.msra.mxu0 %v1035
  %1562 = vmatprep.subr.mxu0 %v1034
  %1563 = vmatpush1.msra.mxu0 %v1033
  %1564 = vmatprep.subr.mxu0 %v1032
  %1565 = vmatpush1.msra.mxu0 %v1031
  %1566 = vmatprep.subr.mxu0 %v1030
  %1567 = vmatpush1.msra.mxu0 %v1029
  %1568 = vmatprep.subr.mxu0 %v1028
  %1569 = vmatpush1.msra.mxu0 %v1027
  %1570 = vmatprep.subr.mxu0 %v1026
  %1571 = vmatpush1.msra.mxu0 %v1025
  %1572 = vmatprep.subr.mxu0 %v1024
  %1573 = vmatpush1.msra.mxu0 %v1023
  %1574 = vmatprep.subr.mxu0 %v1022
  %1575 = vmatpush1.msra.mxu0 %v1021
  %1576 = vmatprep.subr.mxu0 %v1020
  %1577 = vmatpush1.msra.mxu0 %v1019
  %1578 = vmatprep.subr.mxu0 %v1018
  %1579 = vmatpush1.msra.mxu0 %v1017
  %1580 = vmatprep.subr.mxu0 0.0
  %1581 = vmatpush2.msra.mxu0 0.0
  %1582 = vmatprep.subr.mxu0 0.0
  %1583 = vmatpush2.msra.mxu0 0.0
  %1584 = vmatprep.subr.mxu0 0.0
  %1585 = vmatpush2.msra.mxu0 0.0
  %1586 = vmatprep.subr.mxu0 0.0
  %1587 = vmatpush2.msra.mxu0 0.0
  %1588 = vmatprep.subr.mxu0 0.0
  %1589 = vmatpush2.msra.mxu0 0.0
  %1590 = vmatprep.subr.mxu0 0.0
  %1591 = vmatpush2.msra.mxu0 0.0
  %1592 = vmatprep.subr.mxu0 0.0
  %1593 = vmatpush2.msra.mxu0 0.0
  %1594 = vmatprep.subr.mxu0 0.0
  %1595 = vmatpush2.msra.mxu0 0.0
  %1596 = vmatprep.subr.mxu0 0.0
  %1597 = vmatpush2.msra.mxu0 0.0
  %1598 = vmatprep.subr.mxu0 0.0
  %1599 = vmatpush2.msra.mxu0 0.0
  %1600 = vmatprep.subr.mxu0 0.0
  %1601 = vmatpush2.msra.mxu0 0.0
  %1602 = vmatprep.subr.mxu0 0.0
  %1603 = vmatpush2.msra.mxu0 0.0
  %1604 = vmatprep.subr.mxu0 0.0
  %1605 = vmatpush2.msra.mxu0 0.0
  %1606 = vmatprep.subr.mxu0 0.0
  %1607 = vmatpush2.msra.mxu0 0.0
  %1608 = vmatprep.subr.mxu0 0.0
  %1609 = vmatpush2.msra.mxu0 0.0
  %1610 = vmatprep.subr.mxu0 0.0
  %1611 = vmatpush2.msra.mxu0 0.0
  %1612 = vmatprep.mubr.f32.mxu0 0.0
  %1613 = vmatmul.mubr.f32.gmra.mxu0 %v1547
  %v1614 = vpop.f32.mrf.mxu0
  %v1615 = vadd.f32 0.0, %v1614
  %v1616 = vpop.f32.mrf.mxu0
  %v1617 = vadd.f32 0.0, %v1616
  %1618 = vdwg.mxu0
  %s1619 = scalar_lea.vmem %s9, 28
  %v1620 = vld [vmem:[%s1619] sm:$0xf]
  %v1621 = vpack.c.bf16 %v1547, %v1547
  %s1622 = scalar_lea.vmem %s9, 24
  %v1623 = vld [vmem:[%s1622] sm:$0xf]
  %v1624 = vpack.c.bf16 %v1615, %v1615
  %v1626 = vsel %vm1125, %v1623, 0
  %v1629 = vsel %vm358, %v1624, 0
  %1631 = vmatprep.subr.bf16.mxu0 0
  %1632 = vmatpush1.bf16.msra.mxu0 0
  %1633 = vmatprep.subr.bf16.mxu0 0
  %1634 = vmatpush1.bf16.msra.mxu0 0
  %1635 = vmatprep.subr.bf16.mxu0 0
  %1636 = vmatpush1.bf16.msra.mxu0 0
  %1637 = vmatprep.subr.bf16.mxu0 0
  %1638 = vmatpush1.bf16.msra.mxu0 0
  %1639 = vmatprep.subr.bf16.mxu0 0
  %1640 = vmatpush1.bf16.msra.mxu0 0
  %1641 = vmatprep.subr.bf16.mxu0 0
  %1642 = vmatpush1.bf16.msra.mxu0 0
  %1643 = vmatprep.subr.bf16.mxu0 0
  %1644 = vmatpush1.bf16.msra.mxu0 0
  %1645 = vmatprep.subr.bf16.mxu0 0
  %1646 = vmatpush1.bf16.msra.mxu0 %v1629
  %1647 = vmatprep.subr.bf16.mxu0 0
  %1648 = vmatpush2.bf16.msra.mxu0 0
  %1649 = vmatprep.subr.bf16.mxu0 0
  %1650 = vmatpush2.bf16.msra.mxu0 0
  %1651 = vmatprep.subr.bf16.mxu0 0
  %1652 = vmatpush2.bf16.msra.mxu0 0
  %1653 = vmatprep.subr.bf16.mxu0 0
  %1654 = vmatpush2.bf16.msra.mxu0 0
  %1655 = vmatprep.subr.bf16.mxu0 0
  %1656 = vmatpush2.bf16.msra.mxu0 0
  %1657 = vmatprep.subr.bf16.mxu0 0
  %1658 = vmatpush2.bf16.msra.mxu0 0
  %1659 = vmatprep.subr.bf16.mxu0 0
  %1660 = vmatpush2.bf16.msra.mxu0 0
  %1661 = vmatprep.subr.bf16.mxu0 0
  %1662 = vmatpush2.bf16.msra.mxu0 0
  %1663 = vmatprep.mubr.bf16.mxu0 0
  %1664 = vmatmul.mubr.bf16.gmra.mxu0 %v1626
  %v1665 = vpop.f32.mrf.mxu0
  %v1666 = vadd.f32 0.0, %v1665
  %v1667 = vpop.f32.mrf.mxu0
  %v1668 = vpop.f32.mrf.mxu0
  %v1669 = vpop.f32.mrf.mxu0
  %1670 = vdwg.mxu0
  %v1672 = vsel %vm1125, %v1620, 0
  %v1675 = vsel %vm358, %v1621, 0
  %1677 = vmatprep.subr.bf16.mxu0 0
  %1678 = vmatpush1.bf16.msra.mxu0 0
  %1679 = vmatprep.subr.bf16.mxu0 0
  %1680 = vmatpush1.bf16.msra.mxu0 0
  %1681 = vmatprep.subr.bf16.mxu0 0
  %1682 = vmatpush1.bf16.msra.mxu0 0
  %1683 = vmatprep.subr.bf16.mxu0 0
  %1684 = vmatpush1.bf16.msra.mxu0 0
  %1685 = vmatprep.subr.bf16.mxu0 0
  %1686 = vmatpush1.bf16.msra.mxu0 0
  %1687 = vmatprep.subr.bf16.mxu0 0
  %1688 = vmatpush1.bf16.msra.mxu0 0
  %1689 = vmatprep.subr.bf16.mxu0 0
  %1690 = vmatpush1.bf16.msra.mxu0 0
  %1691 = vmatprep.subr.bf16.mxu0 0
  %1692 = vmatpush1.bf16.msra.mxu0 %v1675
  %1693 = vmatprep.subr.bf16.mxu0 0
  %1694 = vmatpush2.bf16.msra.mxu0 0
  %1695 = vmatprep.subr.bf16.mxu0 0
  %1696 = vmatpush2.bf16.msra.mxu0 0
  %1697 = vmatprep.subr.bf16.mxu0 0
  %1698 = vmatpush2.bf16.msra.mxu0 0
  %1699 = vmatprep.subr.bf16.mxu0 0
  %1700 = vmatpush2.bf16.msra.mxu0 0
  %1701 = vmatprep.subr.bf16.mxu0 0
  %1702 = vmatpush2.bf16.msra.mxu0 0
  %1703 = vmatprep.subr.bf16.mxu0 0
  %1704 = vmatpush2.bf16.msra.mxu0 0
  %1705 = vmatprep.subr.bf16.mxu0 0
  %1706 = vmatpush2.bf16.msra.mxu0 0
  %1707 = vmatprep.subr.bf16.mxu0 0
  %1708 = vmatpush2.bf16.msra.mxu0 0
  %1709 = vmatprep.mubr.bf16.mxu0 0
  %1710 = vmatmul.mubr.bf16.gmra.mxu0 %v1672
  %v1711 = vpop.f32.mrf.mxu0
  %v1712 = vadd.f32 %v1666, %v1711
  %v1713 = vpop.f32.mrf.mxu0
  %v1714 = vpop.f32.mrf.mxu0
  %v1715 = vpop.f32.mrf.mxu0
  %1716 = vdwg.mxu0
  %s1717 = scalar_lea.vmem %s9, 32
  %v1718 = vld [vmem:[%s1717] sm:$0xf]
  %v1719 = vpack.c.bf16 %v1617, %v1617
  %v1721 = vsel %vm1125, %v1718, 0
  %v1724 = vsel %vm358, %v1719, 0
  %1726 = vmatprep.subr.bf16.mxu0 0
  %1727 = vmatpush1.bf16.msra.mxu0 0
  %1728 = vmatprep.subr.bf16.mxu0 0
  %1729 = vmatpush1.bf16.msra.mxu0 0
  %1730 = vmatprep.subr.bf16.mxu0 0
  %1731 = vmatpush1.bf16.msra.mxu0 0
  %1732 = vmatprep.subr.bf16.mxu0 0
  %1733 = vmatpush1.bf16.msra.mxu0 0
  %1734 = vmatprep.subr.bf16.mxu0 0
  %1735 = vmatpush1.bf16.msra.mxu0 0
  %1736 = vmatprep.subr.bf16.mxu0 0
  %1737 = vmatpush1.bf16.msra.mxu0 0
  %1738 = vmatprep.subr.bf16.mxu0 0
  %1739 = vmatpush1.bf16.msra.mxu0 0
  %1740 = vmatprep.subr.bf16.mxu0 0
  %1741 = vmatpush1.bf16.msra.mxu0 %v1724
  %1742 = vmatprep.subr.bf16.mxu0 0
  %1743 = vmatpush2.bf16.msra.mxu0 0
  %1744 = vmatprep.subr.bf16.mxu0 0
  %1745 = vmatpush2.bf16.msra.mxu0 0
  %1746 = vmatprep.subr.bf16.mxu0 0
  %1747 = vmatpush2.bf16.msra.mxu0 0
  %1748 = vmatprep.subr.bf16.mxu0 0
  %1749 = vmatpush2.bf16.msra.mxu0 0
  %1750 = vmatprep.subr.bf16.mxu0 0
  %1751 = vmatpush2.bf16.msra.mxu0 0
  %1752 = vmatprep.subr.bf16.mxu0 0
  %1753 = vmatpush2.bf16.msra.mxu0 0
  %1754 = vmatprep.subr.bf16.mxu0 0
  %1755 = vmatpush2.bf16.msra.mxu0 0
  %1756 = vmatprep.subr.bf16.mxu0 0
  %1757 = vmatpush2.bf16.msra.mxu0 0
  %1758 = vmatprep.mubr.bf16.mxu0 0
  %1759 = vmatmul.mubr.bf16.gmra.mxu0 %v1721
  %v1760 = vpop.f32.mrf.mxu0
  %v1761 = vadd.f32 0.0, %v1760
  %v1762 = vpop.f32.mrf.mxu0
  %v1763 = vpop.f32.mrf.mxu0
  %v1764 = vpop.f32.mrf.mxu0
  %1765 = vdwg.mxu0
  %v1766 = vadd.f32 %v1712, %v1761
  %s1767 = scalar_lea.vmem %s10, 16
  %v1768 = vld [vmem:[%s1767] sm:$0xff]
  %1770 = vset.pattern.permute.xlu0 0
  %1771 = vperm.xlu0 %1770, %v1768
  %v1772 = vpop.permute.xlu0 %1771
  %v1774 = vadd.f32 %v1766, %v1772
  %v1775 = vmax.f32 %v1774, 0.0
  %1776 = vadd.xlane.f32.xlu0 %v1775
  %v1777 = vpop.xlane.xlu0 %1776
  %v1778 = vmul.f32 %v1777, %v756
  %v1779 = vsub.f32 %v1775, %v1778
  %v1780 = vmul.f32 %v1779, %v1779
  %1781 = vadd.xlane.f32.xlu0 %v1780
  %v1782 = vpop.xlane.xlu0 %1781
  %v1783 = vmul.f32 %v1782, %v756
  %v1784 = vadd.f32 %v1783, 1e-05
  %v1785 = vrsqrt.pop %v1784
  %v1786 = vmul.f32 %v1779, %v1785
  %1787 = vset.pattern.permute.xlu0 1
  %1788 = vperm.xlu0 %1787, %v1768
  %v1789 = vpop.permute.xlu0 %1788
  %v1791 = vmul.f32 %v1786, %v1789
  %1792 = vset.pattern.permute.xlu0 2
  %1793 = vperm.xlu0 %1792, %v1768
  %v1794 = vpop.permute.xlu0 %1793
  %v1796 = vadd.f32 %v1791, %v1794
  %s1797 = scalar_lea.vmem %s7, 16
  %v1798 = vld [vmem:[%s1797] sm:$0xf]
  %v1799 = vld [vmem:[%s1797 + $0x4] sm:$0xf]
  %v1800 = vld [vmem:[%s1797 + $0x8] sm:$0xf]
  %v1801 = vld [vmem:[%s1797 + $0xc] sm:$0xf]
  %v1802 = vpack.c.bf16 %v1296, %v1013
  %v1803 = vpack.c.bf16 %v1796, %v1546
  %s1804 = scalar_lea.vmem %s8, 32
  %v1805 = vld [vmem:[%s1804] sm:$0xff]
  %v1806 = vld [vmem:[%s1804 + $0x8] sm:$0xff]
  %v1807 = vld [vmem:[%s1804 + $0x10] sm:$0xff]
  %v1808 = vld [vmem:[%s1804 + $0x18] sm:$0xff]
  %1810 = vset.pattern.permute.xlu0 0
  %1811 = vperm.xlu0 %1810, %v1805
  %v1812 = vpop.permute.xlu0 %1811
  %1815 = vset.pattern.permute.xlu0 0
  %1816 = vperm.xlu0 %1815, %v1806
  %v1817 = vpop.permute.xlu0 %1816
  %1820 = vset.pattern.permute.xlu0 0
  %1821 = vperm.xlu0 %1820, %v1807
  %v1822 = vpop.permute.xlu0 %1821
  %1825 = vset.pattern.permute.xlu0 0
  %1826 = vperm.xlu0 %1825, %v1808
  %v1827 = vpop.permute.xlu0 %1826
  %v1833 = vunpack.c.l.b16 %v1798
  %v1834 = vunpack.c.l.b16 %v1799
  %v1835 = vunpack.c.l.b16 %v1800
  %v1836 = vunpack.c.l.b16 %v1801
  %v1837 = vpack.c.b16 %v1834, %v1833
  %v1838 = vpack.c.b16 %v1836, %v1835
  %v1840 = vsel %vm873, %v1837, 0
  %v1843 = vsel %vm873, %v1838, 0
  %1845 = vmatprep.subr.bf16.mxu0 0
  %1846 = vmatpush1.bf16.msra.mxu0 0
  %1847 = vmatprep.subr.bf16.mxu0 0
  %1848 = vmatpush1.bf16.msra.mxu0 0
  %1849 = vmatprep.subr.bf16.mxu0 0
  %1850 = vmatpush1.bf16.msra.mxu0 0
  %1851 = vmatprep.subr.bf16.mxu0 0
  %1852 = vmatpush1.bf16.msra.mxu0 0
  %1853 = vmatprep.subr.bf16.mxu0 0
  %1854 = vmatpush1.bf16.msra.mxu0 0
  %1855 = vmatprep.subr.bf16.mxu0 0
  %1856 = vmatpush1.bf16.msra.mxu0 0
  %1857 = vmatprep.subr.bf16.mxu0 0
  %1858 = vmatpush1.bf16.msra.mxu0 %v1803
  %1859 = vmatprep.subr.bf16.mxu0 0
  %1860 = vmatpush1.bf16.msra.mxu0 %v1802
  %1861 = vmatprep.subr.bf16.mxu0 0
  %1862 = vmatpush2.bf16.msra.mxu0 0
  %1863 = vmatprep.subr.bf16.mxu0 0
  %1864 = vmatpush2.bf16.msra.mxu0 0
  %1865 = vmatprep.subr.bf16.mxu0 0
  %1866 = vmatpush2.bf16.msra.mxu0 0
  %1867 = vmatprep.subr.bf16.mxu0 0
  %1868 = vmatpush2.bf16.msra.mxu0 0
  %1869 = vmatprep.subr.bf16.mxu0 0
  %1870 = vmatpush2.bf16.msra.mxu0 0
  %1871 = vmatprep.subr.bf16.mxu0 0
  %1872 = vmatpush2.bf16.msra.mxu0 0
  %1873 = vmatprep.subr.bf16.mxu0 0
  %1874 = vmatpush2.bf16.msra.mxu0 0
  %1875 = vmatprep.subr.bf16.mxu0 0
  %1876 = vmatpush2.bf16.msra.mxu0 0
  %1877 = vmatprep.mubr.bf16.mxu0 0
  %1878 = vmatmul.mubr.bf16.gmra.mxu0 %v1840
  %v1879 = vpop.f32.mrf.mxu0
  %v1880 = vadd.f32 %v1812, %v1879
  %v1881 = vpop.f32.mrf.mxu0
  %v1882 = vpop.f32.mrf.mxu0
  %v1883 = vadd.f32 %v1817, %v1882
  %v1884 = vpop.f32.mrf.mxu0
  %1885 = vmatprep.mubr.bf16.mxu0 0
  %1886 = vmatmul.mubr.bf16.gmra.mxu0 %v1843
  %v1887 = vpop.f32.mrf.mxu0
  %v1888 = vadd.f32 %v1822, %v1887
  %v1889 = vpop.f32.mrf.mxu0
  %v1890 = vpop.f32.mrf.mxu0
  %v1891 = vadd.f32 %v1827, %v1890
  %v1892 = vpop.f32.mrf.mxu0
  %1893 = vdwg.mxu0
  %v1894 = vmax.f32 %v1880, 0.0
  %v1895 = vmax.f32 %v1883, 0.0
  %v1896 = vmax.f32 %v1888, 0.0
  %v1897 = vmax.f32 %v1891, 0.0
  %1898 = vadd.xlane.f32.xlu0 %v1894
  %v1899 = vpop.xlane.xlu0 %1898
  %1900 = vadd.xlane.f32.xlu0 %v1895
  %v1901 = vpop.xlane.xlu0 %1900
  %1902 = vadd.xlane.f32.xlu0 %v1896
  %v1903 = vpop.xlane.xlu0 %1902
  %1904 = vadd.xlane.f32.xlu0 %v1897
  %v1905 = vpop.xlane.xlu0 %1904
  %v1906 = vmul.f32 %v1899, %v756
  %v1907 = vmul.f32 %v1901, %v756
  %v1908 = vmul.f32 %v1903, %v756
  %v1909 = vmul.f32 %v1905, %v756
  %v1910 = vsub.f32 %v1894, %v1906
  %v1911 = vsub.f32 %v1895, %v1907
  %v1912 = vsub.f32 %v1896, %v1908
  %v1913 = vsub.f32 %v1897, %v1909
  %v1914 = vmul.f32 %v1910, %v1910
  %v1915 = vmul.f32 %v1911, %v1911
  %v1916 = vmul.f32 %v1912, %v1912
  %v1917 = vmul.f32 %v1913, %v1913
  %1918 = vadd.xlane.f32.xlu0 %v1914
  %v1919 = vpop.xlane.xlu0 %1918
  %1920 = vadd.xlane.f32.xlu0 %v1915
  %v1921 = vpop.xlane.xlu0 %1920
  %1922 = vadd.xlane.f32.xlu0 %v1916
  %v1923 = vpop.xlane.xlu0 %1922
  %1924 = vadd.xlane.f32.xlu0 %v1917
  %v1925 = vpop.xlane.xlu0 %1924
  %v1926 = vmul.f32 %v1919, %v756
  %v1927 = vmul.f32 %v1921, %v756
  %v1928 = vmul.f32 %v1923, %v756
  %v1929 = vmul.f32 %v1925, %v756
  %v1930 = vadd.f32 %v1926, 1e-05
  %v1931 = vadd.f32 %v1927, 1e-05
  %v1932 = vadd.f32 %v1928, 1e-05
  %v1933 = vadd.f32 %v1929, 1e-05
  %v1934 = vrsqrt.pop %v1930
  %v1935 = vrsqrt.pop %v1931
  %v1936 = vrsqrt.pop %v1932
  %v1937 = vrsqrt.pop %v1933
  %v1938 = vmul.f32 %v1910, %v1934
  %v1939 = vmul.f32 %v1911, %v1935
  %v1940 = vmul.f32 %v1912, %v1936
  %v1941 = vmul.f32 %v1913, %v1937
  %1942 = vset.pattern.permute.xlu0 1
  %1943 = vperm.xlu0 %1942, %v1805
  %v1944 = vpop.permute.xlu0 %1943
  %1946 = vset.pattern.permute.xlu0 1
  %1947 = vperm.xlu0 %1946, %v1806
  %v1948 = vpop.permute.xlu0 %1947
  %1950 = vset.pattern.permute.xlu0 1
  %1951 = vperm.xlu0 %1950, %v1807
  %v1952 = vpop.permute.xlu0 %1951
  %1954 = vset.pattern.permute.xlu0 1
  %1955 = vperm.xlu0 %1954, %v1808
  %v1956 = vpop.permute.xlu0 %1955
  %v1958 = vmul.f32 %v1938, %v1944
  %v1959 = vmul.f32 %v1939, %v1948
  %v1960 = vmul.f32 %v1940, %v1952
  %v1961 = vmul.f32 %v1941, %v1956
  %1962 = vset.pattern.permute.xlu0 2
  %1963 = vperm.xlu0 %1962, %v1805
  %v1964 = vpop.permute.xlu0 %1963
  %1966 = vset.pattern.permute.xlu0 2
  %1967 = vperm.xlu0 %1966, %v1806
  %v1968 = vpop.permute.xlu0 %1967
  %1970 = vset.pattern.permute.xlu0 2
  %1971 = vperm.xlu0 %1970, %v1807
  %v1972 = vpop.permute.xlu0 %1971
  %1974 = vset.pattern.permute.xlu0 2
  %1975 = vperm.xlu0 %1974, %v1808
  %v1976 = vpop.permute.xlu0 %1975
  %v1978 = vadd.f32 %v1958, %v1964
  %v1979 = vadd.f32 %v1959, %v1968
  %v1980 = vadd.f32 %v1960, %v1972
  %v1981 = vadd.f32 %v1961, %v1976
  %1982 = vmatprep.subr.mxu0 0.0
  %1983 = vmatpush1.msra.mxu0 %v93
  %1984 = vmatprep.subr.mxu0 0.0
  %1985 = vmatpush1.msra.mxu0 %v92
  %1986 = vmatprep.subr.mxu0 0.0
  %1987 = vmatpush1.msra.mxu0 %v91
  %1988 = vmatprep.subr.mxu0 0.0
  %1989 = vmatpush1.msra.mxu0 %v90
  %1990 = vmatprep.subr.mxu0 0.0
  %1991 = vmatpush1.msra.mxu0 %v89
  %1992 = vmatprep.subr.mxu0 0.0
  %1993 = vmatpush1.msra.mxu0 %v88
  %1994 = vmatprep.subr.mxu0 0.0
  %1995 = vmatpush1.msra.mxu0 %v87
  %1996 = vmatprep.subr.mxu0 0.0
  %1997 = vmatpush1.msra.mxu0 %v86
  %1998 = vmatprep.subr.mxu0 0.0
  %1999 = vmatpush1.msra.mxu0 %v85
  %2000 = vmatprep.subr.mxu0 0.0
  %2001 = vmatpush1.msra.mxu0 %v84
  %2002 = vmatprep.subr.mxu0 0.0
  %2003 = vmatpush1.msra.mxu0 %v83
  %2004 = vmatprep.subr.mxu0 0.0
  %2005 = vmatpush1.msra.mxu0 %v82
  %2006 = vmatprep.subr.mxu0 0.0
  %2007 = vmatpush1.msra.mxu0 %v81
  %2008 = vmatprep.subr.mxu0 0.0
  %2009 = vmatpush1.msra.mxu0 %v80
  %2010 = vmatprep.subr.mxu0 0.0
  %2011 = vmatpush1.msra.mxu0 %v79
  %2012 = vmatprep.subr.mxu0 0.0
  %2013 = vmatpush1.msra.mxu0 %v78
  %2014 = vmatprep.subr.mxu0 0.0
  %2015 = vmatpush2.msra.mxu0 0.0
  %2016 = vmatprep.subr.mxu0 0.0
  %2017 = vmatpush2.msra.mxu0 0.0
  %2018 = vmatprep.subr.mxu0 0.0
  %2019 = vmatpush2.msra.mxu0 0.0
  %2020 = vmatprep.subr.mxu0 0.0
  %2021 = vmatpush2.msra.mxu0 0.0
  %2022 = vmatprep.subr.mxu0 0.0
  %2023 = vmatpush2.msra.mxu0 0.0
  %2024 = vmatprep.subr.mxu0 0.0
  %2025 = vmatpush2.msra.mxu0 0.0
  %2026 = vmatprep.subr.mxu0 0.0
  %2027 = vmatpush2.msra.mxu0 0.0
  %2028 = vmatprep.subr.mxu0 0.0
  %2029 = vmatpush2.msra.mxu0 0.0
  %2030 = vmatprep.subr.mxu0 0.0
  %2031 = vmatpush2.msra.mxu0 0.0
  %2032 = vmatprep.subr.mxu0 0.0
  %2033 = vmatpush2.msra.mxu0 0.0
  %2034 = vmatprep.subr.mxu0 0.0
  %2035 = vmatpush2.msra.mxu0 0.0
  %2036 = vmatprep.subr.mxu0 0.0
  %2037 = vmatpush2.msra.mxu0 0.0
  %2038 = vmatprep.subr.mxu0 0.0
  %2039 = vmatpush2.msra.mxu0 0.0
  %2040 = vmatprep.subr.mxu0 0.0
  %2041 = vmatpush2.msra.mxu0 0.0
  %2042 = vmatprep.subr.mxu0 0.0
  %2043 = vmatpush2.msra.mxu0 0.0
  %2044 = vmatprep.subr.mxu0 0.0
  %2045 = vmatpush2.msra.mxu0 0.0
  %2046 = vmatprep.mubr.f32.mxu0 0.0
  %2047 = vmatmul.mubr.f32.gmra.mxu0 %v1978
  %v2048 = vpop.f32.mrf.mxu0
  %v2049 = vadd.f32 0.0, %v2048
  %v2050 = vpop.f32.mrf.mxu0
  %2051 = vmatprep.mubr.f32.mxu0 0.0
  %2052 = vmatmul.mubr.f32.gmra.mxu0 %v1979
  %v2053 = vpop.f32.mrf.mxu0
  %v2054 = vadd.f32 0.0, %v2053
  %v2055 = vpop.f32.mrf.mxu0
  %2056 = vmatprep.mubr.f32.mxu0 0.0
  %2057 = vmatmul.mubr.f32.gmra.mxu0 %v1980
  %v2058 = vpop.f32.mrf.mxu0
  %v2059 = vadd.f32 0.0, %v2058
  %v2060 = vpop.f32.mrf.mxu0
  %2061 = vmatprep.mubr.f32.mxu0 0.0
  %2062 = vmatmul.mubr.f32.gmra.mxu0 %v1981
  %v2063 = vpop.f32.mrf.mxu0
  %v2064 = vadd.f32 0.0, %v2063
  %v2065 = vpop.f32.mrf.mxu0
  %2066 = vdwg.mxu0
  %v2067 = vmul.f32 %v2049, 0.015625
  %v2068 = vmul.f32 %v2054, 0.015625
  %v2069 = vmul.f32 %v2059, 0.015625
  %v2070 = vmul.f32 %v2064, 0.015625
  %v2071 = vld [vmem:[%s11] sm:$0xf]
  %v2072 = vld [vmem:[%s11 + $0x4] sm:$0xf]
  %v2073 = vpack.c.bf16 %v2068, %v2067
  %v2074 = vpack.c.bf16 %v2070, %v2069
  %v2075 = vld [vmem:[%s12] sm:$0xff]
  %v2076 = vld [vmem:[%s12 + $0x8] sm:$0xff]
  %2078 = vset.pattern.permute.xlu0 0
  %2079 = vperm.xlu0 %2078, %v2075
  %v2080 = vpop.permute.xlu0 %2079
  %2083 = vset.pattern.permute.xlu0 0
  %2084 = vperm.xlu0 %2083, %v2076
  %v2085 = vpop.permute.xlu0 %2084
  %v2089 = vunpack.c.l.b16 %v2071
  %v2090 = vunpack.c.l.b16 %v2072
  %v2091 = vpack.c.b16 %v2090, %v2089
  %v2093 = vsel %vm873, %v2091, 0
  %2095 = vmatprep.subr.bf16.mxu0 0
  %2096 = vmatpush1.bf16.msra.mxu0 0
  %2097 = vmatprep.subr.bf16.mxu0 0
  %2098 = vmatpush1.bf16.msra.mxu0 0
  %2099 = vmatprep.subr.bf16.mxu0 0
  %2100 = vmatpush1.bf16.msra.mxu0 0
  %2101 = vmatprep.subr.bf16.mxu0 0
  %2102 = vmatpush1.bf16.msra.mxu0 0
  %2103 = vmatprep.subr.bf16.mxu0 0
  %2104 = vmatpush1.bf16.msra.mxu0 0
  %2105 = vmatprep.subr.bf16.mxu0 0
  %2106 = vmatpush1.bf16.msra.mxu0 0
  %2107 = vmatprep.subr.bf16.mxu0 0
  %2108 = vmatpush1.bf16.msra.mxu0 %v2074
  %2109 = vmatprep.subr.bf16.mxu0 0
  %2110 = vmatpush1.bf16.msra.mxu0 %v2073
  %2111 = vmatprep.subr.bf16.mxu0 0
  %2112 = vmatpush2.bf16.msra.mxu0 0
  %2113 = vmatprep.subr.bf16.mxu0 0
  %2114 = vmatpush2.bf16.msra.mxu0 0
  %2115 = vmatprep.subr.bf16.mxu0 0
  %2116 = vmatpush2.bf16.msra.mxu0 0
  %2117 = vmatprep.subr.bf16.mxu0 0
  %2118 = vmatpush2.bf16.msra.mxu0 0
  %2119 = vmatprep.subr.bf16.mxu0 0
  %2120 = vmatpush2.bf16.msra.mxu0 0
  %2121 = vmatprep.subr.bf16.mxu0 0
  %2122 = vmatpush2.bf16.msra.mxu0 0
  %2123 = vmatprep.subr.bf16.mxu0 0
  %2124 = vmatpush2.bf16.msra.mxu0 0
  %2125 = vmatprep.subr.bf16.mxu0 0
  %2126 = vmatpush2.bf16.msra.mxu0 0
  %2127 = vmatprep.mubr.bf16.mxu0 0
  %2128 = vmatmul.mubr.bf16.gmra.mxu0 %v2093
  %v2129 = vpop.f32.mrf.mxu0
  %v2130 = vadd.f32 %v2080, %v2129
  %v2131 = vpop.f32.mrf.mxu0
  %v2132 = vpop.f32.mrf.mxu0
  %v2133 = vadd.f32 %v2085, %v2132
  %v2134 = vpop.f32.mrf.mxu0
  %2135 = vdwg.mxu0
  %v2136 = vmax.f32 %v2130, 0.0
  %v2137 = vmax.f32 %v2133, 0.0
  %v2138 = vld [vmem:[%s13] sm:$0xf]
  %v2139 = vld [vmem:[%s13 + $0x4] sm:$0xf]
  %v2140 = vld [vmem:[%s13 + $0x8] sm:$0xf]
  %v2141 = vld [vmem:[%s13 + $0xc] sm:$0xf]
  %v2142 = vpack.c.bf16 %v2137, %v2136
  %v2143 = vld [vmem:[%s14] sm:$0xff]
  %v2144 = vld [vmem:[%s14 + $0x8] sm:$0xff]
  %v2145 = vld [vmem:[%s14 + $0x10] sm:$0xff]
  %v2146 = vld [vmem:[%s14 + $0x18] sm:$0xff]
  %2148 = vset.pattern.permute.xlu0 0
  %2149 = vperm.xlu0 %2148, %v2143
  %v2150 = vpop.permute.xlu0 %2149
  %2153 = vset.pattern.permute.xlu0 0
  %2154 = vperm.xlu0 %2153, %v2144
  %v2155 = vpop.permute.xlu0 %2154
  %2158 = vset.pattern.permute.xlu0 0
  %2159 = vperm.xlu0 %2158, %v2145
  %v2160 = vpop.permute.xlu0 %2159
  %2163 = vset.pattern.permute.xlu0 0
  %2164 = vperm.xlu0 %2163, %v2146
  %v2165 = vpop.permute.xlu0 %2164
  %v2171 = vunpack.c.l.b16 %v2138
  %v2172 = vunpack.c.l.b16 %v2139
  %v2173 = vunpack.c.l.b16 %v2140
  %v2174 = vunpack.c.l.b16 %v2141
  %v2175 = vpack.c.b16 %v2172, %v2171
  %v2176 = vpack.c.b16 %v2174, %v2173
  %vm2177 = vcmask 130048
  %v2179 = vsel %vm2177, %v2175, 0
  %v2182 = vsel %vm2177, %v2176, 0
  %2184 = vmatprep.subr.bf16.mxu0 0
  %2185 = vmatpush1.bf16.msra.mxu0 0
  %2186 = vmatprep.subr.bf16.mxu0 0
  %2187 = vmatpush1.bf16.msra.mxu0 0
  %2188 = vmatprep.subr.bf16.mxu0 0
  %2189 = vmatpush1.bf16.msra.mxu0 0
  %2190 = vmatprep.subr.bf16.mxu0 0
  %2191 = vmatpush1.bf16.msra.mxu0 0
  %2192 = vmatprep.subr.bf16.mxu0 0
  %2193 = vmatpush1.bf16.msra.mxu0 0
  %2194 = vmatprep.subr.bf16.mxu0 0
  %2195 = vmatpush1.bf16.msra.mxu0 0
  %2196 = vmatprep.subr.bf16.mxu0 0
  %2197 = vmatpush1.bf16.msra.mxu0 0
  %2198 = vmatprep.subr.bf16.mxu0 0
  %2199 = vmatpush1.bf16.msra.mxu0 %v2142
  %2200 = vmatprep.subr.bf16.mxu0 0
  %2201 = vmatpush2.bf16.msra.mxu0 0
  %2202 = vmatprep.subr.bf16.mxu0 0
  %2203 = vmatpush2.bf16.msra.mxu0 0
  %2204 = vmatprep.subr.bf16.mxu0 0
  %2205 = vmatpush2.bf16.msra.mxu0 0
  %2206 = vmatprep.subr.bf16.mxu0 0
  %2207 = vmatpush2.bf16.msra.mxu0 0
  %2208 = vmatprep.subr.bf16.mxu0 0
  %2209 = vmatpush2.bf16.msra.mxu0 0
  %2210 = vmatprep.subr.bf16.mxu0 0
  %2211 = vmatpush2.bf16.msra.mxu0 0
  %2212 = vmatprep.subr.bf16.mxu0 0
  %2213 = vmatpush2.bf16.msra.mxu0 0
  %2214 = vmatprep.subr.bf16.mxu0 0
  %2215 = vmatpush2.bf16.msra.mxu0 0
  %2216 = vmatprep.mubr.bf16.mxu0 0
  %2217 = vmatmul.mubr.bf16.gmra.mxu0 %v2179
  %v2218 = vpop.f32.mrf.mxu0
  %v2219 = vadd.f32 %v2150, %v2218
  %v2220 = vpop.f32.mrf.mxu0
  %v2221 = vpop.f32.mrf.mxu0
  %v2222 = vadd.f32 %v2155, %v2221
  %v2223 = vpop.f32.mrf.mxu0
  %2224 = vmatprep.mubr.bf16.mxu0 0
  %2225 = vmatmul.mubr.bf16.gmra.mxu0 %v2182
  %v2226 = vpop.f32.mrf.mxu0
  %v2227 = vadd.f32 %v2160, %v2226
  %v2228 = vpop.f32.mrf.mxu0
  %v2229 = vpop.f32.mrf.mxu0
  %v2230 = vadd.f32 %v2165, %v2229
  %v2231 = vpop.f32.mrf.mxu0
  %2232 = vdwg.mxu0
  %v2233 = vxor.u32 %v2219, 2147483648
  %v2234 = vxor.u32 %v2222, 2147483648
  %v2235 = vxor.u32 %v2227, 2147483648
  %v2236 = vxor.u32 %v2230, 2147483648
  %v2237 = vmul.f32 %v2233, 1.442695
  %v2238 = vpow.pop %v2237
  %v2239 = vmul.f32 %v2234, 1.442695
  %v2240 = vpow.pop %v2239
  %v2241 = vmul.f32 %v2235, 1.442695
  %v2242 = vpow.pop %v2241
  %v2243 = vmul.f32 %v2236, 1.442695
  %v2244 = vpow.pop %v2243
  %v2245 = vadd.f32 %v2238, 1.0
  %v2246 = vadd.f32 %v2240, 1.0
  %v2247 = vadd.f32 %v2242, 1.0
  %v2248 = vadd.f32 %v2244, 1.0
  %v2249 = vrcp.pop %v2245
  %v2250 = vmul.f32 1.0, %v2249
  %v2251 = vrcp.pop %v2246
  %v2252 = vmul.f32 1.0, %v2251
  %v2253 = vrcp.pop %v2247
  %v2254 = vmul.f32 1.0, %v2253
  %v2255 = vrcp.pop %v2248
  %v2256 = vmul.f32 1.0, %v2255
  %vm2257 = vcmask 15360
  %v2259 = vsel %vm2257, %v2250, 0
  %v2262 = vsel %vm2257, %v2252, 0
  %v2265 = vsel %vm2257, %v2254, 0
  %v2268 = vsel %vm2257, %v2256, 0
  %vm2270 = vcmask 1041408
  %v2272 = vsel %vm2270, %v94, 0
  %2274 = vmatprep.subr.mxu0 0.0
  %2275 = vmatpush1.msra.mxu0 0.0
  %2276 = vmatprep.subr.mxu0 0.0
  %2277 = vmatpush1.msra.mxu0 0.0
  %2278 = vmatprep.subr.mxu0 0.0
  %2279 = vmatpush1.msra.mxu0 0.0
  %2280 = vmatprep.subr.mxu0 0.0
  %2281 = vmatpush1.msra.mxu0 0.0
  %2282 = vmatprep.subr.mxu0 0.0
  %2283 = vmatpush1.msra.mxu0 0.0
  %2284 = vmatprep.subr.mxu0 0.0
  %2285 = vmatpush1.msra.mxu0 0.0
  %2286 = vmatprep.subr.mxu0 0.0
  %2287 = vmatpush1.msra.mxu0 0.0
  %2288 = vmatprep.subr.mxu0 0.0
  %2289 = vmatpush1.msra.mxu0 0.0
  %2290 = vmatprep.subr.mxu0 0.0
  %2291 = vmatpush1.msra.mxu0 0.0
  %2292 = vmatprep.subr.mxu0 0.0
  %2293 = vmatpush1.msra.mxu0 0.0
  %2294 = vmatprep.subr.mxu0 0.0
  %2295 = vmatpush1.msra.mxu0 0.0
  %2296 = vmatprep.subr.mxu0 0.0
  %2297 = vmatpush1.msra.mxu0 0.0
  %2298 = vmatprep.subr.mxu0 0.0
  %2299 = vmatpush1.msra.mxu0 0.0
  %2300 = vmatprep.subr.mxu0 0.0
  %2301 = vmatpush1.msra.mxu0 0.0
  %2302 = vmatprep.subr.mxu0 0.0
  %2303 = vmatpush1.msra.mxu0 0.0
  %2304 = vmatprep.subr.mxu0 0.0
  %2305 = vmatpush1.msra.mxu0 %v2272
  %2306 = vmatprep.subr.mxu0 0.0
  %2307 = vmatpush2.msra.mxu0 0.0
  %2308 = vmatprep.subr.mxu0 0.0
  %2309 = vmatpush2.msra.mxu0 0.0
  %2310 = vmatprep.subr.mxu0 0.0
  %2311 = vmatpush2.msra.mxu0 0.0
  %2312 = vmatprep.subr.mxu0 0.0
  %2313 = vmatpush2.msra.mxu0 0.0
  %2314 = vmatprep.subr.mxu0 0.0
  %2315 = vmatpush2.msra.mxu0 0.0
  %2316 = vmatprep.subr.mxu0 0.0
  %2317 = vmatpush2.msra.mxu0 0.0
  %2318 = vmatprep.subr.mxu0 0.0
  %2319 = vmatpush2.msra.mxu0 0.0
  %2320 = vmatprep.subr.mxu0 0.0
  %2321 = vmatpush2.msra.mxu0 0.0
  %2322 = vmatprep.subr.mxu0 0.0
  %2323 = vmatpush2.msra.mxu0 0.0
  %2324 = vmatprep.subr.mxu0 0.0
  %2325 = vmatpush2.msra.mxu0 0.0
  %2326 = vmatprep.subr.mxu0 0.0
  %2327 = vmatpush2.msra.mxu0 0.0
  %2328 = vmatprep.subr.mxu0 0.0
  %2329 = vmatpush2.msra.mxu0 0.0
  %2330 = vmatprep.subr.mxu0 0.0
  %2331 = vmatpush2.msra.mxu0 0.0
  %2332 = vmatprep.subr.mxu0 0.0
  %2333 = vmatpush2.msra.mxu0 0.0
  %2334 = vmatprep.subr.mxu0 0.0
  %2335 = vmatpush2.msra.mxu0 0.0
  %2336 = vmatprep.subr.mxu0 0.0
  %2337 = vmatpush2.msra.mxu0 0.0
  %2338 = vmatprep.mubr.f32.mxu0 0.0
  %2339 = vmatmul.mubr.f32.gmra.mxu0 %v2259
  %v2340 = vpop.f32.mrf.mxu0
  %v2341 = vadd.f32 0.0, %v2340
  %v2342 = vpop.f32.mrf.mxu0
  %2343 = vmatprep.mubr.f32.mxu0 0.0
  %2344 = vmatmul.mubr.f32.gmra.mxu0 %v2262
  %v2345 = vpop.f32.mrf.mxu0
  %v2346 = vadd.f32 0.0, %v2345
  %v2347 = vpop.f32.mrf.mxu0
  %2348 = vmatprep.mubr.f32.mxu0 0.0
  %2349 = vmatmul.mubr.f32.gmra.mxu0 %v2265
  %v2350 = vpop.f32.mrf.mxu0
  %v2351 = vadd.f32 0.0, %v2350
  %v2352 = vpop.f32.mrf.mxu0
  %2353 = vmatprep.mubr.f32.mxu0 0.0
  %2354 = vmatmul.mubr.f32.gmra.mxu0 %v2268
  %v2355 = vpop.f32.mrf.mxu0
  %v2356 = vadd.f32 0.0, %v2355
  %v2357 = vpop.f32.mrf.mxu0
  %2358 = vdwg.mxu0
  %v2359 = vmul.f32 %v1978, %v2341
  %v2360 = vmul.f32 %v1979, %v2346
  %v2361 = vmul.f32 %v1980, %v2351
  %v2362 = vmul.f32 %v1981, %v2356
  %v2363 = vadd.f32 %v2359, %v829
  %v2364 = vadd.f32 %v2360, %v830
  %v2365 = vadd.f32 %v2361, %v831
  %v2366 = vadd.f32 %v2362, %v832
  %s2367 = scalar_lea.vmem %s7, 32
  %v2368 = vld [vmem:[%s2367] sm:$0xf]
  %v2369 = vld [vmem:[%s2367 + $0x4] sm:$0xf]
  %v2370 = vld [vmem:[%s2367 + $0x8] sm:$0xf]
  %v2371 = vld [vmem:[%s2367 + $0xc] sm:$0xf]
  %v2372 = vpack.c.bf16 %v2364, %v2363
  %v2373 = vpack.c.bf16 %v2366, %v2365
  %s2374 = scalar_lea.vmem %s8, 64
  %v2375 = vld [vmem:[%s2374] sm:$0xff]
  %v2376 = vld [vmem:[%s2374 + $0x8] sm:$0xff]
  %v2377 = vld [vmem:[%s2374 + $0x10] sm:$0xff]
  %v2378 = vld [vmem:[%s2374 + $0x18] sm:$0xff]
  %2380 = vset.pattern.permute.xlu0 0
  %2381 = vperm.xlu0 %2380, %v2375
  %v2382 = vpop.permute.xlu0 %2381
  %2385 = vset.pattern.permute.xlu0 0
  %2386 = vperm.xlu0 %2385, %v2376
  %v2387 = vpop.permute.xlu0 %2386
  %2390 = vset.pattern.permute.xlu0 0
  %2391 = vperm.xlu0 %2390, %v2377
  %v2392 = vpop.permute.xlu0 %2391
  %2395 = vset.pattern.permute.xlu0 0
  %2396 = vperm.xlu0 %2395, %v2378
  %v2397 = vpop.permute.xlu0 %2396
  %v2403 = vunpack.c.l.b16 %v2368
  %v2404 = vunpack.c.l.b16 %v2369
  %v2405 = vunpack.c.l.b16 %v2370
  %v2406 = vunpack.c.l.b16 %v2371
  %v2407 = vpack.c.b16 %v2404, %v2403
  %v2408 = vpack.c.b16 %v2406, %v2405
  %v2410 = vsel %vm873, %v2407, 0
  %v2413 = vsel %vm873, %v2408, 0
  %2415 = vmatprep.subr.bf16.mxu0 0
  %2416 = vmatpush1.bf16.msra.mxu0 0
  %2417 = vmatprep.subr.bf16.mxu0 0
  %2418 = vmatpush1.bf16.msra.mxu0 0
  %2419 = vmatprep.subr.bf16.mxu0 0
  %2420 = vmatpush1.bf16.msra.mxu0 0
  %2421 = vmatprep.subr.bf16.mxu0 0
  %2422 = vmatpush1.bf16.msra.mxu0 0
  %2423 = vmatprep.subr.bf16.mxu0 0
  %2424 = vmatpush1.bf16.msra.mxu0 0
  %2425 = vmatprep.subr.bf16.mxu0 0
  %2426 = vmatpush1.bf16.msra.mxu0 0
  %2427 = vmatprep.subr.bf16.mxu0 0
  %2428 = vmatpush1.bf16.msra.mxu0 %v2373
  %2429 = vmatprep.subr.bf16.mxu0 0
  %2430 = vmatpush1.bf16.msra.mxu0 %v2372
  %2431 = vmatprep.subr.bf16.mxu0 0
  %2432 = vmatpush2.bf16.msra.mxu0 0
  %2433 = vmatprep.subr.bf16.mxu0 0
  %2434 = vmatpush2.bf16.msra.mxu0 0
  %2435 = vmatprep.subr.bf16.mxu0 0
  %2436 = vmatpush2.bf16.msra.mxu0 0
  %2437 = vmatprep.subr.bf16.mxu0 0
  %2438 = vmatpush2.bf16.msra.mxu0 0
  %2439 = vmatprep.subr.bf16.mxu0 0
  %2440 = vmatpush2.bf16.msra.mxu0 0
  %2441 = vmatprep.subr.bf16.mxu0 0
  %2442 = vmatpush2.bf16.msra.mxu0 0
  %2443 = vmatprep.subr.bf16.mxu0 0
  %2444 = vmatpush2.bf16.msra.mxu0 0
  %2445 = vmatprep.subr.bf16.mxu0 0
  %2446 = vmatpush2.bf16.msra.mxu0 0
  %2447 = vmatprep.mubr.bf16.mxu0 0
  %2448 = vmatmul.mubr.bf16.gmra.mxu0 %v2410
  %v2449 = vpop.f32.mrf.mxu0
  %v2450 = vadd.f32 %v2382, %v2449
  %v2451 = vpop.f32.mrf.mxu0
  %v2452 = vpop.f32.mrf.mxu0
  %v2453 = vadd.f32 %v2387, %v2452
  %v2454 = vpop.f32.mrf.mxu0
  %2455 = vmatprep.mubr.bf16.mxu0 0
  %2456 = vmatmul.mubr.bf16.gmra.mxu0 %v2413
  %v2457 = vpop.f32.mrf.mxu0
  %v2458 = vadd.f32 %v2392, %v2457
  %v2459 = vpop.f32.mrf.mxu0
  %v2460 = vpop.f32.mrf.mxu0
  %v2461 = vadd.f32 %v2397, %v2460
  %v2462 = vpop.f32.mrf.mxu0
  %2463 = vdwg.mxu0
  %v2464 = vmax.f32 %v2450, 0.0
  %v2465 = vmax.f32 %v2453, 0.0
  %v2466 = vmax.f32 %v2458, 0.0
  %v2467 = vmax.f32 %v2461, 0.0
  %2468 = vadd.xlane.f32.xlu0 %v2464
  %v2469 = vpop.xlane.xlu0 %2468
  %2470 = vadd.xlane.f32.xlu0 %v2465
  %v2471 = vpop.xlane.xlu0 %2470
  %2472 = vadd.xlane.f32.xlu0 %v2466
  %v2473 = vpop.xlane.xlu0 %2472
  %2474 = vadd.xlane.f32.xlu0 %v2467
  %v2475 = vpop.xlane.xlu0 %2474
  %v2476 = vmul.f32 %v2469, %v756
  %v2477 = vmul.f32 %v2471, %v756
  %v2478 = vmul.f32 %v2473, %v756
  %v2479 = vmul.f32 %v2475, %v756
  %v2480 = vsub.f32 %v2464, %v2476
  %v2481 = vsub.f32 %v2465, %v2477
  %v2482 = vsub.f32 %v2466, %v2478
  %v2483 = vsub.f32 %v2467, %v2479
  %v2484 = vmul.f32 %v2480, %v2480
  %v2485 = vmul.f32 %v2481, %v2481
  %v2486 = vmul.f32 %v2482, %v2482
  %v2487 = vmul.f32 %v2483, %v2483
  %2488 = vadd.xlane.f32.xlu0 %v2484
  %v2489 = vpop.xlane.xlu0 %2488
  %2490 = vadd.xlane.f32.xlu0 %v2485
  %v2491 = vpop.xlane.xlu0 %2490
  %2492 = vadd.xlane.f32.xlu0 %v2486
  %v2493 = vpop.xlane.xlu0 %2492
  %2494 = vadd.xlane.f32.xlu0 %v2487
  %v2495 = vpop.xlane.xlu0 %2494
  %v2496 = vmul.f32 %v2489, %v756
  %v2497 = vmul.f32 %v2491, %v756
  %v2498 = vmul.f32 %v2493, %v756
  %v2499 = vmul.f32 %v2495, %v756
  %v2500 = vadd.f32 %v2496, 1e-05
  %v2501 = vadd.f32 %v2497, 1e-05
  %v2502 = vadd.f32 %v2498, 1e-05
  %v2503 = vadd.f32 %v2499, 1e-05
  %v2504 = vrsqrt.pop %v2500
  %v2505 = vrsqrt.pop %v2501
  %v2506 = vrsqrt.pop %v2502
  %v2507 = vrsqrt.pop %v2503
  %v2508 = vmul.f32 %v2480, %v2504
  %v2509 = vmul.f32 %v2481, %v2505
  %v2510 = vmul.f32 %v2482, %v2506
  %v2511 = vmul.f32 %v2483, %v2507
  %2512 = vset.pattern.permute.xlu0 1
  %2513 = vperm.xlu0 %2512, %v2375
  %v2514 = vpop.permute.xlu0 %2513
  %2516 = vset.pattern.permute.xlu0 1
  %2517 = vperm.xlu0 %2516, %v2376
  %v2518 = vpop.permute.xlu0 %2517
  %2520 = vset.pattern.permute.xlu0 1
  %2521 = vperm.xlu0 %2520, %v2377
  %v2522 = vpop.permute.xlu0 %2521
  %2524 = vset.pattern.permute.xlu0 1
  %2525 = vperm.xlu0 %2524, %v2378
  %v2526 = vpop.permute.xlu0 %2525
  %v2528 = vmul.f32 %v2508, %v2514
  %v2529 = vmul.f32 %v2509, %v2518
  %v2530 = vmul.f32 %v2510, %v2522
  %v2531 = vmul.f32 %v2511, %v2526
  %2532 = vset.pattern.permute.xlu0 2
  %2533 = vperm.xlu0 %2532, %v2375
  %v2534 = vpop.permute.xlu0 %2533
  %2536 = vset.pattern.permute.xlu0 2
  %2537 = vperm.xlu0 %2536, %v2376
  %v2538 = vpop.permute.xlu0 %2537
  %2540 = vset.pattern.permute.xlu0 2
  %2541 = vperm.xlu0 %2540, %v2377
  %v2542 = vpop.permute.xlu0 %2541
  %2544 = vset.pattern.permute.xlu0 2
  %2545 = vperm.xlu0 %2544, %v2378
  %v2546 = vpop.permute.xlu0 %2545
  %v2548 = vadd.f32 %v2528, %v2534
  %v2549 = vadd.f32 %v2529, %v2538
  %v2550 = vadd.f32 %v2530, %v2542
  %v2551 = vadd.f32 %v2531, %v2546
  %s2552 = scalar_lea.vmem %s2, 256
  %v2553 = vld [vmem:[%s2552] sm:$0xff]
  %v2554 = vld [vmem:[%s2552 + $0x8] sm:$0xff]
  %v2555 = vld [vmem:[%s2552 + $0x10] sm:$0xff]
  %v2556 = vld [vmem:[%s2552 + $0x18] sm:$0xff]
  %v2557 = vld [vmem:[%s2552 + $0x20] sm:$0xff]
  %v2558 = vld [vmem:[%s2552 + $0x28] sm:$0xff]
  %v2559 = vld [vmem:[%s2552 + $0x30] sm:$0xff]
  %v2560 = vld [vmem:[%s2552 + $0x38] sm:$0xff]
  %v2561 = vld [vmem:[%s2552 + $0x40] sm:$0xff]
  %v2562 = vld [vmem:[%s2552 + $0x48] sm:$0xff]
  %v2563 = vld [vmem:[%s2552 + $0x50] sm:$0xff]
  %v2564 = vld [vmem:[%s2552 + $0x58] sm:$0xff]
  %v2565 = vld [vmem:[%s2552 + $0x60] sm:$0xff]
  %v2566 = vld [vmem:[%s2552 + $0x68] sm:$0xff]
  %v2567 = vld [vmem:[%s2552 + $0x70] sm:$0xff]
  %v2568 = vld [vmem:[%s2552 + $0x78] sm:$0xff]
  %v2569 = vld [vmem:[%s2552 + $0x80] sm:$0xff]
  %v2570 = vld [vmem:[%s2552 + $0x88] sm:$0xff]
  %v2571 = vld [vmem:[%s2552 + $0x90] sm:$0xff]
  %v2572 = vld [vmem:[%s2552 + $0x98] sm:$0xff]
  %v2573 = vld [vmem:[%s2552 + $0xa0] sm:$0xff]
  %v2574 = vld [vmem:[%s2552 + $0xa8] sm:$0xff]
  %v2575 = vld [vmem:[%s2552 + $0xb0] sm:$0xff]
  %v2576 = vld [vmem:[%s2552 + $0xb8] sm:$0xff]
  %v2577 = vld [vmem:[%s2552 + $0xc0] sm:$0xff]
  %v2578 = vld [vmem:[%s2552 + $0xc8] sm:$0xff]
  %v2579 = vld [vmem:[%s2552 + $0xd0] sm:$0xff]
  %v2580 = vld [vmem:[%s2552 + $0xd8] sm:$0xff]
  %v2581 = vld [vmem:[%s2552 + $0xe0] sm:$0xff]
  %v2582 = vld [vmem:[%s2552 + $0xe8] sm:$0xff]
  %v2583 = vld [vmem:[%s2552 + $0xf0] sm:$0xff]
  %v2584 = vld [vmem:[%s2552 + $0xf8] sm:$0xff]
  %2585 = vmatprep.subr.mxu0 %v2584
  %2586 = vmatpush1.msra.mxu0 %v2583
  %2587 = vmatprep.subr.mxu0 %v2582
  %2588 = vmatpush1.msra.mxu0 %v2581
  %2589 = vmatprep.subr.mxu0 %v2580
  %2590 = vmatpush1.msra.mxu0 %v2579
  %2591 = vmatprep.subr.mxu0 %v2578
  %2592 = vmatpush1.msra.mxu0 %v2577
  %2593 = vmatprep.subr.mxu0 %v2576
  %2594 = vmatpush1.msra.mxu0 %v2575
  %2595 = vmatprep.subr.mxu0 %v2574
  %2596 = vmatpush1.msra.mxu0 %v2573
  %2597 = vmatprep.subr.mxu0 %v2572
  %2598 = vmatpush1.msra.mxu0 %v2571
  %2599 = vmatprep.subr.mxu0 %v2570
  %2600 = vmatpush1.msra.mxu0 %v2569
  %2601 = vmatprep.subr.mxu0 %v2568
  %2602 = vmatpush1.msra.mxu0 %v2567
  %2603 = vmatprep.subr.mxu0 %v2566
  %2604 = vmatpush1.msra.mxu0 %v2565
  %2605 = vmatprep.subr.mxu0 %v2564
  %2606 = vmatpush1.msra.mxu0 %v2563
  %2607 = vmatprep.subr.mxu0 %v2562
  %2608 = vmatpush1.msra.mxu0 %v2561
  %2609 = vmatprep.subr.mxu0 %v2560
  %2610 = vmatpush1.msra.mxu0 %v2559
  %2611 = vmatprep.subr.mxu0 %v2558
  %2612 = vmatpush1.msra.mxu0 %v2557
  %2613 = vmatprep.subr.mxu0 %v2556
  %2614 = vmatpush1.msra.mxu0 %v2555
  %2615 = vmatprep.subr.mxu0 %v2554
  %2616 = vmatpush1.msra.mxu0 %v2553
  %2617 = vmatprep.subr.mxu0 0.0
  %2618 = vmatpush2.msra.mxu0 0.0
  %2619 = vmatprep.subr.mxu0 0.0
  %2620 = vmatpush2.msra.mxu0 0.0
  %2621 = vmatprep.subr.mxu0 0.0
  %2622 = vmatpush2.msra.mxu0 0.0
  %2623 = vmatprep.subr.mxu0 0.0
  %2624 = vmatpush2.msra.mxu0 0.0
  %2625 = vmatprep.subr.mxu0 0.0
  %2626 = vmatpush2.msra.mxu0 0.0
  %2627 = vmatprep.subr.mxu0 0.0
  %2628 = vmatpush2.msra.mxu0 0.0
  %2629 = vmatprep.subr.mxu0 0.0
  %2630 = vmatpush2.msra.mxu0 0.0
  %2631 = vmatprep.subr.mxu0 0.0
  %2632 = vmatpush2.msra.mxu0 0.0
  %2633 = vmatprep.subr.mxu0 0.0
  %2634 = vmatpush2.msra.mxu0 0.0
  %2635 = vmatprep.subr.mxu0 0.0
  %2636 = vmatpush2.msra.mxu0 0.0
  %2637 = vmatprep.subr.mxu0 0.0
  %2638 = vmatpush2.msra.mxu0 0.0
  %2639 = vmatprep.subr.mxu0 0.0
  %2640 = vmatpush2.msra.mxu0 0.0
  %2641 = vmatprep.subr.mxu0 0.0
  %2642 = vmatpush2.msra.mxu0 0.0
  %2643 = vmatprep.subr.mxu0 0.0
  %2644 = vmatpush2.msra.mxu0 0.0
  %2645 = vmatprep.subr.mxu0 0.0
  %2646 = vmatpush2.msra.mxu0 0.0
  %2647 = vmatprep.subr.mxu0 0.0
  %2648 = vmatpush2.msra.mxu0 0.0
  %2649 = vmatprep.mubr.f32.mxu0 0.0
  %2650 = vmatmul.mubr.f32.gmra.mxu0 %v2549
  %v2651 = vpop.f32.mrf.mxu0
  %v2652 = vadd.f32 0.0, %v2651
  %v2653 = vpop.f32.mrf.mxu0
  %v2654 = vadd.f32 0.0, %v2653
  %2655 = vdwg.mxu0
  %s2656 = scalar_lea.vmem %s9, 40
  %v2657 = vld [vmem:[%s2656] sm:$0xf]
  %v2658 = vpack.c.bf16 %v2549, %v2549
  %s2659 = scalar_lea.vmem %s9, 36
  %v2660 = vld [vmem:[%s2659] sm:$0xf]
  %v2661 = vpack.c.bf16 %v2652, %v2652
  %v2663 = vsel %vm1125, %v2660, 0
  %v2666 = vsel %vm358, %v2661, 0
  %2668 = vmatprep.subr.bf16.mxu0 0
  %2669 = vmatpush1.bf16.msra.mxu0 0
  %2670 = vmatprep.subr.bf16.mxu0 0
  %2671 = vmatpush1.bf16.msra.mxu0 0
  %2672 = vmatprep.subr.bf16.mxu0 0
  %2673 = vmatpush1.bf16.msra.mxu0 0
  %2674 = vmatprep.subr.bf16.mxu0 0
  %2675 = vmatpush1.bf16.msra.mxu0 0
  %2676 = vmatprep.subr.bf16.mxu0 0
  %2677 = vmatpush1.bf16.msra.mxu0 0
  %2678 = vmatprep.subr.bf16.mxu0 0
  %2679 = vmatpush1.bf16.msra.mxu0 0
  %2680 = vmatprep.subr.bf16.mxu0 0
  %2681 = vmatpush1.bf16.msra.mxu0 0
  %2682 = vmatprep.subr.bf16.mxu0 0
  %2683 = vmatpush1.bf16.msra.mxu0 %v2666
  %2684 = vmatprep.subr.bf16.mxu0 0
  %2685 = vmatpush2.bf16.msra.mxu0 0
  %2686 = vmatprep.subr.bf16.mxu0 0
  %2687 = vmatpush2.bf16.msra.mxu0 0
  %2688 = vmatprep.subr.bf16.mxu0 0
  %2689 = vmatpush2.bf16.msra.mxu0 0
  %2690 = vmatprep.subr.bf16.mxu0 0
  %2691 = vmatpush2.bf16.msra.mxu0 0
  %2692 = vmatprep.subr.bf16.mxu0 0
  %2693 = vmatpush2.bf16.msra.mxu0 0
  %2694 = vmatprep.subr.bf16.mxu0 0
  %2695 = vmatpush2.bf16.msra.mxu0 0
  %2696 = vmatprep.subr.bf16.mxu0 0
  %2697 = vmatpush2.bf16.msra.mxu0 0
  %2698 = vmatprep.subr.bf16.mxu0 0
  %2699 = vmatpush2.bf16.msra.mxu0 0
  %2700 = vmatprep.mubr.bf16.mxu0 0
  %2701 = vmatmul.mubr.bf16.gmra.mxu0 %v2663
  %v2702 = vpop.f32.mrf.mxu0
  %v2703 = vadd.f32 0.0, %v2702
  %v2704 = vpop.f32.mrf.mxu0
  %v2705 = vpop.f32.mrf.mxu0
  %v2706 = vpop.f32.mrf.mxu0
  %2707 = vdwg.mxu0
  %v2709 = vsel %vm1125, %v2657, 0
  %v2712 = vsel %vm358, %v2658, 0
  %2714 = vmatprep.subr.bf16.mxu0 0
  %2715 = vmatpush1.bf16.msra.mxu0 0
  %2716 = vmatprep.subr.bf16.mxu0 0
  %2717 = vmatpush1.bf16.msra.mxu0 0
  %2718 = vmatprep.subr.bf16.mxu0 0
  %2719 = vmatpush1.bf16.msra.mxu0 0
  %2720 = vmatprep.subr.bf16.mxu0 0
  %2721 = vmatpush1.bf16.msra.mxu0 0
  %2722 = vmatprep.subr.bf16.mxu0 0
  %2723 = vmatpush1.bf16.msra.mxu0 0
  %2724 = vmatprep.subr.bf16.mxu0 0
  %2725 = vmatpush1.bf16.msra.mxu0 0
  %2726 = vmatprep.subr.bf16.mxu0 0
  %2727 = vmatpush1.bf16.msra.mxu0 0
  %2728 = vmatprep.subr.bf16.mxu0 0
  %2729 = vmatpush1.bf16.msra.mxu0 %v2712
  %2730 = vmatprep.subr.bf16.mxu0 0
  %2731 = vmatpush2.bf16.msra.mxu0 0
  %2732 = vmatprep.subr.bf16.mxu0 0
  %2733 = vmatpush2.bf16.msra.mxu0 0
  %2734 = vmatprep.subr.bf16.mxu0 0
  %2735 = vmatpush2.bf16.msra.mxu0 0
  %2736 = vmatprep.subr.bf16.mxu0 0
  %2737 = vmatpush2.bf16.msra.mxu0 0
  %2738 = vmatprep.subr.bf16.mxu0 0
  %2739 = vmatpush2.bf16.msra.mxu0 0
  %2740 = vmatprep.subr.bf16.mxu0 0
  %2741 = vmatpush2.bf16.msra.mxu0 0
  %2742 = vmatprep.subr.bf16.mxu0 0
  %2743 = vmatpush2.bf16.msra.mxu0 0
  %2744 = vmatprep.subr.bf16.mxu0 0
  %2745 = vmatpush2.bf16.msra.mxu0 0
  %2746 = vmatprep.mubr.bf16.mxu0 0
  %2747 = vmatmul.mubr.bf16.gmra.mxu0 %v2709
  %v2748 = vpop.f32.mrf.mxu0
  %v2749 = vadd.f32 %v2703, %v2748
  %v2750 = vpop.f32.mrf.mxu0
  %v2751 = vpop.f32.mrf.mxu0
  %v2752 = vpop.f32.mrf.mxu0
  %2753 = vdwg.mxu0
  %s2754 = scalar_lea.vmem %s9, 44
  %v2755 = vld [vmem:[%s2754] sm:$0xf]
  %v2756 = vpack.c.bf16 %v2654, %v2654
  %v2758 = vsel %vm1125, %v2755, 0
  %v2761 = vsel %vm358, %v2756, 0
  %2763 = vmatprep.subr.bf16.mxu0 0
  %2764 = vmatpush1.bf16.msra.mxu0 0
  %2765 = vmatprep.subr.bf16.mxu0 0
  %2766 = vmatpush1.bf16.msra.mxu0 0
  %2767 = vmatprep.subr.bf16.mxu0 0
  %2768 = vmatpush1.bf16.msra.mxu0 0
  %2769 = vmatprep.subr.bf16.mxu0 0
  %2770 = vmatpush1.bf16.msra.mxu0 0
  %2771 = vmatprep.subr.bf16.mxu0 0
  %2772 = vmatpush1.bf16.msra.mxu0 0
  %2773 = vmatprep.subr.bf16.mxu0 0
  %2774 = vmatpush1.bf16.msra.mxu0 0
  %2775 = vmatprep.subr.bf16.mxu0 0
  %2776 = vmatpush1.bf16.msra.mxu0 0
  %2777 = vmatprep.subr.bf16.mxu0 0
  %2778 = vmatpush1.bf16.msra.mxu0 %v2761
  %2779 = vmatprep.subr.bf16.mxu0 0
  %2780 = vmatpush2.bf16.msra.mxu0 0
  %2781 = vmatprep.subr.bf16.mxu0 0
  %2782 = vmatpush2.bf16.msra.mxu0 0
  %2783 = vmatprep.subr.bf16.mxu0 0
  %2784 = vmatpush2.bf16.msra.mxu0 0
  %2785 = vmatprep.subr.bf16.mxu0 0
  %2786 = vmatpush2.bf16.msra.mxu0 0
  %2787 = vmatprep.subr.bf16.mxu0 0
  %2788 = vmatpush2.bf16.msra.mxu0 0
  %2789 = vmatprep.subr.bf16.mxu0 0
  %2790 = vmatpush2.bf16.msra.mxu0 0
  %2791 = vmatprep.subr.bf16.mxu0 0
  %2792 = vmatpush2.bf16.msra.mxu0 0
  %2793 = vmatprep.subr.bf16.mxu0 0
  %2794 = vmatpush2.bf16.msra.mxu0 0
  %2795 = vmatprep.mubr.bf16.mxu0 0
  %2796 = vmatmul.mubr.bf16.gmra.mxu0 %v2758
  %v2797 = vpop.f32.mrf.mxu0
  %v2798 = vadd.f32 0.0, %v2797
  %v2799 = vpop.f32.mrf.mxu0
  %v2800 = vpop.f32.mrf.mxu0
  %v2801 = vpop.f32.mrf.mxu0
  %2802 = vdwg.mxu0
  %v2803 = vadd.f32 %v2749, %v2798
  %s2804 = scalar_lea.vmem %s10, 24
  %v2805 = vld [vmem:[%s2804] sm:$0xff]
  %2807 = vset.pattern.permute.xlu0 0
  %2808 = vperm.xlu0 %2807, %v2805
  %v2809 = vpop.permute.xlu0 %2808
  %v2811 = vadd.f32 %v2803, %v2809
  %v2812 = vmax.f32 %v2811, 0.0
  %2813 = vadd.xlane.f32.xlu0 %v2812
  %v2814 = vpop.xlane.xlu0 %2813
  %v2815 = vmul.f32 %v2814, %v756
  %v2816 = vsub.f32 %v2812, %v2815
  %v2817 = vmul.f32 %v2816, %v2816
  %2818 = vadd.xlane.f32.xlu0 %v2817
  %v2819 = vpop.xlane.xlu0 %2818
  %v2820 = vmul.f32 %v2819, %v756
  %v2821 = vadd.f32 %v2820, 1e-05
  %v2822 = vrsqrt.pop %v2821
  %v2823 = vmul.f32 %v2816, %v2822
  %2824 = vset.pattern.permute.xlu0 1
  %2825 = vperm.xlu0 %2824, %v2805
  %v2826 = vpop.permute.xlu0 %2825
  %v2828 = vmul.f32 %v2823, %v2826
  %2829 = vset.pattern.permute.xlu0 2
  %2830 = vperm.xlu0 %2829, %v2805
  %v2831 = vpop.permute.xlu0 %2830
  %v2833 = vadd.f32 %v2828, %v2831
  %v2834 = vadd.f32 %v2550, %v2833
  %2835 = vmatprep.subr.mxu0 %v2584
  %2836 = vmatpush1.msra.mxu0 %v2583
  %2837 = vmatprep.subr.mxu0 %v2582
  %2838 = vmatpush1.msra.mxu0 %v2581
  %2839 = vmatprep.subr.mxu0 %v2580
  %2840 = vmatpush1.msra.mxu0 %v2579
  %2841 = vmatprep.subr.mxu0 %v2578
  %2842 = vmatpush1.msra.mxu0 %v2577
  %2843 = vmatprep.subr.mxu0 %v2576
  %2844 = vmatpush1.msra.mxu0 %v2575
  %2845 = vmatprep.subr.mxu0 %v2574
  %2846 = vmatpush1.msra.mxu0 %v2573
  %2847 = vmatprep.subr.mxu0 %v2572
  %2848 = vmatpush1.msra.mxu0 %v2571
  %2849 = vmatprep.subr.mxu0 %v2570
  %2850 = vmatpush1.msra.mxu0 %v2569
  %2851 = vmatprep.subr.mxu0 %v2568
  %2852 = vmatpush1.msra.mxu0 %v2567
  %2853 = vmatprep.subr.mxu0 %v2566
  %2854 = vmatpush1.msra.mxu0 %v2565
  %2855 = vmatprep.subr.mxu0 %v2564
  %2856 = vmatpush1.msra.mxu0 %v2563
  %2857 = vmatprep.subr.mxu0 %v2562
  %2858 = vmatpush1.msra.mxu0 %v2561
  %2859 = vmatprep.subr.mxu0 %v2560
  %2860 = vmatpush1.msra.mxu0 %v2559
  %2861 = vmatprep.subr.mxu0 %v2558
  %2862 = vmatpush1.msra.mxu0 %v2557
  %2863 = vmatprep.subr.mxu0 %v2556
  %2864 = vmatpush1.msra.mxu0 %v2555
  %2865 = vmatprep.subr.mxu0 %v2554
  %2866 = vmatpush1.msra.mxu0 %v2553
  %2867 = vmatprep.subr.mxu0 0.0
  %2868 = vmatpush2.msra.mxu0 0.0
  %2869 = vmatprep.subr.mxu0 0.0
  %2870 = vmatpush2.msra.mxu0 0.0
  %2871 = vmatprep.subr.mxu0 0.0
  %2872 = vmatpush2.msra.mxu0 0.0
  %2873 = vmatprep.subr.mxu0 0.0
  %2874 = vmatpush2.msra.mxu0 0.0
  %2875 = vmatprep.subr.mxu0 0.0
  %2876 = vmatpush2.msra.mxu0 0.0
  %2877 = vmatprep.subr.mxu0 0.0
  %2878 = vmatpush2.msra.mxu0 0.0
  %2879 = vmatprep.subr.mxu0 0.0
  %2880 = vmatpush2.msra.mxu0 0.0
  %2881 = vmatprep.subr.mxu0 0.0
  %2882 = vmatpush2.msra.mxu0 0.0
  %2883 = vmatprep.subr.mxu0 0.0
  %2884 = vmatpush2.msra.mxu0 0.0
  %2885 = vmatprep.subr.mxu0 0.0
  %2886 = vmatpush2.msra.mxu0 0.0
  %2887 = vmatprep.subr.mxu0 0.0
  %2888 = vmatpush2.msra.mxu0 0.0
  %2889 = vmatprep.subr.mxu0 0.0
  %2890 = vmatpush2.msra.mxu0 0.0
  %2891 = vmatprep.subr.mxu0 0.0
  %2892 = vmatpush2.msra.mxu0 0.0
  %2893 = vmatprep.subr.mxu0 0.0
  %2894 = vmatpush2.msra.mxu0 0.0
  %2895 = vmatprep.subr.mxu0 0.0
  %2896 = vmatpush2.msra.mxu0 0.0
  %2897 = vmatprep.subr.mxu0 0.0
  %2898 = vmatpush2.msra.mxu0 0.0
  %2899 = vmatprep.mubr.f32.mxu0 0.0
  %2900 = vmatmul.mubr.f32.gmra.mxu0 %v2834
  %v2901 = vpop.f32.mrf.mxu0
  %v2902 = vadd.f32 0.0, %v2901
  %v2903 = vpop.f32.mrf.mxu0
  %v2904 = vadd.f32 0.0, %v2903
  %2905 = vdwg.mxu0
  %s2906 = scalar_lea.vmem %s9, 52
  %v2907 = vld [vmem:[%s2906] sm:$0xf]
  %v2908 = vpack.c.bf16 %v2834, %v2834
  %s2909 = scalar_lea.vmem %s9, 48
  %v2910 = vld [vmem:[%s2909] sm:$0xf]
  %v2911 = vpack.c.bf16 %v2902, %v2902
  %v2913 = vsel %vm1125, %v2910, 0
  %v2916 = vsel %vm358, %v2911, 0
  %2918 = vmatprep.subr.bf16.mxu0 0
  %2919 = vmatpush1.bf16.msra.mxu0 0
  %2920 = vmatprep.subr.bf16.mxu0 0
  %2921 = vmatpush1.bf16.msra.mxu0 0
  %2922 = vmatprep.subr.bf16.mxu0 0
  %2923 = vmatpush1.bf16.msra.mxu0 0
  %2924 = vmatprep.subr.bf16.mxu0 0
  %2925 = vmatpush1.bf16.msra.mxu0 0
  %2926 = vmatprep.subr.bf16.mxu0 0
  %2927 = vmatpush1.bf16.msra.mxu0 0
  %2928 = vmatprep.subr.bf16.mxu0 0
  %2929 = vmatpush1.bf16.msra.mxu0 0
  %2930 = vmatprep.subr.bf16.mxu0 0
  %2931 = vmatpush1.bf16.msra.mxu0 0
  %2932 = vmatprep.subr.bf16.mxu0 0
  %2933 = vmatpush1.bf16.msra.mxu0 %v2916
  %2934 = vmatprep.subr.bf16.mxu0 0
  %2935 = vmatpush2.bf16.msra.mxu0 0
  %2936 = vmatprep.subr.bf16.mxu0 0
  %2937 = vmatpush2.bf16.msra.mxu0 0
  %2938 = vmatprep.subr.bf16.mxu0 0
  %2939 = vmatpush2.bf16.msra.mxu0 0
  %2940 = vmatprep.subr.bf16.mxu0 0
  %2941 = vmatpush2.bf16.msra.mxu0 0
  %2942 = vmatprep.subr.bf16.mxu0 0
  %2943 = vmatpush2.bf16.msra.mxu0 0
  %2944 = vmatprep.subr.bf16.mxu0 0
  %2945 = vmatpush2.bf16.msra.mxu0 0
  %2946 = vmatprep.subr.bf16.mxu0 0
  %2947 = vmatpush2.bf16.msra.mxu0 0
  %2948 = vmatprep.subr.bf16.mxu0 0
  %2949 = vmatpush2.bf16.msra.mxu0 0
  %2950 = vmatprep.mubr.bf16.mxu0 0
  %2951 = vmatmul.mubr.bf16.gmra.mxu0 %v2913
  %v2952 = vpop.f32.mrf.mxu0
  %v2953 = vadd.f32 0.0, %v2952
  %v2954 = vpop.f32.mrf.mxu0
  %v2955 = vpop.f32.mrf.mxu0
  %v2956 = vpop.f32.mrf.mxu0
  %2957 = vdwg.mxu0
  %v2959 = vsel %vm1125, %v2907, 0
  %v2962 = vsel %vm358, %v2908, 0
  %2964 = vmatprep.subr.bf16.mxu0 0
  %2965 = vmatpush1.bf16.msra.mxu0 0
  %2966 = vmatprep.subr.bf16.mxu0 0
  %2967 = vmatpush1.bf16.msra.mxu0 0
  %2968 = vmatprep.subr.bf16.mxu0 0
  %2969 = vmatpush1.bf16.msra.mxu0 0
  %2970 = vmatprep.subr.bf16.mxu0 0
  %2971 = vmatpush1.bf16.msra.mxu0 0
  %2972 = vmatprep.subr.bf16.mxu0 0
  %2973 = vmatpush1.bf16.msra.mxu0 0
  %2974 = vmatprep.subr.bf16.mxu0 0
  %2975 = vmatpush1.bf16.msra.mxu0 0
  %2976 = vmatprep.subr.bf16.mxu0 0
  %2977 = vmatpush1.bf16.msra.mxu0 0
  %2978 = vmatprep.subr.bf16.mxu0 0
  %2979 = vmatpush1.bf16.msra.mxu0 %v2962
  %2980 = vmatprep.subr.bf16.mxu0 0
  %2981 = vmatpush2.bf16.msra.mxu0 0
  %2982 = vmatprep.subr.bf16.mxu0 0
  %2983 = vmatpush2.bf16.msra.mxu0 0
  %2984 = vmatprep.subr.bf16.mxu0 0
  %2985 = vmatpush2.bf16.msra.mxu0 0
  %2986 = vmatprep.subr.bf16.mxu0 0
  %2987 = vmatpush2.bf16.msra.mxu0 0
  %2988 = vmatprep.subr.bf16.mxu0 0
  %2989 = vmatpush2.bf16.msra.mxu0 0
  %2990 = vmatprep.subr.bf16.mxu0 0
  %2991 = vmatpush2.bf16.msra.mxu0 0
  %2992 = vmatprep.subr.bf16.mxu0 0
  %2993 = vmatpush2.bf16.msra.mxu0 0
  %2994 = vmatprep.subr.bf16.mxu0 0
  %2995 = vmatpush2.bf16.msra.mxu0 0
  %2996 = vmatprep.mubr.bf16.mxu0 0
  %2997 = vmatmul.mubr.bf16.gmra.mxu0 %v2959
  %v2998 = vpop.f32.mrf.mxu0
  %v2999 = vadd.f32 %v2953, %v2998
  %v3000 = vpop.f32.mrf.mxu0
  %v3001 = vpop.f32.mrf.mxu0
  %v3002 = vpop.f32.mrf.mxu0
  %3003 = vdwg.mxu0
  %s3004 = scalar_lea.vmem %s9, 56
  %v3005 = vld [vmem:[%s3004] sm:$0xf]
  %v3006 = vpack.c.bf16 %v2904, %v2904
  %v3008 = vsel %vm1125, %v3005, 0
  %v3011 = vsel %vm358, %v3006, 0
  %3013 = vmatprep.subr.bf16.mxu0 0
  %3014 = vmatpush1.bf16.msra.mxu0 0
  %3015 = vmatprep.subr.bf16.mxu0 0
  %3016 = vmatpush1.bf16.msra.mxu0 0
  %3017 = vmatprep.subr.bf16.mxu0 0
  %3018 = vmatpush1.bf16.msra.mxu0 0
  %3019 = vmatprep.subr.bf16.mxu0 0
  %3020 = vmatpush1.bf16.msra.mxu0 0
  %3021 = vmatprep.subr.bf16.mxu0 0
  %3022 = vmatpush1.bf16.msra.mxu0 0
  %3023 = vmatprep.subr.bf16.mxu0 0
  %3024 = vmatpush1.bf16.msra.mxu0 0
  %3025 = vmatprep.subr.bf16.mxu0 0
  %3026 = vmatpush1.bf16.msra.mxu0 0
  %3027 = vmatprep.subr.bf16.mxu0 0
  %3028 = vmatpush1.bf16.msra.mxu0 %v3011
  %3029 = vmatprep.subr.bf16.mxu0 0
  %3030 = vmatpush2.bf16.msra.mxu0 0
  %3031 = vmatprep.subr.bf16.mxu0 0
  %3032 = vmatpush2.bf16.msra.mxu0 0
  %3033 = vmatprep.subr.bf16.mxu0 0
  %3034 = vmatpush2.bf16.msra.mxu0 0
  %3035 = vmatprep.subr.bf16.mxu0 0
  %3036 = vmatpush2.bf16.msra.mxu0 0
  %3037 = vmatprep.subr.bf16.mxu0 0
  %3038 = vmatpush2.bf16.msra.mxu0 0
  %3039 = vmatprep.subr.bf16.mxu0 0
  %3040 = vmatpush2.bf16.msra.mxu0 0
  %3041 = vmatprep.subr.bf16.mxu0 0
  %3042 = vmatpush2.bf16.msra.mxu0 0
  %3043 = vmatprep.subr.bf16.mxu0 0
  %3044 = vmatpush2.bf16.msra.mxu0 0
  %3045 = vmatprep.mubr.bf16.mxu0 0
  %3046 = vmatmul.mubr.bf16.gmra.mxu0 %v3008
  %v3047 = vpop.f32.mrf.mxu0
  %v3048 = vadd.f32 0.0, %v3047
  %v3049 = vpop.f32.mrf.mxu0
  %v3050 = vpop.f32.mrf.mxu0
  %v3051 = vpop.f32.mrf.mxu0
  %3052 = vdwg.mxu0
  %v3053 = vadd.f32 %v2999, %v3048
  %s3054 = scalar_lea.vmem %s10, 32
  %v3055 = vld [vmem:[%s3054] sm:$0xff]
  %3057 = vset.pattern.permute.xlu0 0
  %3058 = vperm.xlu0 %3057, %v3055
  %v3059 = vpop.permute.xlu0 %3058
  %v3061 = vadd.f32 %v3053, %v3059
  %v3062 = vmax.f32 %v3061, 0.0
  %3063 = vadd.xlane.f32.xlu0 %v3062
  %v3064 = vpop.xlane.xlu0 %3063
  %v3065 = vmul.f32 %v3064, %v756
  %v3066 = vsub.f32 %v3062, %v3065
  %v3067 = vmul.f32 %v3066, %v3066
  %3068 = vadd.xlane.f32.xlu0 %v3067
  %v3069 = vpop.xlane.xlu0 %3068
  %v3070 = vmul.f32 %v3069, %v756
  %v3071 = vadd.f32 %v3070, 1e-05
  %v3072 = vrsqrt.pop %v3071
  %v3073 = vmul.f32 %v3066, %v3072
  %3074 = vset.pattern.permute.xlu0 1
  %3075 = vperm.xlu0 %3074, %v3055
  %v3076 = vpop.permute.xlu0 %3075
  %v3078 = vmul.f32 %v3073, %v3076
  %3079 = vset.pattern.permute.xlu0 2
  %3080 = vperm.xlu0 %3079, %v3055
  %v3081 = vpop.permute.xlu0 %3080
  %v3083 = vadd.f32 %v3078, %v3081
  %v3084 = vadd.f32 %v2551, %v3083
  %3085 = vmatprep.subr.mxu0 %v2584
  %3086 = vmatpush1.msra.mxu0 %v2583
  %3087 = vmatprep.subr.mxu0 %v2582
  %3088 = vmatpush1.msra.mxu0 %v2581
  %3089 = vmatprep.subr.mxu0 %v2580
  %3090 = vmatpush1.msra.mxu0 %v2579
  %3091 = vmatprep.subr.mxu0 %v2578
  %3092 = vmatpush1.msra.mxu0 %v2577
  %3093 = vmatprep.subr.mxu0 %v2576
  %3094 = vmatpush1.msra.mxu0 %v2575
  %3095 = vmatprep.subr.mxu0 %v2574
  %3096 = vmatpush1.msra.mxu0 %v2573
  %3097 = vmatprep.subr.mxu0 %v2572
  %3098 = vmatpush1.msra.mxu0 %v2571
  %3099 = vmatprep.subr.mxu0 %v2570
  %3100 = vmatpush1.msra.mxu0 %v2569
  %3101 = vmatprep.subr.mxu0 %v2568
  %3102 = vmatpush1.msra.mxu0 %v2567
  %3103 = vmatprep.subr.mxu0 %v2566
  %3104 = vmatpush1.msra.mxu0 %v2565
  %3105 = vmatprep.subr.mxu0 %v2564
  %3106 = vmatpush1.msra.mxu0 %v2563
  %3107 = vmatprep.subr.mxu0 %v2562
  %3108 = vmatpush1.msra.mxu0 %v2561
  %3109 = vmatprep.subr.mxu0 %v2560
  %3110 = vmatpush1.msra.mxu0 %v2559
  %3111 = vmatprep.subr.mxu0 %v2558
  %3112 = vmatpush1.msra.mxu0 %v2557
  %3113 = vmatprep.subr.mxu0 %v2556
  %3114 = vmatpush1.msra.mxu0 %v2555
  %3115 = vmatprep.subr.mxu0 %v2554
  %3116 = vmatpush1.msra.mxu0 %v2553
  %3117 = vmatprep.subr.mxu0 0.0
  %3118 = vmatpush2.msra.mxu0 0.0
  %3119 = vmatprep.subr.mxu0 0.0
  %3120 = vmatpush2.msra.mxu0 0.0
  %3121 = vmatprep.subr.mxu0 0.0
  %3122 = vmatpush2.msra.mxu0 0.0
  %3123 = vmatprep.subr.mxu0 0.0
  %3124 = vmatpush2.msra.mxu0 0.0
  %3125 = vmatprep.subr.mxu0 0.0
  %3126 = vmatpush2.msra.mxu0 0.0
  %3127 = vmatprep.subr.mxu0 0.0
  %3128 = vmatpush2.msra.mxu0 0.0
  %3129 = vmatprep.subr.mxu0 0.0
  %3130 = vmatpush2.msra.mxu0 0.0
  %3131 = vmatprep.subr.mxu0 0.0
  %3132 = vmatpush2.msra.mxu0 0.0
  %3133 = vmatprep.subr.mxu0 0.0
  %3134 = vmatpush2.msra.mxu0 0.0
  %3135 = vmatprep.subr.mxu0 0.0
  %3136 = vmatpush2.msra.mxu0 0.0
  %3137 = vmatprep.subr.mxu0 0.0
  %3138 = vmatpush2.msra.mxu0 0.0
  %3139 = vmatprep.subr.mxu0 0.0
  %3140 = vmatpush2.msra.mxu0 0.0
  %3141 = vmatprep.subr.mxu0 0.0
  %3142 = vmatpush2.msra.mxu0 0.0
  %3143 = vmatprep.subr.mxu0 0.0
  %3144 = vmatpush2.msra.mxu0 0.0
  %3145 = vmatprep.subr.mxu0 0.0
  %3146 = vmatpush2.msra.mxu0 0.0
  %3147 = vmatprep.subr.mxu0 0.0
  %3148 = vmatpush2.msra.mxu0 0.0
  %3149 = vmatprep.mubr.f32.mxu0 0.0
  %3150 = vmatmul.mubr.f32.gmra.mxu0 %v3084
  %v3151 = vpop.f32.mrf.mxu0
  %v3152 = vadd.f32 0.0, %v3151
  %v3153 = vpop.f32.mrf.mxu0
  %v3154 = vadd.f32 0.0, %v3153
  %3155 = vdwg.mxu0
  %s3156 = scalar_lea.vmem %s9, 64
  %v3157 = vld [vmem:[%s3156] sm:$0xf]
  %v3158 = vpack.c.bf16 %v3084, %v3084
  %s3159 = scalar_lea.vmem %s9, 60
  %v3160 = vld [vmem:[%s3159] sm:$0xf]
  %v3161 = vpack.c.bf16 %v3152, %v3152
  %v3163 = vsel %vm1125, %v3160, 0
  %v3166 = vsel %vm358, %v3161, 0
  %3168 = vmatprep.subr.bf16.mxu0 0
  %3169 = vmatpush1.bf16.msra.mxu0 0
  %3170 = vmatprep.subr.bf16.mxu0 0
  %3171 = vmatpush1.bf16.msra.mxu0 0
  %3172 = vmatprep.subr.bf16.mxu0 0
  %3173 = vmatpush1.bf16.msra.mxu0 0
  %3174 = vmatprep.subr.bf16.mxu0 0
  %3175 = vmatpush1.bf16.msra.mxu0 0
  %3176 = vmatprep.subr.bf16.mxu0 0
  %3177 = vmatpush1.bf16.msra.mxu0 0
  %3178 = vmatprep.subr.bf16.mxu0 0
  %3179 = vmatpush1.bf16.msra.mxu0 0
  %3180 = vmatprep.subr.bf16.mxu0 0
  %3181 = vmatpush1.bf16.msra.mxu0 0
  %3182 = vmatprep.subr.bf16.mxu0 0
  %3183 = vmatpush1.bf16.msra.mxu0 %v3166
  %3184 = vmatprep.subr.bf16.mxu0 0
  %3185 = vmatpush2.bf16.msra.mxu0 0
  %3186 = vmatprep.subr.bf16.mxu0 0
  %3187 = vmatpush2.bf16.msra.mxu0 0
  %3188 = vmatprep.subr.bf16.mxu0 0
  %3189 = vmatpush2.bf16.msra.mxu0 0
  %3190 = vmatprep.subr.bf16.mxu0 0
  %3191 = vmatpush2.bf16.msra.mxu0 0
  %3192 = vmatprep.subr.bf16.mxu0 0
  %3193 = vmatpush2.bf16.msra.mxu0 0
  %3194 = vmatprep.subr.bf16.mxu0 0
  %3195 = vmatpush2.bf16.msra.mxu0 0
  %3196 = vmatprep.subr.bf16.mxu0 0
  %3197 = vmatpush2.bf16.msra.mxu0 0
  %3198 = vmatprep.subr.bf16.mxu0 0
  %3199 = vmatpush2.bf16.msra.mxu0 0
  %3200 = vmatprep.mubr.bf16.mxu0 0
  %3201 = vmatmul.mubr.bf16.gmra.mxu0 %v3163
  %v3202 = vpop.f32.mrf.mxu0
  %v3203 = vadd.f32 0.0, %v3202
  %v3204 = vpop.f32.mrf.mxu0
  %v3205 = vpop.f32.mrf.mxu0
  %v3206 = vpop.f32.mrf.mxu0
  %3207 = vdwg.mxu0
  %v3209 = vsel %vm1125, %v3157, 0
  %v3212 = vsel %vm358, %v3158, 0
  %3214 = vmatprep.subr.bf16.mxu0 0
  %3215 = vmatpush1.bf16.msra.mxu0 0
  %3216 = vmatprep.subr.bf16.mxu0 0
  %3217 = vmatpush1.bf16.msra.mxu0 0
  %3218 = vmatprep.subr.bf16.mxu0 0
  %3219 = vmatpush1.bf16.msra.mxu0 0
  %3220 = vmatprep.subr.bf16.mxu0 0
  %3221 = vmatpush1.bf16.msra.mxu0 0
  %3222 = vmatprep.subr.bf16.mxu0 0
  %3223 = vmatpush1.bf16.msra.mxu0 0
  %3224 = vmatprep.subr.bf16.mxu0 0
  %3225 = vmatpush1.bf16.msra.mxu0 0
  %3226 = vmatprep.subr.bf16.mxu0 0
  %3227 = vmatpush1.bf16.msra.mxu0 0
  %3228 = vmatprep.subr.bf16.mxu0 0
  %3229 = vmatpush1.bf16.msra.mxu0 %v3212
  %3230 = vmatprep.subr.bf16.mxu0 0
  %3231 = vmatpush2.bf16.msra.mxu0 0
  %3232 = vmatprep.subr.bf16.mxu0 0
  %3233 = vmatpush2.bf16.msra.mxu0 0
  %3234 = vmatprep.subr.bf16.mxu0 0
  %3235 = vmatpush2.bf16.msra.mxu0 0
  %3236 = vmatprep.subr.bf16.mxu0 0
  %3237 = vmatpush2.bf16.msra.mxu0 0
  %3238 = vmatprep.subr.bf16.mxu0 0
  %3239 = vmatpush2.bf16.msra.mxu0 0
  %3240 = vmatprep.subr.bf16.mxu0 0
  %3241 = vmatpush2.bf16.msra.mxu0 0
  %3242 = vmatprep.subr.bf16.mxu0 0
  %3243 = vmatpush2.bf16.msra.mxu0 0
  %3244 = vmatprep.subr.bf16.mxu0 0
  %3245 = vmatpush2.bf16.msra.mxu0 0
  %3246 = vmatprep.mubr.bf16.mxu0 0
  %3247 = vmatmul.mubr.bf16.gmra.mxu0 %v3209
  %v3248 = vpop.f32.mrf.mxu0
  %v3249 = vadd.f32 %v3203, %v3248
  %v3250 = vpop.f32.mrf.mxu0
  %v3251 = vpop.f32.mrf.mxu0
  %v3252 = vpop.f32.mrf.mxu0
  %3253 = vdwg.mxu0
  %s3254 = scalar_lea.vmem %s9, 68
  %v3255 = vld [vmem:[%s3254] sm:$0xf]
  %v3256 = vpack.c.bf16 %v3154, %v3154
  %v3258 = vsel %vm1125, %v3255, 0
  %v3261 = vsel %vm358, %v3256, 0
  %3263 = vmatprep.subr.bf16.mxu0 0
  %3264 = vmatpush1.bf16.msra.mxu0 0
  %3265 = vmatprep.subr.bf16.mxu0 0
  %3266 = vmatpush1.bf16.msra.mxu0 0
  %3267 = vmatprep.subr.bf16.mxu0 0
  %3268 = vmatpush1.bf16.msra.mxu0 0
  %3269 = vmatprep.subr.bf16.mxu0 0
  %3270 = vmatpush1.bf16.msra.mxu0 0
  %3271 = vmatprep.subr.bf16.mxu0 0
  %3272 = vmatpush1.bf16.msra.mxu0 0
  %3273 = vmatprep.subr.bf16.mxu0 0
  %3274 = vmatpush1.bf16.msra.mxu0 0
  %3275 = vmatprep.subr.bf16.mxu0 0
  %3276 = vmatpush1.bf16.msra.mxu0 0
  %3277 = vmatprep.subr.bf16.mxu0 0
  %3278 = vmatpush1.bf16.msra.mxu0 %v3261
  %3279 = vmatprep.subr.bf16.mxu0 0
  %3280 = vmatpush2.bf16.msra.mxu0 0
  %3281 = vmatprep.subr.bf16.mxu0 0
  %3282 = vmatpush2.bf16.msra.mxu0 0
  %3283 = vmatprep.subr.bf16.mxu0 0
  %3284 = vmatpush2.bf16.msra.mxu0 0
  %3285 = vmatprep.subr.bf16.mxu0 0
  %3286 = vmatpush2.bf16.msra.mxu0 0
  %3287 = vmatprep.subr.bf16.mxu0 0
  %3288 = vmatpush2.bf16.msra.mxu0 0
  %3289 = vmatprep.subr.bf16.mxu0 0
  %3290 = vmatpush2.bf16.msra.mxu0 0
  %3291 = vmatprep.subr.bf16.mxu0 0
  %3292 = vmatpush2.bf16.msra.mxu0 0
  %3293 = vmatprep.subr.bf16.mxu0 0
  %3294 = vmatpush2.bf16.msra.mxu0 0
  %3295 = vmatprep.mubr.bf16.mxu0 0
  %3296 = vmatmul.mubr.bf16.gmra.mxu0 %v3258
  %v3297 = vpop.f32.mrf.mxu0
  %v3298 = vadd.f32 0.0, %v3297
  %v3299 = vpop.f32.mrf.mxu0
  %v3300 = vpop.f32.mrf.mxu0
  %v3301 = vpop.f32.mrf.mxu0
  %3302 = vdwg.mxu0
  %v3303 = vadd.f32 %v3249, %v3298
  %s3304 = scalar_lea.vmem %s10, 40
  %v3305 = vld [vmem:[%s3304] sm:$0xff]
  %3307 = vset.pattern.permute.xlu0 0
  %3308 = vperm.xlu0 %3307, %v3305
  %v3309 = vpop.permute.xlu0 %3308
  %v3311 = vadd.f32 %v3303, %v3309
  %v3312 = vmax.f32 %v3311, 0.0
  %3313 = vadd.xlane.f32.xlu0 %v3312
  %v3314 = vpop.xlane.xlu0 %3313
  %v3315 = vmul.f32 %v3314, %v756
  %v3316 = vsub.f32 %v3312, %v3315
  %v3317 = vmul.f32 %v3316, %v3316
  %3318 = vadd.xlane.f32.xlu0 %v3317
  %v3319 = vpop.xlane.xlu0 %3318
  %v3320 = vmul.f32 %v3319, %v756
  %v3321 = vadd.f32 %v3320, 1e-05
  %v3322 = vrsqrt.pop %v3321
  %v3323 = vmul.f32 %v3316, %v3322
  %3324 = vset.pattern.permute.xlu0 1
  %3325 = vperm.xlu0 %3324, %v3305
  %v3326 = vpop.permute.xlu0 %3325
  %v3328 = vmul.f32 %v3323, %v3326
  %3329 = vset.pattern.permute.xlu0 2
  %3330 = vperm.xlu0 %3329, %v3305
  %v3331 = vpop.permute.xlu0 %3330
  %v3333 = vadd.f32 %v3328, %v3331
  %s3334 = scalar_lea.vmem %s7, 48
  %v3335 = vld [vmem:[%s3334] sm:$0xf]
  %v3336 = vld [vmem:[%s3334 + $0x4] sm:$0xf]
  %v3337 = vld [vmem:[%s3334 + $0x8] sm:$0xf]
  %v3338 = vld [vmem:[%s3334 + $0xc] sm:$0xf]
  %v3339 = vpack.c.bf16 %v2833, %v2548
  %v3340 = vpack.c.bf16 %v3333, %v3083
  %s3341 = scalar_lea.vmem %s8, 96
  %v3342 = vld [vmem:[%s3341] sm:$0xff]
  %v3343 = vld [vmem:[%s3341 + $0x8] sm:$0xff]
  %v3344 = vld [vmem:[%s3341 + $0x10] sm:$0xff]
  %v3345 = vld [vmem:[%s3341 + $0x18] sm:$0xff]
  %3347 = vset.pattern.permute.xlu0 0
  %3348 = vperm.xlu0 %3347, %v3342
  %v3349 = vpop.permute.xlu0 %3348
  %3352 = vset.pattern.permute.xlu0 0
  %3353 = vperm.xlu0 %3352, %v3343
  %v3354 = vpop.permute.xlu0 %3353
  %3357 = vset.pattern.permute.xlu0 0
  %3358 = vperm.xlu0 %3357, %v3344
  %v3359 = vpop.permute.xlu0 %3358
  %3362 = vset.pattern.permute.xlu0 0
  %3363 = vperm.xlu0 %3362, %v3345
  %v3364 = vpop.permute.xlu0 %3363
  %v3370 = vunpack.c.l.b16 %v3335
  %v3371 = vunpack.c.l.b16 %v3336
  %v3372 = vunpack.c.l.b16 %v3337
  %v3373 = vunpack.c.l.b16 %v3338
  %v3374 = vpack.c.b16 %v3371, %v3370
  %v3375 = vpack.c.b16 %v3373, %v3372
  %v3377 = vsel %vm873, %v3374, 0
  %v3380 = vsel %vm873, %v3375, 0
  %3382 = vmatprep.subr.bf16.mxu0 0
  %3383 = vmatpush1.bf16.msra.mxu0 0
  %3384 = vmatprep.subr.bf16.mxu0 0
  %3385 = vmatpush1.bf16.msra.mxu0 0
  %3386 = vmatprep.subr.bf16.mxu0 0
  %3387 = vmatpush1.bf16.msra.mxu0 0
  %3388 = vmatprep.subr.bf16.mxu0 0
  %3389 = vmatpush1.bf16.msra.mxu0 0
  %3390 = vmatprep.subr.bf16.mxu0 0
  %3391 = vmatpush1.bf16.msra.mxu0 0
  %3392 = vmatprep.subr.bf16.mxu0 0
  %3393 = vmatpush1.bf16.msra.mxu0 0
  %3394 = vmatprep.subr.bf16.mxu0 0
  %3395 = vmatpush1.bf16.msra.mxu0 %v3340
  %3396 = vmatprep.subr.bf16.mxu0 0
  %3397 = vmatpush1.bf16.msra.mxu0 %v3339
  %3398 = vmatprep.subr.bf16.mxu0 0
  %3399 = vmatpush2.bf16.msra.mxu0 0
  %3400 = vmatprep.subr.bf16.mxu0 0
  %3401 = vmatpush2.bf16.msra.mxu0 0
  %3402 = vmatprep.subr.bf16.mxu0 0
  %3403 = vmatpush2.bf16.msra.mxu0 0
  %3404 = vmatprep.subr.bf16.mxu0 0
  %3405 = vmatpush2.bf16.msra.mxu0 0
  %3406 = vmatprep.subr.bf16.mxu0 0
  %3407 = vmatpush2.bf16.msra.mxu0 0
  %3408 = vmatprep.subr.bf16.mxu0 0
  %3409 = vmatpush2.bf16.msra.mxu0 0
  %3410 = vmatprep.subr.bf16.mxu0 0
  %3411 = vmatpush2.bf16.msra.mxu0 0
  %3412 = vmatprep.subr.bf16.mxu0 0
  %3413 = vmatpush2.bf16.msra.mxu0 0
  %3414 = vmatprep.mubr.bf16.mxu0 0
  %3415 = vmatmul.mubr.bf16.gmra.mxu0 %v3377
  %v3416 = vpop.f32.mrf.mxu0
  %v3417 = vadd.f32 %v3349, %v3416
  %v3418 = vpop.f32.mrf.mxu0
  %v3419 = vpop.f32.mrf.mxu0
  %v3420 = vadd.f32 %v3354, %v3419
  %v3421 = vpop.f32.mrf.mxu0
  %3422 = vmatprep.mubr.bf16.mxu0 0
  %3423 = vmatmul.mubr.bf16.gmra.mxu0 %v3380
  %v3424 = vpop.f32.mrf.mxu0
  %v3425 = vadd.f32 %v3359, %v3424
  %v3426 = vpop.f32.mrf.mxu0
  %v3427 = vpop.f32.mrf.mxu0
  %v3428 = vadd.f32 %v3364, %v3427
  %v3429 = vpop.f32.mrf.mxu0
  %3430 = vdwg.mxu0
  %v3431 = vmax.f32 %v3417, 0.0
  %v3432 = vmax.f32 %v3420, 0.0
  %v3433 = vmax.f32 %v3425, 0.0
  %v3434 = vmax.f32 %v3428, 0.0
  %3435 = vadd.xlane.f32.xlu0 %v3431
  %v3436 = vpop.xlane.xlu0 %3435
  %3437 = vadd.xlane.f32.xlu0 %v3432
  %v3438 = vpop.xlane.xlu0 %3437
  %3439 = vadd.xlane.f32.xlu0 %v3433
  %v3440 = vpop.xlane.xlu0 %3439
  %3441 = vadd.xlane.f32.xlu0 %v3434
  %v3442 = vpop.xlane.xlu0 %3441
  %v3443 = vmul.f32 %v3436, %v756
  %v3444 = vmul.f32 %v3438, %v756
  %v3445 = vmul.f32 %v3440, %v756
  %v3446 = vmul.f32 %v3442, %v756
  %v3447 = vsub.f32 %v3431, %v3443
  %v3448 = vsub.f32 %v3432, %v3444
  %v3449 = vsub.f32 %v3433, %v3445
  %v3450 = vsub.f32 %v3434, %v3446
  %v3451 = vmul.f32 %v3447, %v3447
  %v3452 = vmul.f32 %v3448, %v3448
  %v3453 = vmul.f32 %v3449, %v3449
  %v3454 = vmul.f32 %v3450, %v3450
  %3455 = vadd.xlane.f32.xlu0 %v3451
  %v3456 = vpop.xlane.xlu0 %3455
  %3457 = vadd.xlane.f32.xlu0 %v3452
  %v3458 = vpop.xlane.xlu0 %3457
  %3459 = vadd.xlane.f32.xlu0 %v3453
  %v3460 = vpop.xlane.xlu0 %3459
  %3461 = vadd.xlane.f32.xlu0 %v3454
  %v3462 = vpop.xlane.xlu0 %3461
  %v3463 = vmul.f32 %v3456, %v756
  %v3464 = vmul.f32 %v3458, %v756
  %v3465 = vmul.f32 %v3460, %v756
  %v3466 = vmul.f32 %v3462, %v756
  %v3467 = vadd.f32 %v3463, 1e-05
  %v3468 = vadd.f32 %v3464, 1e-05
  %v3469 = vadd.f32 %v3465, 1e-05
  %v3470 = vadd.f32 %v3466, 1e-05
  %v3471 = vrsqrt.pop %v3467
  %v3472 = vrsqrt.pop %v3468
  %v3473 = vrsqrt.pop %v3469
  %v3474 = vrsqrt.pop %v3470
  %v3475 = vmul.f32 %v3447, %v3471
  %v3476 = vmul.f32 %v3448, %v3472
  %v3477 = vmul.f32 %v3449, %v3473
  %v3478 = vmul.f32 %v3450, %v3474
  %3479 = vset.pattern.permute.xlu0 1
  %3480 = vperm.xlu0 %3479, %v3342
  %v3481 = vpop.permute.xlu0 %3480
  %3483 = vset.pattern.permute.xlu0 1
  %3484 = vperm.xlu0 %3483, %v3343
  %v3485 = vpop.permute.xlu0 %3484
  %3487 = vset.pattern.permute.xlu0 1
  %3488 = vperm.xlu0 %3487, %v3344
  %v3489 = vpop.permute.xlu0 %3488
  %3491 = vset.pattern.permute.xlu0 1
  %3492 = vperm.xlu0 %3491, %v3345
  %v3493 = vpop.permute.xlu0 %3492
  %v3495 = vmul.f32 %v3475, %v3481
  %v3496 = vmul.f32 %v3476, %v3485
  %v3497 = vmul.f32 %v3477, %v3489
  %v3498 = vmul.f32 %v3478, %v3493
  %3499 = vset.pattern.permute.xlu0 2
  %3500 = vperm.xlu0 %3499, %v3342
  %v3501 = vpop.permute.xlu0 %3500
  %3503 = vset.pattern.permute.xlu0 2
  %3504 = vperm.xlu0 %3503, %v3343
  %v3505 = vpop.permute.xlu0 %3504
  %3507 = vset.pattern.permute.xlu0 2
  %3508 = vperm.xlu0 %3507, %v3344
  %v3509 = vpop.permute.xlu0 %3508
  %3511 = vset.pattern.permute.xlu0 2
  %3512 = vperm.xlu0 %3511, %v3345
  %v3513 = vpop.permute.xlu0 %3512
  %v3515 = vadd.f32 %v3495, %v3501
  %v3516 = vadd.f32 %v3496, %v3505
  %v3517 = vadd.f32 %v3497, %v3509
  %v3518 = vadd.f32 %v3498, %v3513
  %3519 = vmatprep.subr.mxu0 0.0
  %3520 = vmatpush1.msra.mxu0 %v93
  %3521 = vmatprep.subr.mxu0 0.0
  %3522 = vmatpush1.msra.mxu0 %v92
  %3523 = vmatprep.subr.mxu0 0.0
  %3524 = vmatpush1.msra.mxu0 %v91
  %3525 = vmatprep.subr.mxu0 0.0
  %3526 = vmatpush1.msra.mxu0 %v90
  %3527 = vmatprep.subr.mxu0 0.0
  %3528 = vmatpush1.msra.mxu0 %v89
  %3529 = vmatprep.subr.mxu0 0.0
  %3530 = vmatpush1.msra.mxu0 %v88
  %3531 = vmatprep.subr.mxu0 0.0
  %3532 = vmatpush1.msra.mxu0 %v87
  %3533 = vmatprep.subr.mxu0 0.0
  %3534 = vmatpush1.msra.mxu0 %v86
  %3535 = vmatprep.subr.mxu0 0.0
  %3536 = vmatpush1.msra.mxu0 %v85
  %3537 = vmatprep.subr.mxu0 0.0
  %3538 = vmatpush1.msra.mxu0 %v84
  %3539 = vmatprep.subr.mxu0 0.0
  %3540 = vmatpush1.msra.mxu0 %v83
  %3541 = vmatprep.subr.mxu0 0.0
  %3542 = vmatpush1.msra.mxu0 %v82
  %3543 = vmatprep.subr.mxu0 0.0
  %3544 = vmatpush1.msra.mxu0 %v81
  %3545 = vmatprep.subr.mxu0 0.0
  %3546 = vmatpush1.msra.mxu0 %v80
  %3547 = vmatprep.subr.mxu0 0.0
  %3548 = vmatpush1.msra.mxu0 %v79
  %3549 = vmatprep.subr.mxu0 0.0
  %3550 = vmatpush1.msra.mxu0 %v78
  %3551 = vmatprep.subr.mxu0 0.0
  %3552 = vmatpush2.msra.mxu0 0.0
  %3553 = vmatprep.subr.mxu0 0.0
  %3554 = vmatpush2.msra.mxu0 0.0
  %3555 = vmatprep.subr.mxu0 0.0
  %3556 = vmatpush2.msra.mxu0 0.0
  %3557 = vmatprep.subr.mxu0 0.0
  %3558 = vmatpush2.msra.mxu0 0.0
  %3559 = vmatprep.subr.mxu0 0.0
  %3560 = vmatpush2.msra.mxu0 0.0
  %3561 = vmatprep.subr.mxu0 0.0
  %3562 = vmatpush2.msra.mxu0 0.0
  %3563 = vmatprep.subr.mxu0 0.0
  %3564 = vmatpush2.msra.mxu0 0.0
  %3565 = vmatprep.subr.mxu0 0.0
  %3566 = vmatpush2.msra.mxu0 0.0
  %3567 = vmatprep.subr.mxu0 0.0
  %3568 = vmatpush2.msra.mxu0 0.0
  %3569 = vmatprep.subr.mxu0 0.0
  %3570 = vmatpush2.msra.mxu0 0.0
  %3571 = vmatprep.subr.mxu0 0.0
  %3572 = vmatpush2.msra.mxu0 0.0
  %3573 = vmatprep.subr.mxu0 0.0
  %3574 = vmatpush2.msra.mxu0 0.0
  %3575 = vmatprep.subr.mxu0 0.0
  %3576 = vmatpush2.msra.mxu0 0.0
  %3577 = vmatprep.subr.mxu0 0.0
  %3578 = vmatpush2.msra.mxu0 0.0
  %3579 = vmatprep.subr.mxu0 0.0
  %3580 = vmatpush2.msra.mxu0 0.0
  %3581 = vmatprep.subr.mxu0 0.0
  %3582 = vmatpush2.msra.mxu0 0.0
  %3583 = vmatprep.mubr.f32.mxu0 0.0
  %3584 = vmatmul.mubr.f32.gmra.mxu0 %v3515
  %v3585 = vpop.f32.mrf.mxu0
  %v3586 = vadd.f32 0.0, %v3585
  %v3587 = vpop.f32.mrf.mxu0
  %3588 = vmatprep.mubr.f32.mxu0 0.0
  %3589 = vmatmul.mubr.f32.gmra.mxu0 %v3516
  %v3590 = vpop.f32.mrf.mxu0
  %v3591 = vadd.f32 0.0, %v3590
  %v3592 = vpop.f32.mrf.mxu0
  %3593 = vmatprep.mubr.f32.mxu0 0.0
  %3594 = vmatmul.mubr.f32.gmra.mxu0 %v3517
  %v3595 = vpop.f32.mrf.mxu0
  %v3596 = vadd.f32 0.0, %v3595
  %v3597 = vpop.f32.mrf.mxu0
  %3598 = vmatprep.mubr.f32.mxu0 0.0
  %3599 = vmatmul.mubr.f32.gmra.mxu0 %v3518
  %v3600 = vpop.f32.mrf.mxu0
  %v3601 = vadd.f32 0.0, %v3600
  %v3602 = vpop.f32.mrf.mxu0
  %3603 = vdwg.mxu0
  %v3604 = vmul.f32 %v3586, 0.015625
  %v3605 = vmul.f32 %v3591, 0.015625
  %v3606 = vmul.f32 %v3596, 0.015625
  %v3607 = vmul.f32 %v3601, 0.015625
  %s3608 = scalar_lea.vmem %s11, 8
  %v3609 = vld [vmem:[%s3608] sm:$0xf]
  %v3610 = vld [vmem:[%s3608 + $0x4] sm:$0xf]
  %v3611 = vpack.c.bf16 %v3605, %v3604
  %v3612 = vpack.c.bf16 %v3607, %v3606
  %s3613 = scalar_lea.vmem %s12, 16
  %v3614 = vld [vmem:[%s3613] sm:$0xff]
  %v3615 = vld [vmem:[%s3613 + $0x8] sm:$0xff]
  %3617 = vset.pattern.permute.xlu0 0
  %3618 = vperm.xlu0 %3617, %v3614
  %v3619 = vpop.permute.xlu0 %3618
  %3622 = vset.pattern.permute.xlu0 0
  %3623 = vperm.xlu0 %3622, %v3615
  %v3624 = vpop.permute.xlu0 %3623
  %v3628 = vunpack.c.l.b16 %v3609
  %v3629 = vunpack.c.l.b16 %v3610
  %v3630 = vpack.c.b16 %v3629, %v3628
  %v3632 = vsel %vm873, %v3630, 0
  %3634 = vmatprep.subr.bf16.mxu0 0
  %3635 = vmatpush1.bf16.msra.mxu0 0
  %3636 = vmatprep.subr.bf16.mxu0 0
  %3637 = vmatpush1.bf16.msra.mxu0 0
  %3638 = vmatprep.subr.bf16.mxu0 0
  %3639 = vmatpush1.bf16.msra.mxu0 0
  %3640 = vmatprep.subr.bf16.mxu0 0
  %3641 = vmatpush1.bf16.msra.mxu0 0
  %3642 = vmatprep.subr.bf16.mxu0 0
  %3643 = vmatpush1.bf16.msra.mxu0 0
  %3644 = vmatprep.subr.bf16.mxu0 0
  %3645 = vmatpush1.bf16.msra.mxu0 0
  %3646 = vmatprep.subr.bf16.mxu0 0
  %3647 = vmatpush1.bf16.msra.mxu0 %v3612
  %3648 = vmatprep.subr.bf16.mxu0 0
  %3649 = vmatpush1.bf16.msra.mxu0 %v3611
  %3650 = vmatprep.subr.bf16.mxu0 0
  %3651 = vmatpush2.bf16.msra.mxu0 0
  %3652 = vmatprep.subr.bf16.mxu0 0
  %3653 = vmatpush2.bf16.msra.mxu0 0
  %3654 = vmatprep.subr.bf16.mxu0 0
  %3655 = vmatpush2.bf16.msra.mxu0 0
  %3656 = vmatprep.subr.bf16.mxu0 0
  %3657 = vmatpush2.bf16.msra.mxu0 0
  %3658 = vmatprep.subr.bf16.mxu0 0
  %3659 = vmatpush2.bf16.msra.mxu0 0
  %3660 = vmatprep.subr.bf16.mxu0 0
  %3661 = vmatpush2.bf16.msra.mxu0 0
  %3662 = vmatprep.subr.bf16.mxu0 0
  %3663 = vmatpush2.bf16.msra.mxu0 0
  %3664 = vmatprep.subr.bf16.mxu0 0
  %3665 = vmatpush2.bf16.msra.mxu0 0
  %3666 = vmatprep.mubr.bf16.mxu0 0
  %3667 = vmatmul.mubr.bf16.gmra.mxu0 %v3632
  %v3668 = vpop.f32.mrf.mxu0
  %v3669 = vadd.f32 %v3619, %v3668
  %v3670 = vpop.f32.mrf.mxu0
  %v3671 = vpop.f32.mrf.mxu0
  %v3672 = vadd.f32 %v3624, %v3671
  %v3673 = vpop.f32.mrf.mxu0
  %3674 = vdwg.mxu0
  %v3675 = vmax.f32 %v3669, 0.0
  %v3676 = vmax.f32 %v3672, 0.0
  %s3677 = scalar_lea.vmem %s13, 16
  %v3678 = vld [vmem:[%s3677] sm:$0xf]
  %v3679 = vld [vmem:[%s3677 + $0x4] sm:$0xf]
  %v3680 = vld [vmem:[%s3677 + $0x8] sm:$0xf]
  %v3681 = vld [vmem:[%s3677 + $0xc] sm:$0xf]
  %v3682 = vpack.c.bf16 %v3676, %v3675
  %s3683 = scalar_lea.vmem %s14, 32
  %v3684 = vld [vmem:[%s3683] sm:$0xff]
  %v3685 = vld [vmem:[%s3683 + $0x8] sm:$0xff]
  %v3686 = vld [vmem:[%s3683 + $0x10] sm:$0xff]
  %v3687 = vld [vmem:[%s3683 + $0x18] sm:$0xff]
  %3689 = vset.pattern.permute.xlu0 0
  %3690 = vperm.xlu0 %3689, %v3684
  %v3691 = vpop.permute.xlu0 %3690
  %3694 = vset.pattern.permute.xlu0 0
  %3695 = vperm.xlu0 %3694, %v3685
  %v3696 = vpop.permute.xlu0 %3695
  %3699 = vset.pattern.permute.xlu0 0
  %3700 = vperm.xlu0 %3699, %v3686
  %v3701 = vpop.permute.xlu0 %3700
  %3704 = vset.pattern.permute.xlu0 0
  %3705 = vperm.xlu0 %3704, %v3687
  %v3706 = vpop.permute.xlu0 %3705
  %v3712 = vunpack.c.l.b16 %v3678
  %v3713 = vunpack.c.l.b16 %v3679
  %v3714 = vunpack.c.l.b16 %v3680
  %v3715 = vunpack.c.l.b16 %v3681
  %v3716 = vpack.c.b16 %v3713, %v3712
  %v3717 = vpack.c.b16 %v3715, %v3714
  %v3719 = vsel %vm2177, %v3716, 0
  %v3722 = vsel %vm2177, %v3717, 0
  %3724 = vmatprep.subr.bf16.mxu0 0
  %3725 = vmatpush1.bf16.msra.mxu0 0
  %3726 = vmatprep.subr.bf16.mxu0 0
  %3727 = vmatpush1.bf16.msra.mxu0 0
  %3728 = vmatprep.subr.bf16.mxu0 0
  %3729 = vmatpush1.bf16.msra.mxu0 0
  %3730 = vmatprep.subr.bf16.mxu0 0
  %3731 = vmatpush1.bf16.msra.mxu0 0
  %3732 = vmatprep.subr.bf16.mxu0 0
  %3733 = vmatpush1.bf16.msra.mxu0 0
  %3734 = vmatprep.subr.bf16.mxu0 0
  %3735 = vmatpush1.bf16.msra.mxu0 0
  %3736 = vmatprep.subr.bf16.mxu0 0
  %3737 = vmatpush1.bf16.msra.mxu0 0
  %3738 = vmatprep.subr.bf16.mxu0 0
  %3739 = vmatpush1.bf16.msra.mxu0 %v3682
  %3740 = vmatprep.subr.bf16.mxu0 0
  %3741 = vmatpush2.bf16.msra.mxu0 0
  %3742 = vmatprep.subr.bf16.mxu0 0
  %3743 = vmatpush2.bf16.msra.mxu0 0
  %3744 = vmatprep.subr.bf16.mxu0 0
  %3745 = vmatpush2.bf16.msra.mxu0 0
  %3746 = vmatprep.subr.bf16.mxu0 0
  %3747 = vmatpush2.bf16.msra.mxu0 0
  %3748 = vmatprep.subr.bf16.mxu0 0
  %3749 = vmatpush2.bf16.msra.mxu0 0
  %3750 = vmatprep.subr.bf16.mxu0 0
  %3751 = vmatpush2.bf16.msra.mxu0 0
  %3752 = vmatprep.subr.bf16.mxu0 0
  %3753 = vmatpush2.bf16.msra.mxu0 0
  %3754 = vmatprep.subr.bf16.mxu0 0
  %3755 = vmatpush2.bf16.msra.mxu0 0
  %3756 = vmatprep.mubr.bf16.mxu0 0
  %3757 = vmatmul.mubr.bf16.gmra.mxu0 %v3719
  %v3758 = vpop.f32.mrf.mxu0
  %v3759 = vadd.f32 %v3691, %v3758
  %v3760 = vpop.f32.mrf.mxu0
  %v3761 = vpop.f32.mrf.mxu0
  %v3762 = vadd.f32 %v3696, %v3761
  %v3763 = vpop.f32.mrf.mxu0
  %3764 = vmatprep.mubr.bf16.mxu0 0
  %3765 = vmatmul.mubr.bf16.gmra.mxu0 %v3722
  %v3766 = vpop.f32.mrf.mxu0
  %v3767 = vadd.f32 %v3701, %v3766
  %v3768 = vpop.f32.mrf.mxu0
  %v3769 = vpop.f32.mrf.mxu0
  %v3770 = vadd.f32 %v3706, %v3769
  %v3771 = vpop.f32.mrf.mxu0
  %3772 = vdwg.mxu0
  %v3773 = vxor.u32 %v3759, 2147483648
  %v3774 = vxor.u32 %v3762, 2147483648
  %v3775 = vxor.u32 %v3767, 2147483648
  %v3776 = vxor.u32 %v3770, 2147483648
  %v3777 = vmul.f32 %v3773, 1.442695
  %v3778 = vpow.pop %v3777
  %v3779 = vmul.f32 %v3774, 1.442695
  %v3780 = vpow.pop %v3779
  %v3781 = vmul.f32 %v3775, 1.442695
  %v3782 = vpow.pop %v3781
  %v3783 = vmul.f32 %v3776, 1.442695
  %v3784 = vpow.pop %v3783
  %v3785 = vadd.f32 %v3778, 1.0
  %v3786 = vadd.f32 %v3780, 1.0
  %v3787 = vadd.f32 %v3782, 1.0
  %v3788 = vadd.f32 %v3784, 1.0
  %v3789 = vrcp.pop %v3785
  %v3790 = vmul.f32 1.0, %v3789
  %v3791 = vrcp.pop %v3786
  %v3792 = vmul.f32 1.0, %v3791
  %v3793 = vrcp.pop %v3787
  %v3794 = vmul.f32 1.0, %v3793
  %v3795 = vrcp.pop %v3788
  %v3796 = vmul.f32 1.0, %v3795
  %v3798 = vsel %vm2257, %v3790, 0
  %v3801 = vsel %vm2257, %v3792, 0
  %v3804 = vsel %vm2257, %v3794, 0
  %v3807 = vsel %vm2257, %v3796, 0
  %3809 = vmatprep.subr.mxu0 0.0
  %3810 = vmatpush1.msra.mxu0 0.0
  %3811 = vmatprep.subr.mxu0 0.0
  %3812 = vmatpush1.msra.mxu0 0.0
  %3813 = vmatprep.subr.mxu0 0.0
  %3814 = vmatpush1.msra.mxu0 0.0
  %3815 = vmatprep.subr.mxu0 0.0
  %3816 = vmatpush1.msra.mxu0 0.0
  %3817 = vmatprep.subr.mxu0 0.0
  %3818 = vmatpush1.msra.mxu0 0.0
  %3819 = vmatprep.subr.mxu0 0.0
  %3820 = vmatpush1.msra.mxu0 0.0
  %3821 = vmatprep.subr.mxu0 0.0
  %3822 = vmatpush1.msra.mxu0 0.0
  %3823 = vmatprep.subr.mxu0 0.0
  %3824 = vmatpush1.msra.mxu0 0.0
  %3825 = vmatprep.subr.mxu0 0.0
  %3826 = vmatpush1.msra.mxu0 0.0
  %3827 = vmatprep.subr.mxu0 0.0
  %3828 = vmatpush1.msra.mxu0 0.0
  %3829 = vmatprep.subr.mxu0 0.0
  %3830 = vmatpush1.msra.mxu0 0.0
  %3831 = vmatprep.subr.mxu0 0.0
  %3832 = vmatpush1.msra.mxu0 0.0
  %3833 = vmatprep.subr.mxu0 0.0
  %3834 = vmatpush1.msra.mxu0 0.0
  %3835 = vmatprep.subr.mxu0 0.0
  %3836 = vmatpush1.msra.mxu0 0.0
  %3837 = vmatprep.subr.mxu0 0.0
  %3838 = vmatpush1.msra.mxu0 0.0
  %3839 = vmatprep.subr.mxu0 0.0
  %3840 = vmatpush1.msra.mxu0 %v2272
  %3841 = vmatprep.subr.mxu0 0.0
  %3842 = vmatpush2.msra.mxu0 0.0
  %3843 = vmatprep.subr.mxu0 0.0
  %3844 = vmatpush2.msra.mxu0 0.0
  %3845 = vmatprep.subr.mxu0 0.0
  %3846 = vmatpush2.msra.mxu0 0.0
  %3847 = vmatprep.subr.mxu0 0.0
  %3848 = vmatpush2.msra.mxu0 0.0
  %3849 = vmatprep.subr.mxu0 0.0
  %3850 = vmatpush2.msra.mxu0 0.0
  %3851 = vmatprep.subr.mxu0 0.0
  %3852 = vmatpush2.msra.mxu0 0.0
  %3853 = vmatprep.subr.mxu0 0.0
  %3854 = vmatpush2.msra.mxu0 0.0
  %3855 = vmatprep.subr.mxu0 0.0
  %3856 = vmatpush2.msra.mxu0 0.0
  %3857 = vmatprep.subr.mxu0 0.0
  %3858 = vmatpush2.msra.mxu0 0.0
  %3859 = vmatprep.subr.mxu0 0.0
  %3860 = vmatpush2.msra.mxu0 0.0
  %3861 = vmatprep.subr.mxu0 0.0
  %3862 = vmatpush2.msra.mxu0 0.0
  %3863 = vmatprep.subr.mxu0 0.0
  %3864 = vmatpush2.msra.mxu0 0.0
  %3865 = vmatprep.subr.mxu0 0.0
  %3866 = vmatpush2.msra.mxu0 0.0
  %3867 = vmatprep.subr.mxu0 0.0
  %3868 = vmatpush2.msra.mxu0 0.0
  %3869 = vmatprep.subr.mxu0 0.0
  %3870 = vmatpush2.msra.mxu0 0.0
  %3871 = vmatprep.subr.mxu0 0.0
  %3872 = vmatpush2.msra.mxu0 0.0
  %3873 = vmatprep.mubr.f32.mxu0 0.0
  %3874 = vmatmul.mubr.f32.gmra.mxu0 %v3798
  %v3875 = vpop.f32.mrf.mxu0
  %v3876 = vadd.f32 0.0, %v3875
  %v3877 = vpop.f32.mrf.mxu0
  %3878 = vmatprep.mubr.f32.mxu0 0.0
  %3879 = vmatmul.mubr.f32.gmra.mxu0 %v3801
  %v3880 = vpop.f32.mrf.mxu0
  %v3881 = vadd.f32 0.0, %v3880
  %v3882 = vpop.f32.mrf.mxu0
  %3883 = vmatprep.mubr.f32.mxu0 0.0
  %3884 = vmatmul.mubr.f32.gmra.mxu0 %v3804
  %v3885 = vpop.f32.mrf.mxu0
  %v3886 = vadd.f32 0.0, %v3885
  %v3887 = vpop.f32.mrf.mxu0
  %3888 = vmatprep.mubr.f32.mxu0 0.0
  %3889 = vmatmul.mubr.f32.gmra.mxu0 %v3807
  %v3890 = vpop.f32.mrf.mxu0
  %v3891 = vadd.f32 0.0, %v3890
  %v3892 = vpop.f32.mrf.mxu0
  %3893 = vdwg.mxu0
  %v3894 = vmul.f32 %v3515, %v3876
  %v3895 = vmul.f32 %v3516, %v3881
  %v3896 = vmul.f32 %v3517, %v3886
  %v3897 = vmul.f32 %v3518, %v3891
  %v3898 = vadd.f32 %v3894, %v2363
  %v3899 = vadd.f32 %v3895, %v2364
  %v3900 = vadd.f32 %v3896, %v2365
  %v3901 = vadd.f32 %v3897, %v2366
  %s3902 = scalar_lea.vmem %s7, 64
  %v3903 = vld [vmem:[%s3902] sm:$0xf]
  %v3904 = vld [vmem:[%s3902 + $0x4] sm:$0xf]
  %v3905 = vld [vmem:[%s3902 + $0x8] sm:$0xf]
  %v3906 = vld [vmem:[%s3902 + $0xc] sm:$0xf]
  %v3907 = vpack.c.bf16 %v3899, %v3898
  %v3908 = vpack.c.bf16 %v3901, %v3900
  %s3909 = scalar_lea.vmem %s8, 128
  %v3910 = vld [vmem:[%s3909] sm:$0xff]
  %v3911 = vld [vmem:[%s3909 + $0x8] sm:$0xff]
  %v3912 = vld [vmem:[%s3909 + $0x10] sm:$0xff]
  %v3913 = vld [vmem:[%s3909 + $0x18] sm:$0xff]
  %3915 = vset.pattern.permute.xlu0 0
  %3916 = vperm.xlu0 %3915, %v3910
  %v3917 = vpop.permute.xlu0 %3916
  %3920 = vset.pattern.permute.xlu0 0
  %3921 = vperm.xlu0 %3920, %v3911
  %v3922 = vpop.permute.xlu0 %3921
  %3925 = vset.pattern.permute.xlu0 0
  %3926 = vperm.xlu0 %3925, %v3912
  %v3927 = vpop.permute.xlu0 %3926
  %3930 = vset.pattern.permute.xlu0 0
  %3931 = vperm.xlu0 %3930, %v3913
  %v3932 = vpop.permute.xlu0 %3931
  %v3938 = vunpack.c.l.b16 %v3903
  %v3939 = vunpack.c.l.b16 %v3904
  %v3940 = vunpack.c.l.b16 %v3905
  %v3941 = vunpack.c.l.b16 %v3906
  %v3942 = vpack.c.b16 %v3939, %v3938
  %v3943 = vpack.c.b16 %v3941, %v3940
  %v3945 = vsel %vm873, %v3942, 0
  %v3948 = vsel %vm873, %v3943, 0
  %3950 = vmatprep.subr.bf16.mxu0 0
  %3951 = vmatpush1.bf16.msra.mxu0 0
  %3952 = vmatprep.subr.bf16.mxu0 0
  %3953 = vmatpush1.bf16.msra.mxu0 0
  %3954 = vmatprep.subr.bf16.mxu0 0
  %3955 = vmatpush1.bf16.msra.mxu0 0
  %3956 = vmatprep.subr.bf16.mxu0 0
  %3957 = vmatpush1.bf16.msra.mxu0 0
  %3958 = vmatprep.subr.bf16.mxu0 0
  %3959 = vmatpush1.bf16.msra.mxu0 0
  %3960 = vmatprep.subr.bf16.mxu0 0
  %3961 = vmatpush1.bf16.msra.mxu0 0
  %3962 = vmatprep.subr.bf16.mxu0 0
  %3963 = vmatpush1.bf16.msra.mxu0 %v3908
  %3964 = vmatprep.subr.bf16.mxu0 0
  %3965 = vmatpush1.bf16.msra.mxu0 %v3907
  %3966 = vmatprep.subr.bf16.mxu0 0
  %3967 = vmatpush2.bf16.msra.mxu0 0
  %3968 = vmatprep.subr.bf16.mxu0 0
  %3969 = vmatpush2.bf16.msra.mxu0 0
  %3970 = vmatprep.subr.bf16.mxu0 0
  %3971 = vmatpush2.bf16.msra.mxu0 0
  %3972 = vmatprep.subr.bf16.mxu0 0
  %3973 = vmatpush2.bf16.msra.mxu0 0
  %3974 = vmatprep.subr.bf16.mxu0 0
  %3975 = vmatpush2.bf16.msra.mxu0 0
  %3976 = vmatprep.subr.bf16.mxu0 0
  %3977 = vmatpush2.bf16.msra.mxu0 0
  %3978 = vmatprep.subr.bf16.mxu0 0
  %3979 = vmatpush2.bf16.msra.mxu0 0
  %3980 = vmatprep.subr.bf16.mxu0 0
  %3981 = vmatpush2.bf16.msra.mxu0 0
  %3982 = vmatprep.mubr.bf16.mxu0 0
  %3983 = vmatmul.mubr.bf16.gmra.mxu0 %v3945
  %v3984 = vpop.f32.mrf.mxu0
  %v3985 = vadd.f32 %v3917, %v3984
  %v3986 = vpop.f32.mrf.mxu0
  %v3987 = vpop.f32.mrf.mxu0
  %v3988 = vadd.f32 %v3922, %v3987
  %v3989 = vpop.f32.mrf.mxu0
  %3990 = vmatprep.mubr.bf16.mxu0 0
  %3991 = vmatmul.mubr.bf16.gmra.mxu0 %v3948
  %v3992 = vpop.f32.mrf.mxu0
  %v3993 = vadd.f32 %v3927, %v3992
  %v3994 = vpop.f32.mrf.mxu0
  %v3995 = vpop.f32.mrf.mxu0
  %v3996 = vadd.f32 %v3932, %v3995
  %v3997 = vpop.f32.mrf.mxu0
  %3998 = vdwg.mxu0
  %v3999 = vmax.f32 %v3985, 0.0
  %v4000 = vmax.f32 %v3988, 0.0
  %v4001 = vmax.f32 %v3993, 0.0
  %v4002 = vmax.f32 %v3996, 0.0
  %4003 = vadd.xlane.f32.xlu0 %v3999
  %v4004 = vpop.xlane.xlu0 %4003
  %4005 = vadd.xlane.f32.xlu0 %v4000
  %v4006 = vpop.xlane.xlu0 %4005
  %4007 = vadd.xlane.f32.xlu0 %v4001
  %v4008 = vpop.xlane.xlu0 %4007
  %4009 = vadd.xlane.f32.xlu0 %v4002
  %v4010 = vpop.xlane.xlu0 %4009
  %v4011 = vmul.f32 %v4004, %v756
  %v4012 = vmul.f32 %v4006, %v756
  %v4013 = vmul.f32 %v4008, %v756
  %v4014 = vmul.f32 %v4010, %v756
  %v4015 = vsub.f32 %v3999, %v4011
  %v4016 = vsub.f32 %v4000, %v4012
  %v4017 = vsub.f32 %v4001, %v4013
  %v4018 = vsub.f32 %v4002, %v4014
  %v4019 = vmul.f32 %v4015, %v4015
  %v4020 = vmul.f32 %v4016, %v4016
  %v4021 = vmul.f32 %v4017, %v4017
  %v4022 = vmul.f32 %v4018, %v4018
  %4023 = vadd.xlane.f32.xlu0 %v4019
  %v4024 = vpop.xlane.xlu0 %4023
  %4025 = vadd.xlane.f32.xlu0 %v4020
  %v4026 = vpop.xlane.xlu0 %4025
  %4027 = vadd.xlane.f32.xlu0 %v4021
  %v4028 = vpop.xlane.xlu0 %4027
  %4029 = vadd.xlane.f32.xlu0 %v4022
  %v4030 = vpop.xlane.xlu0 %4029
  %v4031 = vmul.f32 %v4024, %v756
  %v4032 = vmul.f32 %v4026, %v756
  %v4033 = vmul.f32 %v4028, %v756
  %v4034 = vmul.f32 %v4030, %v756
  %v4035 = vadd.f32 %v4031, 1e-05
  %v4036 = vadd.f32 %v4032, 1e-05
  %v4037 = vadd.f32 %v4033, 1e-05
  %v4038 = vadd.f32 %v4034, 1e-05
  %v4039 = vrsqrt.pop %v4035
  %v4040 = vrsqrt.pop %v4036
  %v4041 = vrsqrt.pop %v4037
  %v4042 = vrsqrt.pop %v4038
  %v4043 = vmul.f32 %v4015, %v4039
  %v4044 = vmul.f32 %v4016, %v4040
  %v4045 = vmul.f32 %v4017, %v4041
  %v4046 = vmul.f32 %v4018, %v4042
  %4047 = vset.pattern.permute.xlu0 1
  %4048 = vperm.xlu0 %4047, %v3910
  %v4049 = vpop.permute.xlu0 %4048
  %4051 = vset.pattern.permute.xlu0 1
  %4052 = vperm.xlu0 %4051, %v3911
  %v4053 = vpop.permute.xlu0 %4052
  %4055 = vset.pattern.permute.xlu0 1
  %4056 = vperm.xlu0 %4055, %v3912
  %v4057 = vpop.permute.xlu0 %4056
  %4059 = vset.pattern.permute.xlu0 1
  %4060 = vperm.xlu0 %4059, %v3913
  %v4061 = vpop.permute.xlu0 %4060
  %v4063 = vmul.f32 %v4043, %v4049
  %v4064 = vmul.f32 %v4044, %v4053
  %v4065 = vmul.f32 %v4045, %v4057
  %v4066 = vmul.f32 %v4046, %v4061
  %4067 = vset.pattern.permute.xlu0 2
  %4068 = vperm.xlu0 %4067, %v3910
  %v4069 = vpop.permute.xlu0 %4068
  %4071 = vset.pattern.permute.xlu0 2
  %4072 = vperm.xlu0 %4071, %v3911
  %v4073 = vpop.permute.xlu0 %4072
  %4075 = vset.pattern.permute.xlu0 2
  %4076 = vperm.xlu0 %4075, %v3912
  %v4077 = vpop.permute.xlu0 %4076
  %4079 = vset.pattern.permute.xlu0 2
  %4080 = vperm.xlu0 %4079, %v3913
  %v4081 = vpop.permute.xlu0 %4080
  %v4083 = vadd.f32 %v4063, %v4069
  %v4084 = vadd.f32 %v4064, %v4073
  %v4085 = vadd.f32 %v4065, %v4077
  %v4086 = vadd.f32 %v4066, %v4081
  %s4087 = scalar_lea.vmem %s2, 512
  %v4088 = vld [vmem:[%s4087] sm:$0xff]
  %v4089 = vld [vmem:[%s4087 + $0x8] sm:$0xff]
  %v4090 = vld [vmem:[%s4087 + $0x10] sm:$0xff]
  %v4091 = vld [vmem:[%s4087 + $0x18] sm:$0xff]
  %v4092 = vld [vmem:[%s4087 + $0x20] sm:$0xff]
  %v4093 = vld [vmem:[%s4087 + $0x28] sm:$0xff]
  %v4094 = vld [vmem:[%s4087 + $0x30] sm:$0xff]
  %v4095 = vld [vmem:[%s4087 + $0x38] sm:$0xff]
  %v4096 = vld [vmem:[%s4087 + $0x40] sm:$0xff]
  %v4097 = vld [vmem:[%s4087 + $0x48] sm:$0xff]
  %v4098 = vld [vmem:[%s4087 + $0x50] sm:$0xff]
  %v4099 = vld [vmem:[%s4087 + $0x58] sm:$0xff]
  %v4100 = vld [vmem:[%s4087 + $0x60] sm:$0xff]
  %v4101 = vld [vmem:[%s4087 + $0x68] sm:$0xff]
  %v4102 = vld [vmem:[%s4087 + $0x70] sm:$0xff]
  %v4103 = vld [vmem:[%s4087 + $0x78] sm:$0xff]
  %v4104 = vld [vmem:[%s4087 + $0x80] sm:$0xff]
  %v4105 = vld [vmem:[%s4087 + $0x88] sm:$0xff]
  %v4106 = vld [vmem:[%s4087 + $0x90] sm:$0xff]
  %v4107 = vld [vmem:[%s4087 + $0x98] sm:$0xff]
  %v4108 = vld [vmem:[%s4087 + $0xa0] sm:$0xff]
  %v4109 = vld [vmem:[%s4087 + $0xa8] sm:$0xff]
  %v4110 = vld [vmem:[%s4087 + $0xb0] sm:$0xff]
  %v4111 = vld [vmem:[%s4087 + $0xb8] sm:$0xff]
  %v4112 = vld [vmem:[%s4087 + $0xc0] sm:$0xff]
  %v4113 = vld [vmem:[%s4087 + $0xc8] sm:$0xff]
  %v4114 = vld [vmem:[%s4087 + $0xd0] sm:$0xff]
  %v4115 = vld [vmem:[%s4087 + $0xd8] sm:$0xff]
  %v4116 = vld [vmem:[%s4087 + $0xe0] sm:$0xff]
  %v4117 = vld [vmem:[%s4087 + $0xe8] sm:$0xff]
  %v4118 = vld [vmem:[%s4087 + $0xf0] sm:$0xff]
  %v4119 = vld [vmem:[%s4087 + $0xf8] sm:$0xff]
  %4120 = vmatprep.subr.mxu0 %v4119
  %4121 = vmatpush1.msra.mxu0 %v4118
  %4122 = vmatprep.subr.mxu0 %v4117
  %4123 = vmatpush1.msra.mxu0 %v4116
  %4124 = vmatprep.subr.mxu0 %v4115
  %4125 = vmatpush1.msra.mxu0 %v4114
  %4126 = vmatprep.subr.mxu0 %v4113
  %4127 = vmatpush1.msra.mxu0 %v4112
  %4128 = vmatprep.subr.mxu0 %v4111
  %4129 = vmatpush1.msra.mxu0 %v4110
  %4130 = vmatprep.subr.mxu0 %v4109
  %4131 = vmatpush1.msra.mxu0 %v4108
  %4132 = vmatprep.subr.mxu0 %v4107
  %4133 = vmatpush1.msra.mxu0 %v4106
  %4134 = vmatprep.subr.mxu0 %v4105
  %4135 = vmatpush1.msra.mxu0 %v4104
  %4136 = vmatprep.subr.mxu0 %v4103
  %4137 = vmatpush1.msra.mxu0 %v4102
  %4138 = vmatprep.subr.mxu0 %v4101
  %4139 = vmatpush1.msra.mxu0 %v4100
  %4140 = vmatprep.subr.mxu0 %v4099
  %4141 = vmatpush1.msra.mxu0 %v4098
  %4142 = vmatprep.subr.mxu0 %v4097
  %4143 = vmatpush1.msra.mxu0 %v4096
  %4144 = vmatprep.subr.mxu0 %v4095
  %4145 = vmatpush1.msra.mxu0 %v4094
  %4146 = vmatprep.subr.mxu0 %v4093
  %4147 = vmatpush1.msra.mxu0 %v4092
  %4148 = vmatprep.subr.mxu0 %v4091
  %4149 = vmatpush1.msra.mxu0 %v4090
  %4150 = vmatprep.subr.mxu0 %v4089
  %4151 = vmatpush1.msra.mxu0 %v4088
  %4152 = vmatprep.subr.mxu0 0.0
  %4153 = vmatpush2.msra.mxu0 0.0
  %4154 = vmatprep.subr.mxu0 0.0
  %4155 = vmatpush2.msra.mxu0 0.0
  %4156 = vmatprep.subr.mxu0 0.0
  %4157 = vmatpush2.msra.mxu0 0.0
  %4158 = vmatprep.subr.mxu0 0.0
  %4159 = vmatpush2.msra.mxu0 0.0
  %4160 = vmatprep.subr.mxu0 0.0
  %4161 = vmatpush2.msra.mxu0 0.0
  %4162 = vmatprep.subr.mxu0 0.0
  %4163 = vmatpush2.msra.mxu0 0.0
  %4164 = vmatprep.subr.mxu0 0.0
  %4165 = vmatpush2.msra.mxu0 0.0
  %4166 = vmatprep.subr.mxu0 0.0
  %4167 = vmatpush2.msra.mxu0 0.0
  %4168 = vmatprep.subr.mxu0 0.0
  %4169 = vmatpush2.msra.mxu0 0.0
  %4170 = vmatprep.subr.mxu0 0.0
  %4171 = vmatpush2.msra.mxu0 0.0
  %4172 = vmatprep.subr.mxu0 0.0
  %4173 = vmatpush2.msra.mxu0 0.0
  %4174 = vmatprep.subr.mxu0 0.0
  %4175 = vmatpush2.msra.mxu0 0.0
  %4176 = vmatprep.subr.mxu0 0.0
  %4177 = vmatpush2.msra.mxu0 0.0
  %4178 = vmatprep.subr.mxu0 0.0
  %4179 = vmatpush2.msra.mxu0 0.0
  %4180 = vmatprep.subr.mxu0 0.0
  %4181 = vmatpush2.msra.mxu0 0.0
  %4182 = vmatprep.subr.mxu0 0.0
  %4183 = vmatpush2.msra.mxu0 0.0
  %4184 = vmatprep.mubr.f32.mxu0 0.0
  %4185 = vmatmul.mubr.f32.gmra.mxu0 %v4084
  %v4186 = vpop.f32.mrf.mxu0
  %v4187 = vadd.f32 0.0, %v4186
  %v4188 = vpop.f32.mrf.mxu0
  %v4189 = vadd.f32 0.0, %v4188
  %4190 = vdwg.mxu0
  %s4191 = scalar_lea.vmem %s9, 76
  %v4192 = vld [vmem:[%s4191] sm:$0xf]
  %v4193 = vpack.c.bf16 %v4084, %v4084
  %s4194 = scalar_lea.vmem %s9, 72
  %v4195 = vld [vmem:[%s4194] sm:$0xf]
  %v4196 = vpack.c.bf16 %v4187, %v4187
  %v4198 = vsel %vm1125, %v4195, 0
  %v4201 = vsel %vm358, %v4196, 0
  %4203 = vmatprep.subr.bf16.mxu0 0
  %4204 = vmatpush1.bf16.msra.mxu0 0
  %4205 = vmatprep.subr.bf16.mxu0 0
  %4206 = vmatpush1.bf16.msra.mxu0 0
  %4207 = vmatprep.subr.bf16.mxu0 0
  %4208 = vmatpush1.bf16.msra.mxu0 0
  %4209 = vmatprep.subr.bf16.mxu0 0
  %4210 = vmatpush1.bf16.msra.mxu0 0
  %4211 = vmatprep.subr.bf16.mxu0 0
  %4212 = vmatpush1.bf16.msra.mxu0 0
  %4213 = vmatprep.subr.bf16.mxu0 0
  %4214 = vmatpush1.bf16.msra.mxu0 0
  %4215 = vmatprep.subr.bf16.mxu0 0
  %4216 = vmatpush1.bf16.msra.mxu0 0
  %4217 = vmatprep.subr.bf16.mxu0 0
  %4218 = vmatpush1.bf16.msra.mxu0 %v4201
  %4219 = vmatprep.subr.bf16.mxu0 0
  %4220 = vmatpush2.bf16.msra.mxu0 0
  %4221 = vmatprep.subr.bf16.mxu0 0
  %4222 = vmatpush2.bf16.msra.mxu0 0
  %4223 = vmatprep.subr.bf16.mxu0 0
  %4224 = vmatpush2.bf16.msra.mxu0 0
  %4225 = vmatprep.subr.bf16.mxu0 0
  %4226 = vmatpush2.bf16.msra.mxu0 0
  %4227 = vmatprep.subr.bf16.mxu0 0
  %4228 = vmatpush2.bf16.msra.mxu0 0
  %4229 = vmatprep.subr.bf16.mxu0 0
  %4230 = vmatpush2.bf16.msra.mxu0 0
  %4231 = vmatprep.subr.bf16.mxu0 0
  %4232 = vmatpush2.bf16.msra.mxu0 0
  %4233 = vmatprep.subr.bf16.mxu0 0
  %4234 = vmatpush2.bf16.msra.mxu0 0
  %4235 = vmatprep.mubr.bf16.mxu0 0
  %4236 = vmatmul.mubr.bf16.gmra.mxu0 %v4198
  %v4237 = vpop.f32.mrf.mxu0
  %v4238 = vadd.f32 0.0, %v4237
  %v4239 = vpop.f32.mrf.mxu0
  %v4240 = vpop.f32.mrf.mxu0
  %v4241 = vpop.f32.mrf.mxu0
  %4242 = vdwg.mxu0
  %v4244 = vsel %vm1125, %v4192, 0
  %v4247 = vsel %vm358, %v4193, 0
  %4249 = vmatprep.subr.bf16.mxu0 0
  %4250 = vmatpush1.bf16.msra.mxu0 0
  %4251 = vmatprep.subr.bf16.mxu0 0
  %4252 = vmatpush1.bf16.msra.mxu0 0
  %4253 = vmatprep.subr.bf16.mxu0 0
  %4254 = vmatpush1.bf16.msra.mxu0 0
  %4255 = vmatprep.subr.bf16.mxu0 0
  %4256 = vmatpush1.bf16.msra.mxu0 0
  %4257 = vmatprep.subr.bf16.mxu0 0
  %4258 = vmatpush1.bf16.msra.mxu0 0
  %4259 = vmatprep.subr.bf16.mxu0 0
  %4260 = vmatpush1.bf16.msra.mxu0 0
  %4261 = vmatprep.subr.bf16.mxu0 0
  %4262 = vmatpush1.bf16.msra.mxu0 0
  %4263 = vmatprep.subr.bf16.mxu0 0
  %4264 = vmatpush1.bf16.msra.mxu0 %v4247
  %4265 = vmatprep.subr.bf16.mxu0 0
  %4266 = vmatpush2.bf16.msra.mxu0 0
  %4267 = vmatprep.subr.bf16.mxu0 0
  %4268 = vmatpush2.bf16.msra.mxu0 0
  %4269 = vmatprep.subr.bf16.mxu0 0
  %4270 = vmatpush2.bf16.msra.mxu0 0
  %4271 = vmatprep.subr.bf16.mxu0 0
  %4272 = vmatpush2.bf16.msra.mxu0 0
  %4273 = vmatprep.subr.bf16.mxu0 0
  %4274 = vmatpush2.bf16.msra.mxu0 0
  %4275 = vmatprep.subr.bf16.mxu0 0
  %4276 = vmatpush2.bf16.msra.mxu0 0
  %4277 = vmatprep.subr.bf16.mxu0 0
  %4278 = vmatpush2.bf16.msra.mxu0 0
  %4279 = vmatprep.subr.bf16.mxu0 0
  %4280 = vmatpush2.bf16.msra.mxu0 0
  %4281 = vmatprep.mubr.bf16.mxu0 0
  %4282 = vmatmul.mubr.bf16.gmra.mxu0 %v4244
  %v4283 = vpop.f32.mrf.mxu0
  %v4284 = vadd.f32 %v4238, %v4283
  %v4285 = vpop.f32.mrf.mxu0
  %v4286 = vpop.f32.mrf.mxu0
  %v4287 = vpop.f32.mrf.mxu0
  %4288 = vdwg.mxu0
  %s4289 = scalar_lea.vmem %s9, 80
  %v4290 = vld [vmem:[%s4289] sm:$0xf]
  %v4291 = vpack.c.bf16 %v4189, %v4189
  %v4293 = vsel %vm1125, %v4290, 0
  %v4296 = vsel %vm358, %v4291, 0
  %4298 = vmatprep.subr.bf16.mxu0 0
  %4299 = vmatpush1.bf16.msra.mxu0 0
  %4300 = vmatprep.subr.bf16.mxu0 0
  %4301 = vmatpush1.bf16.msra.mxu0 0
  %4302 = vmatprep.subr.bf16.mxu0 0
  %4303 = vmatpush1.bf16.msra.mxu0 0
  %4304 = vmatprep.subr.bf16.mxu0 0
  %4305 = vmatpush1.bf16.msra.mxu0 0
  %4306 = vmatprep.subr.bf16.mxu0 0
  %4307 = vmatpush1.bf16.msra.mxu0 0
  %4308 = vmatprep.subr.bf16.mxu0 0
  %4309 = vmatpush1.bf16.msra.mxu0 0
  %4310 = vmatprep.subr.bf16.mxu0 0
  %4311 = vmatpush1.bf16.msra.mxu0 0
  %4312 = vmatprep.subr.bf16.mxu0 0
  %4313 = vmatpush1.bf16.msra.mxu0 %v4296
  %4314 = vmatprep.subr.bf16.mxu0 0
  %4315 = vmatpush2.bf16.msra.mxu0 0
  %4316 = vmatprep.subr.bf16.mxu0 0
  %4317 = vmatpush2.bf16.msra.mxu0 0
  %4318 = vmatprep.subr.bf16.mxu0 0
  %4319 = vmatpush2.bf16.msra.mxu0 0
  %4320 = vmatprep.subr.bf16.mxu0 0
  %4321 = vmatpush2.bf16.msra.mxu0 0
  %4322 = vmatprep.subr.bf16.mxu0 0
  %4323 = vmatpush2.bf16.msra.mxu0 0
  %4324 = vmatprep.subr.bf16.mxu0 0
  %4325 = vmatpush2.bf16.msra.mxu0 0
  %4326 = vmatprep.subr.bf16.mxu0 0
  %4327 = vmatpush2.bf16.msra.mxu0 0
  %4328 = vmatprep.subr.bf16.mxu0 0
  %4329 = vmatpush2.bf16.msra.mxu0 0
  %4330 = vmatprep.mubr.bf16.mxu0 0
  %4331 = vmatmul.mubr.bf16.gmra.mxu0 %v4293
  %v4332 = vpop.f32.mrf.mxu0
  %v4333 = vadd.f32 0.0, %v4332
  %v4334 = vpop.f32.mrf.mxu0
  %v4335 = vpop.f32.mrf.mxu0
  %v4336 = vpop.f32.mrf.mxu0
  %4337 = vdwg.mxu0
  %v4338 = vadd.f32 %v4284, %v4333
  %s4339 = scalar_lea.vmem %s10, 48
  %v4340 = vld [vmem:[%s4339] sm:$0xff]
  %4342 = vset.pattern.permute.xlu0 0
  %4343 = vperm.xlu0 %4342, %v4340
  %v4344 = vpop.permute.xlu0 %4343
  %v4346 = vadd.f32 %v4338, %v4344
  %v4347 = vmax.f32 %v4346, 0.0
  %4348 = vadd.xlane.f32.xlu0 %v4347
  %v4349 = vpop.xlane.xlu0 %4348
  %v4350 = vmul.f32 %v4349, %v756
  %v4351 = vsub.f32 %v4347, %v4350
  %v4352 = vmul.f32 %v4351, %v4351
  %4353 = vadd.xlane.f32.xlu0 %v4352
  %v4354 = vpop.xlane.xlu0 %4353
  %v4355 = vmul.f32 %v4354, %v756
  %v4356 = vadd.f32 %v4355, 1e-05
  %v4357 = vrsqrt.pop %v4356
  %v4358 = vmul.f32 %v4351, %v4357
  %4359 = vset.pattern.permute.xlu0 1
  %4360 = vperm.xlu0 %4359, %v4340
  %v4361 = vpop.permute.xlu0 %4360
  %v4363 = vmul.f32 %v4358, %v4361
  %4364 = vset.pattern.permute.xlu0 2
  %4365 = vperm.xlu0 %4364, %v4340
  %v4366 = vpop.permute.xlu0 %4365
  %v4368 = vadd.f32 %v4363, %v4366
  %v4369 = vadd.f32 %v4085, %v4368
  %4370 = vmatprep.subr.mxu0 %v4119
  %4371 = vmatpush1.msra.mxu0 %v4118
  %4372 = vmatprep.subr.mxu0 %v4117
  %4373 = vmatpush1.msra.mxu0 %v4116
  %4374 = vmatprep.subr.mxu0 %v4115
  %4375 = vmatpush1.msra.mxu0 %v4114
  %4376 = vmatprep.subr.mxu0 %v4113
  %4377 = vmatpush1.msra.mxu0 %v4112
  %4378 = vmatprep.subr.mxu0 %v4111
  %4379 = vmatpush1.msra.mxu0 %v4110
  %4380 = vmatprep.subr.mxu0 %v4109
  %4381 = vmatpush1.msra.mxu0 %v4108
  %4382 = vmatprep.subr.mxu0 %v4107
  %4383 = vmatpush1.msra.mxu0 %v4106
  %4384 = vmatprep.subr.mxu0 %v4105
  %4385 = vmatpush1.msra.mxu0 %v4104
  %4386 = vmatprep.subr.mxu0 %v4103
  %4387 = vmatpush1.msra.mxu0 %v4102
  %4388 = vmatprep.subr.mxu0 %v4101
  %4389 = vmatpush1.msra.mxu0 %v4100
  %4390 = vmatprep.subr.mxu0 %v4099
  %4391 = vmatpush1.msra.mxu0 %v4098
  %4392 = vmatprep.subr.mxu0 %v4097
  %4393 = vmatpush1.msra.mxu0 %v4096
  %4394 = vmatprep.subr.mxu0 %v4095
  %4395 = vmatpush1.msra.mxu0 %v4094
  %4396 = vmatprep.subr.mxu0 %v4093
  %4397 = vmatpush1.msra.mxu0 %v4092
  %4398 = vmatprep.subr.mxu0 %v4091
  %4399 = vmatpush1.msra.mxu0 %v4090
  %4400 = vmatprep.subr.mxu0 %v4089
  %4401 = vmatpush1.msra.mxu0 %v4088
  %4402 = vmatprep.subr.mxu0 0.0
  %4403 = vmatpush2.msra.mxu0 0.0
  %4404 = vmatprep.subr.mxu0 0.0
  %4405 = vmatpush2.msra.mxu0 0.0
  %4406 = vmatprep.subr.mxu0 0.0
  %4407 = vmatpush2.msra.mxu0 0.0
  %4408 = vmatprep.subr.mxu0 0.0
  %4409 = vmatpush2.msra.mxu0 0.0
  %4410 = vmatprep.subr.mxu0 0.0
  %4411 = vmatpush2.msra.mxu0 0.0
  %4412 = vmatprep.subr.mxu0 0.0
  %4413 = vmatpush2.msra.mxu0 0.0
  %4414 = vmatprep.subr.mxu0 0.0
  %4415 = vmatpush2.msra.mxu0 0.0
  %4416 = vmatprep.subr.mxu0 0.0
  %4417 = vmatpush2.msra.mxu0 0.0
  %4418 = vmatprep.subr.mxu0 0.0
  %4419 = vmatpush2.msra.mxu0 0.0
  %4420 = vmatprep.subr.mxu0 0.0
  %4421 = vmatpush2.msra.mxu0 0.0
  %4422 = vmatprep.subr.mxu0 0.0
  %4423 = vmatpush2.msra.mxu0 0.0
  %4424 = vmatprep.subr.mxu0 0.0
  %4425 = vmatpush2.msra.mxu0 0.0
  %4426 = vmatprep.subr.mxu0 0.0
  %4427 = vmatpush2.msra.mxu0 0.0
  %4428 = vmatprep.subr.mxu0 0.0
  %4429 = vmatpush2.msra.mxu0 0.0
  %4430 = vmatprep.subr.mxu0 0.0
  %4431 = vmatpush2.msra.mxu0 0.0
  %4432 = vmatprep.subr.mxu0 0.0
  %4433 = vmatpush2.msra.mxu0 0.0
  %4434 = vmatprep.mubr.f32.mxu0 0.0
  %4435 = vmatmul.mubr.f32.gmra.mxu0 %v4369
  %v4436 = vpop.f32.mrf.mxu0
  %v4437 = vadd.f32 0.0, %v4436
  %v4438 = vpop.f32.mrf.mxu0
  %v4439 = vadd.f32 0.0, %v4438
  %4440 = vdwg.mxu0
  %s4441 = scalar_lea.vmem %s9, 88
  %v4442 = vld [vmem:[%s4441] sm:$0xf]
  %v4443 = vpack.c.bf16 %v4369, %v4369
  %s4444 = scalar_lea.vmem %s9, 84
  %v4445 = vld [vmem:[%s4444] sm:$0xf]
  %v4446 = vpack.c.bf16 %v4437, %v4437
  %v4448 = vsel %vm1125, %v4445, 0
  %v4451 = vsel %vm358, %v4446, 0
  %4453 = vmatprep.subr.bf16.mxu0 0
  %4454 = vmatpush1.bf16.msra.mxu0 0
  %4455 = vmatprep.subr.bf16.mxu0 0
  %4456 = vmatpush1.bf16.msra.mxu0 0
  %4457 = vmatprep.subr.bf16.mxu0 0
  %4458 = vmatpush1.bf16.msra.mxu0 0
  %4459 = vmatprep.subr.bf16.mxu0 0
  %4460 = vmatpush1.bf16.msra.mxu0 0
  %4461 = vmatprep.subr.bf16.mxu0 0
  %4462 = vmatpush1.bf16.msra.mxu0 0
  %4463 = vmatprep.subr.bf16.mxu0 0
  %4464 = vmatpush1.bf16.msra.mxu0 0
  %4465 = vmatprep.subr.bf16.mxu0 0
  %4466 = vmatpush1.bf16.msra.mxu0 0
  %4467 = vmatprep.subr.bf16.mxu0 0
  %4468 = vmatpush1.bf16.msra.mxu0 %v4451
  %4469 = vmatprep.subr.bf16.mxu0 0
  %4470 = vmatpush2.bf16.msra.mxu0 0
  %4471 = vmatprep.subr.bf16.mxu0 0
  %4472 = vmatpush2.bf16.msra.mxu0 0
  %4473 = vmatprep.subr.bf16.mxu0 0
  %4474 = vmatpush2.bf16.msra.mxu0 0
  %4475 = vmatprep.subr.bf16.mxu0 0
  %4476 = vmatpush2.bf16.msra.mxu0 0
  %4477 = vmatprep.subr.bf16.mxu0 0
  %4478 = vmatpush2.bf16.msra.mxu0 0
  %4479 = vmatprep.subr.bf16.mxu0 0
  %4480 = vmatpush2.bf16.msra.mxu0 0
  %4481 = vmatprep.subr.bf16.mxu0 0
  %4482 = vmatpush2.bf16.msra.mxu0 0
  %4483 = vmatprep.subr.bf16.mxu0 0
  %4484 = vmatpush2.bf16.msra.mxu0 0
  %4485 = vmatprep.mubr.bf16.mxu0 0
  %4486 = vmatmul.mubr.bf16.gmra.mxu0 %v4448
  %v4487 = vpop.f32.mrf.mxu0
  %v4488 = vadd.f32 0.0, %v4487
  %v4489 = vpop.f32.mrf.mxu0
  %v4490 = vpop.f32.mrf.mxu0
  %v4491 = vpop.f32.mrf.mxu0
  %4492 = vdwg.mxu0
  %v4494 = vsel %vm1125, %v4442, 0
  %v4497 = vsel %vm358, %v4443, 0
  %4499 = vmatprep.subr.bf16.mxu0 0
  %4500 = vmatpush1.bf16.msra.mxu0 0
  %4501 = vmatprep.subr.bf16.mxu0 0
  %4502 = vmatpush1.bf16.msra.mxu0 0
  %4503 = vmatprep.subr.bf16.mxu0 0
  %4504 = vmatpush1.bf16.msra.mxu0 0
  %4505 = vmatprep.subr.bf16.mxu0 0
  %4506 = vmatpush1.bf16.msra.mxu0 0
  %4507 = vmatprep.subr.bf16.mxu0 0
  %4508 = vmatpush1.bf16.msra.mxu0 0
  %4509 = vmatprep.subr.bf16.mxu0 0
  %4510 = vmatpush1.bf16.msra.mxu0 0
  %4511 = vmatprep.subr.bf16.mxu0 0
  %4512 = vmatpush1.bf16.msra.mxu0 0
  %4513 = vmatprep.subr.bf16.mxu0 0
  %4514 = vmatpush1.bf16.msra.mxu0 %v4497
  %4515 = vmatprep.subr.bf16.mxu0 0
  %4516 = vmatpush2.bf16.msra.mxu0 0
  %4517 = vmatprep.subr.bf16.mxu0 0
  %4518 = vmatpush2.bf16.msra.mxu0 0
  %4519 = vmatprep.subr.bf16.mxu0 0
  %4520 = vmatpush2.bf16.msra.mxu0 0
  %4521 = vmatprep.subr.bf16.mxu0 0
  %4522 = vmatpush2.bf16.msra.mxu0 0
  %4523 = vmatprep.subr.bf16.mxu0 0
  %4524 = vmatpush2.bf16.msra.mxu0 0
  %4525 = vmatprep.subr.bf16.mxu0 0
  %4526 = vmatpush2.bf16.msra.mxu0 0
  %4527 = vmatprep.subr.bf16.mxu0 0
  %4528 = vmatpush2.bf16.msra.mxu0 0
  %4529 = vmatprep.subr.bf16.mxu0 0
  %4530 = vmatpush2.bf16.msra.mxu0 0
  %4531 = vmatprep.mubr.bf16.mxu0 0
  %4532 = vmatmul.mubr.bf16.gmra.mxu0 %v4494
  %v4533 = vpop.f32.mrf.mxu0
  %v4534 = vadd.f32 %v4488, %v4533
  %v4535 = vpop.f32.mrf.mxu0
  %v4536 = vpop.f32.mrf.mxu0
  %v4537 = vpop.f32.mrf.mxu0
  %4538 = vdwg.mxu0
  %s4539 = scalar_lea.vmem %s9, 92
  %v4540 = vld [vmem:[%s4539] sm:$0xf]
  %v4541 = vpack.c.bf16 %v4439, %v4439
  %v4543 = vsel %vm1125, %v4540, 0
  %v4546 = vsel %vm358, %v4541, 0
  %4548 = vmatprep.subr.bf16.mxu0 0
  %4549 = vmatpush1.bf16.msra.mxu0 0
  %4550 = vmatprep.subr.bf16.mxu0 0
  %4551 = vmatpush1.bf16.msra.mxu0 0
  %4552 = vmatprep.subr.bf16.mxu0 0
  %4553 = vmatpush1.bf16.msra.mxu0 0
  %4554 = vmatprep.subr.bf16.mxu0 0
  %4555 = vmatpush1.bf16.msra.mxu0 0
  %4556 = vmatprep.subr.bf16.mxu0 0
  %4557 = vmatpush1.bf16.msra.mxu0 0
  %4558 = vmatprep.subr.bf16.mxu0 0
  %4559 = vmatpush1.bf16.msra.mxu0 0
  %4560 = vmatprep.subr.bf16.mxu0 0
  %4561 = vmatpush1.bf16.msra.mxu0 0
  %4562 = vmatprep.subr.bf16.mxu0 0
  %4563 = vmatpush1.bf16.msra.mxu0 %v4546
  %4564 = vmatprep.subr.bf16.mxu0 0
  %4565 = vmatpush2.bf16.msra.mxu0 0
  %4566 = vmatprep.subr.bf16.mxu0 0
  %4567 = vmatpush2.bf16.msra.mxu0 0
  %4568 = vmatprep.subr.bf16.mxu0 0
  %4569 = vmatpush2.bf16.msra.mxu0 0
  %4570 = vmatprep.subr.bf16.mxu0 0
  %4571 = vmatpush2.bf16.msra.mxu0 0
  %4572 = vmatprep.subr.bf16.mxu0 0
  %4573 = vmatpush2.bf16.msra.mxu0 0
  %4574 = vmatprep.subr.bf16.mxu0 0
  %4575 = vmatpush2.bf16.msra.mxu0 0
  %4576 = vmatprep.subr.bf16.mxu0 0
  %4577 = vmatpush2.bf16.msra.mxu0 0
  %4578 = vmatprep.subr.bf16.mxu0 0
  %4579 = vmatpush2.bf16.msra.mxu0 0
  %4580 = vmatprep.mubr.bf16.mxu0 0
  %4581 = vmatmul.mubr.bf16.gmra.mxu0 %v4543
  %v4582 = vpop.f32.mrf.mxu0
  %v4583 = vadd.f32 0.0, %v4582
  %v4584 = vpop.f32.mrf.mxu0
  %v4585 = vpop.f32.mrf.mxu0
  %v4586 = vpop.f32.mrf.mxu0
  %4587 = vdwg.mxu0
  %v4588 = vadd.f32 %v4534, %v4583
  %s4589 = scalar_lea.vmem %s10, 56
  %v4590 = vld [vmem:[%s4589] sm:$0xff]
  %4592 = vset.pattern.permute.xlu0 0
  %4593 = vperm.xlu0 %4592, %v4590
  %v4594 = vpop.permute.xlu0 %4593
  %v4596 = vadd.f32 %v4588, %v4594
  %v4597 = vmax.f32 %v4596, 0.0
  %4598 = vadd.xlane.f32.xlu0 %v4597
  %v4599 = vpop.xlane.xlu0 %4598
  %v4600 = vmul.f32 %v4599, %v756
  %v4601 = vsub.f32 %v4597, %v4600
  %v4602 = vmul.f32 %v4601, %v4601
  %4603 = vadd.xlane.f32.xlu0 %v4602
  %v4604 = vpop.xlane.xlu0 %4603
  %v4605 = vmul.f32 %v4604, %v756
  %v4606 = vadd.f32 %v4605, 1e-05
  %v4607 = vrsqrt.pop %v4606
  %v4608 = vmul.f32 %v4601, %v4607
  %4609 = vset.pattern.permute.xlu0 1
  %4610 = vperm.xlu0 %4609, %v4590
  %v4611 = vpop.permute.xlu0 %4610
  %v4613 = vmul.f32 %v4608, %v4611
  %4614 = vset.pattern.permute.xlu0 2
  %4615 = vperm.xlu0 %4614, %v4590
  %v4616 = vpop.permute.xlu0 %4615
  %v4618 = vadd.f32 %v4613, %v4616
  %v4619 = vadd.f32 %v4086, %v4618
  %4620 = vmatprep.subr.mxu0 %v4119
  %4621 = vmatpush1.msra.mxu0 %v4118
  %4622 = vmatprep.subr.mxu0 %v4117
  %4623 = vmatpush1.msra.mxu0 %v4116
  %4624 = vmatprep.subr.mxu0 %v4115
  %4625 = vmatpush1.msra.mxu0 %v4114
  %4626 = vmatprep.subr.mxu0 %v4113
  %4627 = vmatpush1.msra.mxu0 %v4112
  %4628 = vmatprep.subr.mxu0 %v4111
  %4629 = vmatpush1.msra.mxu0 %v4110
  %4630 = vmatprep.subr.mxu0 %v4109
  %4631 = vmatpush1.msra.mxu0 %v4108
  %4632 = vmatprep.subr.mxu0 %v4107
  %4633 = vmatpush1.msra.mxu0 %v4106
  %4634 = vmatprep.subr.mxu0 %v4105
  %4635 = vmatpush1.msra.mxu0 %v4104
  %4636 = vmatprep.subr.mxu0 %v4103
  %4637 = vmatpush1.msra.mxu0 %v4102
  %4638 = vmatprep.subr.mxu0 %v4101
  %4639 = vmatpush1.msra.mxu0 %v4100
  %4640 = vmatprep.subr.mxu0 %v4099
  %4641 = vmatpush1.msra.mxu0 %v4098
  %4642 = vmatprep.subr.mxu0 %v4097
  %4643 = vmatpush1.msra.mxu0 %v4096
  %4644 = vmatprep.subr.mxu0 %v4095
  %4645 = vmatpush1.msra.mxu0 %v4094
  %4646 = vmatprep.subr.mxu0 %v4093
  %4647 = vmatpush1.msra.mxu0 %v4092
  %4648 = vmatprep.subr.mxu0 %v4091
  %4649 = vmatpush1.msra.mxu0 %v4090
  %4650 = vmatprep.subr.mxu0 %v4089
  %4651 = vmatpush1.msra.mxu0 %v4088
  %4652 = vmatprep.subr.mxu0 0.0
  %4653 = vmatpush2.msra.mxu0 0.0
  %4654 = vmatprep.subr.mxu0 0.0
  %4655 = vmatpush2.msra.mxu0 0.0
  %4656 = vmatprep.subr.mxu0 0.0
  %4657 = vmatpush2.msra.mxu0 0.0
  %4658 = vmatprep.subr.mxu0 0.0
  %4659 = vmatpush2.msra.mxu0 0.0
  %4660 = vmatprep.subr.mxu0 0.0
  %4661 = vmatpush2.msra.mxu0 0.0
  %4662 = vmatprep.subr.mxu0 0.0
  %4663 = vmatpush2.msra.mxu0 0.0
  %4664 = vmatprep.subr.mxu0 0.0
  %4665 = vmatpush2.msra.mxu0 0.0
  %4666 = vmatprep.subr.mxu0 0.0
  %4667 = vmatpush2.msra.mxu0 0.0
  %4668 = vmatprep.subr.mxu0 0.0
  %4669 = vmatpush2.msra.mxu0 0.0
  %4670 = vmatprep.subr.mxu0 0.0
  %4671 = vmatpush2.msra.mxu0 0.0
  %4672 = vmatprep.subr.mxu0 0.0
  %4673 = vmatpush2.msra.mxu0 0.0
  %4674 = vmatprep.subr.mxu0 0.0
  %4675 = vmatpush2.msra.mxu0 0.0
  %4676 = vmatprep.subr.mxu0 0.0
  %4677 = vmatpush2.msra.mxu0 0.0
  %4678 = vmatprep.subr.mxu0 0.0
  %4679 = vmatpush2.msra.mxu0 0.0
  %4680 = vmatprep.subr.mxu0 0.0
  %4681 = vmatpush2.msra.mxu0 0.0
  %4682 = vmatprep.subr.mxu0 0.0
  %4683 = vmatpush2.msra.mxu0 0.0
  %4684 = vmatprep.mubr.f32.mxu0 0.0
  %4685 = vmatmul.mubr.f32.gmra.mxu0 %v4619
  %v4686 = vpop.f32.mrf.mxu0
  %v4687 = vadd.f32 0.0, %v4686
  %v4688 = vpop.f32.mrf.mxu0
  %v4689 = vadd.f32 0.0, %v4688
  %4690 = vdwg.mxu0
  %s4691 = scalar_lea.vmem %s9, 100
  %v4692 = vld [vmem:[%s4691] sm:$0xf]
  %v4693 = vpack.c.bf16 %v4619, %v4619
  %s4694 = scalar_lea.vmem %s9, 96
  %v4695 = vld [vmem:[%s4694] sm:$0xf]
  %v4696 = vpack.c.bf16 %v4687, %v4687
  %v4698 = vsel %vm1125, %v4695, 0
  %v4701 = vsel %vm358, %v4696, 0
  %4703 = vmatprep.subr.bf16.mxu0 0
  %4704 = vmatpush1.bf16.msra.mxu0 0
  %4705 = vmatprep.subr.bf16.mxu0 0
  %4706 = vmatpush1.bf16.msra.mxu0 0
  %4707 = vmatprep.subr.bf16.mxu0 0
  %4708 = vmatpush1.bf16.msra.mxu0 0
  %4709 = vmatprep.subr.bf16.mxu0 0
  %4710 = vmatpush1.bf16.msra.mxu0 0
  %4711 = vmatprep.subr.bf16.mxu0 0
  %4712 = vmatpush1.bf16.msra.mxu0 0
  %4713 = vmatprep.subr.bf16.mxu0 0
  %4714 = vmatpush1.bf16.msra.mxu0 0
  %4715 = vmatprep.subr.bf16.mxu0 0
  %4716 = vmatpush1.bf16.msra.mxu0 0
  %4717 = vmatprep.subr.bf16.mxu0 0
  %4718 = vmatpush1.bf16.msra.mxu0 %v4701
  %4719 = vmatprep.subr.bf16.mxu0 0
  %4720 = vmatpush2.bf16.msra.mxu0 0
  %4721 = vmatprep.subr.bf16.mxu0 0
  %4722 = vmatpush2.bf16.msra.mxu0 0
  %4723 = vmatprep.subr.bf16.mxu0 0
  %4724 = vmatpush2.bf16.msra.mxu0 0
  %4725 = vmatprep.subr.bf16.mxu0 0
  %4726 = vmatpush2.bf16.msra.mxu0 0
  %4727 = vmatprep.subr.bf16.mxu0 0
  %4728 = vmatpush2.bf16.msra.mxu0 0
  %4729 = vmatprep.subr.bf16.mxu0 0
  %4730 = vmatpush2.bf16.msra.mxu0 0
  %4731 = vmatprep.subr.bf16.mxu0 0
  %4732 = vmatpush2.bf16.msra.mxu0 0
  %4733 = vmatprep.subr.bf16.mxu0 0
  %4734 = vmatpush2.bf16.msra.mxu0 0
  %4735 = vmatprep.mubr.bf16.mxu0 0
  %4736 = vmatmul.mubr.bf16.gmra.mxu0 %v4698
  %v4737 = vpop.f32.mrf.mxu0
  %v4738 = vadd.f32 0.0, %v4737
  %v4739 = vpop.f32.mrf.mxu0
  %v4740 = vpop.f32.mrf.mxu0
  %v4741 = vpop.f32.mrf.mxu0
  %4742 = vdwg.mxu0
  %v4744 = vsel %vm1125, %v4692, 0
  %v4747 = vsel %vm358, %v4693, 0
  %4749 = vmatprep.subr.bf16.mxu0 0
  %4750 = vmatpush1.bf16.msra.mxu0 0
  %4751 = vmatprep.subr.bf16.mxu0 0
  %4752 = vmatpush1.bf16.msra.mxu0 0
  %4753 = vmatprep.subr.bf16.mxu0 0
  %4754 = vmatpush1.bf16.msra.mxu0 0
  %4755 = vmatprep.subr.bf16.mxu0 0
  %4756 = vmatpush1.bf16.msra.mxu0 0
  %4757 = vmatprep.subr.bf16.mxu0 0
  %4758 = vmatpush1.bf16.msra.mxu0 0
  %4759 = vmatprep.subr.bf16.mxu0 0
  %4760 = vmatpush1.bf16.msra.mxu0 0
  %4761 = vmatprep.subr.bf16.mxu0 0
  %4762 = vmatpush1.bf16.msra.mxu0 0
  %4763 = vmatprep.subr.bf16.mxu0 0
  %4764 = vmatpush1.bf16.msra.mxu0 %v4747
  %4765 = vmatprep.subr.bf16.mxu0 0
  %4766 = vmatpush2.bf16.msra.mxu0 0
  %4767 = vmatprep.subr.bf16.mxu0 0
  %4768 = vmatpush2.bf16.msra.mxu0 0
  %4769 = vmatprep.subr.bf16.mxu0 0
  %4770 = vmatpush2.bf16.msra.mxu0 0
  %4771 = vmatprep.subr.bf16.mxu0 0
  %4772 = vmatpush2.bf16.msra.mxu0 0
  %4773 = vmatprep.subr.bf16.mxu0 0
  %4774 = vmatpush2.bf16.msra.mxu0 0
  %4775 = vmatprep.subr.bf16.mxu0 0
  %4776 = vmatpush2.bf16.msra.mxu0 0
  %4777 = vmatprep.subr.bf16.mxu0 0
  %4778 = vmatpush2.bf16.msra.mxu0 0
  %4779 = vmatprep.subr.bf16.mxu0 0
  %4780 = vmatpush2.bf16.msra.mxu0 0
  %4781 = vmatprep.mubr.bf16.mxu0 0
  %4782 = vmatmul.mubr.bf16.gmra.mxu0 %v4744
  %v4783 = vpop.f32.mrf.mxu0
  %v4784 = vadd.f32 %v4738, %v4783
  %v4785 = vpop.f32.mrf.mxu0
  %v4786 = vpop.f32.mrf.mxu0
  %v4787 = vpop.f32.mrf.mxu0
  %4788 = vdwg.mxu0
  %s4789 = scalar_lea.vmem %s9, 104
  %v4790 = vld [vmem:[%s4789] sm:$0xf]
  %v4791 = vpack.c.bf16 %v4689, %v4689
  %v4793 = vsel %vm1125, %v4790, 0
  %v4796 = vsel %vm358, %v4791, 0
  %4798 = vmatprep.subr.bf16.mxu0 0
  %4799 = vmatpush1.bf16.msra.mxu0 0
  %4800 = vmatprep.subr.bf16.mxu0 0
  %4801 = vmatpush1.bf16.msra.mxu0 0
  %4802 = vmatprep.subr.bf16.mxu0 0
  %4803 = vmatpush1.bf16.msra.mxu0 0
  %4804 = vmatprep.subr.bf16.mxu0 0
  %4805 = vmatpush1.bf16.msra.mxu0 0
  %4806 = vmatprep.subr.bf16.mxu0 0
  %4807 = vmatpush1.bf16.msra.mxu0 0
  %4808 = vmatprep.subr.bf16.mxu0 0
  %4809 = vmatpush1.bf16.msra.mxu0 0
  %4810 = vmatprep.subr.bf16.mxu0 0
  %4811 = vmatpush1.bf16.msra.mxu0 0
  %4812 = vmatprep.subr.bf16.mxu0 0
  %4813 = vmatpush1.bf16.msra.mxu0 %v4796
  %4814 = vmatprep.subr.bf16.mxu0 0
  %4815 = vmatpush2.bf16.msra.mxu0 0
  %4816 = vmatprep.subr.bf16.mxu0 0
  %4817 = vmatpush2.bf16.msra.mxu0 0
  %4818 = vmatprep.subr.bf16.mxu0 0
  %4819 = vmatpush2.bf16.msra.mxu0 0
  %4820 = vmatprep.subr.bf16.mxu0 0
  %4821 = vmatpush2.bf16.msra.mxu0 0
  %4822 = vmatprep.subr.bf16.mxu0 0
  %4823 = vmatpush2.bf16.msra.mxu0 0
  %4824 = vmatprep.subr.bf16.mxu0 0
  %4825 = vmatpush2.bf16.msra.mxu0 0
  %4826 = vmatprep.subr.bf16.mxu0 0
  %4827 = vmatpush2.bf16.msra.mxu0 0
  %4828 = vmatprep.subr.bf16.mxu0 0
  %4829 = vmatpush2.bf16.msra.mxu0 0
  %4830 = vmatprep.mubr.bf16.mxu0 0
  %4831 = vmatmul.mubr.bf16.gmra.mxu0 %v4793
  %v4832 = vpop.f32.mrf.mxu0
  %v4833 = vadd.f32 0.0, %v4832
  %v4834 = vpop.f32.mrf.mxu0
  %v4835 = vpop.f32.mrf.mxu0
  %v4836 = vpop.f32.mrf.mxu0
  %4837 = vdwg.mxu0
  %v4838 = vadd.f32 %v4784, %v4833
  %s4839 = scalar_lea.vmem %s10, 64
  %v4840 = vld [vmem:[%s4839] sm:$0xff]
  %4842 = vset.pattern.permute.xlu0 0
  %4843 = vperm.xlu0 %4842, %v4840
  %v4844 = vpop.permute.xlu0 %4843
  %v4846 = vadd.f32 %v4838, %v4844
  %v4847 = vmax.f32 %v4846, 0.0
  %4848 = vadd.xlane.f32.xlu0 %v4847
  %v4849 = vpop.xlane.xlu0 %4848
  %v4850 = vmul.f32 %v4849, %v756
  %v4851 = vsub.f32 %v4847, %v4850
  %v4852 = vmul.f32 %v4851, %v4851
  %4853 = vadd.xlane.f32.xlu0 %v4852
  %v4854 = vpop.xlane.xlu0 %4853
  %v4855 = vmul.f32 %v4854, %v756
  %v4856 = vadd.f32 %v4855, 1e-05
  %v4857 = vrsqrt.pop %v4856
  %v4858 = vmul.f32 %v4851, %v4857
  %4859 = vset.pattern.permute.xlu0 1
  %4860 = vperm.xlu0 %4859, %v4840
  %v4861 = vpop.permute.xlu0 %4860
  %v4863 = vmul.f32 %v4858, %v4861
  %4864 = vset.pattern.permute.xlu0 2
  %4865 = vperm.xlu0 %4864, %v4840
  %v4866 = vpop.permute.xlu0 %4865
  %v4868 = vadd.f32 %v4863, %v4866
  %s4869 = scalar_lea.vmem %s7, 80
  %v4870 = vld [vmem:[%s4869] sm:$0xf]
  %v4871 = vld [vmem:[%s4869 + $0x4] sm:$0xf]
  %v4872 = vld [vmem:[%s4869 + $0x8] sm:$0xf]
  %v4873 = vld [vmem:[%s4869 + $0xc] sm:$0xf]
  %v4874 = vpack.c.bf16 %v4368, %v4083
  %v4875 = vpack.c.bf16 %v4868, %v4618
  %s4876 = scalar_lea.vmem %s8, 160
  %v4877 = vld [vmem:[%s4876] sm:$0xff]
  %v4878 = vld [vmem:[%s4876 + $0x8] sm:$0xff]
  %v4879 = vld [vmem:[%s4876 + $0x10] sm:$0xff]
  %v4880 = vld [vmem:[%s4876 + $0x18] sm:$0xff]
  %4882 = vset.pattern.permute.xlu0 0
  %4883 = vperm.xlu0 %4882, %v4877
  %v4884 = vpop.permute.xlu0 %4883
  %4887 = vset.pattern.permute.xlu0 0
  %4888 = vperm.xlu0 %4887, %v4878
  %v4889 = vpop.permute.xlu0 %4888
  %4892 = vset.pattern.permute.xlu0 0
  %4893 = vperm.xlu0 %4892, %v4879
  %v4894 = vpop.permute.xlu0 %4893
  %4897 = vset.pattern.permute.xlu0 0
  %4898 = vperm.xlu0 %4897, %v4880
  %v4899 = vpop.permute.xlu0 %4898
  %v4905 = vunpack.c.l.b16 %v4870
  %v4906 = vunpack.c.l.b16 %v4871
  %v4907 = vunpack.c.l.b16 %v4872
  %v4908 = vunpack.c.l.b16 %v4873
  %v4909 = vpack.c.b16 %v4906, %v4905
  %v4910 = vpack.c.b16 %v4908, %v4907
  %v4912 = vsel %vm873, %v4909, 0
  %v4915 = vsel %vm873, %v4910, 0
  %4917 = vmatprep.subr.bf16.mxu0 0
  %4918 = vmatpush1.bf16.msra.mxu0 0
  %4919 = vmatprep.subr.bf16.mxu0 0
  %4920 = vmatpush1.bf16.msra.mxu0 0
  %4921 = vmatprep.subr.bf16.mxu0 0
  %4922 = vmatpush1.bf16.msra.mxu0 0
  %4923 = vmatprep.subr.bf16.mxu0 0
  %4924 = vmatpush1.bf16.msra.mxu0 0
  %4925 = vmatprep.subr.bf16.mxu0 0
  %4926 = vmatpush1.bf16.msra.mxu0 0
  %4927 = vmatprep.subr.bf16.mxu0 0
  %4928 = vmatpush1.bf16.msra.mxu0 0
  %4929 = vmatprep.subr.bf16.mxu0 0
  %4930 = vmatpush1.bf16.msra.mxu0 %v4875
  %4931 = vmatprep.subr.bf16.mxu0 0
  %4932 = vmatpush1.bf16.msra.mxu0 %v4874
  %4933 = vmatprep.subr.bf16.mxu0 0
  %4934 = vmatpush2.bf16.msra.mxu0 0
  %4935 = vmatprep.subr.bf16.mxu0 0
  %4936 = vmatpush2.bf16.msra.mxu0 0
  %4937 = vmatprep.subr.bf16.mxu0 0
  %4938 = vmatpush2.bf16.msra.mxu0 0
  %4939 = vmatprep.subr.bf16.mxu0 0
  %4940 = vmatpush2.bf16.msra.mxu0 0
  %4941 = vmatprep.subr.bf16.mxu0 0
  %4942 = vmatpush2.bf16.msra.mxu0 0
  %4943 = vmatprep.subr.bf16.mxu0 0
  %4944 = vmatpush2.bf16.msra.mxu0 0
  %4945 = vmatprep.subr.bf16.mxu0 0
  %4946 = vmatpush2.bf16.msra.mxu0 0
  %4947 = vmatprep.subr.bf16.mxu0 0
  %4948 = vmatpush2.bf16.msra.mxu0 0
  %4949 = vmatprep.mubr.bf16.mxu0 0
  %4950 = vmatmul.mubr.bf16.gmra.mxu0 %v4912
  %v4951 = vpop.f32.mrf.mxu0
  %v4952 = vadd.f32 %v4884, %v4951
  %v4953 = vpop.f32.mrf.mxu0
  %v4954 = vpop.f32.mrf.mxu0
  %v4955 = vadd.f32 %v4889, %v4954
  %v4956 = vpop.f32.mrf.mxu0
  %4957 = vmatprep.mubr.bf16.mxu0 0
  %4958 = vmatmul.mubr.bf16.gmra.mxu0 %v4915
  %v4959 = vpop.f32.mrf.mxu0
  %v4960 = vadd.f32 %v4894, %v4959
  %v4961 = vpop.f32.mrf.mxu0
  %v4962 = vpop.f32.mrf.mxu0
  %v4963 = vadd.f32 %v4899, %v4962
  %v4964 = vpop.f32.mrf.mxu0
  %4965 = vdwg.mxu0
  %v4966 = vmax.f32 %v4952, 0.0
  %v4967 = vmax.f32 %v4955, 0.0
  %v4968 = vmax.f32 %v4960, 0.0
  %v4969 = vmax.f32 %v4963, 0.0
  %4970 = vadd.xlane.f32.xlu0 %v4966
  %v4971 = vpop.xlane.xlu0 %4970
  %4972 = vadd.xlane.f32.xlu0 %v4967
  %v4973 = vpop.xlane.xlu0 %4972
  %4974 = vadd.xlane.f32.xlu0 %v4968
  %v4975 = vpop.xlane.xlu0 %4974
  %4976 = vadd.xlane.f32.xlu0 %v4969
  %v4977 = vpop.xlane.xlu0 %4976
  %v4978 = vmul.f32 %v4971, %v756
  %v4979 = vmul.f32 %v4973, %v756
  %v4980 = vmul.f32 %v4975, %v756
  %v4981 = vmul.f32 %v4977, %v756
  %v4982 = vsub.f32 %v4966, %v4978
  %v4983 = vsub.f32 %v4967, %v4979
  %v4984 = vsub.f32 %v4968, %v4980
  %v4985 = vsub.f32 %v4969, %v4981
  %v4986 = vmul.f32 %v4982, %v4982
  %v4987 = vmul.f32 %v4983, %v4983
  %v4988 = vmul.f32 %v4984, %v4984
  %v4989 = vmul.f32 %v4985, %v4985
  %4990 = vadd.xlane.f32.xlu0 %v4986
  %v4991 = vpop.xlane.xlu0 %4990
  %4992 = vadd.xlane.f32.xlu0 %v4987
  %v4993 = vpop.xlane.xlu0 %4992
  %4994 = vadd.xlane.f32.xlu0 %v4988
  %v4995 = vpop.xlane.xlu0 %4994
  %4996 = vadd.xlane.f32.xlu0 %v4989
  %v4997 = vpop.xlane.xlu0 %4996
  %v4998 = vmul.f32 %v4991, %v756
  %v4999 = vmul.f32 %v4993, %v756
  %v5000 = vmul.f32 %v4995, %v756
  %v5001 = vmul.f32 %v4997, %v756
  %v5002 = vadd.f32 %v4998, 1e-05
  %v5003 = vadd.f32 %v4999, 1e-05
  %v5004 = vadd.f32 %v5000, 1e-05
  %v5005 = vadd.f32 %v5001, 1e-05
  %v5006 = vrsqrt.pop %v5002
  %v5007 = vrsqrt.pop %v5003
  %v5008 = vrsqrt.pop %v5004
  %v5009 = vrsqrt.pop %v5005
  %v5010 = vmul.f32 %v4982, %v5006
  %v5011 = vmul.f32 %v4983, %v5007
  %v5012 = vmul.f32 %v4984, %v5008
  %v5013 = vmul.f32 %v4985, %v5009
  %5014 = vset.pattern.permute.xlu0 1
  %5015 = vperm.xlu0 %5014, %v4877
  %v5016 = vpop.permute.xlu0 %5015
  %5018 = vset.pattern.permute.xlu0 1
  %5019 = vperm.xlu0 %5018, %v4878
  %v5020 = vpop.permute.xlu0 %5019
  %5022 = vset.pattern.permute.xlu0 1
  %5023 = vperm.xlu0 %5022, %v4879
  %v5024 = vpop.permute.xlu0 %5023
  %5026 = vset.pattern.permute.xlu0 1
  %5027 = vperm.xlu0 %5026, %v4880
  %v5028 = vpop.permute.xlu0 %5027
  %v5030 = vmul.f32 %v5010, %v5016
  %v5031 = vmul.f32 %v5011, %v5020
  %v5032 = vmul.f32 %v5012, %v5024
  %v5033 = vmul.f32 %v5013, %v5028
  %5034 = vset.pattern.permute.xlu0 2
  %5035 = vperm.xlu0 %5034, %v4877
  %v5036 = vpop.permute.xlu0 %5035
  %5038 = vset.pattern.permute.xlu0 2
  %5039 = vperm.xlu0 %5038, %v4878
  %v5040 = vpop.permute.xlu0 %5039
  %5042 = vset.pattern.permute.xlu0 2
  %5043 = vperm.xlu0 %5042, %v4879
  %v5044 = vpop.permute.xlu0 %5043
  %5046 = vset.pattern.permute.xlu0 2
  %5047 = vperm.xlu0 %5046, %v4880
  %v5048 = vpop.permute.xlu0 %5047
  %v5050 = vadd.f32 %v5030, %v5036
  %v5051 = vadd.f32 %v5031, %v5040
  %v5052 = vadd.f32 %v5032, %v5044
  %v5053 = vadd.f32 %v5033, %v5048
  %5054 = vmatprep.subr.mxu0 0.0
  %5055 = vmatpush1.msra.mxu0 %v93
  %5056 = vmatprep.subr.mxu0 0.0
  %5057 = vmatpush1.msra.mxu0 %v92
  %5058 = vmatprep.subr.mxu0 0.0
  %5059 = vmatpush1.msra.mxu0 %v91
  %5060 = vmatprep.subr.mxu0 0.0
  %5061 = vmatpush1.msra.mxu0 %v90
  %5062 = vmatprep.subr.mxu0 0.0
  %5063 = vmatpush1.msra.mxu0 %v89
  %5064 = vmatprep.subr.mxu0 0.0
  %5065 = vmatpush1.msra.mxu0 %v88
  %5066 = vmatprep.subr.mxu0 0.0
  %5067 = vmatpush1.msra.mxu0 %v87
  %5068 = vmatprep.subr.mxu0 0.0
  %5069 = vmatpush1.msra.mxu0 %v86
  %5070 = vmatprep.subr.mxu0 0.0
  %5071 = vmatpush1.msra.mxu0 %v85
  %5072 = vmatprep.subr.mxu0 0.0
  %5073 = vmatpush1.msra.mxu0 %v84
  %5074 = vmatprep.subr.mxu0 0.0
  %5075 = vmatpush1.msra.mxu0 %v83
  %5076 = vmatprep.subr.mxu0 0.0
  %5077 = vmatpush1.msra.mxu0 %v82
  %5078 = vmatprep.subr.mxu0 0.0
  %5079 = vmatpush1.msra.mxu0 %v81
  %5080 = vmatprep.subr.mxu0 0.0
  %5081 = vmatpush1.msra.mxu0 %v80
  %5082 = vmatprep.subr.mxu0 0.0
  %5083 = vmatpush1.msra.mxu0 %v79
  %5084 = vmatprep.subr.mxu0 0.0
  %5085 = vmatpush1.msra.mxu0 %v78
  %5086 = vmatprep.subr.mxu0 0.0
  %5087 = vmatpush2.msra.mxu0 0.0
  %5088 = vmatprep.subr.mxu0 0.0
  %5089 = vmatpush2.msra.mxu0 0.0
  %5090 = vmatprep.subr.mxu0 0.0
  %5091 = vmatpush2.msra.mxu0 0.0
  %5092 = vmatprep.subr.mxu0 0.0
  %5093 = vmatpush2.msra.mxu0 0.0
  %5094 = vmatprep.subr.mxu0 0.0
  %5095 = vmatpush2.msra.mxu0 0.0
  %5096 = vmatprep.subr.mxu0 0.0
  %5097 = vmatpush2.msra.mxu0 0.0
  %5098 = vmatprep.subr.mxu0 0.0
  %5099 = vmatpush2.msra.mxu0 0.0
  %5100 = vmatprep.subr.mxu0 0.0
  %5101 = vmatpush2.msra.mxu0 0.0
  %5102 = vmatprep.subr.mxu0 0.0
  %5103 = vmatpush2.msra.mxu0 0.0
  %5104 = vmatprep.subr.mxu0 0.0
  %5105 = vmatpush2.msra.mxu0 0.0
  %5106 = vmatprep.subr.mxu0 0.0
  %5107 = vmatpush2.msra.mxu0 0.0
  %5108 = vmatprep.subr.mxu0 0.0
  %5109 = vmatpush2.msra.mxu0 0.0
  %5110 = vmatprep.subr.mxu0 0.0
  %5111 = vmatpush2.msra.mxu0 0.0
  %5112 = vmatprep.subr.mxu0 0.0
  %5113 = vmatpush2.msra.mxu0 0.0
  %5114 = vmatprep.subr.mxu0 0.0
  %5115 = vmatpush2.msra.mxu0 0.0
  %5116 = vmatprep.subr.mxu0 0.0
  %5117 = vmatpush2.msra.mxu0 0.0
  %5118 = vmatprep.mubr.f32.mxu0 0.0
  %5119 = vmatmul.mubr.f32.gmra.mxu0 %v5050
  %v5120 = vpop.f32.mrf.mxu0
  %v5121 = vadd.f32 0.0, %v5120
  %v5122 = vpop.f32.mrf.mxu0
  %5123 = vmatprep.mubr.f32.mxu0 0.0
  %5124 = vmatmul.mubr.f32.gmra.mxu0 %v5051
  %v5125 = vpop.f32.mrf.mxu0
  %v5126 = vadd.f32 0.0, %v5125
  %v5127 = vpop.f32.mrf.mxu0
  %5128 = vmatprep.mubr.f32.mxu0 0.0
  %5129 = vmatmul.mubr.f32.gmra.mxu0 %v5052
  %v5130 = vpop.f32.mrf.mxu0
  %v5131 = vadd.f32 0.0, %v5130
  %v5132 = vpop.f32.mrf.mxu0
  %5133 = vmatprep.mubr.f32.mxu0 0.0
  %5134 = vmatmul.mubr.f32.gmra.mxu0 %v5053
  %v5135 = vpop.f32.mrf.mxu0
  %v5136 = vadd.f32 0.0, %v5135
  %v5137 = vpop.f32.mrf.mxu0
  %5138 = vdwg.mxu0
  %v5139 = vmul.f32 %v5121, 0.015625
  %v5140 = vmul.f32 %v5126, 0.015625
  %v5141 = vmul.f32 %v5131, 0.015625
  %v5142 = vmul.f32 %v5136, 0.015625
  %s5143 = scalar_lea.vmem %s11, 16
  %v5144 = vld [vmem:[%s5143] sm:$0xf]
  %v5145 = vld [vmem:[%s5143 + $0x4] sm:$0xf]
  %v5146 = vpack.c.bf16 %v5140, %v5139
  %v5147 = vpack.c.bf16 %v5142, %v5141
  %s5148 = scalar_lea.vmem %s12, 32
  %v5149 = vld [vmem:[%s5148] sm:$0xff]
  %v5150 = vld [vmem:[%s5148 + $0x8] sm:$0xff]
  %5152 = vset.pattern.permute.xlu0 0
  %5153 = vperm.xlu0 %5152, %v5149
  %v5154 = vpop.permute.xlu0 %5153
  %5157 = vset.pattern.permute.xlu0 0
  %5158 = vperm.xlu0 %5157, %v5150
  %v5159 = vpop.permute.xlu0 %5158
  %v5163 = vunpack.c.l.b16 %v5144
  %v5164 = vunpack.c.l.b16 %v5145
  %v5165 = vpack.c.b16 %v5164, %v5163
  %v5167 = vsel %vm873, %v5165, 0
  %5169 = vmatprep.subr.bf16.mxu0 0
  %5170 = vmatpush1.bf16.msra.mxu0 0
  %5171 = vmatprep.subr.bf16.mxu0 0
  %5172 = vmatpush1.bf16.msra.mxu0 0
  %5173 = vmatprep.subr.bf16.mxu0 0
  %5174 = vmatpush1.bf16.msra.mxu0 0
  %5175 = vmatprep.subr.bf16.mxu0 0
  %5176 = vmatpush1.bf16.msra.mxu0 0
  %5177 = vmatprep.subr.bf16.mxu0 0
  %5178 = vmatpush1.bf16.msra.mxu0 0
  %5179 = vmatprep.subr.bf16.mxu0 0
  %5180 = vmatpush1.bf16.msra.mxu0 0
  %5181 = vmatprep.subr.bf16.mxu0 0
  %5182 = vmatpush1.bf16.msra.mxu0 %v5147
  %5183 = vmatprep.subr.bf16.mxu0 0
  %5184 = vmatpush1.bf16.msra.mxu0 %v5146
  %5185 = vmatprep.subr.bf16.mxu0 0
  %5186 = vmatpush2.bf16.msra.mxu0 0
  %5187 = vmatprep.subr.bf16.mxu0 0
  %5188 = vmatpush2.bf16.msra.mxu0 0
  %5189 = vmatprep.subr.bf16.mxu0 0
  %5190 = vmatpush2.bf16.msra.mxu0 0
  %5191 = vmatprep.subr.bf16.mxu0 0
  %5192 = vmatpush2.bf16.msra.mxu0 0
  %5193 = vmatprep.subr.bf16.mxu0 0
  %5194 = vmatpush2.bf16.msra.mxu0 0
  %5195 = vmatprep.subr.bf16.mxu0 0
  %5196 = vmatpush2.bf16.msra.mxu0 0
  %5197 = vmatprep.subr.bf16.mxu0 0
  %5198 = vmatpush2.bf16.msra.mxu0 0
  %5199 = vmatprep.subr.bf16.mxu0 0
  %5200 = vmatpush2.bf16.msra.mxu0 0
  %5201 = vmatprep.mubr.bf16.mxu0 0
  %5202 = vmatmul.mubr.bf16.gmra.mxu0 %v5167
  %v5203 = vpop.f32.mrf.mxu0
  %v5204 = vadd.f32 %v5154, %v5203
  %v5205 = vpop.f32.mrf.mxu0
  %v5206 = vpop.f32.mrf.mxu0
  %v5207 = vadd.f32 %v5159, %v5206
  %v5208 = vpop.f32.mrf.mxu0
  %5209 = vdwg.mxu0
  %v5210 = vmax.f32 %v5204, 0.0
  %v5211 = vmax.f32 %v5207, 0.0
  %s5212 = scalar_lea.vmem %s13, 32
  %v5213 = vld [vmem:[%s5212] sm:$0xf]
  %v5214 = vld [vmem:[%s5212 + $0x4] sm:$0xf]
  %v5215 = vld [vmem:[%s5212 + $0x8] sm:$0xf]
  %v5216 = vld [vmem:[%s5212 + $0xc] sm:$0xf]
  %v5217 = vpack.c.bf16 %v5211, %v5210
  %s5218 = scalar_lea.vmem %s14, 64
  %v5219 = vld [vmem:[%s5218] sm:$0xff]
  %v5220 = vld [vmem:[%s5218 + $0x8] sm:$0xff]
  %v5221 = vld [vmem:[%s5218 + $0x10] sm:$0xff]
  %v5222 = vld [vmem:[%s5218 + $0x18] sm:$0xff]
  %5224 = vset.pattern.permute.xlu0 0
  %5225 = vperm.xlu0 %5224, %v5219
  %v5226 = vpop.permute.xlu0 %5225
  %5229 = vset.pattern.permute.xlu0 0
  %5230 = vperm.xlu0 %5229, %v5220
  %v5231 = vpop.permute.xlu0 %5230
  %5234 = vset.pattern.permute.xlu0 0
  %5235 = vperm.xlu0 %5234, %v5221
  %v5236 = vpop.permute.xlu0 %5235
  %5239 = vset.pattern.permute.xlu0 0
  %5240 = vperm.xlu0 %5239, %v5222
  %v5241 = vpop.permute.xlu0 %5240
  %v5247 = vunpack.c.l.b16 %v5213
  %v5248 = vunpack.c.l.b16 %v5214
  %v5249 = vunpack.c.l.b16 %v5215
  %v5250 = vunpack.c.l.b16 %v5216
  %v5251 = vpack.c.b16 %v5248, %v5247
  %v5252 = vpack.c.b16 %v5250, %v5249
  %v5254 = vsel %vm2177, %v5251, 0
  %v5257 = vsel %vm2177, %v5252, 0
  %5259 = vmatprep.subr.bf16.mxu0 0
  %5260 = vmatpush1.bf16.msra.mxu0 0
  %5261 = vmatprep.subr.bf16.mxu0 0
  %5262 = vmatpush1.bf16.msra.mxu0 0
  %5263 = vmatprep.subr.bf16.mxu0 0
  %5264 = vmatpush1.bf16.msra.mxu0 0
  %5265 = vmatprep.subr.bf16.mxu0 0
  %5266 = vmatpush1.bf16.msra.mxu0 0
  %5267 = vmatprep.subr.bf16.mxu0 0
  %5268 = vmatpush1.bf16.msra.mxu0 0
  %5269 = vmatprep.subr.bf16.mxu0 0
  %5270 = vmatpush1.bf16.msra.mxu0 0
  %5271 = vmatprep.subr.bf16.mxu0 0
  %5272 = vmatpush1.bf16.msra.mxu0 0
  %5273 = vmatprep.subr.bf16.mxu0 0
  %5274 = vmatpush1.bf16.msra.mxu0 %v5217
  %5275 = vmatprep.subr.bf16.mxu0 0
  %5276 = vmatpush2.bf16.msra.mxu0 0
  %5277 = vmatprep.subr.bf16.mxu0 0
  %5278 = vmatpush2.bf16.msra.mxu0 0
  %5279 = vmatprep.subr.bf16.mxu0 0
  %5280 = vmatpush2.bf16.msra.mxu0 0
  %5281 = vmatprep.subr.bf16.mxu0 0
  %5282 = vmatpush2.bf16.msra.mxu0 0
  %5283 = vmatprep.subr.bf16.mxu0 0
  %5284 = vmatpush2.bf16.msra.mxu0 0
  %5285 = vmatprep.subr.bf16.mxu0 0
  %5286 = vmatpush2.bf16.msra.mxu0 0
  %5287 = vmatprep.subr.bf16.mxu0 0
  %5288 = vmatpush2.bf16.msra.mxu0 0
  %5289 = vmatprep.subr.bf16.mxu0 0
  %5290 = vmatpush2.bf16.msra.mxu0 0
  %5291 = vmatprep.mubr.bf16.mxu0 0
  %5292 = vmatmul.mubr.bf16.gmra.mxu0 %v5254
  %v5293 = vpop.f32.mrf.mxu0
  %v5294 = vadd.f32 %v5226, %v5293
  %v5295 = vpop.f32.mrf.mxu0
  %v5296 = vpop.f32.mrf.mxu0
  %v5297 = vadd.f32 %v5231, %v5296
  %v5298 = vpop.f32.mrf.mxu0
  %5299 = vmatprep.mubr.bf16.mxu0 0
  %5300 = vmatmul.mubr.bf16.gmra.mxu0 %v5257
  %v5301 = vpop.f32.mrf.mxu0
  %v5302 = vadd.f32 %v5236, %v5301
  %v5303 = vpop.f32.mrf.mxu0
  %v5304 = vpop.f32.mrf.mxu0
  %v5305 = vadd.f32 %v5241, %v5304
  %v5306 = vpop.f32.mrf.mxu0
  %5307 = vdwg.mxu0
  %v5308 = vxor.u32 %v5294, 2147483648
  %v5309 = vxor.u32 %v5297, 2147483648
  %v5310 = vxor.u32 %v5302, 2147483648
  %v5311 = vxor.u32 %v5305, 2147483648
  %v5312 = vmul.f32 %v5308, 1.442695
  %v5313 = vpow.pop %v5312
  %v5314 = vmul.f32 %v5309, 1.442695
  %v5315 = vpow.pop %v5314
  %v5316 = vmul.f32 %v5310, 1.442695
  %v5317 = vpow.pop %v5316
  %v5318 = vmul.f32 %v5311, 1.442695
  %v5319 = vpow.pop %v5318
  %v5320 = vadd.f32 %v5313, 1.0
  %v5321 = vadd.f32 %v5315, 1.0
  %v5322 = vadd.f32 %v5317, 1.0
  %v5323 = vadd.f32 %v5319, 1.0
  %v5324 = vrcp.pop %v5320
  %v5325 = vmul.f32 1.0, %v5324
  %v5326 = vrcp.pop %v5321
  %v5327 = vmul.f32 1.0, %v5326
  %v5328 = vrcp.pop %v5322
  %v5329 = vmul.f32 1.0, %v5328
  %v5330 = vrcp.pop %v5323
  %v5331 = vmul.f32 1.0, %v5330
  %v5333 = vsel %vm2257, %v5325, 0
  %v5336 = vsel %vm2257, %v5327, 0
  %v5339 = vsel %vm2257, %v5329, 0
  %v5342 = vsel %vm2257, %v5331, 0
  %5344 = vmatprep.subr.mxu0 0.0
  %5345 = vmatpush1.msra.mxu0 0.0
  %5346 = vmatprep.subr.mxu0 0.0
  %5347 = vmatpush1.msra.mxu0 0.0
  %5348 = vmatprep.subr.mxu0 0.0
  %5349 = vmatpush1.msra.mxu0 0.0
  %5350 = vmatprep.subr.mxu0 0.0
  %5351 = vmatpush1.msra.mxu0 0.0
  %5352 = vmatprep.subr.mxu0 0.0
  %5353 = vmatpush1.msra.mxu0 0.0
  %5354 = vmatprep.subr.mxu0 0.0
  %5355 = vmatpush1.msra.mxu0 0.0
  %5356 = vmatprep.subr.mxu0 0.0
  %5357 = vmatpush1.msra.mxu0 0.0
  %5358 = vmatprep.subr.mxu0 0.0
  %5359 = vmatpush1.msra.mxu0 0.0
  %5360 = vmatprep.subr.mxu0 0.0
  %5361 = vmatpush1.msra.mxu0 0.0
  %5362 = vmatprep.subr.mxu0 0.0
  %5363 = vmatpush1.msra.mxu0 0.0
  %5364 = vmatprep.subr.mxu0 0.0
  %5365 = vmatpush1.msra.mxu0 0.0
  %5366 = vmatprep.subr.mxu0 0.0
  %5367 = vmatpush1.msra.mxu0 0.0
  %5368 = vmatprep.subr.mxu0 0.0
  %5369 = vmatpush1.msra.mxu0 0.0
  %5370 = vmatprep.subr.mxu0 0.0
  %5371 = vmatpush1.msra.mxu0 0.0
  %5372 = vmatprep.subr.mxu0 0.0
  %5373 = vmatpush1.msra.mxu0 0.0
  %5374 = vmatprep.subr.mxu0 0.0
  %5375 = vmatpush1.msra.mxu0 %v2272
  %5376 = vmatprep.subr.mxu0 0.0
  %5377 = vmatpush2.msra.mxu0 0.0
  %5378 = vmatprep.subr.mxu0 0.0
  %5379 = vmatpush2.msra.mxu0 0.0
  %5380 = vmatprep.subr.mxu0 0.0
  %5381 = vmatpush2.msra.mxu0 0.0
  %5382 = vmatprep.subr.mxu0 0.0
  %5383 = vmatpush2.msra.mxu0 0.0
  %5384 = vmatprep.subr.mxu0 0.0
  %5385 = vmatpush2.msra.mxu0 0.0
  %5386 = vmatprep.subr.mxu0 0.0
  %5387 = vmatpush2.msra.mxu0 0.0
  %5388 = vmatprep.subr.mxu0 0.0
  %5389 = vmatpush2.msra.mxu0 0.0
  %5390 = vmatprep.subr.mxu0 0.0
  %5391 = vmatpush2.msra.mxu0 0.0
  %5392 = vmatprep.subr.mxu0 0.0
  %5393 = vmatpush2.msra.mxu0 0.0
  %5394 = vmatprep.subr.mxu0 0.0
  %5395 = vmatpush2.msra.mxu0 0.0
  %5396 = vmatprep.subr.mxu0 0.0
  %5397 = vmatpush2.msra.mxu0 0.0
  %5398 = vmatprep.subr.mxu0 0.0
  %5399 = vmatpush2.msra.mxu0 0.0
  %5400 = vmatprep.subr.mxu0 0.0
  %5401 = vmatpush2.msra.mxu0 0.0
  %5402 = vmatprep.subr.mxu0 0.0
  %5403 = vmatpush2.msra.mxu0 0.0
  %5404 = vmatprep.subr.mxu0 0.0
  %5405 = vmatpush2.msra.mxu0 0.0
  %5406 = vmatprep.subr.mxu0 0.0
  %5407 = vmatpush2.msra.mxu0 0.0
  %5408 = vmatprep.mubr.f32.mxu0 0.0
  %5409 = vmatmul.mubr.f32.gmra.mxu0 %v5333
  %v5410 = vpop.f32.mrf.mxu0
  %v5411 = vadd.f32 0.0, %v5410
  %v5412 = vpop.f32.mrf.mxu0
  %5413 = vmatprep.mubr.f32.mxu0 0.0
  %5414 = vmatmul.mubr.f32.gmra.mxu0 %v5336
  %v5415 = vpop.f32.mrf.mxu0
  %v5416 = vadd.f32 0.0, %v5415
  %v5417 = vpop.f32.mrf.mxu0
  %5418 = vmatprep.mubr.f32.mxu0 0.0
  %5419 = vmatmul.mubr.f32.gmra.mxu0 %v5339
  %v5420 = vpop.f32.mrf.mxu0
  %v5421 = vadd.f32 0.0, %v5420
  %v5422 = vpop.f32.mrf.mxu0
  %5423 = vmatprep.mubr.f32.mxu0 0.0
  %5424 = vmatmul.mubr.f32.gmra.mxu0 %v5342
  %v5425 = vpop.f32.mrf.mxu0
  %v5426 = vadd.f32 0.0, %v5425
  %v5427 = vpop.f32.mrf.mxu0
  %5428 = vdwg.mxu0
  %v5429 = vmul.f32 %v5050, %v5411
  %v5430 = vmul.f32 %v5051, %v5416
  %v5431 = vmul.f32 %v5052, %v5421
  %v5432 = vmul.f32 %v5053, %v5426
  %v5433 = vadd.f32 %v5429, %v3898
  %v5434 = vadd.f32 %v5430, %v3899
  %v5435 = vadd.f32 %v5431, %v3900
  %v5436 = vadd.f32 %v5432, %v3901
  %v5437 = vld [vmem:[%s15] sm:$0xf]
  %v5438 = vld [vmem:[%s15 + $0x4] sm:$0xf]
  %v5439 = vld [vmem:[%s15 + $0x8] sm:$0xf]
  %v5440 = vld [vmem:[%s15 + $0xc] sm:$0xf]
  %v5441 = vld [vmem:[%s15 + $0x10] sm:$0xf]
  %v5442 = vld [vmem:[%s15 + $0x14] sm:$0xf]
  %v5443 = vld [vmem:[%s15 + $0x18] sm:$0xf]
  %v5444 = vld [vmem:[%s15 + $0x1c] sm:$0xf]
  %v5445 = vld [vmem:[%s15 + $0x20] sm:$0xf]
  %v5446 = vld [vmem:[%s15 + $0x24] sm:$0xf]
  %v5447 = vld [vmem:[%s15 + $0x28] sm:$0xf]
  %v5448 = vld [vmem:[%s15 + $0x2c] sm:$0xf]
  %s5449 = scalar_lea.vmem %s15, 48
  %v5450 = vld [vmem:[%s5449] sm:$0xf]
  %v5451 = vld [vmem:[%s5449 + $0x4] sm:$0xf]
  %v5452 = vld [vmem:[%s5449 + $0x8] sm:$0xf]
  %v5453 = vld [vmem:[%s5449 + $0xc] sm:$0xf]
  %v5454 = vld [vmem:[%s5449 + $0x10] sm:$0xf]
  %v5455 = vld [vmem:[%s5449 + $0x14] sm:$0xf]
  %v5456 = vld [vmem:[%s5449 + $0x18] sm:$0xf]
  %v5457 = vld [vmem:[%s5449 + $0x1c] sm:$0xf]
  %v5458 = vld [vmem:[%s5449 + $0x20] sm:$0xf]
  %v5459 = vld [vmem:[%s5449 + $0x24] sm:$0xf]
  %v5460 = vld [vmem:[%s5449 + $0x28] sm:$0xf]
  %v5461 = vld [vmem:[%s5449 + $0x2c] sm:$0xf]
  %v5474 = vunpack.c.l.b16 %v5450
  %v5475 = vunpack.c.l.b16 %v5451
  %v5476 = vunpack.c.l.b16 %v5452
  %v5477 = vunpack.c.l.b16 %v5453
  %v5478 = vunpack.c.l.b16 %v5454
  %v5479 = vunpack.c.l.b16 %v5455
  %v5480 = vunpack.c.l.b16 %v5456
  %v5481 = vunpack.c.l.b16 %v5457
  %v5482 = vunpack.c.l.b16 %v5458
  %v5483 = vunpack.c.l.b16 %v5459
  %v5484 = vunpack.c.l.b16 %v5460
  %v5485 = vunpack.c.l.b16 %v5461
  %v5486 = vpack.c.b16 %v5475, %v5474
  %v5487 = vpack.c.b16 %v5477, %v5476
  %v5488 = vpack.c.b16 %v5479, %v5478
  %v5489 = vpack.c.b16 %v5481, %v5480
  %v5490 = vpack.c.b16 %v5483, %v5482
  %v5491 = vpack.c.b16 %v5485, %v5484
  %v5493 = vsel %vm873, %v5486, 0
  %v5496 = vsel %vm873, %v5487, 0
  %v5499 = vsel %vm873, %v5488, 0
  %v5502 = vsel %vm873, %v5489, 0
  %v5505 = vsel %vm873, %v5490, 0
  %v5508 = vsel %vm873, %v5491, 0
  %5510 = vmatprep.subr.bf16.mxu0 0
  %5511 = vmatpush1.bf16.msra.mxu0 0
  %5512 = vmatprep.subr.bf16.mxu0 0
  %5513 = vmatpush1.bf16.msra.mxu0 0
  %5514 = vmatprep.subr.bf16.mxu0 0
  %5515 = vmatpush1.bf16.msra.mxu0 0
  %5516 = vmatprep.subr.bf16.mxu0 0
  %5517 = vmatpush1.bf16.msra.mxu0 0
  %5518 = vmatprep.subr.bf16.mxu0 0
  %5519 = vmatpush1.bf16.msra.mxu0 0
  %5520 = vmatprep.subr.bf16.mxu0 0
  %5521 = vmatpush1.bf16.msra.mxu0 0
  %5522 = vmatprep.subr.bf16.mxu0 0
  %5523 = vmatpush1.bf16.msra.mxu0 %v3908
  %5524 = vmatprep.subr.bf16.mxu0 0
  %5525 = vmatpush1.bf16.msra.mxu0 %v3907
  %5526 = vmatprep.subr.bf16.mxu0 0
  %5527 = vmatpush2.bf16.msra.mxu0 0
  %5528 = vmatprep.subr.bf16.mxu0 0
  %5529 = vmatpush2.bf16.msra.mxu0 0
  %5530 = vmatprep.subr.bf16.mxu0 0
  %5531 = vmatpush2.bf16.msra.mxu0 0
  %5532 = vmatprep.subr.bf16.mxu0 0
  %5533 = vmatpush2.bf16.msra.mxu0 0
  %5534 = vmatprep.subr.bf16.mxu0 0
  %5535 = vmatpush2.bf16.msra.mxu0 0
  %5536 = vmatprep.subr.bf16.mxu0 0
  %5537 = vmatpush2.bf16.msra.mxu0 0
  %5538 = vmatprep.subr.bf16.mxu0 0
  %5539 = vmatpush2.bf16.msra.mxu0 0
  %5540 = vmatprep.subr.bf16.mxu0 0
  %5541 = vmatpush2.bf16.msra.mxu0 0
  %5542 = vmatprep.mubr.bf16.mxu0 0
  %5543 = vmatmul.mubr.bf16.gmra.mxu0 %v5493
  %v5544 = vpop.f32.mrf.mxu0
  %v5545 = vadd.f32 0.0, %v5544
  %v5546 = vpop.f32.mrf.mxu0
  %v5547 = vpop.f32.mrf.mxu0
  %v5548 = vadd.f32 0.0, %v5547
  %v5549 = vpop.f32.mrf.mxu0
  %5550 = vmatprep.mubr.bf16.mxu0 0
  %5551 = vmatmul.mubr.bf16.gmra.mxu0 %v5496
  %v5552 = vpop.f32.mrf.mxu0
  %v5553 = vadd.f32 0.0, %v5552
  %v5554 = vpop.f32.mrf.mxu0
  %v5555 = vpop.f32.mrf.mxu0
  %v5556 = vadd.f32 0.0, %v5555
  %v5557 = vpop.f32.mrf.mxu0
  %5558 = vmatprep.mubr.bf16.mxu0 0
  %5559 = vmatmul.mubr.bf16.gmra.mxu0 %v5499
  %v5560 = vpop.f32.mrf.mxu0
  %v5561 = vadd.f32 0.0, %v5560
  %v5562 = vpop.f32.mrf.mxu0
  %v5563 = vpop.f32.mrf.mxu0
  %v5564 = vadd.f32 0.0, %v5563
  %v5565 = vpop.f32.mrf.mxu0
  %5566 = vmatprep.mubr.bf16.mxu0 0
  %5567 = vmatmul.mubr.bf16.gmra.mxu0 %v5502
  %v5568 = vpop.f32.mrf.mxu0
  %v5569 = vadd.f32 0.0, %v5568
  %v5570 = vpop.f32.mrf.mxu0
  %v5571 = vpop.f32.mrf.mxu0
  %v5572 = vadd.f32 0.0, %v5571
  %v5573 = vpop.f32.mrf.mxu0
  %5574 = vmatprep.mubr.bf16.mxu0 0
  %5575 = vmatmul.mubr.bf16.gmra.mxu0 %v5505
  %v5576 = vpop.f32.mrf.mxu0
  %v5577 = vadd.f32 0.0, %v5576
  %v5578 = vpop.f32.mrf.mxu0
  %v5579 = vpop.f32.mrf.mxu0
  %v5580 = vadd.f32 0.0, %v5579
  %v5581 = vpop.f32.mrf.mxu0
  %5582 = vmatprep.mubr.bf16.mxu0 0
  %5583 = vmatmul.mubr.bf16.gmra.mxu0 %v5508
  %v5584 = vpop.f32.mrf.mxu0
  %v5585 = vadd.f32 0.0, %v5584
  %v5586 = vpop.f32.mrf.mxu0
  %v5587 = vpop.f32.mrf.mxu0
  %v5588 = vadd.f32 0.0, %v5587
  %v5589 = vpop.f32.mrf.mxu0
  %5590 = vdwg.mxu0
  %v5603 = vunpack.c.l.b16 %v5437
  %v5604 = vunpack.c.l.b16 %v5438
  %v5605 = vunpack.c.l.b16 %v5439
  %v5606 = vunpack.c.l.b16 %v5440
  %v5607 = vunpack.c.l.b16 %v5441
  %v5608 = vunpack.c.l.b16 %v5442
  %v5609 = vunpack.c.l.b16 %v5443
  %v5610 = vunpack.c.l.b16 %v5444
  %v5611 = vunpack.c.l.b16 %v5445
  %v5612 = vunpack.c.l.b16 %v5446
  %v5613 = vunpack.c.l.b16 %v5447
  %v5614 = vunpack.c.l.b16 %v5448
  %v5615 = vpack.c.b16 %v5604, %v5603
  %v5616 = vpack.c.b16 %v5606, %v5605
  %v5617 = vpack.c.b16 %v5608, %v5607
  %v5618 = vpack.c.b16 %v5610, %v5609
  %v5619 = vpack.c.b16 %v5612, %v5611
  %v5620 = vpack.c.b16 %v5614, %v5613
  %v5622 = vsel %vm873, %v5615, 0
  %v5625 = vsel %vm873, %v5616, 0
  %v5628 = vsel %vm873, %v5617, 0
  %v5631 = vsel %vm873, %v5618, 0
  %v5634 = vsel %vm873, %v5619, 0
  %v5637 = vsel %vm873, %v5620, 0
  %5639 = vmatprep.subr.bf16.mxu0 0
  %5640 = vmatpush1.bf16.msra.mxu0 0
  %5641 = vmatprep.subr.bf16.mxu0 0
  %5642 = vmatpush1.bf16.msra.mxu0 0
  %5643 = vmatprep.subr.bf16.mxu0 0
  %5644 = vmatpush1.bf16.msra.mxu0 0
  %5645 = vmatprep.subr.bf16.mxu0 0
  %5646 = vmatpush1.bf16.msra.mxu0 0
  %5647 = vmatprep.subr.bf16.mxu0 0
  %5648 = vmatpush1.bf16.msra.mxu0 0
  %5649 = vmatprep.subr.bf16.mxu0 0
  %5650 = vmatpush1.bf16.msra.mxu0 0
  %5651 = vmatprep.subr.bf16.mxu0 0
  %5652 = vmatpush1.bf16.msra.mxu0 %v2373
  %5653 = vmatprep.subr.bf16.mxu0 0
  %5654 = vmatpush1.bf16.msra.mxu0 %v2372
  %5655 = vmatprep.subr.bf16.mxu0 0
  %5656 = vmatpush2.bf16.msra.mxu0 0
  %5657 = vmatprep.subr.bf16.mxu0 0
  %5658 = vmatpush2.bf16.msra.mxu0 0
  %5659 = vmatprep.subr.bf16.mxu0 0
  %5660 = vmatpush2.bf16.msra.mxu0 0
  %5661 = vmatprep.subr.bf16.mxu0 0
  %5662 = vmatpush2.bf16.msra.mxu0 0
  %5663 = vmatprep.subr.bf16.mxu0 0
  %5664 = vmatpush2.bf16.msra.mxu0 0
  %5665 = vmatprep.subr.bf16.mxu0 0
  %5666 = vmatpush2.bf16.msra.mxu0 0
  %5667 = vmatprep.subr.bf16.mxu0 0
  %5668 = vmatpush2.bf16.msra.mxu0 0
  %5669 = vmatprep.subr.bf16.mxu0 0
  %5670 = vmatpush2.bf16.msra.mxu0 0
  %5671 = vmatprep.mubr.bf16.mxu0 0
  %5672 = vmatmul.mubr.bf16.gmra.mxu0 %v5622
  %v5673 = vpop.f32.mrf.mxu0
  %v5674 = vadd.f32 %v5545, %v5673
  %v5675 = vpop.f32.mrf.mxu0
  %v5676 = vpop.f32.mrf.mxu0
  %v5677 = vadd.f32 %v5548, %v5676
  %v5678 = vpop.f32.mrf.mxu0
  %5679 = vmatprep.mubr.bf16.mxu0 0
  %5680 = vmatmul.mubr.bf16.gmra.mxu0 %v5625
  %v5681 = vpop.f32.mrf.mxu0
  %v5682 = vadd.f32 %v5553, %v5681
  %v5683 = vpop.f32.mrf.mxu0
  %v5684 = vpop.f32.mrf.mxu0
  %v5685 = vadd.f32 %v5556, %v5684
  %v5686 = vpop.f32.mrf.mxu0
  %5687 = vmatprep.mubr.bf16.mxu0 0
  %5688 = vmatmul.mubr.bf16.gmra.mxu0 %v5628
  %v5689 = vpop.f32.mrf.mxu0
  %v5690 = vadd.f32 %v5561, %v5689
  %v5691 = vpop.f32.mrf.mxu0
  %v5692 = vpop.f32.mrf.mxu0
  %v5693 = vadd.f32 %v5564, %v5692
  %v5694 = vpop.f32.mrf.mxu0
  %5695 = vmatprep.mubr.bf16.mxu0 0
  %5696 = vmatmul.mubr.bf16.gmra.mxu0 %v5631
  %v5697 = vpop.f32.mrf.mxu0
  %v5698 = vadd.f32 %v5569, %v5697
  %v5699 = vpop.f32.mrf.mxu0
  %v5700 = vpop.f32.mrf.mxu0
  %v5701 = vadd.f32 %v5572, %v5700
  %v5702 = vpop.f32.mrf.mxu0
  %5703 = vmatprep.mubr.bf16.mxu0 0
  %5704 = vmatmul.mubr.bf16.gmra.mxu0 %v5634
  %v5705 = vpop.f32.mrf.mxu0
  %v5706 = vadd.f32 %v5577, %v5705
  %v5707 = vpop.f32.mrf.mxu0
  %v5708 = vpop.f32.mrf.mxu0
  %v5709 = vadd.f32 %v5580, %v5708
  %v5710 = vpop.f32.mrf.mxu0
  %5711 = vmatprep.mubr.bf16.mxu0 0
  %5712 = vmatmul.mubr.bf16.gmra.mxu0 %v5637
  %v5713 = vpop.f32.mrf.mxu0
  %v5714 = vadd.f32 %v5585, %v5713
  %v5715 = vpop.f32.mrf.mxu0
  %v5716 = vpop.f32.mrf.mxu0
  %v5717 = vadd.f32 %v5588, %v5716
  %v5718 = vpop.f32.mrf.mxu0
  %5719 = vdwg.mxu0
  %s5720 = scalar_lea.vmem %s15, 96
  %v5721 = vld [vmem:[%s5720] sm:$0xf]
  %v5722 = vld [vmem:[%s5720 + $0x4] sm:$0xf]
  %v5723 = vld [vmem:[%s5720 + $0x8] sm:$0xf]
  %v5724 = vld [vmem:[%s5720 + $0xc] sm:$0xf]
  %v5725 = vld [vmem:[%s5720 + $0x10] sm:$0xf]
  %v5726 = vld [vmem:[%s5720 + $0x14] sm:$0xf]
  %v5727 = vld [vmem:[%s5720 + $0x18] sm:$0xf]
  %v5728 = vld [vmem:[%s5720 + $0x1c] sm:$0xf]
  %v5729 = vld [vmem:[%s5720 + $0x20] sm:$0xf]
  %v5730 = vld [vmem:[%s5720 + $0x24] sm:$0xf]
  %v5731 = vld [vmem:[%s5720 + $0x28] sm:$0xf]
  %v5732 = vld [vmem:[%s5720 + $0x2c] sm:$0xf]
  %v5733 = vpack.c.bf16 %v5434, %v5433
  %v5734 = vpack.c.bf16 %v5436, %v5435
  %v5747 = vunpack.c.l.b16 %v5721
  %v5748 = vunpack.c.l.b16 %v5722
  %v5749 = vunpack.c.l.b16 %v5723
  %v5750 = vunpack.c.l.b16 %v5724
  %v5751 = vunpack.c.l.b16 %v5725
  %v5752 = vunpack.c.l.b16 %v5726
  %v5753 = vunpack.c.l.b16 %v5727
  %v5754 = vunpack.c.l.b16 %v5728
  %v5755 = vunpack.c.l.b16 %v5729
  %v5756 = vunpack.c.l.b16 %v5730
  %v5757 = vunpack.c.l.b16 %v5731
  %v5758 = vunpack.c.l.b16 %v5732
  %v5759 = vpack.c.b16 %v5748, %v5747
  %v5760 = vpack.c.b16 %v5750, %v5749
  %v5761 = vpack.c.b16 %v5752, %v5751
  %v5762 = vpack.c.b16 %v5754, %v5753
  %v5763 = vpack.c.b16 %v5756, %v5755
  %v5764 = vpack.c.b16 %v5758, %v5757
  %v5766 = vsel %vm873, %v5759, 0
  %v5769 = vsel %vm873, %v5760, 0
  %v5772 = vsel %vm873, %v5761, 0
  %v5775 = vsel %vm873, %v5762, 0
  %v5778 = vsel %vm873, %v5763, 0
  %v5781 = vsel %vm873, %v5764, 0
  %5783 = vmatprep.subr.bf16.mxu0 0
  %5784 = vmatpush1.bf16.msra.mxu0 0
  %5785 = vmatprep.subr.bf16.mxu0 0
  %5786 = vmatpush1.bf16.msra.mxu0 0
  %5787 = vmatprep.subr.bf16.mxu0 0
  %5788 = vmatpush1.bf16.msra.mxu0 0
  %5789 = vmatprep.subr.bf16.mxu0 0
  %5790 = vmatpush1.bf16.msra.mxu0 0
  %5791 = vmatprep.subr.bf16.mxu0 0
  %5792 = vmatpush1.bf16.msra.mxu0 0
  %5793 = vmatprep.subr.bf16.mxu0 0
  %5794 = vmatpush1.bf16.msra.mxu0 0
  %5795 = vmatprep.subr.bf16.mxu0 0
  %5796 = vmatpush1.bf16.msra.mxu0 %v5734
  %5797 = vmatprep.subr.bf16.mxu0 0
  %5798 = vmatpush1.bf16.msra.mxu0 %v5733
  %5799 = vmatprep.subr.bf16.mxu0 0
  %5800 = vmatpush2.bf16.msra.mxu0 0
  %5801 = vmatprep.subr.bf16.mxu0 0
  %5802 = vmatpush2.bf16.msra.mxu0 0
  %5803 = vmatprep.subr.bf16.mxu0 0
  %5804 = vmatpush2.bf16.msra.mxu0 0
  %5805 = vmatprep.subr.bf16.mxu0 0
  %5806 = vmatpush2.bf16.msra.mxu0 0
  %5807 = vmatprep.subr.bf16.mxu0 0
  %5808 = vmatpush2.bf16.msra.mxu0 0
  %5809 = vmatprep.subr.bf16.mxu0 0
  %5810 = vmatpush2.bf16.msra.mxu0 0
  %5811 = vmatprep.subr.bf16.mxu0 0
  %5812 = vmatpush2.bf16.msra.mxu0 0
  %5813 = vmatprep.subr.bf16.mxu0 0
  %5814 = vmatpush2.bf16.msra.mxu0 0
  %5815 = vmatprep.mubr.bf16.mxu0 0
  %5816 = vmatmul.mubr.bf16.gmra.mxu0 %v5766
  %v5817 = vpop.f32.mrf.mxu0
  %v5818 = vadd.f32 0.0, %v5817
  %v5819 = vpop.f32.mrf.mxu0
  %v5820 = vpop.f32.mrf.mxu0
  %v5821 = vadd.f32 0.0, %v5820
  %v5822 = vpop.f32.mrf.mxu0
  %5823 = vmatprep.mubr.bf16.mxu0 0
  %5824 = vmatmul.mubr.bf16.gmra.mxu0 %v5769
  %v5825 = vpop.f32.mrf.mxu0
  %v5826 = vadd.f32 0.0, %v5825
  %v5827 = vpop.f32.mrf.mxu0
  %v5828 = vpop.f32.mrf.mxu0
  %v5829 = vadd.f32 0.0, %v5828
  %v5830 = vpop.f32.mrf.mxu0
  %5831 = vmatprep.mubr.bf16.mxu0 0
  %5832 = vmatmul.mubr.bf16.gmra.mxu0 %v5772
  %v5833 = vpop.f32.mrf.mxu0
  %v5834 = vadd.f32 0.0, %v5833
  %v5835 = vpop.f32.mrf.mxu0
  %v5836 = vpop.f32.mrf.mxu0
  %v5837 = vadd.f32 0.0, %v5836
  %v5838 = vpop.f32.mrf.mxu0
  %5839 = vmatprep.mubr.bf16.mxu0 0
  %5840 = vmatmul.mubr.bf16.gmra.mxu0 %v5775
  %v5841 = vpop.f32.mrf.mxu0
  %v5842 = vadd.f32 0.0, %v5841
  %v5843 = vpop.f32.mrf.mxu0
  %v5844 = vpop.f32.mrf.mxu0
  %v5845 = vadd.f32 0.0, %v5844
  %v5846 = vpop.f32.mrf.mxu0
  %5847 = vmatprep.mubr.bf16.mxu0 0
  %5848 = vmatmul.mubr.bf16.gmra.mxu0 %v5778
  %v5849 = vpop.f32.mrf.mxu0
  %v5850 = vadd.f32 0.0, %v5849
  %v5851 = vpop.f32.mrf.mxu0
  %v5852 = vpop.f32.mrf.mxu0
  %v5853 = vadd.f32 0.0, %v5852
  %v5854 = vpop.f32.mrf.mxu0
  %5855 = vmatprep.mubr.bf16.mxu0 0
  %5856 = vmatmul.mubr.bf16.gmra.mxu0 %v5781
  %v5857 = vpop.f32.mrf.mxu0
  %v5858 = vadd.f32 0.0, %v5857
  %v5859 = vpop.f32.mrf.mxu0
  %v5860 = vpop.f32.mrf.mxu0
  %v5861 = vadd.f32 0.0, %v5860
  %v5862 = vpop.f32.mrf.mxu0
  %5863 = vdwg.mxu0
  %v5864 = vadd.f32 %v5674, %v5818
  %v5865 = vadd.f32 %v5677, %v5821
  %v5866 = vadd.f32 %v5682, %v5826
  %v5867 = vadd.f32 %v5685, %v5829
  %v5868 = vadd.f32 %v5690, %v5834
  %v5869 = vadd.f32 %v5693, %v5837
  %v5870 = vadd.f32 %v5698, %v5842
  %v5871 = vadd.f32 %v5701, %v5845
  %v5872 = vadd.f32 %v5706, %v5850
  %v5873 = vadd.f32 %v5709, %v5853
  %v5874 = vadd.f32 %v5714, %v5858
  %v5875 = vadd.f32 %v5717, %v5861
  %v5876 = vld [vmem:[%s16] sm:$0xff]
  %v5877 = vld [vmem:[%s16 + $0x8] sm:$0xff]
  %v5878 = vld [vmem:[%s16 + $0x10] sm:$0xff]
  %v5879 = vld [vmem:[%s16 + $0x18] sm:$0xff]
  %v5880 = vld [vmem:[%s16 + $0x20] sm:$0xff]
  %v5881 = vld [vmem:[%s16 + $0x28] sm:$0xff]
  %v5882 = vld [vmem:[%s16 + $0x30] sm:$0xff]
  %v5883 = vld [vmem:[%s16 + $0x38] sm:$0xff]
  %v5884 = vld [vmem:[%s16 + $0x40] sm:$0xff]
  %v5885 = vld [vmem:[%s16 + $0x48] sm:$0xff]
  %v5886 = vld [vmem:[%s16 + $0x50] sm:$0xff]
  %v5887 = vld [vmem:[%s16 + $0x58] sm:$0xff]
  %5889 = vset.pattern.permute.xlu0 0
  %5890 = vperm.xlu0 %5889, %v5876
  %v5891 = vpop.permute.xlu0 %5890
  %5894 = vset.pattern.permute.xlu0 0
  %5895 = vperm.xlu0 %5894, %v5877
  %v5896 = vpop.permute.xlu0 %5895
  %5899 = vset.pattern.permute.xlu0 0
  %5900 = vperm.xlu0 %5899, %v5878
  %v5901 = vpop.permute.xlu0 %5900
  %5904 = vset.pattern.permute.xlu0 0
  %5905 = vperm.xlu0 %5904, %v5879
  %v5906 = vpop.permute.xlu0 %5905
  %5909 = vset.pattern.permute.xlu0 0
  %5910 = vperm.xlu0 %5909, %v5880
  %v5911 = vpop.permute.xlu0 %5910
  %5914 = vset.pattern.permute.xlu0 0
  %5915 = vperm.xlu0 %5914, %v5881
  %v5916 = vpop.permute.xlu0 %5915
  %5919 = vset.pattern.permute.xlu0 0
  %5920 = vperm.xlu0 %5919, %v5882
  %v5921 = vpop.permute.xlu0 %5920
  %5924 = vset.pattern.permute.xlu0 0
  %5925 = vperm.xlu0 %5924, %v5883
  %v5926 = vpop.permute.xlu0 %5925
  %5929 = vset.pattern.permute.xlu0 0
  %5930 = vperm.xlu0 %5929, %v5884
  %v5931 = vpop.permute.xlu0 %5930
  %5934 = vset.pattern.permute.xlu0 0
  %5935 = vperm.xlu0 %5934, %v5885
  %v5936 = vpop.permute.xlu0 %5935
  %5939 = vset.pattern.permute.xlu0 0
  %5940 = vperm.xlu0 %5939, %v5886
  %v5941 = vpop.permute.xlu0 %5940
  %5944 = vset.pattern.permute.xlu0 0
  %5945 = vperm.xlu0 %5944, %v5887
  %v5946 = vpop.permute.xlu0 %5945
  %v5948 = vadd.f32 %v5864, %v5891
  %v5949 = vadd.f32 %v5865, %v5896
  %v5950 = vadd.f32 %v5866, %v5901
  %v5951 = vadd.f32 %v5867, %v5906
  %v5952 = vadd.f32 %v5868, %v5911
  %v5953 = vadd.f32 %v5869, %v5916
  %v5954 = vadd.f32 %v5870, %v5921
  %v5955 = vadd.f32 %v5871, %v5926
  %v5956 = vadd.f32 %v5872, %v5931
  %v5957 = vadd.f32 %v5873, %v5936
  %v5958 = vadd.f32 %v5874, %v5941
  %v5959 = vadd.f32 %v5875, %v5946
  %v5960 = vmax.f32 %v5948, 0.0
  %v5961 = vmax.f32 %v5949, 0.0
  %v5962 = vmax.f32 %v5950, 0.0
  %v5963 = vmax.f32 %v5951, 0.0
  %v5964 = vmax.f32 %v5952, 0.0
  %v5965 = vmax.f32 %v5953, 0.0
  %v5966 = vmax.f32 %v5954, 0.0
  %v5967 = vmax.f32 %v5955, 0.0
  %v5968 = vmax.f32 %v5956, 0.0
  %v5969 = vmax.f32 %v5957, 0.0
  %v5970 = vmax.f32 %v5958, 0.0
  %v5971 = vmax.f32 %v5959, 0.0
  %5972 = vadd.xlane.f32.xlu0 %v5960
  %v5973 = vpop.xlane.xlu0 %5972
  %5974 = vadd.xlane.f32.xlu0 %v5961
  %v5975 = vpop.xlane.xlu0 %5974
  %5976 = vadd.xlane.f32.xlu0 %v5962
  %v5977 = vpop.xlane.xlu0 %5976
  %5978 = vadd.xlane.f32.xlu0 %v5963
  %v5979 = vpop.xlane.xlu0 %5978
  %5980 = vadd.xlane.f32.xlu0 %v5964
  %v5981 = vpop.xlane.xlu0 %5980
  %5982 = vadd.xlane.f32.xlu0 %v5965
  %v5983 = vpop.xlane.xlu0 %5982
  %5984 = vadd.xlane.f32.xlu0 %v5966
  %v5985 = vpop.xlane.xlu0 %5984
  %5986 = vadd.xlane.f32.xlu0 %v5967
  %v5987 = vpop.xlane.xlu0 %5986
  %5988 = vadd.xlane.f32.xlu0 %v5968
  %v5989 = vpop.xlane.xlu0 %5988
  %5990 = vadd.xlane.f32.xlu0 %v5969
  %v5991 = vpop.xlane.xlu0 %5990
  %5992 = vadd.xlane.f32.xlu0 %v5970
  %v5993 = vpop.xlane.xlu0 %5992
  %5994 = vadd.xlane.f32.xlu0 %v5971
  %v5995 = vpop.xlane.xlu0 %5994
  %v5996 = vmul.f32 %v5973, %v756
  %v5997 = vmul.f32 %v5975, %v756
  %v5998 = vmul.f32 %v5977, %v756
  %v5999 = vmul.f32 %v5979, %v756
  %v6000 = vmul.f32 %v5981, %v756
  %v6001 = vmul.f32 %v5983, %v756
  %v6002 = vmul.f32 %v5985, %v756
  %v6003 = vmul.f32 %v5987, %v756
  %v6004 = vmul.f32 %v5989, %v756
  %v6005 = vmul.f32 %v5991, %v756
  %v6006 = vmul.f32 %v5993, %v756
  %v6007 = vmul.f32 %v5995, %v756
  %v6008 = vsub.f32 %v5960, %v5996
  %v6009 = vsub.f32 %v5961, %v5997
  %v6010 = vsub.f32 %v5962, %v5998
  %v6011 = vsub.f32 %v5963, %v5999
  %v6012 = vsub.f32 %v5964, %v6000
  %v6013 = vsub.f32 %v5965, %v6001
  %v6014 = vsub.f32 %v5966, %v6002
  %v6015 = vsub.f32 %v5967, %v6003
  %v6016 = vsub.f32 %v5968, %v6004
  %v6017 = vsub.f32 %v5969, %v6005
  %v6018 = vsub.f32 %v5970, %v6006
  %v6019 = vsub.f32 %v5971, %v6007
  %v6020 = vmul.f32 %v6008, %v6008
  %v6021 = vmul.f32 %v6009, %v6009
  %v6022 = vmul.f32 %v6010, %v6010
  %v6023 = vmul.f32 %v6011, %v6011
  %v6024 = vmul.f32 %v6012, %v6012
  %v6025 = vmul.f32 %v6013, %v6013
  %v6026 = vmul.f32 %v6014, %v6014
  %v6027 = vmul.f32 %v6015, %v6015
  %v6028 = vmul.f32 %v6016, %v6016
  %v6029 = vmul.f32 %v6017, %v6017
  %v6030 = vmul.f32 %v6018, %v6018
  %v6031 = vmul.f32 %v6019, %v6019
  %6032 = vadd.xlane.f32.xlu0 %v6020
  %v6033 = vpop.xlane.xlu0 %6032
  %6034 = vadd.xlane.f32.xlu0 %v6021
  %v6035 = vpop.xlane.xlu0 %6034
  %6036 = vadd.xlane.f32.xlu0 %v6022
  %v6037 = vpop.xlane.xlu0 %6036
  %6038 = vadd.xlane.f32.xlu0 %v6023
  %v6039 = vpop.xlane.xlu0 %6038
  %6040 = vadd.xlane.f32.xlu0 %v6024
  %v6041 = vpop.xlane.xlu0 %6040
  %6042 = vadd.xlane.f32.xlu0 %v6025
  %v6043 = vpop.xlane.xlu0 %6042
  %6044 = vadd.xlane.f32.xlu0 %v6026
  %v6045 = vpop.xlane.xlu0 %6044
  %6046 = vadd.xlane.f32.xlu0 %v6027
  %v6047 = vpop.xlane.xlu0 %6046
  %6048 = vadd.xlane.f32.xlu0 %v6028
  %v6049 = vpop.xlane.xlu0 %6048
  %6050 = vadd.xlane.f32.xlu0 %v6029
  %v6051 = vpop.xlane.xlu0 %6050
  %6052 = vadd.xlane.f32.xlu0 %v6030
  %v6053 = vpop.xlane.xlu0 %6052
  %6054 = vadd.xlane.f32.xlu0 %v6031
  %v6055 = vpop.xlane.xlu0 %6054
  %v6056 = vmul.f32 %v6033, %v756
  %v6057 = vmul.f32 %v6035, %v756
  %v6058 = vmul.f32 %v6037, %v756
  %v6059 = vmul.f32 %v6039, %v756
  %v6060 = vmul.f32 %v6041, %v756
  %v6061 = vmul.f32 %v6043, %v756
  %v6062 = vmul.f32 %v6045, %v756
  %v6063 = vmul.f32 %v6047, %v756
  %v6064 = vmul.f32 %v6049, %v756
  %v6065 = vmul.f32 %v6051, %v756
  %v6066 = vmul.f32 %v6053, %v756
  %v6067 = vmul.f32 %v6055, %v756
  %v6068 = vadd.f32 %v6056, 1e-05
  %v6069 = vadd.f32 %v6057, 1e-05
  %v6070 = vadd.f32 %v6058, 1e-05
  %v6071 = vadd.f32 %v6059, 1e-05
  %v6072 = vadd.f32 %v6060, 1e-05
  %v6073 = vadd.f32 %v6061, 1e-05
  %v6074 = vadd.f32 %v6062, 1e-05
  %v6075 = vadd.f32 %v6063, 1e-05
  %v6076 = vadd.f32 %v6064, 1e-05
  %v6077 = vadd.f32 %v6065, 1e-05
  %v6078 = vadd.f32 %v6066, 1e-05
  %v6079 = vadd.f32 %v6067, 1e-05
  %v6080 = vrsqrt.pop %v6068
  %v6081 = vrsqrt.pop %v6069
  %v6082 = vrsqrt.pop %v6070
  %v6083 = vrsqrt.pop %v6071
  %v6084 = vrsqrt.pop %v6072
  %v6085 = vrsqrt.pop %v6073
  %v6086 = vrsqrt.pop %v6074
  %v6087 = vrsqrt.pop %v6075
  %v6088 = vrsqrt.pop %v6076
  %v6089 = vrsqrt.pop %v6077
  %v6090 = vrsqrt.pop %v6078
  %v6091 = vrsqrt.pop %v6079
  %v6092 = vmul.f32 %v6008, %v6080
  %v6093 = vmul.f32 %v6009, %v6081
  %v6094 = vmul.f32 %v6010, %v6082
  %v6095 = vmul.f32 %v6011, %v6083
  %v6096 = vmul.f32 %v6012, %v6084
  %v6097 = vmul.f32 %v6013, %v6085
  %v6098 = vmul.f32 %v6014, %v6086
  %v6099 = vmul.f32 %v6015, %v6087
  %v6100 = vmul.f32 %v6016, %v6088
  %v6101 = vmul.f32 %v6017, %v6089
  %v6102 = vmul.f32 %v6018, %v6090
  %v6103 = vmul.f32 %v6019, %v6091
  %6104 = vset.pattern.permute.xlu0 1
  %6105 = vperm.xlu0 %6104, %v5876
  %v6106 = vpop.permute.xlu0 %6105
  %6108 = vset.pattern.permute.xlu0 1
  %6109 = vperm.xlu0 %6108, %v5877
  %v6110 = vpop.permute.xlu0 %6109
  %6112 = vset.pattern.permute.xlu0 1
  %6113 = vperm.xlu0 %6112, %v5878
  %v6114 = vpop.permute.xlu0 %6113
  %6116 = vset.pattern.permute.xlu0 1
  %6117 = vperm.xlu0 %6116, %v5879
  %v6118 = vpop.permute.xlu0 %6117
  %6120 = vset.pattern.permute.xlu0 1
  %6121 = vperm.xlu0 %6120, %v5880
  %v6122 = vpop.permute.xlu0 %6121
  %6124 = vset.pattern.permute.xlu0 1
  %6125 = vperm.xlu0 %6124, %v5881
  %v6126 = vpop.permute.xlu0 %6125
  %6128 = vset.pattern.permute.xlu0 1
  %6129 = vperm.xlu0 %6128, %v5882
  %v6130 = vpop.permute.xlu0 %6129
  %6132 = vset.pattern.permute.xlu0 1
  %6133 = vperm.xlu0 %6132, %v5883
  %v6134 = vpop.permute.xlu0 %6133
  %6136 = vset.pattern.permute.xlu0 1
  %6137 = vperm.xlu0 %6136, %v5884
  %v6138 = vpop.permute.xlu0 %6137
  %6140 = vset.pattern.permute.xlu0 1
  %6141 = vperm.xlu0 %6140, %v5885
  %v6142 = vpop.permute.xlu0 %6141
  %6144 = vset.pattern.permute.xlu0 1
  %6145 = vperm.xlu0 %6144, %v5886
  %v6146 = vpop.permute.xlu0 %6145
  %6148 = vset.pattern.permute.xlu0 1
  %6149 = vperm.xlu0 %6148, %v5887
  %v6150 = vpop.permute.xlu0 %6149
  %v6152 = vmul.f32 %v6092, %v6106
  %v6153 = vmul.f32 %v6093, %v6110
  %v6154 = vmul.f32 %v6094, %v6114
  %v6155 = vmul.f32 %v6095, %v6118
  %v6156 = vmul.f32 %v6096, %v6122
  %v6157 = vmul.f32 %v6097, %v6126
  %v6158 = vmul.f32 %v6098, %v6130
  %v6159 = vmul.f32 %v6099, %v6134
  %v6160 = vmul.f32 %v6100, %v6138
  %v6161 = vmul.f32 %v6101, %v6142
  %v6162 = vmul.f32 %v6102, %v6146
  %v6163 = vmul.f32 %v6103, %v6150
  %6164 = vset.pattern.permute.xlu0 2
  %6165 = vperm.xlu0 %6164, %v5876
  %v6166 = vpop.permute.xlu0 %6165
  %6168 = vset.pattern.permute.xlu0 2
  %6169 = vperm.xlu0 %6168, %v5877
  %v6170 = vpop.permute.xlu0 %6169
  %6172 = vset.pattern.permute.xlu0 2
  %6173 = vperm.xlu0 %6172, %v5878
  %v6174 = vpop.permute.xlu0 %6173
  %6176 = vset.pattern.permute.xlu0 2
  %6177 = vperm.xlu0 %6176, %v5879
  %v6178 = vpop.permute.xlu0 %6177
  %6180 = vset.pattern.permute.xlu0 2
  %6181 = vperm.xlu0 %6180, %v5880
  %v6182 = vpop.permute.xlu0 %6181
  %6184 = vset.pattern.permute.xlu0 2
  %6185 = vperm.xlu0 %6184, %v5881
  %v6186 = vpop.permute.xlu0 %6185
  %6188 = vset.pattern.permute.xlu0 2
  %6189 = vperm.xlu0 %6188, %v5882
  %v6190 = vpop.permute.xlu0 %6189
  %6192 = vset.pattern.permute.xlu0 2
  %6193 = vperm.xlu0 %6192, %v5883
  %v6194 = vpop.permute.xlu0 %6193
  %6196 = vset.pattern.permute.xlu0 2
  %6197 = vperm.xlu0 %6196, %v5884
  %v6198 = vpop.permute.xlu0 %6197
  %6200 = vset.pattern.permute.xlu0 2
  %6201 = vperm.xlu0 %6200, %v5885
  %v6202 = vpop.permute.xlu0 %6201
  %6204 = vset.pattern.permute.xlu0 2
  %6205 = vperm.xlu0 %6204, %v5886
  %v6206 = vpop.permute.xlu0 %6205
  %6208 = vset.pattern.permute.xlu0 2
  %6209 = vperm.xlu0 %6208, %v5887
  %v6210 = vpop.permute.xlu0 %6209
  %v6212 = vadd.f32 %v6152, %v6166
  %v6213 = vadd.f32 %v6153, %v6170
  %v6214 = vadd.f32 %v6154, %v6174
  %v6215 = vadd.f32 %v6155, %v6178
  %v6216 = vadd.f32 %v6156, %v6182
  %v6217 = vadd.f32 %v6157, %v6186
  %v6218 = vadd.f32 %v6158, %v6190
  %v6219 = vadd.f32 %v6159, %v6194
  %v6220 = vadd.f32 %v6160, %v6198
  %v6221 = vadd.f32 %v6161, %v6202
  %v6222 = vadd.f32 %v6162, %v6206
  %v6223 = vadd.f32 %v6163, %v6210
  %6224 = vmatprep.subr.mxu0 0.0
  %6225 = vmatpush1.msra.mxu0 %v93
  %6226 = vmatprep.subr.mxu0 0.0
  %6227 = vmatpush1.msra.mxu0 %v92
  %6228 = vmatprep.subr.mxu0 0.0
  %6229 = vmatpush1.msra.mxu0 %v91
  %6230 = vmatprep.subr.mxu0 0.0
  %6231 = vmatpush1.msra.mxu0 %v90
  %6232 = vmatprep.subr.mxu0 0.0
  %6233 = vmatpush1.msra.mxu0 %v89
  %6234 = vmatprep.subr.mxu0 0.0
  %6235 = vmatpush1.msra.mxu0 %v88
  %6236 = vmatprep.subr.mxu0 0.0
  %6237 = vmatpush1.msra.mxu0 %v87
  %6238 = vmatprep.subr.mxu0 0.0
  %6239 = vmatpush1.msra.mxu0 %v86
  %6240 = vmatprep.subr.mxu0 0.0
  %6241 = vmatpush1.msra.mxu0 %v85
  %6242 = vmatprep.subr.mxu0 0.0
  %6243 = vmatpush1.msra.mxu0 %v84
  %6244 = vmatprep.subr.mxu0 0.0
  %6245 = vmatpush1.msra.mxu0 %v83
  %6246 = vmatprep.subr.mxu0 0.0
  %6247 = vmatpush1.msra.mxu0 %v82
  %6248 = vmatprep.subr.mxu0 0.0
  %6249 = vmatpush1.msra.mxu0 %v81
  %6250 = vmatprep.subr.mxu0 0.0
  %6251 = vmatpush1.msra.mxu0 %v80
  %6252 = vmatprep.subr.mxu0 0.0
  %6253 = vmatpush1.msra.mxu0 %v79
  %6254 = vmatprep.subr.mxu0 0.0
  %6255 = vmatpush1.msra.mxu0 %v78
  %6256 = vmatprep.subr.mxu0 0.0
  %6257 = vmatpush2.msra.mxu0 0.0
  %6258 = vmatprep.subr.mxu0 0.0
  %6259 = vmatpush2.msra.mxu0 0.0
  %6260 = vmatprep.subr.mxu0 0.0
  %6261 = vmatpush2.msra.mxu0 0.0
  %6262 = vmatprep.subr.mxu0 0.0
  %6263 = vmatpush2.msra.mxu0 0.0
  %6264 = vmatprep.subr.mxu0 0.0
  %6265 = vmatpush2.msra.mxu0 0.0
  %6266 = vmatprep.subr.mxu0 0.0
  %6267 = vmatpush2.msra.mxu0 0.0
  %6268 = vmatprep.subr.mxu0 0.0
  %6269 = vmatpush2.msra.mxu0 0.0
  %6270 = vmatprep.subr.mxu0 0.0
  %6271 = vmatpush2.msra.mxu0 0.0
  %6272 = vmatprep.subr.mxu0 0.0
  %6273 = vmatpush2.msra.mxu0 0.0
  %6274 = vmatprep.subr.mxu0 0.0
  %6275 = vmatpush2.msra.mxu0 0.0
  %6276 = vmatprep.subr.mxu0 0.0
  %6277 = vmatpush2.msra.mxu0 0.0
  %6278 = vmatprep.subr.mxu0 0.0
  %6279 = vmatpush2.msra.mxu0 0.0
  %6280 = vmatprep.subr.mxu0 0.0
  %6281 = vmatpush2.msra.mxu0 0.0
  %6282 = vmatprep.subr.mxu0 0.0
  %6283 = vmatpush2.msra.mxu0 0.0
  %6284 = vmatprep.subr.mxu0 0.0
  %6285 = vmatpush2.msra.mxu0 0.0
  %6286 = vmatprep.subr.mxu0 0.0
  %6287 = vmatpush2.msra.mxu0 0.0
  %6288 = vmatprep.mubr.f32.mxu0 0.0
  %6289 = vmatmul.mubr.f32.gmra.mxu0 %v6212
  %v6290 = vpop.f32.mrf.mxu0
  %v6291 = vadd.f32 0.0, %v6290
  %v6292 = vpop.f32.mrf.mxu0
  %6293 = vmatprep.mubr.f32.mxu0 0.0
  %6294 = vmatmul.mubr.f32.gmra.mxu0 %v6213
  %v6295 = vpop.f32.mrf.mxu0
  %v6296 = vadd.f32 0.0, %v6295
  %v6297 = vpop.f32.mrf.mxu0
  %6298 = vmatprep.mubr.f32.mxu0 0.0
  %6299 = vmatmul.mubr.f32.gmra.mxu0 %v6214
  %v6300 = vpop.f32.mrf.mxu0
  %v6301 = vadd.f32 0.0, %v6300
  %v6302 = vpop.f32.mrf.mxu0
  %6303 = vmatprep.mubr.f32.mxu0 0.0
  %6304 = vmatmul.mubr.f32.gmra.mxu0 %v6215
  %v6305 = vpop.f32.mrf.mxu0
  %v6306 = vadd.f32 0.0, %v6305
  %v6307 = vpop.f32.mrf.mxu0
  %6308 = vmatprep.mubr.f32.mxu0 0.0
  %6309 = vmatmul.mubr.f32.gmra.mxu0 %v6216
  %v6310 = vpop.f32.mrf.mxu0
  %v6311 = vadd.f32 0.0, %v6310
  %v6312 = vpop.f32.mrf.mxu0
  %6313 = vmatprep.mubr.f32.mxu0 0.0
  %6314 = vmatmul.mubr.f32.gmra.mxu0 %v6217
  %v6315 = vpop.f32.mrf.mxu0
  %v6316 = vadd.f32 0.0, %v6315
  %v6317 = vpop.f32.mrf.mxu0
  %6318 = vmatprep.mubr.f32.mxu0 0.0
  %6319 = vmatmul.mubr.f32.gmra.mxu0 %v6218
  %v6320 = vpop.f32.mrf.mxu0
  %v6321 = vadd.f32 0.0, %v6320
  %v6322 = vpop.f32.mrf.mxu0
  %6323 = vmatprep.mubr.f32.mxu0 0.0
  %6324 = vmatmul.mubr.f32.gmra.mxu0 %v6219
  %v6325 = vpop.f32.mrf.mxu0
  %v6326 = vadd.f32 0.0, %v6325
  %v6327 = vpop.f32.mrf.mxu0
  %6328 = vmatprep.mubr.f32.mxu0 0.0
  %6329 = vmatmul.mubr.f32.gmra.mxu0 %v6220
  %v6330 = vpop.f32.mrf.mxu0
  %v6331 = vadd.f32 0.0, %v6330
  %v6332 = vpop.f32.mrf.mxu0
  %6333 = vmatprep.mubr.f32.mxu0 0.0
  %6334 = vmatmul.mubr.f32.gmra.mxu0 %v6221
  %v6335 = vpop.f32.mrf.mxu0
  %v6336 = vadd.f32 0.0, %v6335
  %v6337 = vpop.f32.mrf.mxu0
  %6338 = vmatprep.mubr.f32.mxu0 0.0
  %6339 = vmatmul.mubr.f32.gmra.mxu0 %v6222
  %v6340 = vpop.f32.mrf.mxu0
  %v6341 = vadd.f32 0.0, %v6340
  %v6342 = vpop.f32.mrf.mxu0
  %6343 = vmatprep.mubr.f32.mxu0 0.0
  %6344 = vmatmul.mubr.f32.gmra.mxu0 %v6223
  %v6345 = vpop.f32.mrf.mxu0
  %v6346 = vadd.f32 0.0, %v6345
  %v6347 = vpop.f32.mrf.mxu0
  %6348 = vdwg.mxu0
  %v6349 = vmul.f32 %v6291, 0.015625
  %v6350 = vmul.f32 %v6296, 0.015625
  %v6351 = vmul.f32 %v6301, 0.015625
  %v6352 = vmul.f32 %v6306, 0.015625
  %v6353 = vmul.f32 %v6311, 0.015625
  %v6354 = vmul.f32 %v6316, 0.015625
  %v6355 = vmul.f32 %v6321, 0.015625
  %v6356 = vmul.f32 %v6326, 0.015625
  %v6357 = vmul.f32 %v6331, 0.015625
  %v6358 = vmul.f32 %v6336, 0.015625
  %v6359 = vmul.f32 %v6341, 0.015625
  %v6360 = vmul.f32 %v6346, 0.015625
  %v6362 = vsel %vm2257, %v6349, 0
  %v6365 = vsel %vm2257, %v6350, 0
  %v6368 = vsel %vm2257, %v6351, 0
  %v6371 = vsel %vm2257, %v6352, 0
  %v6374 = vsel %vm2257, %v6353, 0
  %v6377 = vsel %vm2257, %v6354, 0
  %v6380 = vsel %vm2257, %v6355, 0
  %v6383 = vsel %vm2257, %v6356, 0
  %v6386 = vsel %vm2257, %v6357, 0
  %v6389 = vsel %vm2257, %v6358, 0
  %v6392 = vsel %vm2257, %v6359, 0
  %v6395 = vsel %vm2257, %v6360, 0
  %6397 = vmatprep.subr.mxu0 0.0
  %6398 = vmatpush1.msra.mxu0 0.0
  %6399 = vmatprep.subr.mxu0 0.0
  %6400 = vmatpush1.msra.mxu0 0.0
  %6401 = vmatprep.subr.mxu0 0.0
  %6402 = vmatpush1.msra.mxu0 0.0
  %6403 = vmatprep.subr.mxu0 0.0
  %6404 = vmatpush1.msra.mxu0 0.0
  %6405 = vmatprep.subr.mxu0 0.0
  %6406 = vmatpush1.msra.mxu0 0.0
  %6407 = vmatprep.subr.mxu0 0.0
  %6408 = vmatpush1.msra.mxu0 0.0
  %6409 = vmatprep.subr.mxu0 0.0
  %6410 = vmatpush1.msra.mxu0 0.0
  %6411 = vmatprep.subr.mxu0 0.0
  %6412 = vmatpush1.msra.mxu0 0.0
  %6413 = vmatprep.subr.mxu0 0.0
  %6414 = vmatpush1.msra.mxu0 0.0
  %6415 = vmatprep.subr.mxu0 0.0
  %6416 = vmatpush1.msra.mxu0 0.0
  %6417 = vmatprep.subr.mxu0 0.0
  %6418 = vmatpush1.msra.mxu0 0.0
  %6419 = vmatprep.subr.mxu0 0.0
  %6420 = vmatpush1.msra.mxu0 0.0
  %6421 = vmatprep.subr.mxu0 0.0
  %6422 = vmatpush1.msra.mxu0 0.0
  %6423 = vmatprep.subr.mxu0 0.0
  %6424 = vmatpush1.msra.mxu0 0.0
  %6425 = vmatprep.subr.mxu0 0.0
  %6426 = vmatpush1.msra.mxu0 0.0
  %6427 = vmatprep.subr.mxu0 0.0
  %6428 = vmatpush1.msra.mxu0 %v2272
  %6429 = vmatprep.subr.mxu0 0.0
  %6430 = vmatpush2.msra.mxu0 0.0
  %6431 = vmatprep.subr.mxu0 0.0
  %6432 = vmatpush2.msra.mxu0 0.0
  %6433 = vmatprep.subr.mxu0 0.0
  %6434 = vmatpush2.msra.mxu0 0.0
  %6435 = vmatprep.subr.mxu0 0.0
  %6436 = vmatpush2.msra.mxu0 0.0
  %6437 = vmatprep.subr.mxu0 0.0
  %6438 = vmatpush2.msra.mxu0 0.0
  %6439 = vmatprep.subr.mxu0 0.0
  %6440 = vmatpush2.msra.mxu0 0.0
  %6441 = vmatprep.subr.mxu0 0.0
  %6442 = vmatpush2.msra.mxu0 0.0
  %6443 = vmatprep.subr.mxu0 0.0
  %6444 = vmatpush2.msra.mxu0 0.0
  %6445 = vmatprep.subr.mxu0 0.0
  %6446 = vmatpush2.msra.mxu0 0.0
  %6447 = vmatprep.subr.mxu0 0.0
  %6448 = vmatpush2.msra.mxu0 0.0
  %6449 = vmatprep.subr.mxu0 0.0
  %6450 = vmatpush2.msra.mxu0 0.0
  %6451 = vmatprep.subr.mxu0 0.0
  %6452 = vmatpush2.msra.mxu0 0.0
  %6453 = vmatprep.subr.mxu0 0.0
  %6454 = vmatpush2.msra.mxu0 0.0
  %6455 = vmatprep.subr.mxu0 0.0
  %6456 = vmatpush2.msra.mxu0 0.0
  %6457 = vmatprep.subr.mxu0 0.0
  %6458 = vmatpush2.msra.mxu0 0.0
  %6459 = vmatprep.subr.mxu0 0.0
  %6460 = vmatpush2.msra.mxu0 0.0
  %6461 = vmatprep.mubr.f32.mxu0 0.0
  %6462 = vmatmul.mubr.f32.gmra.mxu0 %v6362
  %v6463 = vpop.f32.mrf.mxu0
  %v6464 = vadd.f32 0.0, %v6463
  %v6465 = vpop.f32.mrf.mxu0
  %6466 = vmatprep.mubr.f32.mxu0 0.0
  %6467 = vmatmul.mubr.f32.gmra.mxu0 %v6365
  %v6468 = vpop.f32.mrf.mxu0
  %v6469 = vadd.f32 0.0, %v6468
  %v6470 = vpop.f32.mrf.mxu0
  %6471 = vmatprep.mubr.f32.mxu0 0.0
  %6472 = vmatmul.mubr.f32.gmra.mxu0 %v6368
  %v6473 = vpop.f32.mrf.mxu0
  %v6474 = vadd.f32 0.0, %v6473
  %v6475 = vpop.f32.mrf.mxu0
  %6476 = vmatprep.mubr.f32.mxu0 0.0
  %6477 = vmatmul.mubr.f32.gmra.mxu0 %v6371
  %v6478 = vpop.f32.mrf.mxu0
  %v6479 = vadd.f32 0.0, %v6478
  %v6480 = vpop.f32.mrf.mxu0
  %6481 = vmatprep.mubr.f32.mxu0 0.0
  %6482 = vmatmul.mubr.f32.gmra.mxu0 %v6374
  %v6483 = vpop.f32.mrf.mxu0
  %v6484 = vadd.f32 0.0, %v6483
  %v6485 = vpop.f32.mrf.mxu0
  %6486 = vmatprep.mubr.f32.mxu0 0.0
  %6487 = vmatmul.mubr.f32.gmra.mxu0 %v6377
  %v6488 = vpop.f32.mrf.mxu0
  %v6489 = vadd.f32 0.0, %v6488
  %v6490 = vpop.f32.mrf.mxu0
  %6491 = vmatprep.mubr.f32.mxu0 0.0
  %6492 = vmatmul.mubr.f32.gmra.mxu0 %v6380
  %v6493 = vpop.f32.mrf.mxu0
  %v6494 = vadd.f32 0.0, %v6493
  %v6495 = vpop.f32.mrf.mxu0
  %6496 = vmatprep.mubr.f32.mxu0 0.0
  %6497 = vmatmul.mubr.f32.gmra.mxu0 %v6383
  %v6498 = vpop.f32.mrf.mxu0
  %v6499 = vadd.f32 0.0, %v6498
  %v6500 = vpop.f32.mrf.mxu0
  %6501 = vmatprep.mubr.f32.mxu0 0.0
  %6502 = vmatmul.mubr.f32.gmra.mxu0 %v6386
  %v6503 = vpop.f32.mrf.mxu0
  %v6504 = vadd.f32 0.0, %v6503
  %v6505 = vpop.f32.mrf.mxu0
  %6506 = vmatprep.mubr.f32.mxu0 0.0
  %6507 = vmatmul.mubr.f32.gmra.mxu0 %v6389
  %v6508 = vpop.f32.mrf.mxu0
  %v6509 = vadd.f32 0.0, %v6508
  %v6510 = vpop.f32.mrf.mxu0
  %6511 = vmatprep.mubr.f32.mxu0 0.0
  %6512 = vmatmul.mubr.f32.gmra.mxu0 %v6392
  %v6513 = vpop.f32.mrf.mxu0
  %v6514 = vadd.f32 0.0, %v6513
  %v6515 = vpop.f32.mrf.mxu0
  %6516 = vmatprep.mubr.f32.mxu0 0.0
  %6517 = vmatmul.mubr.f32.gmra.mxu0 %v6395
  %v6518 = vpop.f32.mrf.mxu0
  %v6519 = vadd.f32 0.0, %v6518
  %v6520 = vpop.f32.mrf.mxu0
  %6521 = vdwg.mxu0
  %v6522 = vsub.f32 %v6212, %v6464
  %v6523 = vsub.f32 %v6213, %v6469
  %v6524 = vsub.f32 %v6214, %v6474
  %v6525 = vsub.f32 %v6215, %v6479
  %v6526 = vsub.f32 %v6216, %v6484
  %v6527 = vsub.f32 %v6217, %v6489
  %v6528 = vsub.f32 %v6218, %v6494
  %v6529 = vsub.f32 %v6219, %v6499
  %v6530 = vsub.f32 %v6220, %v6504
  %v6531 = vsub.f32 %v6221, %v6509
  %v6532 = vsub.f32 %v6222, %v6514
  %v6533 = vsub.f32 %v6223, %v6519
  %v6534 = vmul.f32 %v6522, %v6522
  %v6535 = vmul.f32 %v6523, %v6523
  %v6536 = vmul.f32 %v6524, %v6524
  %v6537 = vmul.f32 %v6525, %v6525
  %v6538 = vmul.f32 %v6526, %v6526
  %v6539 = vmul.f32 %v6527, %v6527
  %v6540 = vmul.f32 %v6528, %v6528
  %v6541 = vmul.f32 %v6529, %v6529
  %v6542 = vmul.f32 %v6530, %v6530
  %v6543 = vmul.f32 %v6531, %v6531
  %v6544 = vmul.f32 %v6532, %v6532
  %v6545 = vmul.f32 %v6533, %v6533
  %6546 = vmatprep.subr.mxu0 0.0
  %6547 = vmatpush1.msra.mxu0 %v93
  %6548 = vmatprep.subr.mxu0 0.0
  %6549 = vmatpush1.msra.mxu0 %v92
  %6550 = vmatprep.subr.mxu0 0.0
  %6551 = vmatpush1.msra.mxu0 %v91
  %6552 = vmatprep.subr.mxu0 0.0
  %6553 = vmatpush1.msra.mxu0 %v90
  %6554 = vmatprep.subr.mxu0 0.0
  %6555 = vmatpush1.msra.mxu0 %v89
  %6556 = vmatprep.subr.mxu0 0.0
  %6557 = vmatpush1.msra.mxu0 %v88
  %6558 = vmatprep.subr.mxu0 0.0
  %6559 = vmatpush1.msra.mxu0 %v87
  %6560 = vmatprep.subr.mxu0 0.0
  %6561 = vmatpush1.msra.mxu0 %v86
  %6562 = vmatprep.subr.mxu0 0.0
  %6563 = vmatpush1.msra.mxu0 %v85
  %6564 = vmatprep.subr.mxu0 0.0
  %6565 = vmatpush1.msra.mxu0 %v84
  %6566 = vmatprep.subr.mxu0 0.0
  %6567 = vmatpush1.msra.mxu0 %v83
  %6568 = vmatprep.subr.mxu0 0.0
  %6569 = vmatpush1.msra.mxu0 %v82
  %6570 = vmatprep.subr.mxu0 0.0
  %6571 = vmatpush1.msra.mxu0 %v81
  %6572 = vmatprep.subr.mxu0 0.0
  %6573 = vmatpush1.msra.mxu0 %v80
  %6574 = vmatprep.subr.mxu0 0.0
  %6575 = vmatpush1.msra.mxu0 %v79
  %6576 = vmatprep.subr.mxu0 0.0
  %6577 = vmatpush1.msra.mxu0 %v78
  %6578 = vmatprep.subr.mxu0 0.0
  %6579 = vmatpush2.msra.mxu0 0.0
  %6580 = vmatprep.subr.mxu0 0.0
  %6581 = vmatpush2.msra.mxu0 0.0
  %6582 = vmatprep.subr.mxu0 0.0
  %6583 = vmatpush2.msra.mxu0 0.0
  %6584 = vmatprep.subr.mxu0 0.0
  %6585 = vmatpush2.msra.mxu0 0.0
  %6586 = vmatprep.subr.mxu0 0.0
  %6587 = vmatpush2.msra.mxu0 0.0
  %6588 = vmatprep.subr.mxu0 0.0
  %6589 = vmatpush2.msra.mxu0 0.0
  %6590 = vmatprep.subr.mxu0 0.0
  %6591 = vmatpush2.msra.mxu0 0.0
  %6592 = vmatprep.subr.mxu0 0.0
  %6593 = vmatpush2.msra.mxu0 0.0
  %6594 = vmatprep.subr.mxu0 0.0
  %6595 = vmatpush2.msra.mxu0 0.0
  %6596 = vmatprep.subr.mxu0 0.0
  %6597 = vmatpush2.msra.mxu0 0.0
  %6598 = vmatprep.subr.mxu0 0.0
  %6599 = vmatpush2.msra.mxu0 0.0
  %6600 = vmatprep.subr.mxu0 0.0
  %6601 = vmatpush2.msra.mxu0 0.0
  %6602 = vmatprep.subr.mxu0 0.0
  %6603 = vmatpush2.msra.mxu0 0.0
  %6604 = vmatprep.subr.mxu0 0.0
  %6605 = vmatpush2.msra.mxu0 0.0
  %6606 = vmatprep.subr.mxu0 0.0
  %6607 = vmatpush2.msra.mxu0 0.0
  %6608 = vmatprep.subr.mxu0 0.0
  %6609 = vmatpush2.msra.mxu0 0.0
  %6610 = vmatprep.mubr.f32.mxu0 0.0
  %6611 = vmatmul.mubr.f32.gmra.mxu0 %v6534
  %v6612 = vpop.f32.mrf.mxu0
  %v6613 = vadd.f32 0.0, %v6612
  %v6614 = vpop.f32.mrf.mxu0
  %6615 = vmatprep.mubr.f32.mxu0 0.0
  %6616 = vmatmul.mubr.f32.gmra.mxu0 %v6535
  %v6617 = vpop.f32.mrf.mxu0
  %v6618 = vadd.f32 0.0, %v6617
  %v6619 = vpop.f32.mrf.mxu0
  %6620 = vmatprep.mubr.f32.mxu0 0.0
  %6621 = vmatmul.mubr.f32.gmra.mxu0 %v6536
  %v6622 = vpop.f32.mrf.mxu0
  %v6623 = vadd.f32 0.0, %v6622
  %v6624 = vpop.f32.mrf.mxu0
  %6625 = vmatprep.mubr.f32.mxu0 0.0
  %6626 = vmatmul.mubr.f32.gmra.mxu0 %v6537
  %v6627 = vpop.f32.mrf.mxu0
  %v6628 = vadd.f32 0.0, %v6627
  %v6629 = vpop.f32.mrf.mxu0
  %6630 = vmatprep.mubr.f32.mxu0 0.0
  %6631 = vmatmul.mubr.f32.gmra.mxu0 %v6538
  %v6632 = vpop.f32.mrf.mxu0
  %v6633 = vadd.f32 0.0, %v6632
  %v6634 = vpop.f32.mrf.mxu0
  %6635 = vmatprep.mubr.f32.mxu0 0.0
  %6636 = vmatmul.mubr.f32.gmra.mxu0 %v6539
  %v6637 = vpop.f32.mrf.mxu0
  %v6638 = vadd.f32 0.0, %v6637
  %v6639 = vpop.f32.mrf.mxu0
  %6640 = vmatprep.mubr.f32.mxu0 0.0
  %6641 = vmatmul.mubr.f32.gmra.mxu0 %v6540
  %v6642 = vpop.f32.mrf.mxu0
  %v6643 = vadd.f32 0.0, %v6642
  %v6644 = vpop.f32.mrf.mxu0
  %6645 = vmatprep.mubr.f32.mxu0 0.0
  %6646 = vmatmul.mubr.f32.gmra.mxu0 %v6541
  %v6647 = vpop.f32.mrf.mxu0
  %v6648 = vadd.f32 0.0, %v6647
  %v6649 = vpop.f32.mrf.mxu0
  %6650 = vmatprep.mubr.f32.mxu0 0.0
  %6651 = vmatmul.mubr.f32.gmra.mxu0 %v6542
  %v6652 = vpop.f32.mrf.mxu0
  %v6653 = vadd.f32 0.0, %v6652
  %v6654 = vpop.f32.mrf.mxu0
  %6655 = vmatprep.mubr.f32.mxu0 0.0
  %6656 = vmatmul.mubr.f32.gmra.mxu0 %v6543
  %v6657 = vpop.f32.mrf.mxu0
  %v6658 = vadd.f32 0.0, %v6657
  %v6659 = vpop.f32.mrf.mxu0
  %6660 = vmatprep.mubr.f32.mxu0 0.0
  %6661 = vmatmul.mubr.f32.gmra.mxu0 %v6544
  %v6662 = vpop.f32.mrf.mxu0
  %v6663 = vadd.f32 0.0, %v6662
  %v6664 = vpop.f32.mrf.mxu0
  %6665 = vmatprep.mubr.f32.mxu0 0.0
  %6666 = vmatmul.mubr.f32.gmra.mxu0 %v6545
  %v6667 = vpop.f32.mrf.mxu0
  %v6668 = vadd.f32 0.0, %v6667
  %v6669 = vpop.f32.mrf.mxu0
  %6670 = vdwg.mxu0
  %v6671 = vmul.f32 %v6613, 0.015625
  %v6672 = vmul.f32 %v6618, 0.015625
  %v6673 = vmul.f32 %v6623, 0.015625
  %v6674 = vmul.f32 %v6628, 0.015625
  %v6675 = vmul.f32 %v6633, 0.015625
  %v6676 = vmul.f32 %v6638, 0.015625
  %v6677 = vmul.f32 %v6643, 0.015625
  %v6678 = vmul.f32 %v6648, 0.015625
  %v6679 = vmul.f32 %v6653, 0.015625
  %v6680 = vmul.f32 %v6658, 0.015625
  %v6681 = vmul.f32 %v6663, 0.015625
  %v6682 = vmul.f32 %v6668, 0.015625
  %v6683 = vmax.f32 %v6671, 1e-12
  %v6684 = vmax.f32 %v6672, 1e-12
  %v6685 = vmax.f32 %v6673, 1e-12
  %v6686 = vmax.f32 %v6674, 1e-12
  %v6687 = vmax.f32 %v6675, 1e-12
  %v6688 = vmax.f32 %v6676, 1e-12
  %v6689 = vmax.f32 %v6677, 1e-12
  %v6690 = vmax.f32 %v6678, 1e-12
  %v6691 = vmax.f32 %v6679, 1e-12
  %v6692 = vmax.f32 %v6680, 1e-12
  %v6693 = vmax.f32 %v6681, 1e-12
  %v6694 = vmax.f32 %v6682, 1e-12
  %v6695 = vrsqrt.pop %v6683
  %v6696 = vmul.f32 %v6683, %v6695
  %vm6697 = vcmp.eq.f32.partialorder %v6683, inf
  %v6698 = vsel %vm6697, %v6683, %v6696
  %vm6699 = vcmp.eq.f32.partialorder %v6683, 0.0
  %v6700 = vand.u32 %v6683, 2147483648
  %v6701 = vsel %vm6699, %v6700, %v6698
  %v6702 = vrsqrt.pop %v6684
  %v6703 = vmul.f32 %v6684, %v6702
  %vm6704 = vcmp.eq.f32.partialorder %v6684, inf
  %v6705 = vsel %vm6704, %v6684, %v6703
  %vm6706 = vcmp.eq.f32.partialorder %v6684, 0.0
  %v6707 = vand.u32 %v6684, 2147483648
  %v6708 = vsel %vm6706, %v6707, %v6705
  %v6709 = vrsqrt.pop %v6685
  %v6710 = vmul.f32 %v6685, %v6709
  %vm6711 = vcmp.eq.f32.partialorder %v6685, inf
  %v6712 = vsel %vm6711, %v6685, %v6710
  %vm6713 = vcmp.eq.f32.partialorder %v6685, 0.0
  %v6714 = vand.u32 %v6685, 2147483648
  %v6715 = vsel %vm6713, %v6714, %v6712
  %v6716 = vrsqrt.pop %v6686
  %v6717 = vmul.f32 %v6686, %v6716
  %vm6718 = vcmp.eq.f32.partialorder %v6686, inf
  %v6719 = vsel %vm6718, %v6686, %v6717
  %vm6720 = vcmp.eq.f32.partialorder %v6686, 0.0
  %v6721 = vand.u32 %v6686, 2147483648
  %v6722 = vsel %vm6720, %v6721, %v6719
  %v6723 = vrsqrt.pop %v6687
  %v6724 = vmul.f32 %v6687, %v6723
  %vm6725 = vcmp.eq.f32.partialorder %v6687, inf
  %v6726 = vsel %vm6725, %v6687, %v6724
  %vm6727 = vcmp.eq.f32.partialorder %v6687, 0.0
  %v6728 = vand.u32 %v6687, 2147483648
  %v6729 = vsel %vm6727, %v6728, %v6726
  %v6730 = vrsqrt.pop %v6688
  %v6731 = vmul.f32 %v6688, %v6730
  %vm6732 = vcmp.eq.f32.partialorder %v6688, inf
  %v6733 = vsel %vm6732, %v6688, %v6731
  %vm6734 = vcmp.eq.f32.partialorder %v6688, 0.0
  %v6735 = vand.u32 %v6688, 2147483648
  %v6736 = vsel %vm6734, %v6735, %v6733
  %v6737 = vrsqrt.pop %v6689
  %v6738 = vmul.f32 %v6689, %v6737
  %vm6739 = vcmp.eq.f32.partialorder %v6689, inf
  %v6740 = vsel %vm6739, %v6689, %v6738
  %vm6741 = vcmp.eq.f32.partialorder %v6689, 0.0
  %v6742 = vand.u32 %v6689, 2147483648
  %v6743 = vsel %vm6741, %v6742, %v6740
  %v6744 = vrsqrt.pop %v6690
  %v6745 = vmul.f32 %v6690, %v6744
  %vm6746 = vcmp.eq.f32.partialorder %v6690, inf
  %v6747 = vsel %vm6746, %v6690, %v6745
  %vm6748 = vcmp.eq.f32.partialorder %v6690, 0.0
  %v6749 = vand.u32 %v6690, 2147483648
  %v6750 = vsel %vm6748, %v6749, %v6747
  %v6751 = vrsqrt.pop %v6691
  %v6752 = vmul.f32 %v6691, %v6751
  %vm6753 = vcmp.eq.f32.partialorder %v6691, inf
  %v6754 = vsel %vm6753, %v6691, %v6752
  %vm6755 = vcmp.eq.f32.partialorder %v6691, 0.0
  %v6756 = vand.u32 %v6691, 2147483648
  %v6757 = vsel %vm6755, %v6756, %v6754
  %v6758 = vrsqrt.pop %v6692
  %v6759 = vmul.f32 %v6692, %v6758
  %vm6760 = vcmp.eq.f32.partialorder %v6692, inf
  %v6761 = vsel %vm6760, %v6692, %v6759
  %vm6762 = vcmp.eq.f32.partialorder %v6692, 0.0
  %v6763 = vand.u32 %v6692, 2147483648
  %v6764 = vsel %vm6762, %v6763, %v6761
  %v6765 = vrsqrt.pop %v6693
  %v6766 = vmul.f32 %v6693, %v6765
  %vm6767 = vcmp.eq.f32.partialorder %v6693, inf
  %v6768 = vsel %vm6767, %v6693, %v6766
  %vm6769 = vcmp.eq.f32.partialorder %v6693, 0.0
  %v6770 = vand.u32 %v6693, 2147483648
  %v6771 = vsel %vm6769, %v6770, %v6768
  %v6772 = vrsqrt.pop %v6694
  %v6773 = vmul.f32 %v6694, %v6772
  %vm6774 = vcmp.eq.f32.partialorder %v6694, inf
  %v6775 = vsel %vm6774, %v6694, %v6773
  %vm6776 = vcmp.eq.f32.partialorder %v6694, 0.0
  %v6777 = vand.u32 %v6694, 2147483648
  %v6778 = vsel %vm6776, %v6777, %v6775
  %s6779 = scalar_lea.vmem %s17, 8
  %v6780 = vld [vmem:[%s6779] sm:$0xf]
  %v6781 = vld [vmem:[%s6779 + $0x4] sm:$0xf]
  %v6782 = vpack.c.bf16 %v6350, %v6349
  %v6783 = vpack.c.bf16 %v6352, %v6351
  %v6784 = vpack.c.bf16 %v6354, %v6353
  %v6785 = vpack.c.bf16 %v6356, %v6355
  %v6786 = vpack.c.bf16 %v6358, %v6357
  %v6787 = vpack.c.bf16 %v6360, %v6359
  %s6788 = scalar_lea.vmem %s17, 16
  %v6789 = vld [vmem:[%s6788] sm:$0xf]
  %v6790 = vld [vmem:[%s6788 + $0x4] sm:$0xf]
  %v6791 = vpack.c.bf16 %v6708, %v6701
  %v6792 = vpack.c.bf16 %v6722, %v6715
  %v6793 = vpack.c.bf16 %v6736, %v6729
  %v6794 = vpack.c.bf16 %v6750, %v6743
  %v6795 = vpack.c.bf16 %v6764, %v6757
  %v6796 = vpack.c.bf16 %v6778, %v6771
  %v6799 = vunpack.c.l.b16 %v6789
  %v6800 = vunpack.c.l.b16 %v6790
  %v6801 = vpack.c.b16 %v6800, %v6799
  %vm6802 = vcmask 785408
  %v6804 = vsel %vm6802, %v6801, 0
  %6806 = vmatprep.subr.bf16.mxu0 0
  %6807 = vmatpush1.bf16.msra.mxu0 0
  %6808 = vmatprep.subr.bf16.mxu0 0
  %6809 = vmatpush1.bf16.msra.mxu0 0
  %6810 = vmatprep.subr.bf16.mxu0 0
  %6811 = vmatpush1.bf16.msra.mxu0 %v6796
  %6812 = vmatprep.subr.bf16.mxu0 0
  %6813 = vmatpush1.bf16.msra.mxu0 %v6795
  %6814 = vmatprep.subr.bf16.mxu0 0
  %6815 = vmatpush1.bf16.msra.mxu0 %v6794
  %6816 = vmatprep.subr.bf16.mxu0 0
  %6817 = vmatpush1.bf16.msra.mxu0 %v6793
  %6818 = vmatprep.subr.bf16.mxu0 0
  %6819 = vmatpush1.bf16.msra.mxu0 %v6792
  %6820 = vmatprep.subr.bf16.mxu0 0
  %6821 = vmatpush1.bf16.msra.mxu0 %v6791
  %6822 = vmatprep.subr.bf16.mxu0 0
  %6823 = vmatpush2.bf16.msra.mxu0 0
  %6824 = vmatprep.subr.bf16.mxu0 0
  %6825 = vmatpush2.bf16.msra.mxu0 0
  %6826 = vmatprep.subr.bf16.mxu0 0
  %6827 = vmatpush2.bf16.msra.mxu0 0
  %6828 = vmatprep.subr.bf16.mxu0 0
  %6829 = vmatpush2.bf16.msra.mxu0 0
  %6830 = vmatprep.subr.bf16.mxu0 0
  %6831 = vmatpush2.bf16.msra.mxu0 0
  %6832 = vmatprep.subr.bf16.mxu0 0
  %6833 = vmatpush2.bf16.msra.mxu0 0
  %6834 = vmatprep.subr.bf16.mxu0 0
  %6835 = vmatpush2.bf16.msra.mxu0 0
  %6836 = vmatprep.subr.bf16.mxu0 0
  %6837 = vmatpush2.bf16.msra.mxu0 0
  %6838 = vmatprep.mubr.bf16.mxu0 0
  %6839 = vmatmul.mubr.bf16.gmra.mxu0 %v6804
  %v6840 = vpop.f32.mrf.mxu0
  %v6841 = vadd.f32 0.0, %v6840
  %v6842 = vpop.f32.mrf.mxu0
  %v6843 = vpop.f32.mrf.mxu0
  %v6844 = vadd.f32 0.0, %v6843
  %v6845 = vpop.f32.mrf.mxu0
  %6846 = vdwg.mxu0
  %v6849 = vunpack.c.l.b16 %v6780
  %v6850 = vunpack.c.l.b16 %v6781
  %v6851 = vpack.c.b16 %v6850, %v6849
  %v6853 = vsel %vm6802, %v6851, 0
  %6855 = vmatprep.subr.bf16.mxu0 0
  %6856 = vmatpush1.bf16.msra.mxu0 0
  %6857 = vmatprep.subr.bf16.mxu0 0
  %6858 = vmatpush1.bf16.msra.mxu0 0
  %6859 = vmatprep.subr.bf16.mxu0 0
  %6860 = vmatpush1.bf16.msra.mxu0 %v6787
  %6861 = vmatprep.subr.bf16.mxu0 0
  %6862 = vmatpush1.bf16.msra.mxu0 %v6786
  %6863 = vmatprep.subr.bf16.mxu0 0
  %6864 = vmatpush1.bf16.msra.mxu0 %v6785
  %6865 = vmatprep.subr.bf16.mxu0 0
  %6866 = vmatpush1.bf16.msra.mxu0 %v6784
  %6867 = vmatprep.subr.bf16.mxu0 0
  %6868 = vmatpush1.bf16.msra.mxu0 %v6783
  %6869 = vmatprep.subr.bf16.mxu0 0
  %6870 = vmatpush1.bf16.msra.mxu0 %v6782
  %6871 = vmatprep.subr.bf16.mxu0 0
  %6872 = vmatpush2.bf16.msra.mxu0 0
  %6873 = vmatprep.subr.bf16.mxu0 0
  %6874 = vmatpush2.bf16.msra.mxu0 0
  %6875 = vmatprep.subr.bf16.mxu0 0
  %6876 = vmatpush2.bf16.msra.mxu0 0
  %6877 = vmatprep.subr.bf16.mxu0 0
  %6878 = vmatpush2.bf16.msra.mxu0 0
  %6879 = vmatprep.subr.bf16.mxu0 0
  %6880 = vmatpush2.bf16.msra.mxu0 0
  %6881 = vmatprep.subr.bf16.mxu0 0
  %6882 = vmatpush2.bf16.msra.mxu0 0
  %6883 = vmatprep.subr.bf16.mxu0 0
  %6884 = vmatpush2.bf16.msra.mxu0 0
  %6885 = vmatprep.subr.bf16.mxu0 0
  %6886 = vmatpush2.bf16.msra.mxu0 0
  %6887 = vmatprep.mubr.bf16.mxu0 0
  %6888 = vmatmul.mubr.bf16.gmra.mxu0 %v6853
  %v6889 = vpop.f32.mrf.mxu0
  %v6890 = vadd.f32 %v6841, %v6889
  %v6891 = vpop.f32.mrf.mxu0
  %v6892 = vpop.f32.mrf.mxu0
  %v6893 = vadd.f32 %v6844, %v6892
  %v6894 = vpop.f32.mrf.mxu0
  %6895 = vdwg.mxu0
  %v6896 = vld [vmem:[%s17] sm:$0xf]
  %v6897 = vld [vmem:[%s17 + $0x4] sm:$0xf]
  %v6898 = vpack.c.bf16 %v6213, %v6212
  %v6899 = vpack.c.bf16 %v6215, %v6214
  %v6900 = vpack.c.bf16 %v6217, %v6216
  %v6901 = vpack.c.bf16 %v6219, %v6218
  %v6902 = vpack.c.bf16 %v6221, %v6220
  %v6903 = vpack.c.bf16 %v6223, %v6222
  %v6905 = vsel %vm2257, %v6890, 0
  %v6908 = vsel %vm2257, %v6893, 0
  %6910 = vmatprep.subr.mxu0 0.0
  %6911 = vmatpush1.msra.mxu0 0.0
  %6912 = vmatprep.subr.mxu0 0.0
  %6913 = vmatpush1.msra.mxu0 0.0
  %6914 = vmatprep.subr.mxu0 0.0
  %6915 = vmatpush1.msra.mxu0 0.0
  %6916 = vmatprep.subr.mxu0 0.0
  %6917 = vmatpush1.msra.mxu0 0.0
  %6918 = vmatprep.subr.mxu0 0.0
  %6919 = vmatpush1.msra.mxu0 0.0
  %6920 = vmatprep.subr.mxu0 0.0
  %6921 = vmatpush1.msra.mxu0 0.0
  %6922 = vmatprep.subr.mxu0 0.0
  %6923 = vmatpush1.msra.mxu0 0.0
  %6924 = vmatprep.subr.mxu0 0.0
  %6925 = vmatpush1.msra.mxu0 0.0
  %6926 = vmatprep.subr.mxu0 0.0
  %6927 = vmatpush1.msra.mxu0 0.0
  %6928 = vmatprep.subr.mxu0 0.0
  %6929 = vmatpush1.msra.mxu0 0.0
  %6930 = vmatprep.subr.mxu0 0.0
  %6931 = vmatpush1.msra.mxu0 0.0
  %6932 = vmatprep.subr.mxu0 0.0
  %6933 = vmatpush1.msra.mxu0 0.0
  %6934 = vmatprep.subr.mxu0 0.0
  %6935 = vmatpush1.msra.mxu0 0.0
  %6936 = vmatprep.subr.mxu0 0.0
  %6937 = vmatpush1.msra.mxu0 0.0
  %6938 = vmatprep.subr.mxu0 0.0
  %6939 = vmatpush1.msra.mxu0 0.0
  %6940 = vmatprep.subr.mxu0 0.0
  %6941 = vmatpush1.msra.mxu0 %v2272
  %6942 = vmatprep.subr.mxu0 0.0
  %6943 = vmatpush2.msra.mxu0 0.0
  %6944 = vmatprep.subr.mxu0 0.0
  %6945 = vmatpush2.msra.mxu0 0.0
  %6946 = vmatprep.subr.mxu0 0.0
  %6947 = vmatpush2.msra.mxu0 0.0
  %6948 = vmatprep.subr.mxu0 0.0
  %6949 = vmatpush2.msra.mxu0 0.0
  %6950 = vmatprep.subr.mxu0 0.0
  %6951 = vmatpush2.msra.mxu0 0.0
  %6952 = vmatprep.subr.mxu0 0.0
  %6953 = vmatpush2.msra.mxu0 0.0
  %6954 = vmatprep.subr.mxu0 0.0
  %6955 = vmatpush2.msra.mxu0 0.0
  %6956 = vmatprep.subr.mxu0 0.0
  %6957 = vmatpush2.msra.mxu0 0.0
  %6958 = vmatprep.subr.mxu0 0.0
  %6959 = vmatpush2.msra.mxu0 0.0
  %6960 = vmatprep.subr.mxu0 0.0
  %6961 = vmatpush2.msra.mxu0 0.0
  %6962 = vmatprep.subr.mxu0 0.0
  %6963 = vmatpush2.msra.mxu0 0.0
  %6964 = vmatprep.subr.mxu0 0.0
  %6965 = vmatpush2.msra.mxu0 0.0
  %6966 = vmatprep.subr.mxu0 0.0
  %6967 = vmatpush2.msra.mxu0 0.0
  %6968 = vmatprep.subr.mxu0 0.0
  %6969 = vmatpush2.msra.mxu0 0.0
  %6970 = vmatprep.subr.mxu0 0.0
  %6971 = vmatpush2.msra.mxu0 0.0
  %6972 = vmatprep.subr.mxu0 0.0
  %6973 = vmatpush2.msra.mxu0 0.0
  %6974 = vmatprep.mubr.f32.mxu0 0.0
  %6975 = vmatmul.mubr.f32.gmra.mxu0 %v6905
  %v6976 = vpop.f32.mrf.mxu0
  %v6977 = vadd.f32 0.0, %v6976
  %v6978 = vpop.f32.mrf.mxu0
  %6979 = vmatprep.mubr.f32.mxu0 0.0
  %6980 = vmatmul.mubr.f32.gmra.mxu0 %v6908
  %v6981 = vpop.f32.mrf.mxu0
  %v6982 = vadd.f32 0.0, %v6981
  %v6983 = vpop.f32.mrf.mxu0
  %6984 = vdwg.mxu0
  %v6987 = vunpack.c.l.b16 %v6896
  %v6988 = vunpack.c.l.b16 %v6897
  %v6989 = vpack.c.b16 %v6988, %v6987
  %v6991 = vsel %vm6802, %v6989, 0
  %6993 = vmatprep.subr.bf16.mxu0 0
  %6994 = vmatpush1.bf16.msra.mxu0 0
  %6995 = vmatprep.subr.bf16.mxu0 0
  %6996 = vmatpush1.bf16.msra.mxu0 0
  %6997 = vmatprep.subr.bf16.mxu0 0
  %6998 = vmatpush1.bf16.msra.mxu0 %v6903
  %6999 = vmatprep.subr.bf16.mxu0 0
  %7000 = vmatpush1.bf16.msra.mxu0 %v6902
  %7001 = vmatprep.subr.bf16.mxu0 0
  %7002 = vmatpush1.bf16.msra.mxu0 %v6901
  %7003 = vmatprep.subr.bf16.mxu0 0
  %7004 = vmatpush1.bf16.msra.mxu0 %v6900
  %7005 = vmatprep.subr.bf16.mxu0 0
  %7006 = vmatpush1.bf16.msra.mxu0 %v6899
  %7007 = vmatprep.subr.bf16.mxu0 0
  %7008 = vmatpush1.bf16.msra.mxu0 %v6898
  %7009 = vmatprep.subr.bf16.mxu0 0
  %7010 = vmatpush2.bf16.msra.mxu0 0
  %7011 = vmatprep.subr.bf16.mxu0 0
  %7012 = vmatpush2.bf16.msra.mxu0 0
  %7013 = vmatprep.subr.bf16.mxu0 0
  %7014 = vmatpush2.bf16.msra.mxu0 0
  %7015 = vmatprep.subr.bf16.mxu0 0
  %7016 = vmatpush2.bf16.msra.mxu0 0
  %7017 = vmatprep.subr.bf16.mxu0 0
  %7018 = vmatpush2.bf16.msra.mxu0 0
  %7019 = vmatprep.subr.bf16.mxu0 0
  %7020 = vmatpush2.bf16.msra.mxu0 0
  %7021 = vmatprep.subr.bf16.mxu0 0
  %7022 = vmatpush2.bf16.msra.mxu0 0
  %7023 = vmatprep.subr.bf16.mxu0 0
  %7024 = vmatpush2.bf16.msra.mxu0 0
  %7025 = vmatprep.mubr.bf16.mxu0 0
  %7026 = vmatmul.mubr.bf16.gmra.mxu0 %v6991
  %v7027 = vpop.f32.mrf.mxu0
  %v7028 = vadd.f32 %v6977, %v7027
  %v7029 = vpop.f32.mrf.mxu0
  %v7030 = vpop.f32.mrf.mxu0
  %v7031 = vadd.f32 %v6982, %v7030
  %v7032 = vpop.f32.mrf.mxu0
  %7033 = vdwg.mxu0
  %v7034 = vld [vmem:[%s18] sm:$0xff]
  %v7035 = vld [vmem:[%s18 + $0x8] sm:$0xff]
  %7037 = vset.pattern.permute.xlu0 0
  %7038 = vperm.xlu0 %7037, %v7034
  %v7039 = vpop.permute.xlu0 %7038
  %7042 = vset.pattern.permute.xlu0 0
  %7043 = vperm.xlu0 %7042, %v7035
  %v7044 = vpop.permute.xlu0 %7043
  %v7046 = vadd.f32 %v7028, %v7039
  %v7047 = vadd.f32 %v7031, %v7044
  %v7048 = vmax.f32 %v7046, 0.0
  %v7049 = vmax.f32 %v7047, 0.0
  %7050 = vadd.xlane.f32.xlu0 %v7048
  %v7051 = vpop.xlane.xlu0 %7050
  %7052 = vadd.xlane.f32.xlu0 %v7049
  %v7053 = vpop.xlane.xlu0 %7052
  %v7054 = vmul.f32 %v7051, %v756
  %v7055 = vmul.f32 %v7053, %v756
  %v7056 = vsub.f32 %v7048, %v7054
  %v7057 = vsub.f32 %v7049, %v7055
  %v7058 = vmul.f32 %v7056, %v7056
  %v7059 = vmul.f32 %v7057, %v7057
  %7060 = vadd.xlane.f32.xlu0 %v7058
  %v7061 = vpop.xlane.xlu0 %7060
  %7062 = vadd.xlane.f32.xlu0 %v7059
  %v7063 = vpop.xlane.xlu0 %7062
  %v7064 = vmul.f32 %v7061, %v756
  %v7065 = vmul.f32 %v7063, %v756
  %v7066 = vadd.f32 %v7064, 1e-05
  %v7067 = vadd.f32 %v7065, 1e-05
  %v7068 = vrsqrt.pop %v7066
  %v7069 = vrsqrt.pop %v7067
  %v7070 = vmul.f32 %v7056, %v7068
  %v7071 = vmul.f32 %v7057, %v7069
  %7072 = vset.pattern.permute.xlu0 1
  %7073 = vperm.xlu0 %7072, %v7034
  %v7074 = vpop.permute.xlu0 %7073
  %7076 = vset.pattern.permute.xlu0 1
  %7077 = vperm.xlu0 %7076, %v7035
  %v7078 = vpop.permute.xlu0 %7077
  %v7080 = vmul.f32 %v7070, %v7074
  %v7081 = vmul.f32 %v7071, %v7078
  %7082 = vset.pattern.permute.xlu0 2
  %7083 = vperm.xlu0 %7082, %v7034
  %v7084 = vpop.permute.xlu0 %7083
  %7086 = vset.pattern.permute.xlu0 2
  %7087 = vperm.xlu0 %7086, %v7035
  %v7088 = vpop.permute.xlu0 %7087
  %v7090 = vadd.f32 %v7080, %v7084
  %v7091 = vadd.f32 %v7081, %v7088
  %v7092 = vtanh.pop %v7090
  %v7093 = vtanh.pop %v7091
  %v7094 = vld [vmem:[%s19] sm:$0xf]
  %v7095 = vld [vmem:[%s19 + $0x4] sm:$0xf]
  %v7096 = vld [vmem:[%s19 + $0x8] sm:$0xf]
  %v7097 = vld [vmem:[%s19 + $0xc] sm:$0xf]
  %v7098 = vld [vmem:[%s19 + $0x10] sm:$0xf]
  %v7099 = vld [vmem:[%s19 + $0x14] sm:$0xf]
  %v7100 = vld [vmem:[%s19 + $0x18] sm:$0xf]
  %v7101 = vld [vmem:[%s19 + $0x1c] sm:$0xf]
  %v7102 = vld [vmem:[%s19 + $0x20] sm:$0xf]
  %v7103 = vld [vmem:[%s19 + $0x24] sm:$0xf]
  %v7104 = vld [vmem:[%s19 + $0x28] sm:$0xf]
  %v7105 = vld [vmem:[%s19 + $0x2c] sm:$0xf]
  %v7106 = vpack.c.bf16 %v7093, %v7092
  %v7107 = vld [vmem:[%s20] sm:$0xff]
  %v7108 = vld [vmem:[%s20 + $0x8] sm:$0xff]
  %v7109 = vld [vmem:[%s20 + $0x10] sm:$0xff]
  %v7110 = vld [vmem:[%s20 + $0x18] sm:$0xff]
  %v7111 = vld [vmem:[%s20 + $0x20] sm:$0xff]
  %v7112 = vld [vmem:[%s20 + $0x28] sm:$0xff]
  %v7113 = vld [vmem:[%s20 + $0x30] sm:$0xff]
  %v7114 = vld [vmem:[%s20 + $0x38] sm:$0xff]
  %v7115 = vld [vmem:[%s20 + $0x40] sm:$0xff]
  %v7116 = vld [vmem:[%s20 + $0x48] sm:$0xff]
  %v7117 = vld [vmem:[%s20 + $0x50] sm:$0xff]
  %v7118 = vld [vmem:[%s20 + $0x58] sm:$0xff]
  %7120 = vset.pattern.permute.xlu0 0
  %7121 = vperm.xlu0 %7120, %v7107
  %v7122 = vpop.permute.xlu0 %7121
  %7125 = vset.pattern.permute.xlu0 0
  %7126 = vperm.xlu0 %7125, %v7108
  %v7127 = vpop.permute.xlu0 %7126
  %7130 = vset.pattern.permute.xlu0 0
  %7131 = vperm.xlu0 %7130, %v7109
  %v7132 = vpop.permute.xlu0 %7131
  %7135 = vset.pattern.permute.xlu0 0
  %7136 = vperm.xlu0 %7135, %v7110
  %v7137 = vpop.permute.xlu0 %7136
  %7140 = vset.pattern.permute.xlu0 0
  %7141 = vperm.xlu0 %7140, %v7111
  %v7142 = vpop.permute.xlu0 %7141
  %7145 = vset.pattern.permute.xlu0 0
  %7146 = vperm.xlu0 %7145, %v7112
  %v7147 = vpop.permute.xlu0 %7146
  %7150 = vset.pattern.permute.xlu0 0
  %7151 = vperm.xlu0 %7150, %v7113
  %v7152 = vpop.permute.xlu0 %7151
  %7155 = vset.pattern.permute.xlu0 0
  %7156 = vperm.xlu0 %7155, %v7114
  %v7157 = vpop.permute.xlu0 %7156
  %7160 = vset.pattern.permute.xlu0 0
  %7161 = vperm.xlu0 %7160, %v7115
  %v7162 = vpop.permute.xlu0 %7161
  %7165 = vset.pattern.permute.xlu0 0
  %7166 = vperm.xlu0 %7165, %v7116
  %v7167 = vpop.permute.xlu0 %7166
  %7170 = vset.pattern.permute.xlu0 0
  %7171 = vperm.xlu0 %7170, %v7117
  %v7172 = vpop.permute.xlu0 %7171
  %7175 = vset.pattern.permute.xlu0 0
  %7176 = vperm.xlu0 %7175, %v7118
  %v7177 = vpop.permute.xlu0 %7176
  %v7191 = vunpack.c.l.b16 %v7094
  %v7192 = vunpack.c.l.b16 %v7095
  %v7193 = vunpack.c.l.b16 %v7096
  %v7194 = vunpack.c.l.b16 %v7097
  %v7195 = vunpack.c.l.b16 %v7098
  %v7196 = vunpack.c.l.b16 %v7099
  %v7197 = vunpack.c.l.b16 %v7100
  %v7198 = vunpack.c.l.b16 %v7101
  %v7199 = vunpack.c.l.b16 %v7102
  %v7200 = vunpack.c.l.b16 %v7103
  %v7201 = vunpack.c.l.b16 %v7104
  %v7202 = vunpack.c.l.b16 %v7105
  %v7203 = vpack.c.b16 %v7192, %v7191
  %v7204 = vpack.c.b16 %v7194, %v7193
  %v7205 = vpack.c.b16 %v7196, %v7195
  %v7206 = vpack.c.b16 %v7198, %v7197
  %v7207 = vpack.c.b16 %v7200, %v7199
  %v7208 = vpack.c.b16 %v7202, %v7201
  %v7210 = vsel %vm2177, %v7203, 0
  %v7213 = vsel %vm2177, %v7204, 0
  %v7216 = vsel %vm2177, %v7205, 0
  %v7219 = vsel %vm2177, %v7206, 0
  %v7222 = vsel %vm2177, %v7207, 0
  %v7225 = vsel %vm2177, %v7208, 0
  %7227 = vmatprep.subr.bf16.mxu0 0
  %7228 = vmatpush1.bf16.msra.mxu0 0
  %7229 = vmatprep.subr.bf16.mxu0 0
  %7230 = vmatpush1.bf16.msra.mxu0 0
  %7231 = vmatprep.subr.bf16.mxu0 0
  %7232 = vmatpush1.bf16.msra.mxu0 0
  %7233 = vmatprep.subr.bf16.mxu0 0
  %7234 = vmatpush1.bf16.msra.mxu0 0
  %7235 = vmatprep.subr.bf16.mxu0 0
  %7236 = vmatpush1.bf16.msra.mxu0 0
  %7237 = vmatprep.subr.bf16.mxu0 0
  %7238 = vmatpush1.bf16.msra.mxu0 0
  %7239 = vmatprep.subr.bf16.mxu0 0
  %7240 = vmatpush1.bf16.msra.mxu0 0
  %7241 = vmatprep.subr.bf16.mxu0 0
  %7242 = vmatpush1.bf16.msra.mxu0 %v7106
  %7243 = vmatprep.subr.bf16.mxu0 0
  %7244 = vmatpush2.bf16.msra.mxu0 0
  %7245 = vmatprep.subr.bf16.mxu0 0
  %7246 = vmatpush2.bf16.msra.mxu0 0
  %7247 = vmatprep.subr.bf16.mxu0 0
  %7248 = vmatpush2.bf16.msra.mxu0 0
  %7249 = vmatprep.subr.bf16.mxu0 0
  %7250 = vmatpush2.bf16.msra.mxu0 0
  %7251 = vmatprep.subr.bf16.mxu0 0
  %7252 = vmatpush2.bf16.msra.mxu0 0
  %7253 = vmatprep.subr.bf16.mxu0 0
  %7254 = vmatpush2.bf16.msra.mxu0 0
  %7255 = vmatprep.subr.bf16.mxu0 0
  %7256 = vmatpush2.bf16.msra.mxu0 0
  %7257 = vmatprep.subr.bf16.mxu0 0
  %7258 = vmatpush2.bf16.msra.mxu0 0
  %7259 = vmatprep.mubr.bf16.mxu0 0
  %7260 = vmatmul.mubr.bf16.gmra.mxu0 %v7210
  %v7261 = vpop.f32.mrf.mxu0
  %v7262 = vadd.f32 %v7122, %v7261
  %v7263 = vpop.f32.mrf.mxu0
  %v7264 = vpop.f32.mrf.mxu0
  %v7265 = vadd.f32 %v7127, %v7264
  %v7266 = vpop.f32.mrf.mxu0
  %7267 = vmatprep.mubr.bf16.mxu0 0
  %7268 = vmatmul.mubr.bf16.gmra.mxu0 %v7213
  %v7269 = vpop.f32.mrf.mxu0
  %v7270 = vadd.f32 %v7132, %v7269
  %v7271 = vpop.f32.mrf.mxu0
  %v7272 = vpop.f32.mrf.mxu0
  %v7273 = vadd.f32 %v7137, %v7272
  %v7274 = vpop.f32.mrf.mxu0
  %7275 = vmatprep.mubr.bf16.mxu0 0
  %7276 = vmatmul.mubr.bf16.gmra.mxu0 %v7216
  %v7277 = vpop.f32.mrf.mxu0
  %v7278 = vadd.f32 %v7142, %v7277
  %v7279 = vpop.f32.mrf.mxu0
  %v7280 = vpop.f32.mrf.mxu0
  %v7281 = vadd.f32 %v7147, %v7280
  %v7282 = vpop.f32.mrf.mxu0
  %7283 = vmatprep.mubr.bf16.mxu0 0
  %7284 = vmatmul.mubr.bf16.gmra.mxu0 %v7219
  %v7285 = vpop.f32.mrf.mxu0
  %v7286 = vadd.f32 %v7152, %v7285
  %v7287 = vpop.f32.mrf.mxu0
  %v7288 = vpop.f32.mrf.mxu0
  %v7289 = vadd.f32 %v7157, %v7288
  %v7290 = vpop.f32.mrf.mxu0
  %7291 = vmatprep.mubr.bf16.mxu0 0
  %7292 = vmatmul.mubr.bf16.gmra.mxu0 %v7222
  %v7293 = vpop.f32.mrf.mxu0
  %v7294 = vadd.f32 %v7162, %v7293
  %v7295 = vpop.f32.mrf.mxu0
  %v7296 = vpop.f32.mrf.mxu0
  %v7297 = vadd.f32 %v7167, %v7296
  %v7298 = vpop.f32.mrf.mxu0
  %7299 = vmatprep.mubr.bf16.mxu0 0
  %7300 = vmatmul.mubr.bf16.gmra.mxu0 %v7225
  %v7301 = vpop.f32.mrf.mxu0
  %v7302 = vadd.f32 %v7172, %v7301
  %v7303 = vpop.f32.mrf.mxu0
  %v7304 = vpop.f32.mrf.mxu0
  %v7305 = vadd.f32 %v7177, %v7304
  %v7306 = vpop.f32.mrf.mxu0
  %7307 = vdwg.mxu0
  %7308 = vmax.xlane.f32.xlu0 %v7262
  %v7309 = vpop.xlane.xlu0 %7308
  %7310 = vmax.xlane.f32.xlu0 %v7265
  %v7311 = vpop.xlane.xlu0 %7310
  %7312 = vmax.xlane.f32.xlu0 %v7270
  %v7313 = vpop.xlane.xlu0 %7312
  %7314 = vmax.xlane.f32.xlu0 %v7273
  %v7315 = vpop.xlane.xlu0 %7314
  %7316 = vmax.xlane.f32.xlu0 %v7278
  %v7317 = vpop.xlane.xlu0 %7316
  %7318 = vmax.xlane.f32.xlu0 %v7281
  %v7319 = vpop.xlane.xlu0 %7318
  %7320 = vmax.xlane.f32.xlu0 %v7286
  %v7321 = vpop.xlane.xlu0 %7320
  %7322 = vmax.xlane.f32.xlu0 %v7289
  %v7323 = vpop.xlane.xlu0 %7322
  %7324 = vmax.xlane.f32.xlu0 %v7294
  %v7325 = vpop.xlane.xlu0 %7324
  %7326 = vmax.xlane.f32.xlu0 %v7297
  %v7327 = vpop.xlane.xlu0 %7326
  %7328 = vmax.xlane.f32.xlu0 %v7302
  %v7329 = vpop.xlane.xlu0 %7328
  %7330 = vmax.xlane.f32.xlu0 %v7305
  %v7331 = vpop.xlane.xlu0 %7330
  %v7332 = vsub.f32 %v7262, %v7309
  %v7333 = vsub.f32 %v7265, %v7311
  %v7334 = vsub.f32 %v7270, %v7313
  %v7335 = vsub.f32 %v7273, %v7315
  %v7336 = vsub.f32 %v7278, %v7317
  %v7337 = vsub.f32 %v7281, %v7319
  %v7338 = vsub.f32 %v7286, %v7321
  %v7339 = vsub.f32 %v7289, %v7323
  %v7340 = vsub.f32 %v7294, %v7325
  %v7341 = vsub.f32 %v7297, %v7327
  %v7342 = vsub.f32 %v7302, %v7329
  %v7343 = vsub.f32 %v7305, %v7331
  %v7344 = vmul.f32 %v7332, 1.442695
  %v7345 = vpow.pop %v7344
  %v7346 = vmul.f32 %v7333, 1.442695
  %v7347 = vpow.pop %v7346
  %v7348 = vmul.f32 %v7334, 1.442695
  %v7349 = vpow.pop %v7348
  %v7350 = vmul.f32 %v7335, 1.442695
  %v7351 = vpow.pop %v7350
  %v7352 = vmul.f32 %v7336, 1.442695
  %v7353 = vpow.pop %v7352
  %v7354 = vmul.f32 %v7337, 1.442695
  %v7355 = vpow.pop %v7354
  %v7356 = vmul.f32 %v7338, 1.442695
  %v7357 = vpow.pop %v7356
  %v7358 = vmul.f32 %v7339, 1.442695
  %v7359 = vpow.pop %v7358
  %v7360 = vmul.f32 %v7340, 1.442695
  %v7361 = vpow.pop %v7360
  %v7362 = vmul.f32 %v7341, 1.442695
  %v7363 = vpow.pop %v7362
  %v7364 = vmul.f32 %v7342, 1.442695
  %v7365 = vpow.pop %v7364
  %v7366 = vmul.f32 %v7343, 1.442695
  %v7367 = vpow.pop %v7366
  %7368 = vmatprep.subr.mxu0 0.0
  %7369 = vmatpush1.msra.mxu0 %v93
  %7370 = vmatprep.subr.mxu0 0.0
  %7371 = vmatpush1.msra.mxu0 %v92
  %7372 = vmatprep.subr.mxu0 0.0
  %7373 = vmatpush1.msra.mxu0 %v91
  %7374 = vmatprep.subr.mxu0 0.0
  %7375 = vmatpush1.msra.mxu0 %v90
  %7376 = vmatprep.subr.mxu0 0.0
  %7377 = vmatpush1.msra.mxu0 %v89
  %7378 = vmatprep.subr.mxu0 0.0
  %7379 = vmatpush1.msra.mxu0 %v88
  %7380 = vmatprep.subr.mxu0 0.0
  %7381 = vmatpush1.msra.mxu0 %v87
  %7382 = vmatprep.subr.mxu0 0.0
  %7383 = vmatpush1.msra.mxu0 %v86
  %7384 = vmatprep.subr.mxu0 0.0
  %7385 = vmatpush1.msra.mxu0 %v85
  %7386 = vmatprep.subr.mxu0 0.0
  %7387 = vmatpush1.msra.mxu0 %v84
  %7388 = vmatprep.subr.mxu0 0.0
  %7389 = vmatpush1.msra.mxu0 %v83
  %7390 = vmatprep.subr.mxu0 0.0
  %7391 = vmatpush1.msra.mxu0 %v82
  %7392 = vmatprep.subr.mxu0 0.0
  %7393 = vmatpush1.msra.mxu0 %v81
  %7394 = vmatprep.subr.mxu0 0.0
  %7395 = vmatpush1.msra.mxu0 %v80
  %7396 = vmatprep.subr.mxu0 0.0
  %7397 = vmatpush1.msra.mxu0 %v79
  %7398 = vmatprep.subr.mxu0 0.0
  %7399 = vmatpush1.msra.mxu0 %v78
  %7400 = vmatprep.subr.mxu0 0.0
  %7401 = vmatpush2.msra.mxu0 0.0
  %7402 = vmatprep.subr.mxu0 0.0
  %7403 = vmatpush2.msra.mxu0 0.0
  %7404 = vmatprep.subr.mxu0 0.0
  %7405 = vmatpush2.msra.mxu0 0.0
  %7406 = vmatprep.subr.mxu0 0.0
  %7407 = vmatpush2.msra.mxu0 0.0
  %7408 = vmatprep.subr.mxu0 0.0
  %7409 = vmatpush2.msra.mxu0 0.0
  %7410 = vmatprep.subr.mxu0 0.0
  %7411 = vmatpush2.msra.mxu0 0.0
  %7412 = vmatprep.subr.mxu0 0.0
  %7413 = vmatpush2.msra.mxu0 0.0
  %7414 = vmatprep.subr.mxu0 0.0
  %7415 = vmatpush2.msra.mxu0 0.0
  %7416 = vmatprep.subr.mxu0 0.0
  %7417 = vmatpush2.msra.mxu0 0.0
  %7418 = vmatprep.subr.mxu0 0.0
  %7419 = vmatpush2.msra.mxu0 0.0
  %7420 = vmatprep.subr.mxu0 0.0
  %7421 = vmatpush2.msra.mxu0 0.0
  %7422 = vmatprep.subr.mxu0 0.0
  %7423 = vmatpush2.msra.mxu0 0.0
  %7424 = vmatprep.subr.mxu0 0.0
  %7425 = vmatpush2.msra.mxu0 0.0
  %7426 = vmatprep.subr.mxu0 0.0
  %7427 = vmatpush2.msra.mxu0 0.0
  %7428 = vmatprep.subr.mxu0 0.0
  %7429 = vmatpush2.msra.mxu0 0.0
  %7430 = vmatprep.subr.mxu0 0.0
  %7431 = vmatpush2.msra.mxu0 0.0
  %7432 = vmatprep.mubr.f32.mxu0 0.0
  %7433 = vmatmul.mubr.f32.gmra.mxu0 %v7345
  %v7434 = vpop.f32.mrf.mxu0
  %v7435 = vadd.f32 0.0, %v7434
  %v7436 = vpop.f32.mrf.mxu0
  %7437 = vmatprep.mubr.f32.mxu0 0.0
  %7438 = vmatmul.mubr.f32.gmra.mxu0 %v7347
  %v7439 = vpop.f32.mrf.mxu0
  %v7440 = vadd.f32 0.0, %v7439
  %v7441 = vpop.f32.mrf.mxu0
  %7442 = vmatprep.mubr.f32.mxu0 0.0
  %7443 = vmatmul.mubr.f32.gmra.mxu0 %v7349
  %v7444 = vpop.f32.mrf.mxu0
  %v7445 = vadd.f32 0.0, %v7444
  %v7446 = vpop.f32.mrf.mxu0
  %7447 = vmatprep.mubr.f32.mxu0 0.0
  %7448 = vmatmul.mubr.f32.gmra.mxu0 %v7351
  %v7449 = vpop.f32.mrf.mxu0
  %v7450 = vadd.f32 0.0, %v7449
  %v7451 = vpop.f32.mrf.mxu0
  %7452 = vmatprep.mubr.f32.mxu0 0.0
  %7453 = vmatmul.mubr.f32.gmra.mxu0 %v7353
  %v7454 = vpop.f32.mrf.mxu0
  %v7455 = vadd.f32 0.0, %v7454
  %v7456 = vpop.f32.mrf.mxu0
  %7457 = vmatprep.mubr.f32.mxu0 0.0
  %7458 = vmatmul.mubr.f32.gmra.mxu0 %v7355
  %v7459 = vpop.f32.mrf.mxu0
  %v7460 = vadd.f32 0.0, %v7459
  %v7461 = vpop.f32.mrf.mxu0
  %7462 = vmatprep.mubr.f32.mxu0 0.0
  %7463 = vmatmul.mubr.f32.gmra.mxu0 %v7357
  %v7464 = vpop.f32.mrf.mxu0
  %v7465 = vadd.f32 0.0, %v7464
  %v7466 = vpop.f32.mrf.mxu0
  %7467 = vmatprep.mubr.f32.mxu0 0.0
  %7468 = vmatmul.mubr.f32.gmra.mxu0 %v7359
  %v7469 = vpop.f32.mrf.mxu0
  %v7470 = vadd.f32 0.0, %v7469
  %v7471 = vpop.f32.mrf.mxu0
  %7472 = vmatprep.mubr.f32.mxu0 0.0
  %7473 = vmatmul.mubr.f32.gmra.mxu0 %v7361
  %v7474 = vpop.f32.mrf.mxu0
  %v7475 = vadd.f32 0.0, %v7474
  %v7476 = vpop.f32.mrf.mxu0
  %7477 = vmatprep.mubr.f32.mxu0 0.0
  %7478 = vmatmul.mubr.f32.gmra.mxu0 %v7363
  %v7479 = vpop.f32.mrf.mxu0
  %v7480 = vadd.f32 0.0, %v7479
  %v7481 = vpop.f32.mrf.mxu0
  %7482 = vmatprep.mubr.f32.mxu0 0.0
  %7483 = vmatmul.mubr.f32.gmra.mxu0 %v7365
  %v7484 = vpop.f32.mrf.mxu0
  %v7485 = vadd.f32 0.0, %v7484
  %v7486 = vpop.f32.mrf.mxu0
  %7487 = vmatprep.mubr.f32.mxu0 0.0
  %7488 = vmatmul.mubr.f32.gmra.mxu0 %v7367
  %v7489 = vpop.f32.mrf.mxu0
  %v7490 = vadd.f32 0.0, %v7489
  %v7491 = vpop.f32.mrf.mxu0
  %7492 = vdwg.mxu0
  %v7493 = vrcp.pop %v7435
  %v7494 = vrcp.pop %v7440
  %v7495 = vrcp.pop %v7445
  %v7496 = vrcp.pop %v7450
  %v7497 = vrcp.pop %v7455
  %v7498 = vrcp.pop %v7460
  %v7499 = vrcp.pop %v7465
  %v7500 = vrcp.pop %v7470
  %v7501 = vrcp.pop %v7475
  %v7502 = vrcp.pop %v7480
  %v7503 = vrcp.pop %v7485
  %v7504 = vrcp.pop %v7490
  %v7506 = vsel %vm2257, %v7493, 0
  %v7509 = vsel %vm2257, %v7494, 0
  %v7512 = vsel %vm2257, %v7495, 0
  %v7515 = vsel %vm2257, %v7496, 0
  %v7518 = vsel %vm2257, %v7497, 0
  %v7521 = vsel %vm2257, %v7498, 0
  %v7524 = vsel %vm2257, %v7499, 0
  %v7527 = vsel %vm2257, %v7500, 0
  %v7530 = vsel %vm2257, %v7501, 0
  %v7533 = vsel %vm2257, %v7502, 0
  %v7536 = vsel %vm2257, %v7503, 0
  %v7539 = vsel %vm2257, %v7504, 0
  %7541 = vmatprep.subr.mxu0 0.0
  %7542 = vmatpush1.msra.mxu0 0.0
  %7543 = vmatprep.subr.mxu0 0.0
  %7544 = vmatpush1.msra.mxu0 0.0
  %7545 = vmatprep.subr.mxu0 0.0
  %7546 = vmatpush1.msra.mxu0 0.0
  %7547 = vmatprep.subr.mxu0 0.0
  %7548 = vmatpush1.msra.mxu0 0.0
  %7549 = vmatprep.subr.mxu0 0.0
  %7550 = vmatpush1.msra.mxu0 0.0
  %7551 = vmatprep.subr.mxu0 0.0
  %7552 = vmatpush1.msra.mxu0 0.0
  %7553 = vmatprep.subr.mxu0 0.0
  %7554 = vmatpush1.msra.mxu0 0.0
  %7555 = vmatprep.subr.mxu0 0.0
  %7556 = vmatpush1.msra.mxu0 0.0
  %7557 = vmatprep.subr.mxu0 0.0
  %7558 = vmatpush1.msra.mxu0 0.0
  %7559 = vmatprep.subr.mxu0 0.0
  %7560 = vmatpush1.msra.mxu0 0.0
  %7561 = vmatprep.subr.mxu0 0.0
  %7562 = vmatpush1.msra.mxu0 0.0
  %7563 = vmatprep.subr.mxu0 0.0
  %7564 = vmatpush1.msra.mxu0 0.0
  %7565 = vmatprep.subr.mxu0 0.0
  %7566 = vmatpush1.msra.mxu0 0.0
  %7567 = vmatprep.subr.mxu0 0.0
  %7568 = vmatpush1.msra.mxu0 0.0
  %7569 = vmatprep.subr.mxu0 0.0
  %7570 = vmatpush1.msra.mxu0 0.0
  %7571 = vmatprep.subr.mxu0 0.0
  %7572 = vmatpush1.msra.mxu0 %v2272
  %7573 = vmatprep.subr.mxu0 0.0
  %7574 = vmatpush2.msra.mxu0 0.0
  %7575 = vmatprep.subr.mxu0 0.0
  %7576 = vmatpush2.msra.mxu0 0.0
  %7577 = vmatprep.subr.mxu0 0.0
  %7578 = vmatpush2.msra.mxu0 0.0
  %7579 = vmatprep.subr.mxu0 0.0
  %7580 = vmatpush2.msra.mxu0 0.0
  %7581 = vmatprep.subr.mxu0 0.0
  %7582 = vmatpush2.msra.mxu0 0.0
  %7583 = vmatprep.subr.mxu0 0.0
  %7584 = vmatpush2.msra.mxu0 0.0
  %7585 = vmatprep.subr.mxu0 0.0
  %7586 = vmatpush2.msra.mxu0 0.0
  %7587 = vmatprep.subr.mxu0 0.0
  %7588 = vmatpush2.msra.mxu0 0.0
  %7589 = vmatprep.subr.mxu0 0.0
  %7590 = vmatpush2.msra.mxu0 0.0
  %7591 = vmatprep.subr.mxu0 0.0
  %7592 = vmatpush2.msra.mxu0 0.0
  %7593 = vmatprep.subr.mxu0 0.0
  %7594 = vmatpush2.msra.mxu0 0.0
  %7595 = vmatprep.subr.mxu0 0.0
  %7596 = vmatpush2.msra.mxu0 0.0
  %7597 = vmatprep.subr.mxu0 0.0
  %7598 = vmatpush2.msra.mxu0 0.0
  %7599 = vmatprep.subr.mxu0 0.0
  %7600 = vmatpush2.msra.mxu0 0.0
  %7601 = vmatprep.subr.mxu0 0.0
  %7602 = vmatpush2.msra.mxu0 0.0
  %7603 = vmatprep.subr.mxu0 0.0
  %7604 = vmatpush2.msra.mxu0 0.0
  %7605 = vmatprep.mubr.f32.mxu0 0.0
  %7606 = vmatmul.mubr.f32.gmra.mxu0 %v7506
  %v7607 = vpop.f32.mrf.mxu0
  %v7608 = vadd.f32 0.0, %v7607
  %v7609 = vpop.f32.mrf.mxu0
  %7610 = vmatprep.mubr.f32.mxu0 0.0
  %7611 = vmatmul.mubr.f32.gmra.mxu0 %v7509
  %v7612 = vpop.f32.mrf.mxu0
  %v7613 = vadd.f32 0.0, %v7612
  %v7614 = vpop.f32.mrf.mxu0
  %7615 = vmatprep.mubr.f32.mxu0 0.0
  %7616 = vmatmul.mubr.f32.gmra.mxu0 %v7512
  %v7617 = vpop.f32.mrf.mxu0
  %v7618 = vadd.f32 0.0, %v7617
  %v7619 = vpop.f32.mrf.mxu0
  %7620 = vmatprep.mubr.f32.mxu0 0.0
  %7621 = vmatmul.mubr.f32.gmra.mxu0 %v7515
  %v7622 = vpop.f32.mrf.mxu0
  %v7623 = vadd.f32 0.0, %v7622
  %v7624 = vpop.f32.mrf.mxu0
  %7625 = vmatprep.mubr.f32.mxu0 0.0
  %7626 = vmatmul.mubr.f32.gmra.mxu0 %v7518
  %v7627 = vpop.f32.mrf.mxu0
  %v7628 = vadd.f32 0.0, %v7627
  %v7629 = vpop.f32.mrf.mxu0
  %7630 = vmatprep.mubr.f32.mxu0 0.0
  %7631 = vmatmul.mubr.f32.gmra.mxu0 %v7521
  %v7632 = vpop.f32.mrf.mxu0
  %v7633 = vadd.f32 0.0, %v7632
  %v7634 = vpop.f32.mrf.mxu0
  %7635 = vmatprep.mubr.f32.mxu0 0.0
  %7636 = vmatmul.mubr.f32.gmra.mxu0 %v7524
  %v7637 = vpop.f32.mrf.mxu0
  %v7638 = vadd.f32 0.0, %v7637
  %v7639 = vpop.f32.mrf.mxu0
  %7640 = vmatprep.mubr.f32.mxu0 0.0
  %7641 = vmatmul.mubr.f32.gmra.mxu0 %v7527
  %v7642 = vpop.f32.mrf.mxu0
  %v7643 = vadd.f32 0.0, %v7642
  %v7644 = vpop.f32.mrf.mxu0
  %7645 = vmatprep.mubr.f32.mxu0 0.0
  %7646 = vmatmul.mubr.f32.gmra.mxu0 %v7530
  %v7647 = vpop.f32.mrf.mxu0
  %v7648 = vadd.f32 0.0, %v7647
  %v7649 = vpop.f32.mrf.mxu0
  %7650 = vmatprep.mubr.f32.mxu0 0.0
  %7651 = vmatmul.mubr.f32.gmra.mxu0 %v7533
  %v7652 = vpop.f32.mrf.mxu0
  %v7653 = vadd.f32 0.0, %v7652
  %v7654 = vpop.f32.mrf.mxu0
  %7655 = vmatprep.mubr.f32.mxu0 0.0
  %7656 = vmatmul.mubr.f32.gmra.mxu0 %v7536
  %v7657 = vpop.f32.mrf.mxu0
  %v7658 = vadd.f32 0.0, %v7657
  %v7659 = vpop.f32.mrf.mxu0
  %7660 = vmatprep.mubr.f32.mxu0 0.0
  %7661 = vmatmul.mubr.f32.gmra.mxu0 %v7539
  %v7662 = vpop.f32.mrf.mxu0
  %v7663 = vadd.f32 0.0, %v7662
  %v7664 = vpop.f32.mrf.mxu0
  %7665 = vdwg.mxu0
  %v7666 = vmul.f32 %v7345, %v7608
  %v7667 = vmul.f32 %v7347, %v7613
  %v7668 = vmul.f32 %v7349, %v7618
  %v7669 = vmul.f32 %v7351, %v7623
  %v7670 = vmul.f32 %v7353, %v7628
  %v7671 = vmul.f32 %v7355, %v7633
  %v7672 = vmul.f32 %v7357, %v7638
  %v7673 = vmul.f32 %v7359, %v7643
  %v7674 = vmul.f32 %v7361, %v7648
  %v7675 = vmul.f32 %v7363, %v7653
  %v7676 = vmul.f32 %v7365, %v7658
  %v7677 = vmul.f32 %v7367, %v7663
  %v7678 = vmul.f32 %v7666, %v6212
  %v7679 = vmul.f32 %v7667, %v6213
  %v7680 = vmul.f32 %v7668, %v6214
  %v7681 = vmul.f32 %v7669, %v6215
  %v7682 = vmul.f32 %v7670, %v6216
  %v7683 = vmul.f32 %v7671, %v6217
  %v7684 = vmul.f32 %v7672, %v6218
  %v7685 = vmul.f32 %v7673, %v6219
  %v7686 = vmul.f32 %v7674, %v6220
  %v7687 = vmul.f32 %v7675, %v6221
  %v7688 = vmul.f32 %v7676, %v6222
  %v7689 = vmul.f32 %v7677, %v6223
  %7690 = vmatprep.subr.mxu0 0.0
  %7691 = vmatpush1.msra.mxu0 %v93
  %7692 = vmatprep.subr.mxu0 0.0
  %7693 = vmatpush1.msra.mxu0 %v92
  %7694 = vmatprep.subr.mxu0 0.0
  %7695 = vmatpush1.msra.mxu0 %v91
  %7696 = vmatprep.subr.mxu0 0.0
  %7697 = vmatpush1.msra.mxu0 %v90
  %7698 = vmatprep.subr.mxu0 0.0
  %7699 = vmatpush1.msra.mxu0 %v89
  %7700 = vmatprep.subr.mxu0 0.0
  %7701 = vmatpush1.msra.mxu0 %v88
  %7702 = vmatprep.subr.mxu0 0.0
  %7703 = vmatpush1.msra.mxu0 %v87
  %7704 = vmatprep.subr.mxu0 0.0
  %7705 = vmatpush1.msra.mxu0 %v86
  %7706 = vmatprep.subr.mxu0 0.0
  %7707 = vmatpush1.msra.mxu0 %v85
  %7708 = vmatprep.subr.mxu0 0.0
  %7709 = vmatpush1.msra.mxu0 %v84
  %7710 = vmatprep.subr.mxu0 0.0
  %7711 = vmatpush1.msra.mxu0 %v83
  %7712 = vmatprep.subr.mxu0 0.0
  %7713 = vmatpush1.msra.mxu0 %v82
  %7714 = vmatprep.subr.mxu0 0.0
  %7715 = vmatpush1.msra.mxu0 %v81
  %7716 = vmatprep.subr.mxu0 0.0
  %7717 = vmatpush1.msra.mxu0 %v80
  %7718 = vmatprep.subr.mxu0 0.0
  %7719 = vmatpush1.msra.mxu0 %v79
  %7720 = vmatprep.subr.mxu0 0.0
  %7721 = vmatpush1.msra.mxu0 %v78
  %7722 = vmatprep.subr.mxu0 0.0
  %7723 = vmatpush2.msra.mxu0 0.0
  %7724 = vmatprep.subr.mxu0 0.0
  %7725 = vmatpush2.msra.mxu0 0.0
  %7726 = vmatprep.subr.mxu0 0.0
  %7727 = vmatpush2.msra.mxu0 0.0
  %7728 = vmatprep.subr.mxu0 0.0
  %7729 = vmatpush2.msra.mxu0 0.0
  %7730 = vmatprep.subr.mxu0 0.0
  %7731 = vmatpush2.msra.mxu0 0.0
  %7732 = vmatprep.subr.mxu0 0.0
  %7733 = vmatpush2.msra.mxu0 0.0
  %7734 = vmatprep.subr.mxu0 0.0
  %7735 = vmatpush2.msra.mxu0 0.0
  %7736 = vmatprep.subr.mxu0 0.0
  %7737 = vmatpush2.msra.mxu0 0.0
  %7738 = vmatprep.subr.mxu0 0.0
  %7739 = vmatpush2.msra.mxu0 0.0
  %7740 = vmatprep.subr.mxu0 0.0
  %7741 = vmatpush2.msra.mxu0 0.0
  %7742 = vmatprep.subr.mxu0 0.0
  %7743 = vmatpush2.msra.mxu0 0.0
  %7744 = vmatprep.subr.mxu0 0.0
  %7745 = vmatpush2.msra.mxu0 0.0
  %7746 = vmatprep.subr.mxu0 0.0
  %7747 = vmatpush2.msra.mxu0 0.0
  %7748 = vmatprep.subr.mxu0 0.0
  %7749 = vmatpush2.msra.mxu0 0.0
  %7750 = vmatprep.subr.mxu0 0.0
  %7751 = vmatpush2.msra.mxu0 0.0
  %7752 = vmatprep.subr.mxu0 0.0
  %7753 = vmatpush2.msra.mxu0 0.0
  %7754 = vmatprep.mubr.f32.mxu0 0.0
  %7755 = vmatmul.mubr.f32.gmra.mxu0 %v7678
  %v7756 = vpop.f32.mrf.mxu0
  %v7757 = vadd.f32 0.0, %v7756
  %v7758 = vpop.f32.mrf.mxu0
  %7759 = vmatprep.mubr.f32.mxu0 0.0
  %7760 = vmatmul.mubr.f32.gmra.mxu0 %v7679
  %v7761 = vpop.f32.mrf.mxu0
  %v7762 = vadd.f32 0.0, %v7761
  %v7763 = vpop.f32.mrf.mxu0
  %7764 = vmatprep.mubr.f32.mxu0 0.0
  %7765 = vmatmul.mubr.f32.gmra.mxu0 %v7680
  %v7766 = vpop.f32.mrf.mxu0
  %v7767 = vadd.f32 0.0, %v7766
  %v7768 = vpop.f32.mrf.mxu0
  %7769 = vmatprep.mubr.f32.mxu0 0.0
  %7770 = vmatmul.mubr.f32.gmra.mxu0 %v7681
  %v7771 = vpop.f32.mrf.mxu0
  %v7772 = vadd.f32 0.0, %v7771
  %v7773 = vpop.f32.mrf.mxu0
  %7774 = vmatprep.mubr.f32.mxu0 0.0
  %7775 = vmatmul.mubr.f32.gmra.mxu0 %v7682
  %v7776 = vpop.f32.mrf.mxu0
  %v7777 = vadd.f32 0.0, %v7776
  %v7778 = vpop.f32.mrf.mxu0
  %7779 = vmatprep.mubr.f32.mxu0 0.0
  %7780 = vmatmul.mubr.f32.gmra.mxu0 %v7683
  %v7781 = vpop.f32.mrf.mxu0
  %v7782 = vadd.f32 0.0, %v7781
  %v7783 = vpop.f32.mrf.mxu0
  %7784 = vmatprep.mubr.f32.mxu0 0.0
  %7785 = vmatmul.mubr.f32.gmra.mxu0 %v7684
  %v7786 = vpop.f32.mrf.mxu0
  %v7787 = vadd.f32 0.0, %v7786
  %v7788 = vpop.f32.mrf.mxu0
  %7789 = vmatprep.mubr.f32.mxu0 0.0
  %7790 = vmatmul.mubr.f32.gmra.mxu0 %v7685
  %v7791 = vpop.f32.mrf.mxu0
  %v7792 = vadd.f32 0.0, %v7791
  %v7793 = vpop.f32.mrf.mxu0
  %7794 = vmatprep.mubr.f32.mxu0 0.0
  %7795 = vmatmul.mubr.f32.gmra.mxu0 %v7686
  %v7796 = vpop.f32.mrf.mxu0
  %v7797 = vadd.f32 0.0, %v7796
  %v7798 = vpop.f32.mrf.mxu0
  %7799 = vmatprep.mubr.f32.mxu0 0.0
  %7800 = vmatmul.mubr.f32.gmra.mxu0 %v7687
  %v7801 = vpop.f32.mrf.mxu0
  %v7802 = vadd.f32 0.0, %v7801
  %v7803 = vpop.f32.mrf.mxu0
  %7804 = vmatprep.mubr.f32.mxu0 0.0
  %7805 = vmatmul.mubr.f32.gmra.mxu0 %v7688
  %v7806 = vpop.f32.mrf.mxu0
  %v7807 = vadd.f32 0.0, %v7806
  %v7808 = vpop.f32.mrf.mxu0
  %7809 = vmatprep.mubr.f32.mxu0 0.0
  %7810 = vmatmul.mubr.f32.gmra.mxu0 %v7689
  %v7811 = vpop.f32.mrf.mxu0
  %v7812 = vadd.f32 0.0, %v7811
  %v7813 = vpop.f32.mrf.mxu0
  %7814 = vdwg.mxu0
  %v7816 = vsel %vm2257, %v7757, 0
  %v7819 = vsel %vm2257, %v7762, 0
  %v7822 = vsel %vm2257, %v7767, 0
  %v7825 = vsel %vm2257, %v7772, 0
  %v7828 = vsel %vm2257, %v7777, 0
  %v7831 = vsel %vm2257, %v7782, 0
  %v7834 = vsel %vm2257, %v7787, 0
  %v7837 = vsel %vm2257, %v7792, 0
  %v7840 = vsel %vm2257, %v7797, 0
  %v7843 = vsel %vm2257, %v7802, 0
  %v7846 = vsel %vm2257, %v7807, 0
  %v7849 = vsel %vm2257, %v7812, 0
  %7851 = vmatprep.subr.mxu0 0.0
  %7852 = vmatpush1.msra.mxu0 0.0
  %7853 = vmatprep.subr.mxu0 0.0
  %7854 = vmatpush1.msra.mxu0 0.0
  %7855 = vmatprep.subr.mxu0 0.0
  %7856 = vmatpush1.msra.mxu0 0.0
  %7857 = vmatprep.subr.mxu0 0.0
  %7858 = vmatpush1.msra.mxu0 0.0
  %7859 = vmatprep.subr.mxu0 0.0
  %7860 = vmatpush1.msra.mxu0 0.0
  %7861 = vmatprep.subr.mxu0 0.0
  %7862 = vmatpush1.msra.mxu0 0.0
  %7863 = vmatprep.subr.mxu0 0.0
  %7864 = vmatpush1.msra.mxu0 0.0
  %7865 = vmatprep.subr.mxu0 0.0
  %7866 = vmatpush1.msra.mxu0 0.0
  %7867 = vmatprep.subr.mxu0 0.0
  %7868 = vmatpush1.msra.mxu0 0.0
  %7869 = vmatprep.subr.mxu0 0.0
  %7870 = vmatpush1.msra.mxu0 0.0
  %7871 = vmatprep.subr.mxu0 0.0
  %7872 = vmatpush1.msra.mxu0 0.0
  %7873 = vmatprep.subr.mxu0 0.0
  %7874 = vmatpush1.msra.mxu0 0.0
  %7875 = vmatprep.subr.mxu0 0.0
  %7876 = vmatpush1.msra.mxu0 0.0
  %7877 = vmatprep.subr.mxu0 0.0
  %7878 = vmatpush1.msra.mxu0 0.0
  %7879 = vmatprep.subr.mxu0 0.0
  %7880 = vmatpush1.msra.mxu0 0.0
  %7881 = vmatprep.subr.mxu0 0.0
  %7882 = vmatpush1.msra.mxu0 %v2272
  %7883 = vmatprep.subr.mxu0 0.0
  %7884 = vmatpush2.msra.mxu0 0.0
  %7885 = vmatprep.subr.mxu0 0.0
  %7886 = vmatpush2.msra.mxu0 0.0
  %7887 = vmatprep.subr.mxu0 0.0
  %7888 = vmatpush2.msra.mxu0 0.0
  %7889 = vmatprep.subr.mxu0 0.0
  %7890 = vmatpush2.msra.mxu0 0.0
  %7891 = vmatprep.subr.mxu0 0.0
  %7892 = vmatpush2.msra.mxu0 0.0
  %7893 = vmatprep.subr.mxu0 0.0
  %7894 = vmatpush2.msra.mxu0 0.0
  %7895 = vmatprep.subr.mxu0 0.0
  %7896 = vmatpush2.msra.mxu0 0.0
  %7897 = vmatprep.subr.mxu0 0.0
  %7898 = vmatpush2.msra.mxu0 0.0
  %7899 = vmatprep.subr.mxu0 0.0
  %7900 = vmatpush2.msra.mxu0 0.0
  %7901 = vmatprep.subr.mxu0 0.0
  %7902 = vmatpush2.msra.mxu0 0.0
  %7903 = vmatprep.subr.mxu0 0.0
  %7904 = vmatpush2.msra.mxu0 0.0
  %7905 = vmatprep.subr.mxu0 0.0
  %7906 = vmatpush2.msra.mxu0 0.0
  %7907 = vmatprep.subr.mxu0 0.0
  %7908 = vmatpush2.msra.mxu0 0.0
  %7909 = vmatprep.subr.mxu0 0.0
  %7910 = vmatpush2.msra.mxu0 0.0
  %7911 = vmatprep.subr.mxu0 0.0
  %7912 = vmatpush2.msra.mxu0 0.0
  %7913 = vmatprep.subr.mxu0 0.0
  %7914 = vmatpush2.msra.mxu0 0.0
  %7915 = vmatprep.mubr.f32.mxu0 0.0
  %7916 = vmatmul.mubr.f32.gmra.mxu0 %v7816
  %v7917 = vpop.f32.mrf.mxu0
  %v7918 = vadd.f32 0.0, %v7917
  %v7919 = vpop.f32.mrf.mxu0
  %7920 = vmatprep.mubr.f32.mxu0 0.0
  %7921 = vmatmul.mubr.f32.gmra.mxu0 %v7819
  %v7922 = vpop.f32.mrf.mxu0
  %v7923 = vadd.f32 0.0, %v7922
  %v7924 = vpop.f32.mrf.mxu0
  %7925 = vmatprep.mubr.f32.mxu0 0.0
  %7926 = vmatmul.mubr.f32.gmra.mxu0 %v7822
  %v7927 = vpop.f32.mrf.mxu0
  %v7928 = vadd.f32 0.0, %v7927
  %v7929 = vpop.f32.mrf.mxu0
  %7930 = vmatprep.mubr.f32.mxu0 0.0
  %7931 = vmatmul.mubr.f32.gmra.mxu0 %v7825
  %v7932 = vpop.f32.mrf.mxu0
  %v7933 = vadd.f32 0.0, %v7932
  %v7934 = vpop.f32.mrf.mxu0
  %7935 = vmatprep.mubr.f32.mxu0 0.0
  %7936 = vmatmul.mubr.f32.gmra.mxu0 %v7828
  %v7937 = vpop.f32.mrf.mxu0
  %v7938 = vadd.f32 0.0, %v7937
  %v7939 = vpop.f32.mrf.mxu0
  %7940 = vmatprep.mubr.f32.mxu0 0.0
  %7941 = vmatmul.mubr.f32.gmra.mxu0 %v7831
  %v7942 = vpop.f32.mrf.mxu0
  %v7943 = vadd.f32 0.0, %v7942
  %v7944 = vpop.f32.mrf.mxu0
  %7945 = vmatprep.mubr.f32.mxu0 0.0
  %7946 = vmatmul.mubr.f32.gmra.mxu0 %v7834
  %v7947 = vpop.f32.mrf.mxu0
  %v7948 = vadd.f32 0.0, %v7947
  %v7949 = vpop.f32.mrf.mxu0
  %7950 = vmatprep.mubr.f32.mxu0 0.0
  %7951 = vmatmul.mubr.f32.gmra.mxu0 %v7837
  %v7952 = vpop.f32.mrf.mxu0
  %v7953 = vadd.f32 0.0, %v7952
  %v7954 = vpop.f32.mrf.mxu0
  %7955 = vmatprep.mubr.f32.mxu0 0.0
  %7956 = vmatmul.mubr.f32.gmra.mxu0 %v7840
  %v7957 = vpop.f32.mrf.mxu0
  %v7958 = vadd.f32 0.0, %v7957
  %v7959 = vpop.f32.mrf.mxu0
  %7960 = vmatprep.mubr.f32.mxu0 0.0
  %7961 = vmatmul.mubr.f32.gmra.mxu0 %v7843
  %v7962 = vpop.f32.mrf.mxu0
  %v7963 = vadd.f32 0.0, %v7962
  %v7964 = vpop.f32.mrf.mxu0
  %7965 = vmatprep.mubr.f32.mxu0 0.0
  %7966 = vmatmul.mubr.f32.gmra.mxu0 %v7846
  %v7967 = vpop.f32.mrf.mxu0
  %v7968 = vadd.f32 0.0, %v7967
  %v7969 = vpop.f32.mrf.mxu0
  %7970 = vmatprep.mubr.f32.mxu0 0.0
  %7971 = vmatmul.mubr.f32.gmra.mxu0 %v7849
  %v7972 = vpop.f32.mrf.mxu0
  %v7973 = vadd.f32 0.0, %v7972
  %v7974 = vpop.f32.mrf.mxu0
  %7975 = vdwg.mxu0
  %v7976 = vsub.f32 %v6212, %v7918
  %v7977 = vsub.f32 %v6213, %v7923
  %v7978 = vsub.f32 %v6214, %v7928
  %v7979 = vsub.f32 %v6215, %v7933
  %v7980 = vsub.f32 %v6216, %v7938
  %v7981 = vsub.f32 %v6217, %v7943
  %v7982 = vsub.f32 %v6218, %v7948
  %v7983 = vsub.f32 %v6219, %v7953
  %v7984 = vsub.f32 %v6220, %v7958
  %v7985 = vsub.f32 %v6221, %v7963
  %v7986 = vsub.f32 %v6222, %v7968
  %v7987 = vsub.f32 %v6223, %v7973
  %v7988 = vmul.f32 %v7666, %v7976
  %v7989 = vmul.f32 %v7667, %v7977
  %v7990 = vmul.f32 %v7668, %v7978
  %v7991 = vmul.f32 %v7669, %v7979
  %v7992 = vmul.f32 %v7670, %v7980
  %v7993 = vmul.f32 %v7671, %v7981
  %v7994 = vmul.f32 %v7672, %v7982
  %v7995 = vmul.f32 %v7673, %v7983
  %v7996 = vmul.f32 %v7674, %v7984
  %v7997 = vmul.f32 %v7675, %v7985
  %v7998 = vmul.f32 %v7676, %v7986
  %v7999 = vmul.f32 %v7677, %v7987
  %v8000 = vmul.f32 %v7988, %v7976
  %v8001 = vmul.f32 %v7989, %v7977
  %v8002 = vmul.f32 %v7990, %v7978
  %v8003 = vmul.f32 %v7991, %v7979
  %v8004 = vmul.f32 %v7992, %v7980
  %v8005 = vmul.f32 %v7993, %v7981
  %v8006 = vmul.f32 %v7994, %v7982
  %v8007 = vmul.f32 %v7995, %v7983
  %v8008 = vmul.f32 %v7996, %v7984
  %v8009 = vmul.f32 %v7997, %v7985
  %v8010 = vmul.f32 %v7998, %v7986
  %v8011 = vmul.f32 %v7999, %v7987
  %8012 = vmatprep.subr.mxu0 0.0
  %8013 = vmatpush1.msra.mxu0 %v93
  %8014 = vmatprep.subr.mxu0 0.0
  %8015 = vmatpush1.msra.mxu0 %v92
  %8016 = vmatprep.subr.mxu0 0.0
  %8017 = vmatpush1.msra.mxu0 %v91
  %8018 = vmatprep.subr.mxu0 0.0
  %8019 = vmatpush1.msra.mxu0 %v90
  %8020 = vmatprep.subr.mxu0 0.0
  %8021 = vmatpush1.msra.mxu0 %v89
  %8022 = vmatprep.subr.mxu0 0.0
  %8023 = vmatpush1.msra.mxu0 %v88
  %8024 = vmatprep.subr.mxu0 0.0
  %8025 = vmatpush1.msra.mxu0 %v87
  %8026 = vmatprep.subr.mxu0 0.0
  %8027 = vmatpush1.msra.mxu0 %v86
  %8028 = vmatprep.subr.mxu0 0.0
  %8029 = vmatpush1.msra.mxu0 %v85
  %8030 = vmatprep.subr.mxu0 0.0
  %8031 = vmatpush1.msra.mxu0 %v84
  %8032 = vmatprep.subr.mxu0 0.0
  %8033 = vmatpush1.msra.mxu0 %v83
  %8034 = vmatprep.subr.mxu0 0.0
  %8035 = vmatpush1.msra.mxu0 %v82
  %8036 = vmatprep.subr.mxu0 0.0
  %8037 = vmatpush1.msra.mxu0 %v81
  %8038 = vmatprep.subr.mxu0 0.0
  %8039 = vmatpush1.msra.mxu0 %v80
  %8040 = vmatprep.subr.mxu0 0.0
  %8041 = vmatpush1.msra.mxu0 %v79
  %8042 = vmatprep.subr.mxu0 0.0
  %8043 = vmatpush1.msra.mxu0 %v78
  %8044 = vmatprep.subr.mxu0 0.0
  %8045 = vmatpush2.msra.mxu0 0.0
  %8046 = vmatprep.subr.mxu0 0.0
  %8047 = vmatpush2.msra.mxu0 0.0
  %8048 = vmatprep.subr.mxu0 0.0
  %8049 = vmatpush2.msra.mxu0 0.0
  %8050 = vmatprep.subr.mxu0 0.0
  %8051 = vmatpush2.msra.mxu0 0.0
  %8052 = vmatprep.subr.mxu0 0.0
  %8053 = vmatpush2.msra.mxu0 0.0
  %8054 = vmatprep.subr.mxu0 0.0
  %8055 = vmatpush2.msra.mxu0 0.0
  %8056 = vmatprep.subr.mxu0 0.0
  %8057 = vmatpush2.msra.mxu0 0.0
  %8058 = vmatprep.subr.mxu0 0.0
  %8059 = vmatpush2.msra.mxu0 0.0
  %8060 = vmatprep.subr.mxu0 0.0
  %8061 = vmatpush2.msra.mxu0 0.0
  %8062 = vmatprep.subr.mxu0 0.0
  %8063 = vmatpush2.msra.mxu0 0.0
  %8064 = vmatprep.subr.mxu0 0.0
  %8065 = vmatpush2.msra.mxu0 0.0
  %8066 = vmatprep.subr.mxu0 0.0
  %8067 = vmatpush2.msra.mxu0 0.0
  %8068 = vmatprep.subr.mxu0 0.0
  %8069 = vmatpush2.msra.mxu0 0.0
  %8070 = vmatprep.subr.mxu0 0.0
  %8071 = vmatpush2.msra.mxu0 0.0
  %8072 = vmatprep.subr.mxu0 0.0
  %8073 = vmatpush2.msra.mxu0 0.0
  %8074 = vmatprep.subr.mxu0 0.0
  %8075 = vmatpush2.msra.mxu0 0.0
  %8076 = vmatprep.mubr.f32.mxu0 0.0
  %8077 = vmatmul.mubr.f32.gmra.mxu0 %v8000
  %v8078 = vpop.f32.mrf.mxu0
  %v8079 = vadd.f32 0.0, %v8078
  %v8080 = vpop.f32.mrf.mxu0
  %8081 = vmatprep.mubr.f32.mxu0 0.0
  %8082 = vmatmul.mubr.f32.gmra.mxu0 %v8001
  %v8083 = vpop.f32.mrf.mxu0
  %v8084 = vadd.f32 0.0, %v8083
  %v8085 = vpop.f32.mrf.mxu0
  %8086 = vmatprep.mubr.f32.mxu0 0.0
  %8087 = vmatmul.mubr.f32.gmra.mxu0 %v8002
  %v8088 = vpop.f32.mrf.mxu0
  %v8089 = vadd.f32 0.0, %v8088
  %v8090 = vpop.f32.mrf.mxu0
  %8091 = vmatprep.mubr.f32.mxu0 0.0
  %8092 = vmatmul.mubr.f32.gmra.mxu0 %v8003
  %v8093 = vpop.f32.mrf.mxu0
  %v8094 = vadd.f32 0.0, %v8093
  %v8095 = vpop.f32.mrf.mxu0
  %8096 = vmatprep.mubr.f32.mxu0 0.0
  %8097 = vmatmul.mubr.f32.gmra.mxu0 %v8004
  %v8098 = vpop.f32.mrf.mxu0
  %v8099 = vadd.f32 0.0, %v8098
  %v8100 = vpop.f32.mrf.mxu0
  %8101 = vmatprep.mubr.f32.mxu0 0.0
  %8102 = vmatmul.mubr.f32.gmra.mxu0 %v8005
  %v8103 = vpop.f32.mrf.mxu0
  %v8104 = vadd.f32 0.0, %v8103
  %v8105 = vpop.f32.mrf.mxu0
  %8106 = vmatprep.mubr.f32.mxu0 0.0
  %8107 = vmatmul.mubr.f32.gmra.mxu0 %v8006
  %v8108 = vpop.f32.mrf.mxu0
  %v8109 = vadd.f32 0.0, %v8108
  %v8110 = vpop.f32.mrf.mxu0
  %8111 = vmatprep.mubr.f32.mxu0 0.0
  %8112 = vmatmul.mubr.f32.gmra.mxu0 %v8007
  %v8113 = vpop.f32.mrf.mxu0
  %v8114 = vadd.f32 0.0, %v8113
  %v8115 = vpop.f32.mrf.mxu0
  %8116 = vmatprep.mubr.f32.mxu0 0.0
  %8117 = vmatmul.mubr.f32.gmra.mxu0 %v8008
  %v8118 = vpop.f32.mrf.mxu0
  %v8119 = vadd.f32 0.0, %v8118
  %v8120 = vpop.f32.mrf.mxu0
  %8121 = vmatprep.mubr.f32.mxu0 0.0
  %8122 = vmatmul.mubr.f32.gmra.mxu0 %v8009
  %v8123 = vpop.f32.mrf.mxu0
  %v8124 = vadd.f32 0.0, %v8123
  %v8125 = vpop.f32.mrf.mxu0
  %8126 = vmatprep.mubr.f32.mxu0 0.0
  %8127 = vmatmul.mubr.f32.gmra.mxu0 %v8010
  %v8128 = vpop.f32.mrf.mxu0
  %v8129 = vadd.f32 0.0, %v8128
  %v8130 = vpop.f32.mrf.mxu0
  %8131 = vmatprep.mubr.f32.mxu0 0.0
  %8132 = vmatmul.mubr.f32.gmra.mxu0 %v8011
  %v8133 = vpop.f32.mrf.mxu0
  %v8134 = vadd.f32 0.0, %v8133
  %v8135 = vpop.f32.mrf.mxu0
  %8136 = vdwg.mxu0
  %v8137 = vmax.f32 %v8079, 1e-12
  %v8138 = vmax.f32 %v8084, 1e-12
  %v8139 = vmax.f32 %v8089, 1e-12
  %v8140 = vmax.f32 %v8094, 1e-12
  %v8141 = vmax.f32 %v8099, 1e-12
  %v8142 = vmax.f32 %v8104, 1e-12
  %v8143 = vmax.f32 %v8109, 1e-12
  %v8144 = vmax.f32 %v8114, 1e-12
  %v8145 = vmax.f32 %v8119, 1e-12
  %v8146 = vmax.f32 %v8124, 1e-12
  %v8147 = vmax.f32 %v8129, 1e-12
  %v8148 = vmax.f32 %v8134, 1e-12
  %v8149 = vrsqrt.pop %v8137
  %v8150 = vmul.f32 %v8137, %v8149
  %vm8151 = vcmp.eq.f32.partialorder %v8137, inf
  %v8152 = vsel %vm8151, %v8137, %v8150
  %vm8153 = vcmp.eq.f32.partialorder %v8137, 0.0
  %v8154 = vand.u32 %v8137, 2147483648
  %v8155 = vsel %vm8153, %v8154, %v8152
  %v8156 = vrsqrt.pop %v8138
  %v8157 = vmul.f32 %v8138, %v8156
  %vm8158 = vcmp.eq.f32.partialorder %v8138, inf
  %v8159 = vsel %vm8158, %v8138, %v8157
  %vm8160 = vcmp.eq.f32.partialorder %v8138, 0.0
  %v8161 = vand.u32 %v8138, 2147483648
  %v8162 = vsel %vm8160, %v8161, %v8159
  %v8163 = vrsqrt.pop %v8139
  %v8164 = vmul.f32 %v8139, %v8163
  %vm8165 = vcmp.eq.f32.partialorder %v8139, inf
  %v8166 = vsel %vm8165, %v8139, %v8164
  %vm8167 = vcmp.eq.f32.partialorder %v8139, 0.0
  %v8168 = vand.u32 %v8139, 2147483648
  %v8169 = vsel %vm8167, %v8168, %v8166
  %v8170 = vrsqrt.pop %v8140
  %v8171 = vmul.f32 %v8140, %v8170
  %vm8172 = vcmp.eq.f32.partialorder %v8140, inf
  %v8173 = vsel %vm8172, %v8140, %v8171
  %vm8174 = vcmp.eq.f32.partialorder %v8140, 0.0
  %v8175 = vand.u32 %v8140, 2147483648
  %v8176 = vsel %vm8174, %v8175, %v8173
  %v8177 = vrsqrt.pop %v8141
  %v8178 = vmul.f32 %v8141, %v8177
  %vm8179 = vcmp.eq.f32.partialorder %v8141, inf
  %v8180 = vsel %vm8179, %v8141, %v8178
  %vm8181 = vcmp.eq.f32.partialorder %v8141, 0.0
  %v8182 = vand.u32 %v8141, 2147483648
  %v8183 = vsel %vm8181, %v8182, %v8180
  %v8184 = vrsqrt.pop %v8142
  %v8185 = vmul.f32 %v8142, %v8184
  %vm8186 = vcmp.eq.f32.partialorder %v8142, inf
  %v8187 = vsel %vm8186, %v8142, %v8185
  %vm8188 = vcmp.eq.f32.partialorder %v8142, 0.0
  %v8189 = vand.u32 %v8142, 2147483648
  %v8190 = vsel %vm8188, %v8189, %v8187
  %v8191 = vrsqrt.pop %v8143
  %v8192 = vmul.f32 %v8143, %v8191
  %vm8193 = vcmp.eq.f32.partialorder %v8143, inf
  %v8194 = vsel %vm8193, %v8143, %v8192
  %vm8195 = vcmp.eq.f32.partialorder %v8143, 0.0
  %v8196 = vand.u32 %v8143, 2147483648
  %v8197 = vsel %vm8195, %v8196, %v8194
  %v8198 = vrsqrt.pop %v8144
  %v8199 = vmul.f32 %v8144, %v8198
  %vm8200 = vcmp.eq.f32.partialorder %v8144, inf
  %v8201 = vsel %vm8200, %v8144, %v8199
  %vm8202 = vcmp.eq.f32.partialorder %v8144, 0.0
  %v8203 = vand.u32 %v8144, 2147483648
  %v8204 = vsel %vm8202, %v8203, %v8201
  %v8205 = vrsqrt.pop %v8145
  %v8206 = vmul.f32 %v8145, %v8205
  %vm8207 = vcmp.eq.f32.partialorder %v8145, inf
  %v8208 = vsel %vm8207, %v8145, %v8206
  %vm8209 = vcmp.eq.f32.partialorder %v8145, 0.0
  %v8210 = vand.u32 %v8145, 2147483648
  %v8211 = vsel %vm8209, %v8210, %v8208
  %v8212 = vrsqrt.pop %v8146
  %v8213 = vmul.f32 %v8146, %v8212
  %vm8214 = vcmp.eq.f32.partialorder %v8146, inf
  %v8215 = vsel %vm8214, %v8146, %v8213
  %vm8216 = vcmp.eq.f32.partialorder %v8146, 0.0
  %v8217 = vand.u32 %v8146, 2147483648
  %v8218 = vsel %vm8216, %v8217, %v8215
  %v8219 = vrsqrt.pop %v8147
  %v8220 = vmul.f32 %v8147, %v8219
  %vm8221 = vcmp.eq.f32.partialorder %v8147, inf
  %v8222 = vsel %vm8221, %v8147, %v8220
  %vm8223 = vcmp.eq.f32.partialorder %v8147, 0.0
  %v8224 = vand.u32 %v8147, 2147483648
  %v8225 = vsel %vm8223, %v8224, %v8222
  %v8226 = vrsqrt.pop %v8148
  %v8227 = vmul.f32 %v8148, %v8226
  %vm8228 = vcmp.eq.f32.partialorder %v8148, inf
  %v8229 = vsel %vm8228, %v8148, %v8227
  %vm8230 = vcmp.eq.f32.partialorder %v8148, 0.0
  %v8231 = vand.u32 %v8148, 2147483648
  %v8232 = vsel %vm8230, %v8231, %v8229
  %v8233 = vld [vmem:[%s22] sm:$0xf]
  %v8234 = vld [vmem:[%s22 + $0x4] sm:$0xf]
  %v8235 = vld [vmem:[%s22 + $0x8] sm:$0xf]
  %v8236 = vld [vmem:[%s22 + $0xc] sm:$0xf]
  %v8237 = vld [vmem:[%s21] sm:$0xff]
  %v8238 = vld [vmem:[%s21 + $0x8] sm:$0xff]
  %v8239 = vld [vmem:[%s21 + $0x10] sm:$0xff]
  %v8240 = vld [vmem:[%s21 + $0x18] sm:$0xff]
  %v8241 = vld [vmem:[%s21 + $0x20] sm:$0xff]
  %v8242 = vld [vmem:[%s21 + $0x28] sm:$0xff]
  %v8243 = vld [vmem:[%s21 + $0x30] sm:$0xff]
  %v8244 = vld [vmem:[%s21 + $0x38] sm:$0xff]
  %v8245 = vld [vmem:[%s21 + $0x40] sm:$0xff]
  %v8246 = vld [vmem:[%s21 + $0x48] sm:$0xff]
  %v8247 = vld [vmem:[%s21 + $0x50] sm:$0xff]
  %v8248 = vld [vmem:[%s21 + $0x58] sm:$0xff]
  %v8249 = vsel %vm2257, %v7757, 0.0
  %8250 = vadd.xlane.f32.xlu0 %v8249
  %v8251 = vpop.xlane.xlu0 %8250
  %v8252 = vsel %vm2257, %v7762, 0.0
  %8253 = vadd.xlane.f32.xlu0 %v8252
  %v8254 = vpop.xlane.xlu0 %8253
  %v8255 = vsel %vm2257, %v7767, 0.0
  %8256 = vadd.xlane.f32.xlu0 %v8255
  %v8257 = vpop.xlane.xlu0 %8256
  %v8258 = vsel %vm2257, %v7772, 0.0
  %8259 = vadd.xlane.f32.xlu0 %v8258
  %v8260 = vpop.xlane.xlu0 %8259
  %v8261 = vsel %vm2257, %v7777, 0.0
  %8262 = vadd.xlane.f32.xlu0 %v8261
  %v8263 = vpop.xlane.xlu0 %8262
  %v8264 = vsel %vm2257, %v7782, 0.0
  %8265 = vadd.xlane.f32.xlu0 %v8264
  %v8266 = vpop.xlane.xlu0 %8265
  %v8267 = vsel %vm2257, %v7787, 0.0
  %8268 = vadd.xlane.f32.xlu0 %v8267
  %v8269 = vpop.xlane.xlu0 %8268
  %v8270 = vsel %vm2257, %v7792, 0.0
  %8271 = vadd.xlane.f32.xlu0 %v8270
  %v8272 = vpop.xlane.xlu0 %8271
  %v8273 = vsel %vm2257, %v7797, 0.0
  %8274 = vadd.xlane.f32.xlu0 %v8273
  %v8275 = vpop.xlane.xlu0 %8274
  %v8276 = vsel %vm2257, %v7802, 0.0
  %8277 = vadd.xlane.f32.xlu0 %v8276
  %v8278 = vpop.xlane.xlu0 %8277
  %v8279 = vsel %vm2257, %v7807, 0.0
  %8280 = vadd.xlane.f32.xlu0 %v8279
  %v8281 = vpop.xlane.xlu0 %8280
  %v8282 = vsel %vm2257, %v7812, 0.0
  %8283 = vadd.xlane.f32.xlu0 %v8282
  %v8284 = vpop.xlane.xlu0 %8283
  %v8285 = vrcp.pop 2.0
  %v8286 = vmul.f32 %v8251, %v8285
  %v8287 = vmul.f32 %v8254, %v8285
  %v8288 = vmul.f32 %v8257, %v8285
  %v8289 = vmul.f32 %v8260, %v8285
  %v8290 = vmul.f32 %v8263, %v8285
  %v8291 = vmul.f32 %v8266, %v8285
  %v8292 = vmul.f32 %v8269, %v8285
  %v8293 = vmul.f32 %v8272, %v8285
  %v8294 = vmul.f32 %v8275, %v8285
  %v8295 = vmul.f32 %v8278, %v8285
  %v8296 = vmul.f32 %v8281, %v8285
  %v8297 = vmul.f32 %v8284, %v8285
  %v8298 = vsub.f32 %v7757, %v8286
  %v8299 = vsub.f32 %v7762, %v8287
  %v8300 = vsub.f32 %v7767, %v8288
  %v8301 = vsub.f32 %v7772, %v8289
  %v8302 = vsub.f32 %v7777, %v8290
  %v8303 = vsub.f32 %v7782, %v8291
  %v8304 = vsub.f32 %v7787, %v8292
  %v8305 = vsub.f32 %v7792, %v8293
  %v8306 = vsub.f32 %v7797, %v8294
  %v8307 = vsub.f32 %v7802, %v8295
  %v8308 = vsub.f32 %v7807, %v8296
  %v8309 = vsub.f32 %v7812, %v8297
  %v8310 = vmul.f32 %v8298, %v8298
  %v8311 = vmul.f32 %v8299, %v8299
  %v8312 = vmul.f32 %v8300, %v8300
  %v8313 = vmul.f32 %v8301, %v8301
  %v8314 = vmul.f32 %v8302, %v8302
  %v8315 = vmul.f32 %v8303, %v8303
  %v8316 = vmul.f32 %v8304, %v8304
  %v8317 = vmul.f32 %v8305, %v8305
  %v8318 = vmul.f32 %v8306, %v8306
  %v8319 = vmul.f32 %v8307, %v8307
  %v8320 = vmul.f32 %v8308, %v8308
  %v8321 = vmul.f32 %v8309, %v8309
  %v8322 = vsel %vm2257, %v8310, 0.0
  %8323 = vadd.xlane.f32.xlu0 %v8322
  %v8324 = vpop.xlane.xlu0 %8323
  %v8325 = vsel %vm2257, %v8311, 0.0
  %8326 = vadd.xlane.f32.xlu0 %v8325
  %v8327 = vpop.xlane.xlu0 %8326
  %v8328 = vsel %vm2257, %v8312, 0.0
  %8329 = vadd.xlane.f32.xlu0 %v8328
  %v8330 = vpop.xlane.xlu0 %8329
  %v8331 = vsel %vm2257, %v8313, 0.0
  %8332 = vadd.xlane.f32.xlu0 %v8331
  %v8333 = vpop.xlane.xlu0 %8332
  %v8334 = vsel %vm2257, %v8314, 0.0
  %8335 = vadd.xlane.f32.xlu0 %v8334
  %v8336 = vpop.xlane.xlu0 %8335
  %v8337 = vsel %vm2257, %v8315, 0.0
  %8338 = vadd.xlane.f32.xlu0 %v8337
  %v8339 = vpop.xlane.xlu0 %8338
  %v8340 = vsel %vm2257, %v8316, 0.0
  %8341 = vadd.xlane.f32.xlu0 %v8340
  %v8342 = vpop.xlane.xlu0 %8341
  %v8343 = vsel %vm2257, %v8317, 0.0
  %8344 = vadd.xlane.f32.xlu0 %v8343
  %v8345 = vpop.xlane.xlu0 %8344
  %v8346 = vsel %vm2257, %v8318, 0.0
  %8347 = vadd.xlane.f32.xlu0 %v8346
  %v8348 = vpop.xlane.xlu0 %8347
  %v8349 = vsel %vm2257, %v8319, 0.0
  %8350 = vadd.xlane.f32.xlu0 %v8349
  %v8351 = vpop.xlane.xlu0 %8350
  %v8352 = vsel %vm2257, %v8320, 0.0
  %8353 = vadd.xlane.f32.xlu0 %v8352
  %v8354 = vpop.xlane.xlu0 %8353
  %v8355 = vsel %vm2257, %v8321, 0.0
  %8356 = vadd.xlane.f32.xlu0 %v8355
  %v8357 = vpop.xlane.xlu0 %8356
  %v8358 = vmul.f32 %v8324, %v8285
  %v8359 = vmul.f32 %v8327, %v8285
  %v8360 = vmul.f32 %v8330, %v8285
  %v8361 = vmul.f32 %v8333, %v8285
  %v8362 = vmul.f32 %v8336, %v8285
  %v8363 = vmul.f32 %v8339, %v8285
  %v8364 = vmul.f32 %v8342, %v8285
  %v8365 = vmul.f32 %v8345, %v8285
  %v8366 = vmul.f32 %v8348, %v8285
  %v8367 = vmul.f32 %v8351, %v8285
  %v8368 = vmul.f32 %v8354, %v8285
  %v8369 = vmul.f32 %v8357, %v8285
  %v8370 = vadd.f32 %v8358, 1e-05
  %v8371 = vadd.f32 %v8359, 1e-05
  %v8372 = vadd.f32 %v8360, 1e-05
  %v8373 = vadd.f32 %v8361, 1e-05
  %v8374 = vadd.f32 %v8362, 1e-05
  %v8375 = vadd.f32 %v8363, 1e-05
  %v8376 = vadd.f32 %v8364, 1e-05
  %v8377 = vadd.f32 %v8365, 1e-05
  %v8378 = vadd.f32 %v8366, 1e-05
  %v8379 = vadd.f32 %v8367, 1e-05
  %v8380 = vadd.f32 %v8368, 1e-05
  %v8381 = vadd.f32 %v8369, 1e-05
  %v8382 = vrsqrt.pop %v8370
  %v8383 = vrsqrt.pop %v8371
  %v8384 = vrsqrt.pop %v8372
  %v8385 = vrsqrt.pop %v8373
  %v8386 = vrsqrt.pop %v8374
  %v8387 = vrsqrt.pop %v8375
  %v8388 = vrsqrt.pop %v8376
  %v8389 = vrsqrt.pop %v8377
  %v8390 = vrsqrt.pop %v8378
  %v8391 = vrsqrt.pop %v8379
  %v8392 = vrsqrt.pop %v8380
  %v8393 = vrsqrt.pop %v8381
  %v8394 = vmul.f32 %v8298, %v8382
  %v8395 = vmul.f32 %v8299, %v8383
  %v8396 = vmul.f32 %v8300, %v8384
  %v8397 = vmul.f32 %v8301, %v8385
  %v8398 = vmul.f32 %v8302, %v8386
  %v8399 = vmul.f32 %v8303, %v8387
  %v8400 = vmul.f32 %v8304, %v8388
  %v8401 = vmul.f32 %v8305, %v8389
  %v8402 = vmul.f32 %v8306, %v8390
  %v8403 = vmul.f32 %v8307, %v8391
  %v8404 = vmul.f32 %v8308, %v8392
  %v8405 = vmul.f32 %v8309, %v8393
  %8407 = vset.pattern.permute.xlu0 0
  %8408 = vperm.xlu0 %8407, %v8237
  %v8409 = vpop.permute.xlu0 %8408
  %8412 = vset.pattern.permute.xlu0 0
  %8413 = vperm.xlu0 %8412, %v8238
  %v8414 = vpop.permute.xlu0 %8413
  %8417 = vset.pattern.permute.xlu0 0
  %8418 = vperm.xlu0 %8417, %v8239
  %v8419 = vpop.permute.xlu0 %8418
  %8422 = vset.pattern.permute.xlu0 0
  %8423 = vperm.xlu0 %8422, %v8240
  %v8424 = vpop.permute.xlu0 %8423
  %8427 = vset.pattern.permute.xlu0 0
  %8428 = vperm.xlu0 %8427, %v8241
  %v8429 = vpop.permute.xlu0 %8428
  %8432 = vset.pattern.permute.xlu0 0
  %8433 = vperm.xlu0 %8432, %v8242
  %v8434 = vpop.permute.xlu0 %8433
  %8437 = vset.pattern.permute.xlu0 0
  %8438 = vperm.xlu0 %8437, %v8243
  %v8439 = vpop.permute.xlu0 %8438
  %8442 = vset.pattern.permute.xlu0 0
  %8443 = vperm.xlu0 %8442, %v8244
  %v8444 = vpop.permute.xlu0 %8443
  %8447 = vset.pattern.permute.xlu0 0
  %8448 = vperm.xlu0 %8447, %v8245
  %v8449 = vpop.permute.xlu0 %8448
  %8452 = vset.pattern.permute.xlu0 0
  %8453 = vperm.xlu0 %8452, %v8246
  %v8454 = vpop.permute.xlu0 %8453
  %8457 = vset.pattern.permute.xlu0 0
  %8458 = vperm.xlu0 %8457, %v8247
  %v8459 = vpop.permute.xlu0 %8458
  %8462 = vset.pattern.permute.xlu0 0
  %8463 = vperm.xlu0 %8462, %v8248
  %v8464 = vpop.permute.xlu0 %8463
  %v8466 = vmul.f32 %v8394, %v8409
  %v8467 = vmul.f32 %v8395, %v8414
  %v8468 = vmul.f32 %v8396, %v8419
  %v8469 = vmul.f32 %v8397, %v8424
  %v8470 = vmul.f32 %v8398, %v8429
  %v8471 = vmul.f32 %v8399, %v8434
  %v8472 = vmul.f32 %v8400, %v8439
  %v8473 = vmul.f32 %v8401, %v8444
  %v8474 = vmul.f32 %v8402, %v8449
  %v8475 = vmul.f32 %v8403, %v8454
  %v8476 = vmul.f32 %v8404, %v8459
  %v8477 = vmul.f32 %v8405, %v8464
  %8478 = vset.pattern.permute.xlu0 1
  %8479 = vperm.xlu0 %8478, %v8237
  %v8480 = vpop.permute.xlu0 %8479
  %8482 = vset.pattern.permute.xlu0 1
  %8483 = vperm.xlu0 %8482, %v8238
  %v8484 = vpop.permute.xlu0 %8483
  %8486 = vset.pattern.permute.xlu0 1
  %8487 = vperm.xlu0 %8486, %v8239
  %v8488 = vpop.permute.xlu0 %8487
  %8490 = vset.pattern.permute.xlu0 1
  %8491 = vperm.xlu0 %8490, %v8240
  %v8492 = vpop.permute.xlu0 %8491
  %8494 = vset.pattern.permute.xlu0 1
  %8495 = vperm.xlu0 %8494, %v8241
  %v8496 = vpop.permute.xlu0 %8495
  %8498 = vset.pattern.permute.xlu0 1
  %8499 = vperm.xlu0 %8498, %v8242
  %v8500 = vpop.permute.xlu0 %8499
  %8502 = vset.pattern.permute.xlu0 1
  %8503 = vperm.xlu0 %8502, %v8243
  %v8504 = vpop.permute.xlu0 %8503
  %8506 = vset.pattern.permute.xlu0 1
  %8507 = vperm.xlu0 %8506, %v8244
  %v8508 = vpop.permute.xlu0 %8507
  %8510 = vset.pattern.permute.xlu0 1
  %8511 = vperm.xlu0 %8510, %v8245
  %v8512 = vpop.permute.xlu0 %8511
  %8514 = vset.pattern.permute.xlu0 1
  %8515 = vperm.xlu0 %8514, %v8246
  %v8516 = vpop.permute.xlu0 %8515
  %8518 = vset.pattern.permute.xlu0 1
  %8519 = vperm.xlu0 %8518, %v8247
  %v8520 = vpop.permute.xlu0 %8519
  %8522 = vset.pattern.permute.xlu0 1
  %8523 = vperm.xlu0 %8522, %v8248
  %v8524 = vpop.permute.xlu0 %8523
  %v8526 = vadd.f32 %v8466, %v8480
  %v8527 = vadd.f32 %v8467, %v8484
  %v8528 = vadd.f32 %v8468, %v8488
  %v8529 = vadd.f32 %v8469, %v8492
  %v8530 = vadd.f32 %v8470, %v8496
  %v8531 = vadd.f32 %v8471, %v8500
  %v8532 = vadd.f32 %v8472, %v8504
  %v8533 = vadd.f32 %v8473, %v8508
  %v8534 = vadd.f32 %v8474, %v8512
  %v8535 = vadd.f32 %v8475, %v8516
  %v8536 = vadd.f32 %v8476, %v8520
  %v8537 = vadd.f32 %v8477, %v8524
  %v8538 = vpack.c.bf16 %v8527, %v8526
  %v8539 = vpack.c.bf16 %v8529, %v8528
  %v8540 = vpack.c.bf16 %v8531, %v8530
  %v8541 = vpack.c.bf16 %v8533, %v8532
  %v8542 = vpack.c.bf16 %v8535, %v8534
  %v8543 = vpack.c.bf16 %v8537, %v8536
  %s8544 = scalar_lea.vmem %s22, 16
  %v8545 = vld [vmem:[%s8544] sm:$0xf]
  %v8546 = vld [vmem:[%s8544 + $0x4] sm:$0xf]
  %v8547 = vld [vmem:[%s8544 + $0x8] sm:$0xf]
  %v8548 = vld [vmem:[%s8544 + $0xc] sm:$0xf]
  %s8549 = scalar_lea.vmem %s21, 96
  %v8550 = vld [vmem:[%s8549] sm:$0xff]
  %v8551 = vld [vmem:[%s8549 + $0x8] sm:$0xff]
  %v8552 = vld [vmem:[%s8549 + $0x10] sm:$0xff]
  %v8553 = vld [vmem:[%s8549 + $0x18] sm:$0xff]
  %v8554 = vld [vmem:[%s8549 + $0x20] sm:$0xff]
  %v8555 = vld [vmem:[%s8549 + $0x28] sm:$0xff]
  %v8556 = vld [vmem:[%s8549 + $0x30] sm:$0xff]
  %v8557 = vld [vmem:[%s8549 + $0x38] sm:$0xff]
  %v8558 = vld [vmem:[%s8549 + $0x40] sm:$0xff]
  %v8559 = vld [vmem:[%s8549 + $0x48] sm:$0xff]
  %v8560 = vld [vmem:[%s8549 + $0x50] sm:$0xff]
  %v8561 = vld [vmem:[%s8549 + $0x58] sm:$0xff]
  %v8562 = vsel %vm2257, %v8155, 0.0
  %8563 = vadd.xlane.f32.xlu0 %v8562
  %v8564 = vpop.xlane.xlu0 %8563
  %v8565 = vsel %vm2257, %v8162, 0.0
  %8566 = vadd.xlane.f32.xlu0 %v8565
  %v8567 = vpop.xlane.xlu0 %8566
  %v8568 = vsel %vm2257, %v8169, 0.0
  %8569 = vadd.xlane.f32.xlu0 %v8568
  %v8570 = vpop.xlane.xlu0 %8569
  %v8571 = vsel %vm2257, %v8176, 0.0
  %8572 = vadd.xlane.f32.xlu0 %v8571
  %v8573 = vpop.xlane.xlu0 %8572
  %v8574 = vsel %vm2257, %v8183, 0.0
  %8575 = vadd.xlane.f32.xlu0 %v8574
  %v8576 = vpop.xlane.xlu0 %8575
  %v8577 = vsel %vm2257, %v8190, 0.0
  %8578 = vadd.xlane.f32.xlu0 %v8577
  %v8579 = vpop.xlane.xlu0 %8578
  %v8580 = vsel %vm2257, %v8197, 0.0
  %8581 = vadd.xlane.f32.xlu0 %v8580
  %v8582 = vpop.xlane.xlu0 %8581
  %v8583 = vsel %vm2257, %v8204, 0.0
  %8584 = vadd.xlane.f32.xlu0 %v8583
  %v8585 = vpop.xlane.xlu0 %8584
  %v8586 = vsel %vm2257, %v8211, 0.0
  %8587 = vadd.xlane.f32.xlu0 %v8586
  %v8588 = vpop.xlane.xlu0 %8587
  %v8589 = vsel %vm2257, %v8218, 0.0
  %8590 = vadd.xlane.f32.xlu0 %v8589
  %v8591 = vpop.xlane.xlu0 %8590
  %v8592 = vsel %vm2257, %v8225, 0.0
  %8593 = vadd.xlane.f32.xlu0 %v8592
  %v8594 = vpop.xlane.xlu0 %8593
  %v8595 = vsel %vm2257, %v8232, 0.0
  %8596 = vadd.xlane.f32.xlu0 %v8595
  %v8597 = vpop.xlane.xlu0 %8596
  %v8598 = vmul.f32 %v8564, %v8285
  %v8599 = vmul.f32 %v8567, %v8285
  %v8600 = vmul.f32 %v8570, %v8285
  %v8601 = vmul.f32 %v8573, %v8285
  %v8602 = vmul.f32 %v8576, %v8285
  %v8603 = vmul.f32 %v8579, %v8285
  %v8604 = vmul.f32 %v8582, %v8285
  %v8605 = vmul.f32 %v8585, %v8285
  %v8606 = vmul.f32 %v8588, %v8285
  %v8607 = vmul.f32 %v8591, %v8285
  %v8608 = vmul.f32 %v8594, %v8285
  %v8609 = vmul.f32 %v8597, %v8285
  %v8610 = vsub.f32 %v8155, %v8598
  %v8611 = vsub.f32 %v8162, %v8599
  %v8612 = vsub.f32 %v8169, %v8600
  %v8613 = vsub.f32 %v8176, %v8601
  %v8614 = vsub.f32 %v8183, %v8602
  %v8615 = vsub.f32 %v8190, %v8603
  %v8616 = vsub.f32 %v8197, %v8604
  %v8617 = vsub.f32 %v8204, %v8605
  %v8618 = vsub.f32 %v8211, %v8606
  %v8619 = vsub.f32 %v8218, %v8607
  %v8620 = vsub.f32 %v8225, %v8608
  %v8621 = vsub.f32 %v8232, %v8609
  %v8622 = vmul.f32 %v8610, %v8610
  %v8623 = vmul.f32 %v8611, %v8611
  %v8624 = vmul.f32 %v8612, %v8612
  %v8625 = vmul.f32 %v8613, %v8613
  %v8626 = vmul.f32 %v8614, %v8614
  %v8627 = vmul.f32 %v8615, %v8615
  %v8628 = vmul.f32 %v8616, %v8616
  %v8629 = vmul.f32 %v8617, %v8617
  %v8630 = vmul.f32 %v8618, %v8618
  %v8631 = vmul.f32 %v8619, %v8619
  %v8632 = vmul.f32 %v8620, %v8620
  %v8633 = vmul.f32 %v8621, %v8621
  %v8634 = vsel %vm2257, %v8622, 0.0
  %8635 = vadd.xlane.f32.xlu0 %v8634
  %v8636 = vpop.xlane.xlu0 %8635
  %v8637 = vsel %vm2257, %v8623, 0.0
  %8638 = vadd.xlane.f32.xlu0 %v8637
  %v8639 = vpop.xlane.xlu0 %8638
  %v8640 = vsel %vm2257, %v8624, 0.0
  %8641 = vadd.xlane.f32.xlu0 %v8640
  %v8642 = vpop.xlane.xlu0 %8641
  %v8643 = vsel %vm2257, %v8625, 0.0
  %8644 = vadd.xlane.f32.xlu0 %v8643
  %v8645 = vpop.xlane.xlu0 %8644
  %v8646 = vsel %vm2257, %v8626, 0.0
  %8647 = vadd.xlane.f32.xlu0 %v8646
  %v8648 = vpop.xlane.xlu0 %8647
  %v8649 = vsel %vm2257, %v8627, 0.0
  %8650 = vadd.xlane.f32.xlu0 %v8649
  %v8651 = vpop.xlane.xlu0 %8650
  %v8652 = vsel %vm2257, %v8628, 0.0
  %8653 = vadd.xlane.f32.xlu0 %v8652
  %v8654 = vpop.xlane.xlu0 %8653
  %v8655 = vsel %vm2257, %v8629, 0.0
  %8656 = vadd.xlane.f32.xlu0 %v8655
  %v8657 = vpop.xlane.xlu0 %8656
  %v8658 = vsel %vm2257, %v8630, 0.0
  %8659 = vadd.xlane.f32.xlu0 %v8658
  %v8660 = vpop.xlane.xlu0 %8659
  %v8661 = vsel %vm2257, %v8631, 0.0
  %8662 = vadd.xlane.f32.xlu0 %v8661
  %v8663 = vpop.xlane.xlu0 %8662
  %v8664 = vsel %vm2257, %v8632, 0.0
  %8665 = vadd.xlane.f32.xlu0 %v8664
  %v8666 = vpop.xlane.xlu0 %8665
  %v8667 = vsel %vm2257, %v8633, 0.0
  %8668 = vadd.xlane.f32.xlu0 %v8667
  %v8669 = vpop.xlane.xlu0 %8668
  %v8670 = vmul.f32 %v8636, %v8285
  %v8671 = vmul.f32 %v8639, %v8285
  %v8672 = vmul.f32 %v8642, %v8285
  %v8673 = vmul.f32 %v8645, %v8285
  %v8674 = vmul.f32 %v8648, %v8285
  %v8675 = vmul.f32 %v8651, %v8285
  %v8676 = vmul.f32 %v8654, %v8285
  %v8677 = vmul.f32 %v8657, %v8285
  %v8678 = vmul.f32 %v8660, %v8285
  %v8679 = vmul.f32 %v8663, %v8285
  %v8680 = vmul.f32 %v8666, %v8285
  %v8681 = vmul.f32 %v8669, %v8285
  %v8682 = vadd.f32 %v8670, 1e-05
  %v8683 = vadd.f32 %v8671, 1e-05
  %v8684 = vadd.f32 %v8672, 1e-05
  %v8685 = vadd.f32 %v8673, 1e-05
  %v8686 = vadd.f32 %v8674, 1e-05
  %v8687 = vadd.f32 %v8675, 1e-05
  %v8688 = vadd.f32 %v8676, 1e-05
  %v8689 = vadd.f32 %v8677, 1e-05
  %v8690 = vadd.f32 %v8678, 1e-05
  %v8691 = vadd.f32 %v8679, 1e-05
  %v8692 = vadd.f32 %v8680, 1e-05
  %v8693 = vadd.f32 %v8681, 1e-05
  %v8694 = vrsqrt.pop %v8682
  %v8695 = vrsqrt.pop %v8683
  %v8696 = vrsqrt.pop %v8684
  %v8697 = vrsqrt.pop %v8685
  %v8698 = vrsqrt.pop %v8686
  %v8699 = vrsqrt.pop %v8687
  %v8700 = vrsqrt.pop %v8688
  %v8701 = vrsqrt.pop %v8689
  %v8702 = vrsqrt.pop %v8690
  %v8703 = vrsqrt.pop %v8691
  %v8704 = vrsqrt.pop %v8692
  %v8705 = vrsqrt.pop %v8693
  %v8706 = vmul.f32 %v8610, %v8694
  %v8707 = vmul.f32 %v8611, %v8695
  %v8708 = vmul.f32 %v8612, %v8696
  %v8709 = vmul.f32 %v8613, %v8697
  %v8710 = vmul.f32 %v8614, %v8698
  %v8711 = vmul.f32 %v8615, %v8699
  %v8712 = vmul.f32 %v8616, %v8700
  %v8713 = vmul.f32 %v8617, %v8701
  %v8714 = vmul.f32 %v8618, %v8702
  %v8715 = vmul.f32 %v8619, %v8703
  %v8716 = vmul.f32 %v8620, %v8704
  %v8717 = vmul.f32 %v8621, %v8705
  %8719 = vset.pattern.permute.xlu0 0
  %8720 = vperm.xlu0 %8719, %v8550
  %v8721 = vpop.permute.xlu0 %8720
  %8724 = vset.pattern.permute.xlu0 0
  %8725 = vperm.xlu0 %8724, %v8551
  %v8726 = vpop.permute.xlu0 %8725
  %8729 = vset.pattern.permute.xlu0 0
  %8730 = vperm.xlu0 %8729, %v8552
  %v8731 = vpop.permute.xlu0 %8730
  %8734 = vset.pattern.permute.xlu0 0
  %8735 = vperm.xlu0 %8734, %v8553
  %v8736 = vpop.permute.xlu0 %8735
  %8739 = vset.pattern.permute.xlu0 0
  %8740 = vperm.xlu0 %8739, %v8554
  %v8741 = vpop.permute.xlu0 %8740
  %8744 = vset.pattern.permute.xlu0 0
  %8745 = vperm.xlu0 %8744, %v8555
  %v8746 = vpop.permute.xlu0 %8745
  %8749 = vset.pattern.permute.xlu0 0
  %8750 = vperm.xlu0 %8749, %v8556
  %v8751 = vpop.permute.xlu0 %8750
  %8754 = vset.pattern.permute.xlu0 0
  %8755 = vperm.xlu0 %8754, %v8557
  %v8756 = vpop.permute.xlu0 %8755
  %8759 = vset.pattern.permute.xlu0 0
  %8760 = vperm.xlu0 %8759, %v8558
  %v8761 = vpop.permute.xlu0 %8760
  %8764 = vset.pattern.permute.xlu0 0
  %8765 = vperm.xlu0 %8764, %v8559
  %v8766 = vpop.permute.xlu0 %8765
  %8769 = vset.pattern.permute.xlu0 0
  %8770 = vperm.xlu0 %8769, %v8560
  %v8771 = vpop.permute.xlu0 %8770
  %8774 = vset.pattern.permute.xlu0 0
  %8775 = vperm.xlu0 %8774, %v8561
  %v8776 = vpop.permute.xlu0 %8775
  %v8778 = vmul.f32 %v8706, %v8721
  %v8779 = vmul.f32 %v8707, %v8726
  %v8780 = vmul.f32 %v8708, %v8731
  %v8781 = vmul.f32 %v8709, %v8736
  %v8782 = vmul.f32 %v8710, %v8741
  %v8783 = vmul.f32 %v8711, %v8746
  %v8784 = vmul.f32 %v8712, %v8751
  %v8785 = vmul.f32 %v8713, %v8756
  %v8786 = vmul.f32 %v8714, %v8761
  %v8787 = vmul.f32 %v8715, %v8766
  %v8788 = vmul.f32 %v8716, %v8771
  %v8789 = vmul.f32 %v8717, %v8776
  %8790 = vset.pattern.permute.xlu0 1
  %8791 = vperm.xlu0 %8790, %v8550
  %v8792 = vpop.permute.xlu0 %8791
  %8794 = vset.pattern.permute.xlu0 1
  %8795 = vperm.xlu0 %8794, %v8551
  %v8796 = vpop.permute.xlu0 %8795
  %8798 = vset.pattern.permute.xlu0 1
  %8799 = vperm.xlu0 %8798, %v8552
  %v8800 = vpop.permute.xlu0 %8799
  %8802 = vset.pattern.permute.xlu0 1
  %8803 = vperm.xlu0 %8802, %v8553
  %v8804 = vpop.permute.xlu0 %8803
  %8806 = vset.pattern.permute.xlu0 1
  %8807 = vperm.xlu0 %8806, %v8554
  %v8808 = vpop.permute.xlu0 %8807
  %8810 = vset.pattern.permute.xlu0 1
  %8811 = vperm.xlu0 %8810, %v8555
  %v8812 = vpop.permute.xlu0 %8811
  %8814 = vset.pattern.permute.xlu0 1
  %8815 = vperm.xlu0 %8814, %v8556
  %v8816 = vpop.permute.xlu0 %8815
  %8818 = vset.pattern.permute.xlu0 1
  %8819 = vperm.xlu0 %8818, %v8557
  %v8820 = vpop.permute.xlu0 %8819
  %8822 = vset.pattern.permute.xlu0 1
  %8823 = vperm.xlu0 %8822, %v8558
  %v8824 = vpop.permute.xlu0 %8823
  %8826 = vset.pattern.permute.xlu0 1
  %8827 = vperm.xlu0 %8826, %v8559
  %v8828 = vpop.permute.xlu0 %8827
  %8830 = vset.pattern.permute.xlu0 1
  %8831 = vperm.xlu0 %8830, %v8560
  %v8832 = vpop.permute.xlu0 %8831
  %8834 = vset.pattern.permute.xlu0 1
  %8835 = vperm.xlu0 %8834, %v8561
  %v8836 = vpop.permute.xlu0 %8835
  %v8838 = vadd.f32 %v8778, %v8792
  %v8839 = vadd.f32 %v8779, %v8796
  %v8840 = vadd.f32 %v8780, %v8800
  %v8841 = vadd.f32 %v8781, %v8804
  %v8842 = vadd.f32 %v8782, %v8808
  %v8843 = vadd.f32 %v8783, %v8812
  %v8844 = vadd.f32 %v8784, %v8816
  %v8845 = vadd.f32 %v8785, %v8820
  %v8846 = vadd.f32 %v8786, %v8824
  %v8847 = vadd.f32 %v8787, %v8828
  %v8848 = vadd.f32 %v8788, %v8832
  %v8849 = vadd.f32 %v8789, %v8836
  %v8850 = vpack.c.bf16 %v8839, %v8838
  %v8851 = vpack.c.bf16 %v8841, %v8840
  %v8852 = vpack.c.bf16 %v8843, %v8842
  %v8853 = vpack.c.bf16 %v8845, %v8844
  %v8854 = vpack.c.bf16 %v8847, %v8846
  %v8855 = vpack.c.bf16 %v8849, %v8848
  %v8860 = vunpack.c.l.b16 %v8545
  %v8861 = vunpack.c.l.b16 %v8546
  %v8862 = vunpack.c.l.b16 %v8547
  %v8863 = vunpack.c.l.b16 %v8548
  %v8864 = vpack.c.b16 %v8861, %v8860
  %v8865 = vpack.c.b16 %v8863, %v8862
  %v8867 = vsel %vm6802, %v8864, 0
  %v8870 = vsel %vm6802, %v8865, 0
  %8872 = vmatprep.subr.bf16.mxu0 0
  %8873 = vmatpush1.bf16.msra.mxu0 0
  %8874 = vmatprep.subr.bf16.mxu0 0
  %8875 = vmatpush1.bf16.msra.mxu0 0
  %8876 = vmatprep.subr.bf16.mxu0 0
  %8877 = vmatpush1.bf16.msra.mxu0 %v8855
  %8878 = vmatprep.subr.bf16.mxu0 0
  %8879 = vmatpush1.bf16.msra.mxu0 %v8854
  %8880 = vmatprep.subr.bf16.mxu0 0
  %8881 = vmatpush1.bf16.msra.mxu0 %v8853
  %8882 = vmatprep.subr.bf16.mxu0 0
  %8883 = vmatpush1.bf16.msra.mxu0 %v8852
  %8884 = vmatprep.subr.bf16.mxu0 0
  %8885 = vmatpush1.bf16.msra.mxu0 %v8851
  %8886 = vmatprep.subr.bf16.mxu0 0
  %8887 = vmatpush1.bf16.msra.mxu0 %v8850
  %8888 = vmatprep.subr.bf16.mxu0 0
  %8889 = vmatpush2.bf16.msra.mxu0 0
  %8890 = vmatprep.subr.bf16.mxu0 0
  %8891 = vmatpush2.bf16.msra.mxu0 0
  %8892 = vmatprep.subr.bf16.mxu0 0
  %8893 = vmatpush2.bf16.msra.mxu0 0
  %8894 = vmatprep.subr.bf16.mxu0 0
  %8895 = vmatpush2.bf16.msra.mxu0 0
  %8896 = vmatprep.subr.bf16.mxu0 0
  %8897 = vmatpush2.bf16.msra.mxu0 0
  %8898 = vmatprep.subr.bf16.mxu0 0
  %8899 = vmatpush2.bf16.msra.mxu0 0
  %8900 = vmatprep.subr.bf16.mxu0 0
  %8901 = vmatpush2.bf16.msra.mxu0 0
  %8902 = vmatprep.subr.bf16.mxu0 0
  %8903 = vmatpush2.bf16.msra.mxu0 0
  %8904 = vmatprep.mubr.bf16.mxu0 0
  %8905 = vmatmul.mubr.bf16.gmra.mxu0 %v8867
  %v8906 = vpop.f32.mrf.mxu0
  %v8907 = vadd.f32 0.0, %v8906
  %v8908 = vpop.f32.mrf.mxu0
  %v8909 = vpop.f32.mrf.mxu0
  %v8910 = vadd.f32 0.0, %v8909
  %v8911 = vpop.f32.mrf.mxu0
  %8912 = vmatprep.mubr.bf16.mxu0 0
  %8913 = vmatmul.mubr.bf16.gmra.mxu0 %v8870
  %v8914 = vpop.f32.mrf.mxu0
  %v8915 = vadd.f32 0.0, %v8914
  %v8916 = vpop.f32.mrf.mxu0
  %v8917 = vpop.f32.mrf.mxu0
  %v8918 = vadd.f32 0.0, %v8917
  %v8919 = vpop.f32.mrf.mxu0
  %8920 = vdwg.mxu0
  %v8925 = vunpack.c.l.b16 %v8233
  %v8926 = vunpack.c.l.b16 %v8234
  %v8927 = vunpack.c.l.b16 %v8235
  %v8928 = vunpack.c.l.b16 %v8236
  %v8929 = vpack.c.b16 %v8926, %v8925
  %v8930 = vpack.c.b16 %v8928, %v8927
  %v8932 = vsel %vm6802, %v8929, 0
  %v8935 = vsel %vm6802, %v8930, 0
  %8937 = vmatprep.subr.bf16.mxu0 0
  %8938 = vmatpush1.bf16.msra.mxu0 0
  %8939 = vmatprep.subr.bf16.mxu0 0
  %8940 = vmatpush1.bf16.msra.mxu0 0
  %8941 = vmatprep.subr.bf16.mxu0 0
  %8942 = vmatpush1.bf16.msra.mxu0 %v8543
  %8943 = vmatprep.subr.bf16.mxu0 0
  %8944 = vmatpush1.bf16.msra.mxu0 %v8542
  %8945 = vmatprep.subr.bf16.mxu0 0
  %8946 = vmatpush1.bf16.msra.mxu0 %v8541
  %8947 = vmatprep.subr.bf16.mxu0 0
  %8948 = vmatpush1.bf16.msra.mxu0 %v8540
  %8949 = vmatprep.subr.bf16.mxu0 0
  %8950 = vmatpush1.bf16.msra.mxu0 %v8539
  %8951 = vmatprep.subr.bf16.mxu0 0
  %8952 = vmatpush1.bf16.msra.mxu0 %v8538
  %8953 = vmatprep.subr.bf16.mxu0 0
  %8954 = vmatpush2.bf16.msra.mxu0 0
  %8955 = vmatprep.subr.bf16.mxu0 0
  %8956 = vmatpush2.bf16.msra.mxu0 0
  %8957 = vmatprep.subr.bf16.mxu0 0
  %8958 = vmatpush2.bf16.msra.mxu0 0
  %8959 = vmatprep.subr.bf16.mxu0 0
  %8960 = vmatpush2.bf16.msra.mxu0 0
  %8961 = vmatprep.subr.bf16.mxu0 0
  %8962 = vmatpush2.bf16.msra.mxu0 0
  %8963 = vmatprep.subr.bf16.mxu0 0
  %8964 = vmatpush2.bf16.msra.mxu0 0
  %8965 = vmatprep.subr.bf16.mxu0 0
  %8966 = vmatpush2.bf16.msra.mxu0 0
  %8967 = vmatprep.subr.bf16.mxu0 0
  %8968 = vmatpush2.bf16.msra.mxu0 0
  %8969 = vmatprep.mubr.bf16.mxu0 0
  %8970 = vmatmul.mubr.bf16.gmra.mxu0 %v8932
  %v8971 = vpop.f32.mrf.mxu0
  %v8972 = vadd.f32 %v8907, %v8971
  %v8973 = vpop.f32.mrf.mxu0
  %v8974 = vpop.f32.mrf.mxu0
  %v8975 = vadd.f32 %v8910, %v8974
  %v8976 = vpop.f32.mrf.mxu0
  %8977 = vmatprep.mubr.bf16.mxu0 0
  %8978 = vmatmul.mubr.bf16.gmra.mxu0 %v8935
  %v8979 = vpop.f32.mrf.mxu0
  %v8980 = vadd.f32 %v8915, %v8979
  %v8981 = vpop.f32.mrf.mxu0
  %v8982 = vpop.f32.mrf.mxu0
  %v8983 = vadd.f32 %v8918, %v8982
  %v8984 = vpop.f32.mrf.mxu0
  %8985 = vdwg.mxu0
  %v8986 = vld [vmem:[%s23] sm:$0xff]
  %v8987 = vld [vmem:[%s23 + $0x8] sm:$0xff]
  %v8988 = vld [vmem:[%s23 + $0x10] sm:$0xff]
  %v8989 = vld [vmem:[%s23 + $0x18] sm:$0xff]
  %8991 = vset.pattern.permute.xlu0 0
  %8992 = vperm.xlu0 %8991, %v8986
  %v8993 = vpop.permute.xlu0 %8992
  %8996 = vset.pattern.permute.xlu0 0
  %8997 = vperm.xlu0 %8996, %v8987
  %v8998 = vpop.permute.xlu0 %8997
  %9001 = vset.pattern.permute.xlu0 0
  %9002 = vperm.xlu0 %9001, %v8988
  %v9003 = vpop.permute.xlu0 %9002
  %9006 = vset.pattern.permute.xlu0 0
  %9007 = vperm.xlu0 %9006, %v8989
  %v9008 = vpop.permute.xlu0 %9007
  %v9010 = vadd.f32 %v8972, %v8993
  %v9011 = vadd.f32 %v8975, %v8998
  %v9012 = vadd.f32 %v8980, %v9003
  %v9013 = vadd.f32 %v8983, %v9008
  %9014 = vst.msk [vmem:[%s24] sm:$0xff] %vm2257, %v9010
  %9015 = vst.msk [vmem:[%s24 + $0x8] sm:$0xff] %vm2257, %v9011
  %9016 = vst.msk [vmem:[%s24 + $0x10] sm:$0xff] %vm2257, %v9012
  %9017 = vst.msk [vmem:[%s24 + $0x18] sm:$0xff] %vm2257, %v9013
  // Predicated region
  $region98: #{ecapa_tdnn_forward.1} parent=0 // pred_check
    _
  $region99: #{ecapa_tdnn_forward.1} parent=0 // pred_check_branch
    %9019 = sbr.rel (0) target = $region101
  $region100: #{ecapa_tdnn_forward.1} parent=0 // pred_region
    _
  $region101: #{ecapa_tdnn_forward.1} parent=0 // pred_fallthru
    _
  // Predicated region
  $region102: #{ecapa_tdnn_forward.1} parent=0 // pred_check
    _
  $region103: #{ecapa_tdnn_forward.1} parent=0 // pred_check_branch
    %9021 = sbr.rel (0) target = $region105
  $region104: #{ecapa_tdnn_forward.1} parent=0 // pred_region
    _
  $region105: #{ecapa_tdnn_forward.1} parent=0 // pred_fallthru
    _

</llo_original>
